<compile_context>
chip_gen: v5e
topology: v5e:2x2
jax: 0.10.0
libtpu: 0.0.40
codegen_flags: <defaults>
</compile_context>

<pallas_src>
import functools
import math

import jax
import jax.numpy as jnp
from jax import lax
from jax.experimental import pallas as pl
from jax.experimental.pallas import tpu as pltpu


# ----------------------------- in-kernel helpers ------------------------------


def _silu(v):
    return v * jax.nn.sigmoid(v)


def _softmax(v):
    m = jnp.max(v, axis=-1, keepdims=True)
    e = jnp.exp(v - m)
    # Exact division keeps gate scores (an exported output, and the top-k
    # selection input) numerically tight vs. the reference.
    return e / jnp.sum(e, axis=-1, keepdims=True)


def _softplus(v):
    # torch.nn.Softplus(beta=1, threshold=20)
    return jnp.where(v > 20.0, v, jnp.log1p(jnp.exp(jnp.minimum(v, 20.0))))


def _topk_weights(scores, top_k, num_experts):
    """Dense top-k gate weights: softmax score where among top-k (torch.topk
    tie-break: lowest index first), 0 elsewhere.  A weighted sum with these
    equals the reference gather + weighted-sum (no renormalization, matching
    the PyTorch module)."""
    iota = lax.broadcasted_iota(jnp.int32, scores.shape, 1)
    w = jnp.zeros_like(scores)
    m = scores
    for _ in range(top_k):
        mx = jnp.max(m, axis=-1, keepdims=True)
        first = jnp.min(jnp.where(m == mx, iota, num_experts), axis=-1, keepdims=True)
        sel = iota == first
        w = jnp.where(sel, scores, w)
        m = jnp.where(sel, -jnp.inf, m)
    return w


# ----------------------------- kernel -----------------------------------------

_PARAM_ORDER = (
    "w_ga1", "b_ga1", "w_ga2", "b_ga2",
    "w_gb1", "b_gb1", "w_gb2", "b_gb2",
    "w_e1", "b_e1", "w_e2", "b_e2",
    "sel",
    "w_ha1", "b_ha1", "w_ha2", "b_ha2",
    "w_hb1", "b_hb1", "w_hb2", "b_hb2",
)


def _beta_moe_kernel(D, H, E, EH, top_k,
                     x1_ref, x2_ref,
                     w_ga1, b_ga1, w_ga2, b_ga2,
                     w_gb1, b_gb1, w_gb2, b_gb2,
                     w_e1, b_e1, w_e2, b_e2,
                     sel,
                     w_ha1, b_ha1, w_ha2, b_ha2,
                     w_hb1, b_hb1, w_hb2, b_hb2,
                     out_ref):
    f32 = jnp.float32
    bf16 = jnp.bfloat16

    x1 = x1_ref[...]                                    # (bt, D)   inputs
    x2 = x2_ref[...]                                    # (bt, D)   reference embedding
    x1b = x1.astype(bf16)
    x2b = x2.astype(bf16)

    # ---- gate paths (f32: exported scores + exact top-k parity) -------------
    # combined = [x1 | x2] is never materialized: K-split dots instead.
    wga1 = w_ga1[...]
    ha = _silu(jnp.dot(x1, wga1[:D], preferred_element_type=f32)
               + jnp.dot(x2, wga1[D:], preferred_element_type=f32) + b_ga1[...])
    la = jnp.dot(ha, w_ga2[...], preferred_element_type=f32) + b_ga2[...]

    wgb1 = w_gb1[...]
    hb = _silu(jnp.dot(x1, wgb1[:D], preferred_element_type=f32)
               + jnp.dot(x2, wgb1[D:], preferred_element_type=f32) + b_gb1[...])
    lb = jnp.dot(hb, w_gb2[...], preferred_element_type=f32) + b_gb2[...]

    ga_scores = _softmax(la)                            # (bt, E)
    gb_scores = _softmax(lb)                            # (bt, E)

    # ---- experts: layer 1 packed along lanes, layer 2 block-diagonal --------
    # bf16 MXU operands, f32 accumulation; activations stay f32 for the VPU.
    we1 = w_e1[...]                                     # (2D, E*EH) bf16
    he = _silu(jnp.dot(x1b, we1[:D], preferred_element_type=f32)
               + jnp.dot(x2b, we1[D:], preferred_element_type=f32) + b_e1[...])
    e_out = _silu(jnp.dot(he.astype(bf16), w_e2[...],
                          preferred_element_type=f32) + b_e2[...])   # (bt, E*EH)
    # Dropout layers are identity in eval/inference mode.

    # ---- dense top-k gate weights, expanded to expert lanes via the
    #      precomputed 0/1 selector matmul (kept f32: exact score values) -----
    wa = _topk_weights(ga_scores, top_k, E)             # (bt, E)
    wb = _topk_weights(gb_scores, top_k, E)
    s = sel[...]                                        # (E, E*EH) constant 0/1
    wa_exp = jnp.dot(wa, s, preferred_element_type=f32)  # (bt, E*EH)
    wb_exp = jnp.dot(wb, s, preferred_element_type=f32)

    # ---- heads: per-expert group-sum folded into the tiled head-1 weights ---
    agg_a = (wa_exp * e_out).astype(bf16)               # (bt, E*EH)
    agg_b = (wb_exp * e_out).astype(bf16)
    h_a = _silu(jnp.dot(agg_a, w_ha1[...], preferred_element_type=f32) + b_ha1[...])
    h_b = _silu(jnp.dot(agg_b, w_hb1[...], preferred_element_type=f32) + b_hb1[...])
    alpha = _softplus(jnp.dot(h_a.astype(bf16), w_ha2[...],
                              preferred_element_type=f32) + b_ha2[...])   # (bt, 1)
    beta = _softplus(jnp.dot(h_b.astype(bf16), w_hb2[...],
                             preferred_element_type=f32) + b_hb2[...])    # (bt, 1)

    # Single lane-contiguous output slab: [ga | gb | alpha | beta]
    out_ref[...] = jnp.concatenate([ga_scores, gb_scores, alpha, beta], axis=-1)


# ----------------------------- param packing ----------------------------------


def pack_params(p, *, num_experts):
    """Pack per-layer arrays into per-path slabs (no unaligned in-kernel slices).

    Gate path kept f32 (exact softmax / top-k parity with the reference);
    expert + head matmul weights stored bf16; biases stay f32.
    """
    E = num_experts
    f32, bf16 = jnp.float32, jnp.bfloat16
    two_d, EH = p["ew1"].shape[1], p["ew1"].shape[2]
    EEH = E * EH

    # experts layer 1: concat output lanes; layer 2: block-diagonal
    w_e1 = jnp.transpose(p["ew1"], (1, 0, 2)).reshape(two_d, EEH)
    w_e2 = jax.scipy.linalg.block_diag(*[p["ew2"][e] for e in range(E)])
    b_e1 = p["eb1"].reshape(1, EEH)
    b_e2 = p["eb2"].reshape(1, EEH)

    # heads: fold the per-expert group-sum into head layer 1 (both linear)
    w_ha1 = jnp.tile(p["aw1"], (E, 1))                  # (E*EH, EH)
    w_hb1 = jnp.tile(p["bw1"], (E, 1))

    # gate-weight -> expert-lane 0/1 selector (precomputed; VMEM-resident)
    sel = (jnp.arange(EEH)[None, :] // EH == jnp.arange(E)[:, None]).astype(f32)

    return dict(
        w_ga1=p["gaw1"].astype(f32), b_ga1=p["gab1"].astype(f32),
        w_ga2=p["gaw2"].astype(f32), b_ga2=p["gab2"].astype(f32),
        w_gb1=p["gbw1"].astype(f32), b_gb1=p["gbb1"].astype(f32),
        w_gb2=p["gbw2"].astype(f32), b_gb2=p["gbb2"].astype(f32),
        w_e1=w_e1.astype(bf16), b_e1=b_e1.astype(f32),
        w_e2=w_e2.astype(bf16), b_e2=b_e2.astype(f32),
        sel=sel,
        w_ha1=w_ha1.astype(bf16), b_ha1=p["ab1"].astype(f32),
        w_ha2=p["aw2"].astype(bf16), b_ha2=p["ab2"].astype(f32),
        w_hb1=w_hb1.astype(bf16), b_hb1=p["bb1"].astype(f32),
        w_hb2=p["bw2"].astype(bf16), b_hb2=p["bb2"].astype(f32),
    )


# ----------------------------- wrapper -----------------------------------------


def _pick_batch_tile(B):
    # Largest tile that still yields >=2 grid steps (so both v7x TensorCores get
    # work and the pipeline has depth), capped at 2048.  Ragged / tiny batches
    # are zero-padded in the wrapper to a multiple of the tile.
    for t in (2048, 1024, 512, 256, 128):
        if B >= 2 * t:
            return t
    return 128


@functools.partial(jax.jit, static_argnames=(
    "input_dim", "hidden_dim", "expert_hidden_dim", "num_experts", "top_k"))
def beta_distribution_classifier(inputs, ref_emb, packed, *, input_dim, hidden_dim,
                                 expert_hidden_dim, num_experts, top_k):
    D, H, EH, E = input_dim, hidden_dim, expert_hidden_dim, num_experts
    B = inputs.shape[0]
    bt = _pick_batch_tile(B)
    n_steps = pl.cdiv(B, bt)
    B_pad = n_steps * bt
    if B_pad != B:
        pad = B_pad - B
        inputs = jnp.pad(inputs, ((0, pad), (0, 0)))
        ref_emb = jnp.pad(ref_emb, ((0, pad), (0, 0)))
    n_out = 2 * E + 2

    params = [packed[k] for k in _PARAM_ORDER]

    def const_spec(a):  # weights / biases stay VMEM-resident across grid steps
        return pl.BlockSpec(a.shape, lambda i: (0, 0))

    kernel = functools.partial(_beta_moe_kernel, D, H, E, EH, top_k)
    out = pl.pallas_call(
        kernel,
        out_shape=jax.ShapeDtypeStruct((B_pad, n_out), jnp.float32),
        grid=(n_steps,),
        in_specs=[
            pl.BlockSpec((bt, D), lambda i: (i, 0)),   # inputs
            pl.BlockSpec((bt, D), lambda i: (i, 0)),   # reference_base_embedding
        ] + [const_spec(a) for a in params],
        out_specs=pl.BlockSpec((bt, n_out), lambda i: (i, 0)),
        compiler_params=pltpu.CompilerParams(dimension_semantics=("parallel",)),
    )(inputs, ref_emb, *params)

    out = out[:B]
    ga = out[:, :E]
    gb = out[:, E:2 * E]
    alpha = out[:, 2 * E:2 * E + 1]
    beta = out[:, 2 * E + 1:2 * E + 2]
    return alpha, beta, ga, gb


# ----------------------------- raw param init (matches PyTorch _init_weights) --


def _xavier_uniform(key, fan_in, fan_out):
    bound = math.sqrt(6.0 / (fan_in + fan_out))
    return jax.random.uniform(key, (fan_in, fan_out), jnp.float32,
                              minval=-bound, maxval=bound)


def init_params(key, input_dim, hidden_dim, expert_hidden_dim, num_experts):
    combined_dim = 2 * input_dim
    keys = iter(jax.random.split(key, 64))

    def lin(fi, fo):
        return _xavier_uniform(next(keys), fi, fo), jnp.zeros((1, fo), jnp.float32)

    p = {}
    p["gaw1"], p["gab1"] = lin(combined_dim, hidden_dim)
    p["gaw2"], p["gab2"] = lin(hidden_dim, num_experts)
    p["gbw1"], p["gbb1"] = lin(combined_dim, hidden_dim)
    p["gbw2"], p["gbb2"] = lin(hidden_dim, num_experts)

    p["ew1"] = jnp.stack([_xavier_uniform(next(keys), combined_dim, expert_hidden_dim)
                          for _ in range(num_experts)])            # (E, 2D, EH)
    p["eb1"] = jnp.zeros((num_experts, expert_hidden_dim), jnp.float32)
    p["ew2"] = jnp.stack([_xavier_uniform(next(keys), expert_hidden_dim, expert_hidden_dim)
                          for _ in range(num_experts)])            # (E, EH, EH)
    p["eb2"] = jnp.zeros((num_experts, expert_hidden_dim), jnp.float32)

    p["aw1"], p["ab1"] = lin(expert_hidden_dim, expert_hidden_dim)
    p["aw2"], p["ab2"] = lin(expert_hidden_dim, 1)
    p["bw1"], p["bb1"] = lin(expert_hidden_dim, expert_hidden_dim)
    p["bw2"], p["bb2"] = lin(expert_hidden_dim, 1)
    return p


# ----------------------------- pure-JAX reference (follows PyTorch literally) --


def reference_forward(inputs, ref_emb, p, num_experts, top_k):
    combined = jnp.concatenate([inputs, ref_emb], axis=-1)
    silu = jax.nn.silu
    ga_scores = jax.nn.softmax(silu(combined @ p["gaw1"] + p["gab1"]) @ p["gaw2"]
                               + p["gab2"], axis=-1)
    gb_scores = jax.nn.softmax(silu(combined @ p["gbw1"] + p["gbb1"]) @ p["gbw2"]
                               + p["gbb2"], axis=-1)
    ta_v, ta_i = lax.top_k(ga_scores, top_k)
    tb_v, tb_i = lax.top_k(gb_scores, top_k)
    outs = []
    for e in range(num_experts):
        h = silu(combined @ p["ew1"][e] + p["eb1"][e])
        outs.append(silu(h @ p["ew2"][e] + p["eb2"][e]))
    expert_outputs = jnp.stack(outs, axis=1)                       # (B, E, EH)
    sel_a = jnp.take_along_axis(expert_outputs, ta_i[:, :, None], axis=1)
    agg_a = jnp.sum(sel_a * ta_v[:, :, None], axis=1)
    sel_b = jnp.take_along_axis(expert_outputs, tb_i[:, :, None], axis=1)
    agg_b = jnp.sum(sel_b * tb_v[:, :, None], axis=1)
    alpha = jax.nn.softplus(silu(agg_a @ p["aw1"] + p["ab1"]) @ p["aw2"] + p["ab2"])
    beta = jax.nn.softplus(silu(agg_b @ p["bw1"] + p["bb1"]) @ p["bw2"] + p["bb2"])
    return alpha, beta, ga_scores, gb_scores


# ----------------------------- main ---------------------------------------------


if __name__ == "__main__":
    INPUT_DIM = 16
    HIDDEN_DIM = INPUT_DIM            # hidden_dim defaults to input_dim
    NUM_EXPERTS = 8
    EXPERT_HIDDEN = HIDDEN_DIM // 2   # expert_hidden_dim defaults to hidden_dim // 2
    TOP_K = 3

    key = jax.random.PRNGKey(0)
    k_in, k_ref, k_p = jax.random.split(key, 3)
    raw = init_params(k_p, INPUT_DIM, HIDDEN_DIM, EXPERT_HIDDEN, NUM_EXPERTS)
    packed = pack_params(raw, num_experts=NUM_EXPERTS)

    # Two batch sizes: tiny (padded single block) and ragged multi-step grid.
    for B in (8, 300):
        ki, kr = jax.random.split(jax.random.fold_in(k_in, B))
        inputs = jax.random.normal(ki, (B, INPUT_DIM), jnp.float32)
        ref_emb = jax.random.normal(kr, (B, INPUT_DIM), jnp.float32)

        alpha, beta, ga, gb = beta_distribution_classifier(
            inputs, ref_emb, packed,
            input_dim=INPUT_DIM, hidden_dim=HIDDEN_DIM,
            expert_hidden_dim=EXPERT_HIDDEN, num_experts=NUM_EXPERTS, top_k=TOP_K)
        jax.block_until_ready((alpha, beta, ga, gb))

        assert alpha.shape == (B, 1) and beta.shape == (B, 1)
        assert ga.shape == (B, NUM_EXPERTS) and gb.shape == (B, NUM_EXPERTS)

        # Correctness vs. a literal pure-JAX translation of the module.
        r_alpha, r_beta, r_ga, r_gb = reference_forward(inputs, ref_emb, raw,
                                                        NUM_EXPERTS, TOP_K)
        # Gate path is f32 in the kernel -> tight tolerance.
        assert jnp.allclose(ga, r_ga, rtol=2e-3, atol=2e-3)
        assert jnp.allclose(gb, r_gb, rtol=2e-3, atol=2e-3)
        # Expert/head matmul operands are bf16 (f32 accumulation) -> looser.
        assert jnp.allclose(alpha, r_alpha, rtol=2e-2, atol=2e-2)
        assert jnp.allclose(beta, r_beta, rtol=2e-2, atol=2e-2)

    print("KERNEL_OK")
</pallas_src>

<mosaic_0001>
module attributes {stable_mosaic.version = 11 : i64} {
  func.func @_beta_moe_kernel(%arg0: i32, %arg1: memref<128x16xf32, #tpu.memory_space<vmem>>, %arg2: memref<128x16xf32, #tpu.memory_space<vmem>>, %arg3: memref<32x16xf32, #tpu.memory_space<vmem>>, %arg4: memref<1x16xf32, #tpu.memory_space<vmem>>, %arg5: memref<16x8xf32, #tpu.memory_space<vmem>>, %arg6: memref<1x8xf32, #tpu.memory_space<vmem>>, %arg7: memref<32x16xf32, #tpu.memory_space<vmem>>, %arg8: memref<1x16xf32, #tpu.memory_space<vmem>>, %arg9: memref<16x8xf32, #tpu.memory_space<vmem>>, %arg10: memref<1x8xf32, #tpu.memory_space<vmem>>, %arg11: memref<32x64xbf16, #tpu.memory_space<vmem>>, %arg12: memref<1x64xf32, #tpu.memory_space<vmem>>, %arg13: memref<64x64xbf16, #tpu.memory_space<vmem>>, %arg14: memref<1x64xf32, #tpu.memory_space<vmem>>, %arg15: memref<8x64xf32, #tpu.memory_space<vmem>>, %arg16: memref<64x8xbf16, #tpu.memory_space<vmem>>, %arg17: memref<1x8xf32, #tpu.memory_space<vmem>>, %arg18: memref<8x1xbf16, #tpu.memory_space<vmem>>, %arg19: memref<1x1xf32, #tpu.memory_space<vmem>>, %arg20: memref<64x8xbf16, #tpu.memory_space<vmem>>, %arg21: memref<1x8xf32, #tpu.memory_space<vmem>>, %arg22: memref<8x1xbf16, #tpu.memory_space<vmem>>, %arg23: memref<1x1xf32, #tpu.memory_space<vmem>>, %arg24: memref<128x18xf32, #tpu.memory_space<vmem>>) attributes {dimension_semantics = [#tpu.dimension_semantics<parallel>], iteration_bounds = array<i64: 1>, scalar_prefetch = 0 : i64, scratch_operands = 0 : i64, tpu.core_type = #tpu.core_type<tc>, window_params = [{transform_indices = @transform_0, window_bounds = array<i64: 128, 16>}, {transform_indices = @transform_1, window_bounds = array<i64: 128, 16>}, {pipeline_mode = #tpu.pipeline_mode<synchronous>, transform_indices = @transform_2, window_bounds = array<i64: 32, 16>}, {pipeline_mode = #tpu.pipeline_mode<synchronous>, transform_indices = @transform_3, window_bounds = array<i64: 1, 16>}, {pipeline_mode = #tpu.pipeline_mode<synchronous>, transform_indices = @transform_4, window_bounds = array<i64: 16, 8>}, {pipeline_mode = #tpu.pipeline_mode<synchronous>, transform_indices = @transform_5, window_bounds = array<i64: 1, 8>}, {pipeline_mode = #tpu.pipeline_mode<synchronous>, transform_indices = @transform_6, window_bounds = array<i64: 32, 16>}, {pipeline_mode = #tpu.pipeline_mode<synchronous>, transform_indices = @transform_7, window_bounds = array<i64: 1, 16>}, {pipeline_mode = #tpu.pipeline_mode<synchronous>, transform_indices = @transform_8, window_bounds = array<i64: 16, 8>}, {pipeline_mode = #tpu.pipeline_mode<synchronous>, transform_indices = @transform_9, window_bounds = array<i64: 1, 8>}, {pipeline_mode = #tpu.pipeline_mode<synchronous>, transform_indices = @transform_10, window_bounds = array<i64: 32, 64>}, {pipeline_mode = #tpu.pipeline_mode<synchronous>, transform_indices = @transform_11, window_bounds = array<i64: 1, 64>}, {pipeline_mode = #tpu.pipeline_mode<synchronous>, transform_indices = @transform_12, window_bounds = array<i64: 64, 64>}, {pipeline_mode = #tpu.pipeline_mode<synchronous>, transform_indices = @transform_13, window_bounds = array<i64: 1, 64>}, {pipeline_mode = #tpu.pipeline_mode<synchronous>, transform_indices = @transform_14, window_bounds = array<i64: 8, 64>}, {pipeline_mode = #tpu.pipeline_mode<synchronous>, transform_indices = @transform_15, window_bounds = array<i64: 64, 8>}, {pipeline_mode = #tpu.pipeline_mode<synchronous>, transform_indices = @transform_16, window_bounds = array<i64: 1, 8>}, {pipeline_mode = #tpu.pipeline_mode<synchronous>, transform_indices = @transform_17, window_bounds = array<i64: 8, 1>}, {pipeline_mode = #tpu.pipeline_mode<synchronous>, transform_indices = @transform_18, window_bounds = array<i64: 1, 1>}, {pipeline_mode = #tpu.pipeline_mode<synchronous>, transform_indices = @transform_19, window_bounds = array<i64: 64, 8>}, {pipeline_mode = #tpu.pipeline_mode<synchronous>, transform_indices = @transform_20, window_bounds = array<i64: 1, 8>}, {pipeline_mode = #tpu.pipeline_mode<synchronous>, transform_indices = @transform_21, window_bounds = array<i64: 8, 1>}, {pipeline_mode = #tpu.pipeline_mode<synchronous>, transform_indices = @transform_22, window_bounds = array<i64: 1, 1>}, {transform_indices = @transform_23, window_bounds = array<i64: 128, 18>}]} {
    %c0 = arith.constant 0 : index
    %c0_0 = arith.constant 0 : index
    %0 = vector.load %arg1[%c0, %c0_0] : memref<128x16xf32, #tpu.memory_space<vmem>>, vector<128x16xf32>
    %c0_1 = arith.constant 0 : index
    %c0_2 = arith.constant 0 : index
    %1 = vector.load %arg2[%c0_1, %c0_2] : memref<128x16xf32, #tpu.memory_space<vmem>>, vector<128x16xf32>
    %2 = arith.truncf %0 : vector<128x16xf32> to vector<128x16xbf16>
    %3 = arith.truncf %1 : vector<128x16xf32> to vector<128x16xbf16>
    %c0_3 = arith.constant 0 : index
    %c0_4 = arith.constant 0 : index
    %4 = vector.load %arg3[%c0_3, %c0_4] : memref<32x16xf32, #tpu.memory_space<vmem>>, vector<32x16xf32>
    %5 = vector.extract_strided_slice %4 {offsets = [0, 0], sizes = [16, 16], strides = [1, 1]} : vector<32x16xf32> to vector<16x16xf32>
    %cst = arith.constant dense<0.000000e+00> : vector<128x16xf32>
    %6 = tpu.matmul %0, %5, %cst {dimension_numbers = #tpu.dot_dimension_numbers<[1], [0], [0], [1], [0, 0, 1, 1], [], []>} : vector<128x16xf32>, vector<16x16xf32>, vector<128x16xf32> -> vector<128x16xf32>
    %7 = vector.extract_strided_slice %4 {offsets = [16, 0], sizes = [16, 16], strides = [1, 1]} : vector<32x16xf32> to vector<16x16xf32>
    %cst_5 = arith.constant dense<0.000000e+00> : vector<128x16xf32>
    %8 = tpu.matmul %1, %7, %cst_5 {dimension_numbers = #tpu.dot_dimension_numbers<[1], [0], [0], [1], [0, 0, 1, 1], [], []>} : vector<128x16xf32>, vector<16x16xf32>, vector<128x16xf32> -> vector<128x16xf32>
    %9 = arith.addf %6, %8 : vector<128x16xf32>
    %c0_6 = arith.constant 0 : index
    %c0_7 = arith.constant 0 : index
    %10 = vector.load %arg4[%c0_6, %c0_7] : memref<1x16xf32, #tpu.memory_space<vmem>>, vector<1x16xf32>
    %11 = vector.broadcast %10 : vector<1x16xf32> to vector<128x16xf32>
    %12 = arith.addf %9, %11 : vector<128x16xf32>
    %13 = arith.negf %12 : vector<128x16xf32>
    %14 = math.exp %13 : vector<128x16xf32>
    %cst_8 = arith.constant 1.000000e+00 : f32
    %15 = vector.broadcast %cst_8 : f32 to vector<128x16xf32>
    %16 = arith.addf %15, %14 : vector<128x16xf32>
    %17 = arith.divf %15, %16 : vector<128x16xf32>
    %18 = arith.mulf %12, %17 : vector<128x16xf32>
    %c0_9 = arith.constant 0 : index
    %c0_10 = arith.constant 0 : index
    %19 = vector.load %arg5[%c0_9, %c0_10] : memref<16x8xf32, #tpu.memory_space<vmem>>, vector<16x8xf32>
    %cst_11 = arith.constant dense<0.000000e+00> : vector<128x8xf32>
    %20 = tpu.matmul %18, %19, %cst_11 {dimension_numbers = #tpu.dot_dimension_numbers<[1], [0], [0], [1], [0, 0, 1, 1], [], []>} : vector<128x16xf32>, vector<16x8xf32>, vector<128x8xf32> -> vector<128x8xf32>
    %c0_12 = arith.constant 0 : index
    %c0_13 = arith.constant 0 : index
    %21 = vector.load %arg6[%c0_12, %c0_13] : memref<1x8xf32, #tpu.memory_space<vmem>>, vector<1x8xf32>
    %22 = vector.broadcast %21 : vector<1x8xf32> to vector<128x8xf32>
    %23 = arith.addf %20, %22 : vector<128x8xf32>
    %c0_14 = arith.constant 0 : index
    %c0_15 = arith.constant 0 : index
    %24 = vector.load %arg7[%c0_14, %c0_15] : memref<32x16xf32, #tpu.memory_space<vmem>>, vector<32x16xf32>
    %25 = vector.extract_strided_slice %24 {offsets = [0, 0], sizes = [16, 16], strides = [1, 1]} : vector<32x16xf32> to vector<16x16xf32>
    %cst_16 = arith.constant dense<0.000000e+00> : vector<128x16xf32>
    %26 = tpu.matmul %0, %25, %cst_16 {dimension_numbers = #tpu.dot_dimension_numbers<[1], [0], [0], [1], [0, 0, 1, 1], [], []>} : vector<128x16xf32>, vector<16x16xf32>, vector<128x16xf32> -> vector<128x16xf32>
    %27 = vector.extract_strided_slice %24 {offsets = [16, 0], sizes = [16, 16], strides = [1, 1]} : vector<32x16xf32> to vector<16x16xf32>
    %cst_17 = arith.constant dense<0.000000e+00> : vector<128x16xf32>
    %28 = tpu.matmul %1, %27, %cst_17 {dimension_numbers = #tpu.dot_dimension_numbers<[1], [0], [0], [1], [0, 0, 1, 1], [], []>} : vector<128x16xf32>, vector<16x16xf32>, vector<128x16xf32> -> vector<128x16xf32>
    %29 = arith.addf %26, %28 : vector<128x16xf32>
    %c0_18 = arith.constant 0 : index
    %c0_19 = arith.constant 0 : index
    %30 = vector.load %arg8[%c0_18, %c0_19] : memref<1x16xf32, #tpu.memory_space<vmem>>, vector<1x16xf32>
    %31 = vector.broadcast %30 : vector<1x16xf32> to vector<128x16xf32>
    %32 = arith.addf %29, %31 : vector<128x16xf32>
    %33 = arith.negf %32 : vector<128x16xf32>
    %34 = math.exp %33 : vector<128x16xf32>
    %cst_20 = arith.constant 1.000000e+00 : f32
    %35 = vector.broadcast %cst_20 : f32 to vector<128x16xf32>
    %36 = arith.addf %35, %34 : vector<128x16xf32>
    %37 = arith.divf %35, %36 : vector<128x16xf32>
    %38 = arith.mulf %32, %37 : vector<128x16xf32>
    %c0_21 = arith.constant 0 : index
    %c0_22 = arith.constant 0 : index
    %39 = vector.load %arg9[%c0_21, %c0_22] : memref<16x8xf32, #tpu.memory_space<vmem>>, vector<16x8xf32>
    %cst_23 = arith.constant dense<0.000000e+00> : vector<128x8xf32>
    %40 = tpu.matmul %38, %39, %cst_23 {dimension_numbers = #tpu.dot_dimension_numbers<[1], [0], [0], [1], [0, 0, 1, 1], [], []>} : vector<128x16xf32>, vector<16x8xf32>, vector<128x8xf32> -> vector<128x8xf32>
    %c0_24 = arith.constant 0 : index
    %c0_25 = arith.constant 0 : index
    %41 = vector.load %arg10[%c0_24, %c0_25] : memref<1x8xf32, #tpu.memory_space<vmem>>, vector<1x8xf32>
    %42 = vector.broadcast %41 : vector<1x8xf32> to vector<128x8xf32>
    %43 = arith.addf %40, %42 : vector<128x8xf32>
    %cst_26 = arith.constant dense<0xFF800000> : vector<128xf32>
    %44 = vector.multi_reduction <maximumf>, %23, %cst_26 [1] : vector<128x8xf32> to vector<128xf32>
    %45 = vector.shape_cast %44 : vector<128xf32> to vector<128x1xf32>
    %46 = vector.broadcast %45 : vector<128x1xf32> to vector<128x8xf32>
    %47 = arith.subf %23, %46 : vector<128x8xf32>
    %48 = math.exp %47 : vector<128x8xf32>
    %cst_27 = arith.constant dense<0.000000e+00> : vector<128xf32>
    %49 = vector.multi_reduction <add>, %48, %cst_27 [1] : vector<128x8xf32> to vector<128xf32>
    %50 = vector.shape_cast %49 : vector<128xf32> to vector<128x1xf32>
    %51 = vector.broadcast %50 : vector<128x1xf32> to vector<128x8xf32>
    %52 = arith.divf %48, %51 : vector<128x8xf32>
    %cst_28 = arith.constant dense<0xFF800000> : vector<128xf32>
    %53 = vector.multi_reduction <maximumf>, %43, %cst_28 [1] : vector<128x8xf32> to vector<128xf32>
    %54 = vector.shape_cast %53 : vector<128xf32> to vector<128x1xf32>
    %55 = vector.broadcast %54 : vector<128x1xf32> to vector<128x8xf32>
    %56 = arith.subf %43, %55 : vector<128x8xf32>
    %57 = math.exp %56 : vector<128x8xf32>
    %cst_29 = arith.constant dense<0.000000e+00> : vector<128xf32>
    %58 = vector.multi_reduction <add>, %57, %cst_29 [1] : vector<128x8xf32> to vector<128xf32>
    %59 = vector.shape_cast %58 : vector<128xf32> to vector<128x1xf32>
    %60 = vector.broadcast %59 : vector<128x1xf32> to vector<128x8xf32>
    %61 = arith.divf %57, %60 : vector<128x8xf32>
    %c0_30 = arith.constant 0 : index
    %c0_31 = arith.constant 0 : index
    %62 = vector.load %arg11[%c0_30, %c0_31] : memref<32x64xbf16, #tpu.memory_space<vmem>>, vector<32x64xbf16>
    %63 = vector.extract_strided_slice %62 {offsets = [0, 0], sizes = [16, 64], strides = [1, 1]} : vector<32x64xbf16> to vector<16x64xbf16>
    %cst_32 = arith.constant dense<0.000000e+00> : vector<128x64xf32>
    %64 = tpu.matmul %2, %63, %cst_32 {dimension_numbers = #tpu.dot_dimension_numbers<[1], [0], [0], [1], [0, 0, 1, 1], [], []>} : vector<128x16xbf16>, vector<16x64xbf16>, vector<128x64xf32> -> vector<128x64xf32>
    %65 = vector.extract_strided_slice %62 {offsets = [16, 0], sizes = [16, 64], strides = [1, 1]} : vector<32x64xbf16> to vector<16x64xbf16>
    %cst_33 = arith.constant dense<0.000000e+00> : vector<128x64xf32>
    %66 = tpu.matmul %3, %65, %cst_33 {dimension_numbers = #tpu.dot_dimension_numbers<[1], [0], [0], [1], [0, 0, 1, 1], [], []>} : vector<128x16xbf16>, vector<16x64xbf16>, vector<128x64xf32> -> vector<128x64xf32>
    %67 = arith.addf %64, %66 : vector<128x64xf32>
    %c0_34 = arith.constant 0 : index
    %c0_35 = arith.constant 0 : index
    %68 = vector.load %arg12[%c0_34, %c0_35] : memref<1x64xf32, #tpu.memory_space<vmem>>, vector<1x64xf32>
    %69 = vector.broadcast %68 : vector<1x64xf32> to vector<128x64xf32>
    %70 = arith.addf %67, %69 : vector<128x64xf32>
    %71 = arith.negf %70 : vector<128x64xf32>
    %72 = math.exp %71 : vector<128x64xf32>
    %cst_36 = arith.constant 1.000000e+00 : f32
    %73 = vector.broadcast %cst_36 : f32 to vector<128x64xf32>
    %74 = arith.addf %73, %72 : vector<128x64xf32>
    %75 = arith.divf %73, %74 : vector<128x64xf32>
    %76 = arith.mulf %70, %75 : vector<128x64xf32>
    %77 = arith.truncf %76 : vector<128x64xf32> to vector<128x64xbf16>
    %c0_37 = arith.constant 0 : index
    %c0_38 = arith.constant 0 : index
    %78 = vector.load %arg13[%c0_37, %c0_38] : memref<64x64xbf16, #tpu.memory_space<vmem>>, vector<64x64xbf16>
    %cst_39 = arith.constant dense<0.000000e+00> : vector<128x64xf32>
    %79 = tpu.matmul %77, %78, %cst_39 {dimension_numbers = #tpu.dot_dimension_numbers<[1], [0], [0], [1], [0, 0, 1, 1], [], []>} : vector<128x64xbf16>, vector<64x64xbf16>, vector<128x64xf32> -> vector<128x64xf32>
    %c0_40 = arith.constant 0 : index
    %c0_41 = arith.constant 0 : index
    %80 = vector.load %arg14[%c0_40, %c0_41] : memref<1x64xf32, #tpu.memory_space<vmem>>, vector<1x64xf32>
    %81 = vector.broadcast %80 : vector<1x64xf32> to vector<128x64xf32>
    %82 = arith.addf %79, %81 : vector<128x64xf32>
    %83 = arith.negf %82 : vector<128x64xf32>
    %84 = math.exp %83 : vector<128x64xf32>
    %cst_42 = arith.constant 1.000000e+00 : f32
    %85 = vector.broadcast %cst_42 : f32 to vector<128x64xf32>
    %86 = arith.addf %85, %84 : vector<128x64xf32>
    %87 = arith.divf %85, %86 : vector<128x64xf32>
    %88 = arith.mulf %82, %87 : vector<128x64xf32>
    %89 = tpu.iota {dimensions = array<i32: 1>} : vector<128x8xi32>
    %cst_43 = arith.constant 0.000000e+00 : f32
    %90 = vector.broadcast %cst_43 : f32 to vector<128x8xf32>
    %cst_44 = arith.constant dense<0xFF800000> : vector<128xf32>
    %91 = vector.multi_reduction <maximumf>, %52, %cst_44 [1] : vector<128x8xf32> to vector<128xf32>
    %92 = vector.shape_cast %91 : vector<128xf32> to vector<128x1xf32>
    %93 = vector.broadcast %92 : vector<128x1xf32> to vector<128x8xf32>
    %94 = arith.cmpf oeq, %52, %93 : vector<128x8xf32>
    %c8_i32 = arith.constant 8 : i32
    %95 = vector.broadcast %c8_i32 : i32 to vector<128x8xi32>
    %96 = arith.select %94, %89, %95 : vector<128x8xi1>, vector<128x8xi32>
    %cst_45 = arith.constant dense<2147483647> : vector<128xi32>
    %97 = vector.multi_reduction <minsi>, %96, %cst_45 [1] : vector<128x8xi32> to vector<128xi32>
    %98 = vector.shape_cast %97 : vector<128xi32> to vector<128x1xi32>
    %99 = vector.broadcast %98 : vector<128x1xi32> to vector<128x8xi32>
    %100 = arith.cmpi eq, %89, %99 : vector<128x8xi32>
    %101 = arith.select %100, %52, %90 : vector<128x8xi1>, vector<128x8xf32>
    %cst_46 = arith.constant 0xFF800000 : f32
    %102 = vector.broadcast %cst_46 : f32 to vector<128x8xf32>
    %103 = arith.select %100, %102, %52 : vector<128x8xi1>, vector<128x8xf32>
    %cst_47 = arith.constant dense<0xFF800000> : vector<128xf32>
    %104 = vector.multi_reduction <maximumf>, %103, %cst_47 [1] : vector<128x8xf32> to vector<128xf32>
    %105 = vector.shape_cast %104 : vector<128xf32> to vector<128x1xf32>
    %106 = vector.broadcast %105 : vector<128x1xf32> to vector<128x8xf32>
    %107 = arith.cmpf oeq, %103, %106 : vector<128x8xf32>
    %c8_i32_48 = arith.constant 8 : i32
    %108 = vector.broadcast %c8_i32_48 : i32 to vector<128x8xi32>
    %109 = arith.select %107, %89, %108 : vector<128x8xi1>, vector<128x8xi32>
    %cst_49 = arith.constant dense<2147483647> : vector<128xi32>
    %110 = vector.multi_reduction <minsi>, %109, %cst_49 [1] : vector<128x8xi32> to vector<128xi32>
    %111 = vector.shape_cast %110 : vector<128xi32> to vector<128x1xi32>
    %112 = vector.broadcast %111 : vector<128x1xi32> to vector<128x8xi32>
    %113 = arith.cmpi eq, %89, %112 : vector<128x8xi32>
    %114 = arith.select %113, %52, %101 : vector<128x8xi1>, vector<128x8xf32>
    %cst_50 = arith.constant 0xFF800000 : f32
    %115 = vector.broadcast %cst_50 : f32 to vector<128x8xf32>
    %116 = arith.select %113, %115, %103 : vector<128x8xi1>, vector<128x8xf32>
    %cst_51 = arith.constant dense<0xFF800000> : vector<128xf32>
    %117 = vector.multi_reduction <maximumf>, %116, %cst_51 [1] : vector<128x8xf32> to vector<128xf32>
    %118 = vector.shape_cast %117 : vector<128xf32> to vector<128x1xf32>
    %119 = vector.broadcast %118 : vector<128x1xf32> to vector<128x8xf32>
    %120 = arith.cmpf oeq, %116, %119 : vector<128x8xf32>
    %c8_i32_52 = arith.constant 8 : i32
    %121 = vector.broadcast %c8_i32_52 : i32 to vector<128x8xi32>
    %122 = arith.select %120, %89, %121 : vector<128x8xi1>, vector<128x8xi32>
    %cst_53 = arith.constant dense<2147483647> : vector<128xi32>
    %123 = vector.multi_reduction <minsi>, %122, %cst_53 [1] : vector<128x8xi32> to vector<128xi32>
    %124 = vector.shape_cast %123 : vector<128xi32> to vector<128x1xi32>
    %125 = vector.broadcast %124 : vector<128x1xi32> to vector<128x8xi32>
    %126 = arith.cmpi eq, %89, %125 : vector<128x8xi32>
    %127 = arith.select %126, %52, %114 : vector<128x8xi1>, vector<128x8xf32>
    %128 = tpu.iota {dimensions = array<i32: 1>} : vector<128x8xi32>
    %cst_54 = arith.constant 0.000000e+00 : f32
    %129 = vector.broadcast %cst_54 : f32 to vector<128x8xf32>
    %cst_55 = arith.constant dense<0xFF800000> : vector<128xf32>
    %130 = vector.multi_reduction <maximumf>, %61, %cst_55 [1] : vector<128x8xf32> to vector<128xf32>
    %131 = vector.shape_cast %130 : vector<128xf32> to vector<128x1xf32>
    %132 = vector.broadcast %131 : vector<128x1xf32> to vector<128x8xf32>
    %133 = arith.cmpf oeq, %61, %132 : vector<128x8xf32>
    %c8_i32_56 = arith.constant 8 : i32
    %134 = vector.broadcast %c8_i32_56 : i32 to vector<128x8xi32>
    %135 = arith.select %133, %128, %134 : vector<128x8xi1>, vector<128x8xi32>
    %cst_57 = arith.constant dense<2147483647> : vector<128xi32>
    %136 = vector.multi_reduction <minsi>, %135, %cst_57 [1] : vector<128x8xi32> to vector<128xi32>
    %137 = vector.shape_cast %136 : vector<128xi32> to vector<128x1xi32>
    %138 = vector.broadcast %137 : vector<128x1xi32> to vector<128x8xi32>
    %139 = arith.cmpi eq, %128, %138 : vector<128x8xi32>
    %140 = arith.select %139, %61, %129 : vector<128x8xi1>, vector<128x8xf32>
    %cst_58 = arith.constant 0xFF800000 : f32
    %141 = vector.broadcast %cst_58 : f32 to vector<128x8xf32>
    %142 = arith.select %139, %141, %61 : vector<128x8xi1>, vector<128x8xf32>
    %cst_59 = arith.constant dense<0xFF800000> : vector<128xf32>
    %143 = vector.multi_reduction <maximumf>, %142, %cst_59 [1] : vector<128x8xf32> to vector<128xf32>
    %144 = vector.shape_cast %143 : vector<128xf32> to vector<128x1xf32>
    %145 = vector.broadcast %144 : vector<128x1xf32> to vector<128x8xf32>
    %146 = arith.cmpf oeq, %142, %145 : vector<128x8xf32>
    %c8_i32_60 = arith.constant 8 : i32
    %147 = vector.broadcast %c8_i32_60 : i32 to vector<128x8xi32>
    %148 = arith.select %146, %128, %147 : vector<128x8xi1>, vector<128x8xi32>
    %cst_61 = arith.constant dense<2147483647> : vector<128xi32>
    %149 = vector.multi_reduction <minsi>, %148, %cst_61 [1] : vector<128x8xi32> to vector<128xi32>
    %150 = vector.shape_cast %149 : vector<128xi32> to vector<128x1xi32>
    %151 = vector.broadcast %150 : vector<128x1xi32> to vector<128x8xi32>
    %152 = arith.cmpi eq, %128, %151 : vector<128x8xi32>
    %153 = arith.select %152, %61, %140 : vector<128x8xi1>, vector<128x8xf32>
    %cst_62 = arith.constant 0xFF800000 : f32
    %154 = vector.broadcast %cst_62 : f32 to vector<128x8xf32>
    %155 = arith.select %152, %154, %142 : vector<128x8xi1>, vector<128x8xf32>
    %cst_63 = arith.constant dense<0xFF800000> : vector<128xf32>
    %156 = vector.multi_reduction <maximumf>, %155, %cst_63 [1] : vector<128x8xf32> to vector<128xf32>
    %157 = vector.shape_cast %156 : vector<128xf32> to vector<128x1xf32>
    %158 = vector.broadcast %157 : vector<128x1xf32> to vector<128x8xf32>
    %159 = arith.cmpf oeq, %155, %158 : vector<128x8xf32>
    %c8_i32_64 = arith.constant 8 : i32
    %160 = vector.broadcast %c8_i32_64 : i32 to vector<128x8xi32>
    %161 = arith.select %159, %128, %160 : vector<128x8xi1>, vector<128x8xi32>
    %cst_65 = arith.constant dense<2147483647> : vector<128xi32>
    %162 = vector.multi_reduction <minsi>, %161, %cst_65 [1] : vector<128x8xi32> to vector<128xi32>
    %163 = vector.shape_cast %162 : vector<128xi32> to vector<128x1xi32>
    %164 = vector.broadcast %163 : vector<128x1xi32> to vector<128x8xi32>
    %165 = arith.cmpi eq, %128, %164 : vector<128x8xi32>
    %166 = arith.select %165, %61, %153 : vector<128x8xi1>, vector<128x8xf32>
    %c0_66 = arith.constant 0 : index
    %c0_67 = arith.constant 0 : index
    %167 = vector.load %arg15[%c0_66, %c0_67] : memref<8x64xf32, #tpu.memory_space<vmem>>, vector<8x64xf32>
    %cst_68 = arith.constant dense<0.000000e+00> : vector<128x64xf32>
    %168 = tpu.matmul %127, %167, %cst_68 {dimension_numbers = #tpu.dot_dimension_numbers<[1], [0], [0], [1], [0, 0, 1, 1], [], []>} : vector<128x8xf32>, vector<8x64xf32>, vector<128x64xf32> -> vector<128x64xf32>
    %cst_69 = arith.constant dense<0.000000e+00> : vector<128x64xf32>
    %169 = tpu.matmul %166, %167, %cst_69 {dimension_numbers = #tpu.dot_dimension_numbers<[1], [0], [0], [1], [0, 0, 1, 1], [], []>} : vector<128x8xf32>, vector<8x64xf32>, vector<128x64xf32> -> vector<128x64xf32>
    %170 = arith.mulf %168, %88 : vector<128x64xf32>
    %171 = arith.truncf %170 : vector<128x64xf32> to vector<128x64xbf16>
    %172 = arith.mulf %169, %88 : vector<128x64xf32>
    %173 = arith.truncf %172 : vector<128x64xf32> to vector<128x64xbf16>
    %c0_70 = arith.constant 0 : index
    %c0_71 = arith.constant 0 : index
    %174 = vector.load %arg16[%c0_70, %c0_71] : memref<64x8xbf16, #tpu.memory_space<vmem>>, vector<64x8xbf16>
    %cst_72 = arith.constant dense<0.000000e+00> : vector<128x8xf32>
    %175 = tpu.matmul %171, %174, %cst_72 {dimension_numbers = #tpu.dot_dimension_numbers<[1], [0], [0], [1], [0, 0, 1, 1], [], []>} : vector<128x64xbf16>, vector<64x8xbf16>, vector<128x8xf32> -> vector<128x8xf32>
    %c0_73 = arith.constant 0 : index
    %c0_74 = arith.constant 0 : index
    %176 = vector.load %arg17[%c0_73, %c0_74] : memref<1x8xf32, #tpu.memory_space<vmem>>, vector<1x8xf32>
    %177 = vector.broadcast %176 : vector<1x8xf32> to vector<128x8xf32>
    %178 = arith.addf %175, %177 : vector<128x8xf32>
    %179 = arith.negf %178 : vector<128x8xf32>
    %180 = math.exp %179 : vector<128x8xf32>
    %cst_75 = arith.constant 1.000000e+00 : f32
    %181 = vector.broadcast %cst_75 : f32 to vector<128x8xf32>
    %182 = arith.addf %181, %180 : vector<128x8xf32>
    %183 = arith.divf %181, %182 : vector<128x8xf32>
    %184 = arith.mulf %178, %183 : vector<128x8xf32>
    %c0_76 = arith.constant 0 : index
    %c0_77 = arith.constant 0 : index
    %185 = vector.load %arg20[%c0_76, %c0_77] : memref<64x8xbf16, #tpu.memory_space<vmem>>, vector<64x8xbf16>
    %cst_78 = arith.constant dense<0.000000e+00> : vector<128x8xf32>
    %186 = tpu.matmul %173, %185, %cst_78 {dimension_numbers = #tpu.dot_dimension_numbers<[1], [0], [0], [1], [0, 0, 1, 1], [], []>} : vector<128x64xbf16>, vector<64x8xbf16>, vector<128x8xf32> -> vector<128x8xf32>
    %c0_79 = arith.constant 0 : index
    %c0_80 = arith.constant 0 : index
    %187 = vector.load %arg21[%c0_79, %c0_80] : memref<1x8xf32, #tpu.memory_space<vmem>>, vector<1x8xf32>
    %188 = vector.broadcast %187 : vector<1x8xf32> to vector<128x8xf32>
    %189 = arith.addf %186, %188 : vector<128x8xf32>
    %190 = arith.negf %189 : vector<128x8xf32>
    %191 = math.exp %190 : vector<128x8xf32>
    %cst_81 = arith.constant 1.000000e+00 : f32
    %192 = vector.broadcast %cst_81 : f32 to vector<128x8xf32>
    %193 = arith.addf %192, %191 : vector<128x8xf32>
    %194 = arith.divf %192, %193 : vector<128x8xf32>
    %195 = arith.mulf %189, %194 : vector<128x8xf32>
    %196 = arith.truncf %184 : vector<128x8xf32> to vector<128x8xbf16>
    %c0_82 = arith.constant 0 : index
    %c0_83 = arith.constant 0 : index
    %197 = vector.load %arg18[%c0_82, %c0_83] : memref<8x1xbf16, #tpu.memory_space<vmem>>, vector<8x1xbf16>
    %cst_84 = arith.constant dense<0.000000e+00> : vector<128x1xf32>
    %198 = tpu.matmul %196, %197, %cst_84 {dimension_numbers = #tpu.dot_dimension_numbers<[1], [0], [0], [1], [0, 0, 1, 1], [], []>} : vector<128x8xbf16>, vector<8x1xbf16>, vector<128x1xf32> -> vector<128x1xf32>
    %c0_85 = arith.constant 0 : index
    %c0_86 = arith.constant 0 : index
    %199 = vector.load %arg19[%c0_85, %c0_86] : memref<1x1xf32, #tpu.memory_space<vmem>>, vector<1x1xf32>
    %200 = vector.broadcast %199 : vector<1x1xf32> to vector<128x1xf32>
    %201 = arith.addf %198, %200 : vector<128x1xf32>
    %cst_87 = arith.constant 2.000000e+01 : f32
    %202 = vector.broadcast %cst_87 : f32 to vector<128x1xf32>
    %203 = arith.cmpf ogt, %201, %202 : vector<128x1xf32>
    %cst_88 = arith.constant 2.000000e+01 : f32
    %204 = vector.broadcast %cst_88 : f32 to vector<128x1xf32>
    %205 = arith.minimumf %201, %204 : vector<128x1xf32>
    %206 = math.exp %205 : vector<128x1xf32>
    %207 = math.log1p %206 : vector<128x1xf32>
    %208 = arith.select %203, %201, %207 : vector<128x1xi1>, vector<128x1xf32>
    %209 = arith.truncf %195 : vector<128x8xf32> to vector<128x8xbf16>
    %c0_89 = arith.constant 0 : index
    %c0_90 = arith.constant 0 : index
    %210 = vector.load %arg22[%c0_89, %c0_90] : memref<8x1xbf16, #tpu.memory_space<vmem>>, vector<8x1xbf16>
    %cst_91 = arith.constant dense<0.000000e+00> : vector<128x1xf32>
    %211 = tpu.matmul %209, %210, %cst_91 {dimension_numbers = #tpu.dot_dimension_numbers<[1], [0], [0], [1], [0, 0, 1, 1], [], []>} : vector<128x8xbf16>, vector<8x1xbf16>, vector<128x1xf32> -> vector<128x1xf32>
    %c0_92 = arith.constant 0 : index
    %c0_93 = arith.constant 0 : index
    %212 = vector.load %arg23[%c0_92, %c0_93] : memref<1x1xf32, #tpu.memory_space<vmem>>, vector<1x1xf32>
    %213 = vector.broadcast %212 : vector<1x1xf32> to vector<128x1xf32>
    %214 = arith.addf %211, %213 : vector<128x1xf32>
    %cst_94 = arith.constant 2.000000e+01 : f32
    %215 = vector.broadcast %cst_94 : f32 to vector<128x1xf32>
    %216 = arith.cmpf ogt, %214, %215 : vector<128x1xf32>
    %cst_95 = arith.constant 2.000000e+01 : f32
    %217 = vector.broadcast %cst_95 : f32 to vector<128x1xf32>
    %218 = arith.minimumf %214, %217 : vector<128x1xf32>
    %219 = math.exp %218 : vector<128x1xf32>
    %220 = math.log1p %219 : vector<128x1xf32>
    %221 = arith.select %216, %214, %220 : vector<128x1xi1>, vector<128x1xf32>
    %222 = tpu.concatenate %52, %61, %208, %221 in 1 : vector<128x8xf32>, vector<128x8xf32>, vector<128x1xf32>, vector<128x1xf32> -> vector<128x18xf32>
    %c0_96 = arith.constant 0 : index
    %c0_97 = arith.constant 0 : index
    %223 = vector.load %arg24[%c0_96, %c0_97] : memref<128x18xf32, #tpu.memory_space<vmem>>, vector<128x18xf32>
    tpu.vector_store %arg24[%c0_96, %c0_97], %222 {strides = array<i32>} : memref<128x18xf32, #tpu.memory_space<vmem>>, vector<128x18xf32>,
    return
  }
  func.func @transform_0(%arg0: i32) -> (i32, i32) {
    %c0_i32 = arith.constant 0 : i32
    %c0_i32_0 = arith.constant 0 : i32
    return %arg0, %c0_i32 : i32, i32
  }
  func.func @transform_1(%arg0: i32) -> (i32, i32) {
    %c0_i32 = arith.constant 0 : i32
    %c0_i32_0 = arith.constant 0 : i32
    return %arg0, %c0_i32 : i32, i32
  }
  func.func @transform_2(%arg0: i32) -> (i32, i32) {
    %c0_i32 = arith.constant 0 : i32
    %c0_i32_0 = arith.constant 0 : i32
    %c0_i32_1 = arith.constant 0 : i32
    return %c0_i32, %c0_i32_0 : i32, i32
  }
  func.func @transform_3(%arg0: i32) -> (i32, i32) {
    %c0_i32 = arith.constant 0 : i32
    %c0_i32_0 = arith.constant 0 : i32
    %c0_i32_1 = arith.constant 0 : i32
    return %c0_i32, %c0_i32_0 : i32, i32
  }
  func.func @transform_4(%arg0: i32) -> (i32, i32) {
    %c0_i32 = arith.constant 0 : i32
    %c0_i32_0 = arith.constant 0 : i32
    %c0_i32_1 = arith.constant 0 : i32
    return %c0_i32, %c0_i32_0 : i32, i32
  }
  func.func @transform_5(%arg0: i32) -> (i32, i32) {
    %c0_i32 = arith.constant 0 : i32
    %c0_i32_0 = arith.constant 0 : i32
    %c0_i32_1 = arith.constant 0 : i32
    return %c0_i32, %c0_i32_0 : i32, i32
  }
  func.func @transform_6(%arg0: i32) -> (i32, i32) {
    %c0_i32 = arith.constant 0 : i32
    %c0_i32_0 = arith.constant 0 : i32
    %c0_i32_1 = arith.constant 0 : i32
    return %c0_i32, %c0_i32_0 : i32, i32
  }
  func.func @transform_7(%arg0: i32) -> (i32, i32) {
    %c0_i32 = arith.constant 0 : i32
    %c0_i32_0 = arith.constant 0 : i32
    %c0_i32_1 = arith.constant 0 : i32
    return %c0_i32, %c0_i32_0 : i32, i32
  }
  func.func @transform_8(%arg0: i32) -> (i32, i32) {
    %c0_i32 = arith.constant 0 : i32
    %c0_i32_0 = arith.constant 0 : i32
    %c0_i32_1 = arith.constant 0 : i32
    return %c0_i32, %c0_i32_0 : i32, i32
  }
  func.func @transform_9(%arg0: i32) -> (i32, i32) {
    %c0_i32 = arith.constant 0 : i32
    %c0_i32_0 = arith.constant 0 : i32
    %c0_i32_1 = arith.constant 0 : i32
    return %c0_i32, %c0_i32_0 : i32, i32
  }
  func.func @transform_10(%arg0: i32) -> (i32, i32) {
    %c0_i32 = arith.constant 0 : i32
    %c0_i32_0 = arith.constant 0 : i32
    %c0_i32_1 = arith.constant 0 : i32
    return %c0_i32, %c0_i32_0 : i32, i32
  }
  func.func @transform_11(%arg0: i32) -> (i32, i32) {
    %c0_i32 = arith.constant 0 : i32
    %c0_i32_0 = arith.constant 0 : i32
    %c0_i32_1 = arith.constant 0 : i32
    return %c0_i32, %c0_i32_0 : i32, i32
  }
  func.func @transform_12(%arg0: i32) -> (i32, i32) {
    %c0_i32 = arith.constant 0 : i32
    %c0_i32_0 = arith.constant 0 : i32
    %c0_i32_1 = arith.constant 0 : i32
    return %c0_i32, %c0_i32_0 : i32, i32
  }
  func.func @transform_13(%arg0: i32) -> (i32, i32) {
    %c0_i32 = arith.constant 0 : i32
    %c0_i32_0 = arith.constant 0 : i32
    %c0_i32_1 = arith.constant 0 : i32
    return %c0_i32, %c0_i32_0 : i32, i32
  }
  func.func @transform_14(%arg0: i32) -> (i32, i32) {
    %c0_i32 = arith.constant 0 : i32
    %c0_i32_0 = arith.constant 0 : i32
    %c0_i32_1 = arith.constant 0 : i32
    return %c0_i32, %c0_i32_0 : i32, i32
  }
  func.func @transform_15(%arg0: i32) -> (i32, i32) {
    %c0_i32 = arith.constant 0 : i32
    %c0_i32_0 = arith.constant 0 : i32
    %c0_i32_1 = arith.constant 0 : i32
    return %c0_i32, %c0_i32_0 : i32, i32
  }
  func.func @transform_16(%arg0: i32) -> (i32, i32) {
    %c0_i32 = arith.constant 0 : i32
    %c0_i32_0 = arith.constant 0 : i32
    %c0_i32_1 = arith.constant 0 : i32
    return %c0_i32, %c0_i32_0 : i32, i32
  }
  func.func @transform_17(%arg0: i32) -> (i32, i32) {
    %c0_i32 = arith.constant 0 : i32
    %c0_i32_0 = arith.constant 0 : i32
    %c0_i32_1 = arith.constant 0 : i32
    return %c0_i32, %c0_i32_0 : i32, i32
  }
  func.func @transform_18(%arg0: i32) -> (i32, i32) {
    %c0_i32 = arith.constant 0 : i32
    %c0_i32_0 = arith.constant 0 : i32
    %c0_i32_1 = arith.constant 0 : i32
    return %c0_i32, %c0_i32_0 : i32, i32
  }
  func.func @transform_19(%arg0: i32) -> (i32, i32) {
    %c0_i32 = arith.constant 0 : i32
    %c0_i32_0 = arith.constant 0 : i32
    %c0_i32_1 = arith.constant 0 : i32
    return %c0_i32, %c0_i32_0 : i32, i32
  }
  func.func @transform_20(%arg0: i32) -> (i32, i32) {
    %c0_i32 = arith.constant 0 : i32
    %c0_i32_0 = arith.constant 0 : i32
    %c0_i32_1 = arith.constant 0 : i32
    return %c0_i32, %c0_i32_0 : i32, i32
  }
  func.func @transform_21(%arg0: i32) -> (i32, i32) {
    %c0_i32 = arith.constant 0 : i32
    %c0_i32_0 = arith.constant 0 : i32
    %c0_i32_1 = arith.constant 0 : i32
    return %c0_i32, %c0_i32_0 : i32, i32
  }
  func.func @transform_22(%arg0: i32) -> (i32, i32) {
    %c0_i32 = arith.constant 0 : i32
    %c0_i32_0 = arith.constant 0 : i32
    %c0_i32_1 = arith.constant 0 : i32
    return %c0_i32, %c0_i32_0 : i32, i32
  }
  func.func @transform_23(%arg0: i32) -> (i32, i32) {
    %c0_i32 = arith.constant 0 : i32
    %c0_i32_0 = arith.constant 0 : i32
    return %arg0, %c0_i32 : i32, i32
  }
}

</mosaic_0001>

<llo_original>
// kernel: beta_distribution_classifier.1
$region0: #{beta_distribution_classifier.1}
  #allocation0 [shape = 'u32[]', space=smem, size = 0x4, offset = 0x4, fixed_abs, tag = 'smem constant byte address 0x4 - core index']
  #allocation1 [shape = 'u32[72,128]{1,0:T(1,128)}', space=vmem, size = 0x9000, scoped, tag = 'internal scratch']
  #allocation2 [shape = 'f32[1,1]{1,0:T(1,128)S(1)}', space=vmem, size = 0x200, scoped, tag = 'scoped memory for beta_distribution_classifier.1']
  #allocation3 [shape = 'f32[1,1]{1,0:T(1,128)S(1)}', space=vmem, size = 0x200, scoped, tag = 'scoped memory for beta_distribution_classifier.1']
  %s0 = inlined_call_operand.vmem [shape: f32[128,16], index: 0, kind: input, shape index: {}]
  %s1 = inlined_call_operand.vmem [shape: f32[128,16], index: 1, kind: input, shape index: {}]
  %s2 = inlined_call_operand.vmem [shape: f32[32,16], index: 2, kind: input, shape index: {}]
  %s3 = inlined_call_operand.vmem [shape: f32[1,16], index: 3, kind: input, shape index: {}]
  %s4 = inlined_call_operand.vmem [shape: f32[16,8], index: 4, kind: input, shape index: {}]
  %s5 = inlined_call_operand.vmem [shape: f32[1,8], index: 5, kind: input, shape index: {}]
  %s6 = inlined_call_operand.vmem [shape: f32[32,16], index: 6, kind: input, shape index: {}]
  %s7 = inlined_call_operand.vmem [shape: f32[1,16], index: 7, kind: input, shape index: {}]
  %s8 = inlined_call_operand.vmem [shape: f32[16,8], index: 8, kind: input, shape index: {}]
  %s9 = inlined_call_operand.vmem [shape: f32[1,8], index: 9, kind: input, shape index: {}]
  %s10 = inlined_call_operand.vmem [shape: bf16[32,64], index: 10, kind: input, shape index: {}]
  %s11 = inlined_call_operand.vmem [shape: f32[1,64], index: 11, kind: input, shape index: {}]
  %s12 = inlined_call_operand.vmem [shape: bf16[64,64], index: 12, kind: input, shape index: {}]
  %s13 = inlined_call_operand.vmem [shape: f32[1,64], index: 13, kind: input, shape index: {}]
  %s14 = inlined_call_operand.vmem [shape: f32[8,64], index: 14, kind: input, shape index: {}]
  %s15 = inlined_call_operand.vmem [shape: bf16[64,8], index: 15, kind: input, shape index: {}]
  %s16 = inlined_call_operand.vmem [shape: f32[1,8], index: 16, kind: input, shape index: {}]
  %s17 = inlined_call_operand.vmem [shape: bf16[8,1], index: 17, kind: input, shape index: {}]
  %s18 = inlined_call_operand.<no memory space> [shape: f32[1,1], index: 18, kind: input, shape index: {}]
  %s19 = inlined_call_operand.vmem [shape: bf16[64,8], index: 19, kind: input, shape index: {}]
  %s20 = inlined_call_operand.vmem [shape: f32[1,8], index: 20, kind: input, shape index: {}]
  %s21 = inlined_call_operand.vmem [shape: bf16[8,1], index: 21, kind: input, shape index: {}]
  %s22 = inlined_call_operand.<no memory space> [shape: f32[1,1], index: 22, kind: input, shape index: {}]
  %s23 = inlined_call_operand.vmem [shape: f32[128,18], index: 23, kind: output, shape index: {}]
  %s24 = sld [smem:[#allocation0]]
  $region102: #{beta_distribution_classifier.1} parent=0
    _
  %s26 = ssub.s32 1, %s24
  %s27 = scalar_select 0, %s26, %s24
  %v28 = vstv %s18
  %29 = vst [vmem:[#allocation2] sm:$0x1] %v28
  %v30 = vstv %s22
  %31 = vst [vmem:[#allocation3] sm:$0x1] %v30
  // Predicated region
  $region2: #{beta_distribution_classifier.1} parent=0 // pred_check
    _
  $region3: #{beta_distribution_classifier.1} parent=0 // pred_check_branch
    %33 = sbr.rel (0) target = $region5
  $region4: #{beta_distribution_classifier.1} parent=0 // pred_region
    _
  $region5: #{beta_distribution_classifier.1} parent=0 // pred_fallthru
    _
  // Predicated region
  $region6: #{beta_distribution_classifier.1} parent=0 // pred_check
    _
  $region7: #{beta_distribution_classifier.1} parent=0 // pred_check_branch
    %35 = sbr.rel (0) target = $region9
  $region8: #{beta_distribution_classifier.1} parent=0 // pred_region
    _
  $region9: #{beta_distribution_classifier.1} parent=0 // pred_fallthru
    _
  // Predicated region
  $region10: #{beta_distribution_classifier.1} parent=0 // pred_check
    _
  $region11: #{beta_distribution_classifier.1} parent=0 // pred_check_branch
    %37 = sbr.rel (0) target = $region13
  $region12: #{beta_distribution_classifier.1} parent=0 // pred_region
    _
  $region13: #{beta_distribution_classifier.1} parent=0 // pred_fallthru
    _
  // Predicated region
  $region14: #{beta_distribution_classifier.1} parent=0 // pred_check
    _
  $region15: #{beta_distribution_classifier.1} parent=0 // pred_check_branch
    %39 = sbr.rel (0) target = $region17
  $region16: #{beta_distribution_classifier.1} parent=0 // pred_region
    _
  $region17: #{beta_distribution_classifier.1} parent=0 // pred_fallthru
    _
  // Predicated region
  $region18: #{beta_distribution_classifier.1} parent=0 // pred_check
    _
  $region19: #{beta_distribution_classifier.1} parent=0 // pred_check_branch
    %41 = sbr.rel (0) target = $region21
  $region20: #{beta_distribution_classifier.1} parent=0 // pred_region
    _
  $region21: #{beta_distribution_classifier.1} parent=0 // pred_fallthru
    _
  // Predicated region
  $region22: #{beta_distribution_classifier.1} parent=0 // pred_check
    _
  $region23: #{beta_distribution_classifier.1} parent=0 // pred_check_branch
    %43 = sbr.rel (0) target = $region25
  $region24: #{beta_distribution_classifier.1} parent=0 // pred_region
    _
  $region25: #{beta_distribution_classifier.1} parent=0 // pred_fallthru
    _
  // Predicated region
  $region26: #{beta_distribution_classifier.1} parent=0 // pred_check
    _
  $region27: #{beta_distribution_classifier.1} parent=0 // pred_check_branch
    %45 = sbr.rel (0) target = $region29
  $region28: #{beta_distribution_classifier.1} parent=0 // pred_region
    _
  $region29: #{beta_distribution_classifier.1} parent=0 // pred_fallthru
    _
  // Predicated region
  $region30: #{beta_distribution_classifier.1} parent=0 // pred_check
    _
  $region31: #{beta_distribution_classifier.1} parent=0 // pred_check_branch
    %47 = sbr.rel (0) target = $region33
  $region32: #{beta_distribution_classifier.1} parent=0 // pred_region
    _
  $region33: #{beta_distribution_classifier.1} parent=0 // pred_fallthru
    _
  // Predicated region
  $region34: #{beta_distribution_classifier.1} parent=0 // pred_check
    _
  $region35: #{beta_distribution_classifier.1} parent=0 // pred_check_branch
    %49 = sbr.rel (0) target = $region37
  $region36: #{beta_distribution_classifier.1} parent=0 // pred_region
    _
  $region37: #{beta_distribution_classifier.1} parent=0 // pred_fallthru
    _
  // Predicated region
  $region38: #{beta_distribution_classifier.1} parent=0 // pred_check
    _
  $region39: #{beta_distribution_classifier.1} parent=0 // pred_check_branch
    %51 = sbr.rel (0) target = $region41
  $region40: #{beta_distribution_classifier.1} parent=0 // pred_region
    _
  $region41: #{beta_distribution_classifier.1} parent=0 // pred_fallthru
    _
  // Predicated region
  $region42: #{beta_distribution_classifier.1} parent=0 // pred_check
    _
  $region43: #{beta_distribution_classifier.1} parent=0 // pred_check_branch
    %53 = sbr.rel (0) target = $region45
  $region44: #{beta_distribution_classifier.1} parent=0 // pred_region
    _
  $region45: #{beta_distribution_classifier.1} parent=0 // pred_fallthru
    _
  // Predicated region
  $region46: #{beta_distribution_classifier.1} parent=0 // pred_check
    _
  $region47: #{beta_distribution_classifier.1} parent=0 // pred_check_branch
    %55 = sbr.rel (0) target = $region49
  $region48: #{beta_distribution_classifier.1} parent=0 // pred_region
    _
  $region49: #{beta_distribution_classifier.1} parent=0 // pred_fallthru
    _
  // Predicated region
  $region50: #{beta_distribution_classifier.1} parent=0 // pred_check
    _
  $region51: #{beta_distribution_classifier.1} parent=0 // pred_check_branch
    %57 = sbr.rel (0) target = $region53
  $region52: #{beta_distribution_classifier.1} parent=0 // pred_region
    _
  $region53: #{beta_distribution_classifier.1} parent=0 // pred_fallthru
    _
  // Predicated region
  $region54: #{beta_distribution_classifier.1} parent=0 // pred_check
    _
  $region55: #{beta_distribution_classifier.1} parent=0 // pred_check_branch
    %59 = sbr.rel (0) target = $region57
  $region56: #{beta_distribution_classifier.1} parent=0 // pred_region
    _
  $region57: #{beta_distribution_classifier.1} parent=0 // pred_fallthru
    _
  // Predicated region
  $region58: #{beta_distribution_classifier.1} parent=0 // pred_check
    _
  $region59: #{beta_distribution_classifier.1} parent=0 // pred_check_branch
    %61 = sbr.rel (0) target = $region61
  $region60: #{beta_distribution_classifier.1} parent=0 // pred_region
    _
  $region61: #{beta_distribution_classifier.1} parent=0 // pred_fallthru
    _
  // Predicated region
  $region62: #{beta_distribution_classifier.1} parent=0 // pred_check
    _
  $region63: #{beta_distribution_classifier.1} parent=0 // pred_check_branch
    %63 = sbr.rel (0) target = $region65
  $region64: #{beta_distribution_classifier.1} parent=0 // pred_region
    _
  $region65: #{beta_distribution_classifier.1} parent=0 // pred_fallthru
    _
  // Predicated region
  $region66: #{beta_distribution_classifier.1} parent=0 // pred_check
    _
  $region67: #{beta_distribution_classifier.1} parent=0 // pred_check_branch
    %65 = sbr.rel (0) target = $region69
  $region68: #{beta_distribution_classifier.1} parent=0 // pred_region
    _
  $region69: #{beta_distribution_classifier.1} parent=0 // pred_fallthru
    _
  // Predicated region
  $region70: #{beta_distribution_classifier.1} parent=0 // pred_check
    _
  $region71: #{beta_distribution_classifier.1} parent=0 // pred_check_branch
    %67 = sbr.rel (0) target = $region73
  $region72: #{beta_distribution_classifier.1} parent=0 // pred_region
    _
  $region73: #{beta_distribution_classifier.1} parent=0 // pred_fallthru
    _
  // Predicated region
  $region74: #{beta_distribution_classifier.1} parent=0 // pred_check
    _
  $region75: #{beta_distribution_classifier.1} parent=0 // pred_check_branch
    %69 = sbr.rel (0) target = $region77
  $region76: #{beta_distribution_classifier.1} parent=0 // pred_region
    _
  $region77: #{beta_distribution_classifier.1} parent=0 // pred_fallthru
    _
  // Predicated region
  $region78: #{beta_distribution_classifier.1} parent=0 // pred_check
    _
  $region79: #{beta_distribution_classifier.1} parent=0 // pred_check_branch
    %71 = sbr.rel (0) target = $region81
  $region80: #{beta_distribution_classifier.1} parent=0 // pred_region
    _
  $region81: #{beta_distribution_classifier.1} parent=0 // pred_fallthru
    _
  // Predicated region
  $region82: #{beta_distribution_classifier.1} parent=0 // pred_check
    _
  $region83: #{beta_distribution_classifier.1} parent=0 // pred_check_branch
    %73 = sbr.rel (0) target = $region85
  $region84: #{beta_distribution_classifier.1} parent=0 // pred_region
    _
  $region85: #{beta_distribution_classifier.1} parent=0 // pred_fallthru
    _
  // Predicated region
  $region86: #{beta_distribution_classifier.1} parent=0 // pred_check
    _
  $region87: #{beta_distribution_classifier.1} parent=0 // pred_check_branch
    %75 = sbr.rel (0) target = $region89
  $region88: #{beta_distribution_classifier.1} parent=0 // pred_region
    _
  $region89: #{beta_distribution_classifier.1} parent=0 // pred_fallthru
    _
  // Predicated region
  $region90: #{beta_distribution_classifier.1} parent=0 // pred_check
    _
  $region91: #{beta_distribution_classifier.1} parent=0 // pred_check_branch
    %77 = sbr.rel (0) target = $region93
  $region92: #{beta_distribution_classifier.1} parent=0 // pred_region
    _
  $region93: #{beta_distribution_classifier.1} parent=0 // pred_fallthru
    _
  %v79 = vld [vmem:[%s0] sm:$0xff]
  %v80 = vld [vmem:[%s0 + $0x8] sm:$0xff]
  %v81 = vld [vmem:[%s0 + $0x10] sm:$0xff]
  %v82 = vld [vmem:[%s0 + $0x18] sm:$0xff]
  %v83 = vld [vmem:[%s0 + $0x20] sm:$0xff]
  %v84 = vld [vmem:[%s0 + $0x28] sm:$0xff]
  %v85 = vld [vmem:[%s0 + $0x30] sm:$0xff]
  %v86 = vld [vmem:[%s0 + $0x38] sm:$0xff]
  %v87 = vld [vmem:[%s0 + $0x40] sm:$0xff]
  %v88 = vld [vmem:[%s0 + $0x48] sm:$0xff]
  %v89 = vld [vmem:[%s0 + $0x50] sm:$0xff]
  %v90 = vld [vmem:[%s0 + $0x58] sm:$0xff]
  %v91 = vld [vmem:[%s0 + $0x60] sm:$0xff]
  %v92 = vld [vmem:[%s0 + $0x68] sm:$0xff]
  %v93 = vld [vmem:[%s0 + $0x70] sm:$0xff]
  %v94 = vld [vmem:[%s0 + $0x78] sm:$0xff]
  %v95 = vld [vmem:[%s1] sm:$0xff]
  %v96 = vld [vmem:[%s1 + $0x8] sm:$0xff]
  %v97 = vld [vmem:[%s1 + $0x10] sm:$0xff]
  %v98 = vld [vmem:[%s1 + $0x18] sm:$0xff]
  %v99 = vld [vmem:[%s1 + $0x20] sm:$0xff]
  %v100 = vld [vmem:[%s1 + $0x28] sm:$0xff]
  %v101 = vld [vmem:[%s1 + $0x30] sm:$0xff]
  %v102 = vld [vmem:[%s1 + $0x38] sm:$0xff]
  %v103 = vld [vmem:[%s1 + $0x40] sm:$0xff]
  %v104 = vld [vmem:[%s1 + $0x48] sm:$0xff]
  %v105 = vld [vmem:[%s1 + $0x50] sm:$0xff]
  %v106 = vld [vmem:[%s1 + $0x58] sm:$0xff]
  %v107 = vld [vmem:[%s1 + $0x60] sm:$0xff]
  %v108 = vld [vmem:[%s1 + $0x68] sm:$0xff]
  %v109 = vld [vmem:[%s1 + $0x70] sm:$0xff]
  %v110 = vld [vmem:[%s1 + $0x78] sm:$0xff]
  %v111 = vpack.c.bf16 %v80, %v79
  %v112 = vpack.c.bf16 %v82, %v81
  %v113 = vpack.c.bf16 %v84, %v83
  %v114 = vpack.c.bf16 %v86, %v85
  %v115 = vpack.c.bf16 %v88, %v87
  %v116 = vpack.c.bf16 %v90, %v89
  %v117 = vpack.c.bf16 %v92, %v91
  %v118 = vpack.c.bf16 %v94, %v93
  %v119 = vpack.c.bf16 %v96, %v95
  %v120 = vpack.c.bf16 %v98, %v97
  %v121 = vpack.c.bf16 %v100, %v99
  %v122 = vpack.c.bf16 %v102, %v101
  %v123 = vpack.c.bf16 %v104, %v103
  %v124 = vpack.c.bf16 %v106, %v105
  %v125 = vpack.c.bf16 %v108, %v107
  %v126 = vpack.c.bf16 %v110, %v109
  %v127 = vld [vmem:[%s2] sm:$0xff]
  %v128 = vld [vmem:[%s2 + $0x8] sm:$0xff]
  %v129 = vld [vmem:[%s2 + $0x10] sm:$0xff]
  %v130 = vld [vmem:[%s2 + $0x18] sm:$0xff]
  %vm131 = vcmask 130048
  %v133 = vsel %vm131, %v95, 0
  %v136 = vsel %vm131, %v96, 0
  %v139 = vsel %vm131, %v97, 0
  %v142 = vsel %vm131, %v98, 0
  %v145 = vsel %vm131, %v99, 0
  %v148 = vsel %vm131, %v100, 0
  %v151 = vsel %vm131, %v101, 0
  %v154 = vsel %vm131, %v102, 0
  %v157 = vsel %vm131, %v103, 0
  %v160 = vsel %vm131, %v104, 0
  %v163 = vsel %vm131, %v105, 0
  %v166 = vsel %vm131, %v106, 0
  %v169 = vsel %vm131, %v107, 0
  %v172 = vsel %vm131, %v108, 0
  %v175 = vsel %vm131, %v109, 0
  %v178 = vsel %vm131, %v110, 0
  %180 = vmatpush.msra.mxu0 0.0
  %181 = vmatpush.msra.mxu0 0.0
  %182 = vmatpush.msra.mxu0 0.0
  %183 = vmatpush.msra.mxu0 0.0
  %184 = vmatpush.msra.mxu0 0.0
  %185 = vmatpush.msra.mxu0 0.0
  %186 = vmatpush.msra.mxu0 0.0
  %187 = vmatpush.msra.mxu0 0.0
  %188 = vmatpush.msra.mxu0 0.0
  %189 = vmatpush.msra.mxu0 0.0
  %190 = vmatpush.msra.mxu0 0.0
  %191 = vmatpush.msra.mxu0 0.0
  %192 = vmatpush.msra.mxu0 0.0
  %193 = vmatpush.msra.mxu0 0.0
  %194 = vmatpush.msra.mxu0 %v130
  %195 = vmatpush.msra.mxu0 %v129
  %196 = vmatmul.f32.gmra.mxu0 %v133
  %v197 = vpop.f32.mrf.mxu0
  %v198 = vadd.f32 0.0, %v197
  %199 = vmatmul.f32.gmra.mxu0 %v136
  %v200 = vpop.f32.mrf.mxu0
  %v201 = vadd.f32 0.0, %v200
  %202 = vmatmul.f32.gmra.mxu0 %v139
  %v203 = vpop.f32.mrf.mxu0
  %v204 = vadd.f32 0.0, %v203
  %205 = vmatmul.f32.gmra.mxu0 %v142
  %v206 = vpop.f32.mrf.mxu0
  %v207 = vadd.f32 0.0, %v206
  %208 = vmatmul.f32.gmra.mxu0 %v145
  %v209 = vpop.f32.mrf.mxu0
  %v210 = vadd.f32 0.0, %v209
  %211 = vmatmul.f32.gmra.mxu0 %v148
  %v212 = vpop.f32.mrf.mxu0
  %v213 = vadd.f32 0.0, %v212
  %214 = vmatmul.f32.gmra.mxu0 %v151
  %v215 = vpop.f32.mrf.mxu0
  %v216 = vadd.f32 0.0, %v215
  %217 = vmatmul.f32.gmra.mxu0 %v154
  %v218 = vpop.f32.mrf.mxu0
  %v219 = vadd.f32 0.0, %v218
  %220 = vmatmul.f32.gmra.mxu0 %v157
  %v221 = vpop.f32.mrf.mxu0
  %v222 = vadd.f32 0.0, %v221
  %223 = vmatmul.f32.gmra.mxu0 %v160
  %v224 = vpop.f32.mrf.mxu0
  %v225 = vadd.f32 0.0, %v224
  %226 = vmatmul.f32.gmra.mxu0 %v163
  %v227 = vpop.f32.mrf.mxu0
  %v228 = vadd.f32 0.0, %v227
  %229 = vmatmul.f32.gmra.mxu0 %v166
  %v230 = vpop.f32.mrf.mxu0
  %v231 = vadd.f32 0.0, %v230
  %232 = vmatmul.f32.gmra.mxu0 %v169
  %v233 = vpop.f32.mrf.mxu0
  %v234 = vadd.f32 0.0, %v233
  %235 = vmatmul.f32.gmra.mxu0 %v172
  %v236 = vpop.f32.mrf.mxu0
  %v237 = vadd.f32 0.0, %v236
  %238 = vmatmul.f32.gmra.mxu0 %v175
  %v239 = vpop.f32.mrf.mxu0
  %v240 = vadd.f32 0.0, %v239
  %241 = vmatmul.f32.gmra.mxu0 %v178
  %v242 = vpop.f32.mrf.mxu0
  %v243 = vadd.f32 0.0, %v242
  %244 = vdwg.mxu0
  %v246 = vsel %vm131, %v79, 0
  %v249 = vsel %vm131, %v80, 0
  %v252 = vsel %vm131, %v81, 0
  %v255 = vsel %vm131, %v82, 0
  %v258 = vsel %vm131, %v83, 0
  %v261 = vsel %vm131, %v84, 0
  %v264 = vsel %vm131, %v85, 0
  %v267 = vsel %vm131, %v86, 0
  %v270 = vsel %vm131, %v87, 0
  %v273 = vsel %vm131, %v88, 0
  %v276 = vsel %vm131, %v89, 0
  %v279 = vsel %vm131, %v90, 0
  %v282 = vsel %vm131, %v91, 0
  %v285 = vsel %vm131, %v92, 0
  %v288 = vsel %vm131, %v93, 0
  %v291 = vsel %vm131, %v94, 0
  %293 = vmatpush.msra.mxu0 0.0
  %294 = vmatpush.msra.mxu0 0.0
  %295 = vmatpush.msra.mxu0 0.0
  %296 = vmatpush.msra.mxu0 0.0
  %297 = vmatpush.msra.mxu0 0.0
  %298 = vmatpush.msra.mxu0 0.0
  %299 = vmatpush.msra.mxu0 0.0
  %300 = vmatpush.msra.mxu0 0.0
  %301 = vmatpush.msra.mxu0 0.0
  %302 = vmatpush.msra.mxu0 0.0
  %303 = vmatpush.msra.mxu0 0.0
  %304 = vmatpush.msra.mxu0 0.0
  %305 = vmatpush.msra.mxu0 0.0
  %306 = vmatpush.msra.mxu0 0.0
  %307 = vmatpush.msra.mxu0 %v128
  %308 = vmatpush.msra.mxu0 %v127
  %309 = vmatmul.f32.gmra.mxu0 %v246
  %v310 = vpop.f32.mrf.mxu0
  %v311 = vadd.f32 %v198, %v310
  %312 = vmatmul.f32.gmra.mxu0 %v249
  %v313 = vpop.f32.mrf.mxu0
  %v314 = vadd.f32 %v201, %v313
  %315 = vmatmul.f32.gmra.mxu0 %v252
  %v316 = vpop.f32.mrf.mxu0
  %v317 = vadd.f32 %v204, %v316
  %318 = vmatmul.f32.gmra.mxu0 %v255
  %v319 = vpop.f32.mrf.mxu0
  %v320 = vadd.f32 %v207, %v319
  %321 = vmatmul.f32.gmra.mxu0 %v258
  %v322 = vpop.f32.mrf.mxu0
  %v323 = vadd.f32 %v210, %v322
  %324 = vmatmul.f32.gmra.mxu0 %v261
  %v325 = vpop.f32.mrf.mxu0
  %v326 = vadd.f32 %v213, %v325
  %327 = vmatmul.f32.gmra.mxu0 %v264
  %v328 = vpop.f32.mrf.mxu0
  %v329 = vadd.f32 %v216, %v328
  %330 = vmatmul.f32.gmra.mxu0 %v267
  %v331 = vpop.f32.mrf.mxu0
  %v332 = vadd.f32 %v219, %v331
  %333 = vmatmul.f32.gmra.mxu0 %v270
  %v334 = vpop.f32.mrf.mxu0
  %v335 = vadd.f32 %v222, %v334
  %336 = vmatmul.f32.gmra.mxu0 %v273
  %v337 = vpop.f32.mrf.mxu0
  %v338 = vadd.f32 %v225, %v337
  %339 = vmatmul.f32.gmra.mxu0 %v276
  %v340 = vpop.f32.mrf.mxu0
  %v341 = vadd.f32 %v228, %v340
  %342 = vmatmul.f32.gmra.mxu0 %v279
  %v343 = vpop.f32.mrf.mxu0
  %v344 = vadd.f32 %v231, %v343
  %345 = vmatmul.f32.gmra.mxu0 %v282
  %v346 = vpop.f32.mrf.mxu0
  %v347 = vadd.f32 %v234, %v346
  %348 = vmatmul.f32.gmra.mxu0 %v285
  %v349 = vpop.f32.mrf.mxu0
  %v350 = vadd.f32 %v237, %v349
  %351 = vmatmul.f32.gmra.mxu0 %v288
  %v352 = vpop.f32.mrf.mxu0
  %v353 = vadd.f32 %v240, %v352
  %354 = vmatmul.f32.gmra.mxu0 %v291
  %v355 = vpop.f32.mrf.mxu0
  %v356 = vadd.f32 %v243, %v355
  %357 = vdwg.mxu0
  %v358 = vld [vmem:[%s3] sm:$0x1]
  %v360 = vperm.slane %v358, 0
  %v362 = vadd.f32 %v311, %v360
  %v363 = vadd.f32 %v314, %v360
  %v364 = vadd.f32 %v317, %v360
  %v365 = vadd.f32 %v320, %v360
  %v366 = vadd.f32 %v323, %v360
  %v367 = vadd.f32 %v326, %v360
  %v368 = vadd.f32 %v329, %v360
  %v369 = vadd.f32 %v332, %v360
  %v370 = vadd.f32 %v335, %v360
  %v371 = vadd.f32 %v338, %v360
  %v372 = vadd.f32 %v341, %v360
  %v373 = vadd.f32 %v344, %v360
  %v374 = vadd.f32 %v347, %v360
  %v375 = vadd.f32 %v350, %v360
  %v376 = vadd.f32 %v353, %v360
  %v377 = vadd.f32 %v356, %v360
  %v378 = vxor.u32 %v362, 2147483648
  %v379 = vxor.u32 %v363, 2147483648
  %v380 = vxor.u32 %v364, 2147483648
  %v381 = vxor.u32 %v365, 2147483648
  %v382 = vxor.u32 %v366, 2147483648
  %v383 = vxor.u32 %v367, 2147483648
  %v384 = vxor.u32 %v368, 2147483648
  %v385 = vxor.u32 %v369, 2147483648
  %v386 = vxor.u32 %v370, 2147483648
  %v387 = vxor.u32 %v371, 2147483648
  %v388 = vxor.u32 %v372, 2147483648
  %v389 = vxor.u32 %v373, 2147483648
  %v390 = vxor.u32 %v374, 2147483648
  %v391 = vxor.u32 %v375, 2147483648
  %v392 = vxor.u32 %v376, 2147483648
  %v393 = vxor.u32 %v377, 2147483648
  %v394 = vmul.f32 %v378, 1.442695
  %v395 = vpow.pop %v394
  %v396 = vmul.f32 %v379, 1.442695
  %v397 = vpow.pop %v396
  %v398 = vmul.f32 %v380, 1.442695
  %v399 = vpow.pop %v398
  %v400 = vmul.f32 %v381, 1.442695
  %v401 = vpow.pop %v400
  %v402 = vmul.f32 %v382, 1.442695
  %v403 = vpow.pop %v402
  %v404 = vmul.f32 %v383, 1.442695
  %v405 = vpow.pop %v404
  %v406 = vmul.f32 %v384, 1.442695
  %v407 = vpow.pop %v406
  %v408 = vmul.f32 %v385, 1.442695
  %v409 = vpow.pop %v408
  %v410 = vmul.f32 %v386, 1.442695
  %v411 = vpow.pop %v410
  %v412 = vmul.f32 %v387, 1.442695
  %v413 = vpow.pop %v412
  %v414 = vmul.f32 %v388, 1.442695
  %v415 = vpow.pop %v414
  %v416 = vmul.f32 %v389, 1.442695
  %v417 = vpow.pop %v416
  %v418 = vmul.f32 %v390, 1.442695
  %v419 = vpow.pop %v418
  %v420 = vmul.f32 %v391, 1.442695
  %v421 = vpow.pop %v420
  %v422 = vmul.f32 %v392, 1.442695
  %v423 = vpow.pop %v422
  %v424 = vmul.f32 %v393, 1.442695
  %v425 = vpow.pop %v424
  %v426 = vadd.f32 %v395, 1.0
  %v427 = vadd.f32 %v397, 1.0
  %v428 = vadd.f32 %v399, 1.0
  %v429 = vadd.f32 %v401, 1.0
  %v430 = vadd.f32 %v403, 1.0
  %v431 = vadd.f32 %v405, 1.0
  %v432 = vadd.f32 %v407, 1.0
  %v433 = vadd.f32 %v409, 1.0
  %v434 = vadd.f32 %v411, 1.0
  %v435 = vadd.f32 %v413, 1.0
  %v436 = vadd.f32 %v415, 1.0
  %v437 = vadd.f32 %v417, 1.0
  %v438 = vadd.f32 %v419, 1.0
  %v439 = vadd.f32 %v421, 1.0
  %v440 = vadd.f32 %v423, 1.0
  %v441 = vadd.f32 %v425, 1.0
  %v442 = vrcp.pop %v426
  %v443 = vmul.f32 %v426, %v442
  %v444 = vsub.f32 1.0, %v443
  %v445 = vmul.f32 %v442, %v444
  %v446 = vadd.f32 %v442, %v445
  %vm447 = vweird.f32 %v426
  %vm448 = vweird.f32 %v442
  %vm449 = vmor %vm447, %vm448
  %v450 = vsel %vm449, %v442, %v446
  %v451 = vand.u32 2147483647, %v426
  %vm452 = vcmp.eq.f32.partialorder %v451, 8.507059e+37
  %v453 = vand.u32 %v426, 2147483648
  %v454 = vor.u32 1.1754944e-38, %v453
  %v455 = vsel %vm452, %v454, %v450
  %v456 = vmul.f32 1.0, %v455
  %v457 = vrcp.pop %v427
  %v458 = vmul.f32 %v427, %v457
  %v459 = vsub.f32 1.0, %v458
  %v460 = vmul.f32 %v457, %v459
  %v461 = vadd.f32 %v457, %v460
  %vm462 = vweird.f32 %v427
  %vm463 = vweird.f32 %v457
  %vm464 = vmor %vm462, %vm463
  %v465 = vsel %vm464, %v457, %v461
  %v466 = vand.u32 2147483647, %v427
  %vm467 = vcmp.eq.f32.partialorder %v466, 8.507059e+37
  %v468 = vand.u32 %v427, 2147483648
  %v469 = vor.u32 1.1754944e-38, %v468
  %v470 = vsel %vm467, %v469, %v465
  %v471 = vmul.f32 1.0, %v470
  %v472 = vrcp.pop %v428
  %v473 = vmul.f32 %v428, %v472
  %v474 = vsub.f32 1.0, %v473
  %v475 = vmul.f32 %v472, %v474
  %v476 = vadd.f32 %v472, %v475
  %vm477 = vweird.f32 %v428
  %vm478 = vweird.f32 %v472
  %vm479 = vmor %vm477, %vm478
  %v480 = vsel %vm479, %v472, %v476
  %v481 = vand.u32 2147483647, %v428
  %vm482 = vcmp.eq.f32.partialorder %v481, 8.507059e+37
  %v483 = vand.u32 %v428, 2147483648
  %v484 = vor.u32 1.1754944e-38, %v483
  %v485 = vsel %vm482, %v484, %v480
  %v486 = vmul.f32 1.0, %v485
  %v487 = vrcp.pop %v429
  %v488 = vmul.f32 %v429, %v487
  %v489 = vsub.f32 1.0, %v488
  %v490 = vmul.f32 %v487, %v489
  %v491 = vadd.f32 %v487, %v490
  %vm492 = vweird.f32 %v429
  %vm493 = vweird.f32 %v487
  %vm494 = vmor %vm492, %vm493
  %v495 = vsel %vm494, %v487, %v491
  %v496 = vand.u32 2147483647, %v429
  %vm497 = vcmp.eq.f32.partialorder %v496, 8.507059e+37
  %v498 = vand.u32 %v429, 2147483648
  %v499 = vor.u32 1.1754944e-38, %v498
  %v500 = vsel %vm497, %v499, %v495
  %v501 = vmul.f32 1.0, %v500
  %v502 = vrcp.pop %v430
  %v503 = vmul.f32 %v430, %v502
  %v504 = vsub.f32 1.0, %v503
  %v505 = vmul.f32 %v502, %v504
  %v506 = vadd.f32 %v502, %v505
  %vm507 = vweird.f32 %v430
  %vm508 = vweird.f32 %v502
  %vm509 = vmor %vm507, %vm508
  %v510 = vsel %vm509, %v502, %v506
  %v511 = vand.u32 2147483647, %v430
  %vm512 = vcmp.eq.f32.partialorder %v511, 8.507059e+37
  %v513 = vand.u32 %v430, 2147483648
  %v514 = vor.u32 1.1754944e-38, %v513
  %v515 = vsel %vm512, %v514, %v510
  %v516 = vmul.f32 1.0, %v515
  %v517 = vrcp.pop %v431
  %v518 = vmul.f32 %v431, %v517
  %v519 = vsub.f32 1.0, %v518
  %v520 = vmul.f32 %v517, %v519
  %v521 = vadd.f32 %v517, %v520
  %vm522 = vweird.f32 %v431
  %vm523 = vweird.f32 %v517
  %vm524 = vmor %vm522, %vm523
  %v525 = vsel %vm524, %v517, %v521
  %v526 = vand.u32 2147483647, %v431
  %vm527 = vcmp.eq.f32.partialorder %v526, 8.507059e+37
  %v528 = vand.u32 %v431, 2147483648
  %v529 = vor.u32 1.1754944e-38, %v528
  %v530 = vsel %vm527, %v529, %v525
  %v531 = vmul.f32 1.0, %v530
  %v532 = vrcp.pop %v432
  %v533 = vmul.f32 %v432, %v532
  %v534 = vsub.f32 1.0, %v533
  %v535 = vmul.f32 %v532, %v534
  %v536 = vadd.f32 %v532, %v535
  %vm537 = vweird.f32 %v432
  %vm538 = vweird.f32 %v532
  %vm539 = vmor %vm537, %vm538
  %v540 = vsel %vm539, %v532, %v536
  %v541 = vand.u32 2147483647, %v432
  %vm542 = vcmp.eq.f32.partialorder %v541, 8.507059e+37
  %v543 = vand.u32 %v432, 2147483648
  %v544 = vor.u32 1.1754944e-38, %v543
  %v545 = vsel %vm542, %v544, %v540
  %v546 = vmul.f32 1.0, %v545
  %v547 = vrcp.pop %v433
  %v548 = vmul.f32 %v433, %v547
  %v549 = vsub.f32 1.0, %v548
  %v550 = vmul.f32 %v547, %v549
  %v551 = vadd.f32 %v547, %v550
  %vm552 = vweird.f32 %v433
  %vm553 = vweird.f32 %v547
  %vm554 = vmor %vm552, %vm553
  %v555 = vsel %vm554, %v547, %v551
  %v556 = vand.u32 2147483647, %v433
  %vm557 = vcmp.eq.f32.partialorder %v556, 8.507059e+37
  %v558 = vand.u32 %v433, 2147483648
  %v559 = vor.u32 1.1754944e-38, %v558
  %v560 = vsel %vm557, %v559, %v555
  %v561 = vmul.f32 1.0, %v560
  %v562 = vrcp.pop %v434
  %v563 = vmul.f32 %v434, %v562
  %v564 = vsub.f32 1.0, %v563
  %v565 = vmul.f32 %v562, %v564
  %v566 = vadd.f32 %v562, %v565
  %vm567 = vweird.f32 %v434
  %vm568 = vweird.f32 %v562
  %vm569 = vmor %vm567, %vm568
  %v570 = vsel %vm569, %v562, %v566
  %v571 = vand.u32 2147483647, %v434
  %vm572 = vcmp.eq.f32.partialorder %v571, 8.507059e+37
  %v573 = vand.u32 %v434, 2147483648
  %v574 = vor.u32 1.1754944e-38, %v573
  %v575 = vsel %vm572, %v574, %v570
  %v576 = vmul.f32 1.0, %v575
  %v577 = vrcp.pop %v435
  %v578 = vmul.f32 %v435, %v577
  %v579 = vsub.f32 1.0, %v578
  %v580 = vmul.f32 %v577, %v579
  %v581 = vadd.f32 %v577, %v580
  %vm582 = vweird.f32 %v435
  %vm583 = vweird.f32 %v577
  %vm584 = vmor %vm582, %vm583
  %v585 = vsel %vm584, %v577, %v581
  %v586 = vand.u32 2147483647, %v435
  %vm587 = vcmp.eq.f32.partialorder %v586, 8.507059e+37
  %v588 = vand.u32 %v435, 2147483648
  %v589 = vor.u32 1.1754944e-38, %v588
  %v590 = vsel %vm587, %v589, %v585
  %v591 = vmul.f32 1.0, %v590
  %v592 = vrcp.pop %v436
  %v593 = vmul.f32 %v436, %v592
  %v594 = vsub.f32 1.0, %v593
  %v595 = vmul.f32 %v592, %v594
  %v596 = vadd.f32 %v592, %v595
  %vm597 = vweird.f32 %v436
  %vm598 = vweird.f32 %v592
  %vm599 = vmor %vm597, %vm598
  %v600 = vsel %vm599, %v592, %v596
  %v601 = vand.u32 2147483647, %v436
  %vm602 = vcmp.eq.f32.partialorder %v601, 8.507059e+37
  %v603 = vand.u32 %v436, 2147483648
  %v604 = vor.u32 1.1754944e-38, %v603
  %v605 = vsel %vm602, %v604, %v600
  %v606 = vmul.f32 1.0, %v605
  %v607 = vrcp.pop %v437
  %v608 = vmul.f32 %v437, %v607
  %v609 = vsub.f32 1.0, %v608
  %v610 = vmul.f32 %v607, %v609
  %v611 = vadd.f32 %v607, %v610
  %vm612 = vweird.f32 %v437
  %vm613 = vweird.f32 %v607
  %vm614 = vmor %vm612, %vm613
  %v615 = vsel %vm614, %v607, %v611
  %v616 = vand.u32 2147483647, %v437
  %vm617 = vcmp.eq.f32.partialorder %v616, 8.507059e+37
  %v618 = vand.u32 %v437, 2147483648
  %v619 = vor.u32 1.1754944e-38, %v618
  %v620 = vsel %vm617, %v619, %v615
  %v621 = vmul.f32 1.0, %v620
  %v622 = vrcp.pop %v438
  %v623 = vmul.f32 %v438, %v622
  %v624 = vsub.f32 1.0, %v623
  %v625 = vmul.f32 %v622, %v624
  %v626 = vadd.f32 %v622, %v625
  %vm627 = vweird.f32 %v438
  %vm628 = vweird.f32 %v622
  %vm629 = vmor %vm627, %vm628
  %v630 = vsel %vm629, %v622, %v626
  %v631 = vand.u32 2147483647, %v438
  %vm632 = vcmp.eq.f32.partialorder %v631, 8.507059e+37
  %v633 = vand.u32 %v438, 2147483648
  %v634 = vor.u32 1.1754944e-38, %v633
  %v635 = vsel %vm632, %v634, %v630
  %v636 = vmul.f32 1.0, %v635
  %v637 = vrcp.pop %v439
  %v638 = vmul.f32 %v439, %v637
  %v639 = vsub.f32 1.0, %v638
  %v640 = vmul.f32 %v637, %v639
  %v641 = vadd.f32 %v637, %v640
  %vm642 = vweird.f32 %v439
  %vm643 = vweird.f32 %v637
  %vm644 = vmor %vm642, %vm643
  %v645 = vsel %vm644, %v637, %v641
  %v646 = vand.u32 2147483647, %v439
  %vm647 = vcmp.eq.f32.partialorder %v646, 8.507059e+37
  %v648 = vand.u32 %v439, 2147483648
  %v649 = vor.u32 1.1754944e-38, %v648
  %v650 = vsel %vm647, %v649, %v645
  %v651 = vmul.f32 1.0, %v650
  %v652 = vrcp.pop %v440
  %v653 = vmul.f32 %v440, %v652
  %v654 = vsub.f32 1.0, %v653
  %v655 = vmul.f32 %v652, %v654
  %v656 = vadd.f32 %v652, %v655
  %vm657 = vweird.f32 %v440
  %vm658 = vweird.f32 %v652
  %vm659 = vmor %vm657, %vm658
  %v660 = vsel %vm659, %v652, %v656
  %v661 = vand.u32 2147483647, %v440
  %vm662 = vcmp.eq.f32.partialorder %v661, 8.507059e+37
  %v663 = vand.u32 %v440, 2147483648
  %v664 = vor.u32 1.1754944e-38, %v663
  %v665 = vsel %vm662, %v664, %v660
  %v666 = vmul.f32 1.0, %v665
  %v667 = vrcp.pop %v441
  %v668 = vmul.f32 %v441, %v667
  %v669 = vsub.f32 1.0, %v668
  %v670 = vmul.f32 %v667, %v669
  %v671 = vadd.f32 %v667, %v670
  %vm672 = vweird.f32 %v441
  %vm673 = vweird.f32 %v667
  %vm674 = vmor %vm672, %vm673
  %v675 = vsel %vm674, %v667, %v671
  %v676 = vand.u32 2147483647, %v441
  %vm677 = vcmp.eq.f32.partialorder %v676, 8.507059e+37
  %v678 = vand.u32 %v441, 2147483648
  %v679 = vor.u32 1.1754944e-38, %v678
  %v680 = vsel %vm677, %v679, %v675
  %v681 = vmul.f32 1.0, %v680
  %v682 = vmul.f32 %v362, %v456
  %v683 = vmul.f32 %v363, %v471
  %v684 = vmul.f32 %v364, %v486
  %v685 = vmul.f32 %v365, %v501
  %v686 = vmul.f32 %v366, %v516
  %v687 = vmul.f32 %v367, %v531
  %v688 = vmul.f32 %v368, %v546
  %v689 = vmul.f32 %v369, %v561
  %v690 = vmul.f32 %v370, %v576
  %v691 = vmul.f32 %v371, %v591
  %v692 = vmul.f32 %v372, %v606
  %v693 = vmul.f32 %v373, %v621
  %v694 = vmul.f32 %v374, %v636
  %v695 = vmul.f32 %v375, %v651
  %v696 = vmul.f32 %v376, %v666
  %v697 = vmul.f32 %v377, %v681
  %v698 = vld [vmem:[%s4] sm:$0xff]
  %v699 = vld [vmem:[%s4 + $0x8] sm:$0xff]
  %v700 = vld [vmem:[%s5] sm:$0x1]
  %v702 = vperm.slane %v700, 0
  %v705 = vsel %vm131, %v682, 0
  %v708 = vsel %vm131, %v683, 0
  %v711 = vsel %vm131, %v684, 0
  %v714 = vsel %vm131, %v685, 0
  %v717 = vsel %vm131, %v686, 0
  %v720 = vsel %vm131, %v687, 0
  %v723 = vsel %vm131, %v688, 0
  %v726 = vsel %vm131, %v689, 0
  %v729 = vsel %vm131, %v690, 0
  %v732 = vsel %vm131, %v691, 0
  %v735 = vsel %vm131, %v692, 0
  %v738 = vsel %vm131, %v693, 0
  %v741 = vsel %vm131, %v694, 0
  %v744 = vsel %vm131, %v695, 0
  %v747 = vsel %vm131, %v696, 0
  %v750 = vsel %vm131, %v697, 0
  %752 = vmatpush.msra.mxu0 0.0
  %753 = vmatpush.msra.mxu0 0.0
  %754 = vmatpush.msra.mxu0 0.0
  %755 = vmatpush.msra.mxu0 0.0
  %756 = vmatpush.msra.mxu0 0.0
  %757 = vmatpush.msra.mxu0 0.0
  %758 = vmatpush.msra.mxu0 0.0
  %759 = vmatpush.msra.mxu0 0.0
  %760 = vmatpush.msra.mxu0 0.0
  %761 = vmatpush.msra.mxu0 0.0
  %762 = vmatpush.msra.mxu0 0.0
  %763 = vmatpush.msra.mxu0 0.0
  %764 = vmatpush.msra.mxu0 0.0
  %765 = vmatpush.msra.mxu0 0.0
  %766 = vmatpush.msra.mxu0 %v699
  %767 = vmatpush.msra.mxu0 %v698
  %768 = vmatmul.f32.gmra.mxu0 %v705
  %v769 = vpop.f32.mrf.mxu0
  %v770 = vadd.f32 %v702, %v769
  %771 = vmatmul.f32.gmra.mxu0 %v708
  %v772 = vpop.f32.mrf.mxu0
  %v773 = vadd.f32 %v702, %v772
  %774 = vmatmul.f32.gmra.mxu0 %v711
  %v775 = vpop.f32.mrf.mxu0
  %v776 = vadd.f32 %v702, %v775
  %777 = vmatmul.f32.gmra.mxu0 %v714
  %v778 = vpop.f32.mrf.mxu0
  %v779 = vadd.f32 %v702, %v778
  %780 = vmatmul.f32.gmra.mxu0 %v717
  %v781 = vpop.f32.mrf.mxu0
  %v782 = vadd.f32 %v702, %v781
  %783 = vmatmul.f32.gmra.mxu0 %v720
  %v784 = vpop.f32.mrf.mxu0
  %v785 = vadd.f32 %v702, %v784
  %786 = vmatmul.f32.gmra.mxu0 %v723
  %v787 = vpop.f32.mrf.mxu0
  %v788 = vadd.f32 %v702, %v787
  %789 = vmatmul.f32.gmra.mxu0 %v726
  %v790 = vpop.f32.mrf.mxu0
  %v791 = vadd.f32 %v702, %v790
  %792 = vmatmul.f32.gmra.mxu0 %v729
  %v793 = vpop.f32.mrf.mxu0
  %v794 = vadd.f32 %v702, %v793
  %795 = vmatmul.f32.gmra.mxu0 %v732
  %v796 = vpop.f32.mrf.mxu0
  %v797 = vadd.f32 %v702, %v796
  %798 = vmatmul.f32.gmra.mxu0 %v735
  %v799 = vpop.f32.mrf.mxu0
  %v800 = vadd.f32 %v702, %v799
  %801 = vmatmul.f32.gmra.mxu0 %v738
  %v802 = vpop.f32.mrf.mxu0
  %v803 = vadd.f32 %v702, %v802
  %804 = vmatmul.f32.gmra.mxu0 %v741
  %v805 = vpop.f32.mrf.mxu0
  %v806 = vadd.f32 %v702, %v805
  %807 = vmatmul.f32.gmra.mxu0 %v744
  %v808 = vpop.f32.mrf.mxu0
  %v809 = vadd.f32 %v702, %v808
  %810 = vmatmul.f32.gmra.mxu0 %v747
  %v811 = vpop.f32.mrf.mxu0
  %v812 = vadd.f32 %v702, %v811
  %813 = vmatmul.f32.gmra.mxu0 %v750
  %v814 = vpop.f32.mrf.mxu0
  %v815 = vadd.f32 %v702, %v814
  %816 = vdwg.mxu0
  %v817 = vld [vmem:[%s6] sm:$0xff]
  %v818 = vld [vmem:[%s6 + $0x8] sm:$0xff]
  %v819 = vld [vmem:[%s6 + $0x10] sm:$0xff]
  %v820 = vld [vmem:[%s6 + $0x18] sm:$0xff]
  %821 = vmatpush.msra.mxu0 0.0
  %822 = vmatpush.msra.mxu0 0.0
  %823 = vmatpush.msra.mxu0 0.0
  %824 = vmatpush.msra.mxu0 0.0
  %825 = vmatpush.msra.mxu0 0.0
  %826 = vmatpush.msra.mxu0 0.0
  %827 = vmatpush.msra.mxu0 0.0
  %828 = vmatpush.msra.mxu0 0.0
  %829 = vmatpush.msra.mxu0 0.0
  %830 = vmatpush.msra.mxu0 0.0
  %831 = vmatpush.msra.mxu0 0.0
  %832 = vmatpush.msra.mxu0 0.0
  %833 = vmatpush.msra.mxu0 0.0
  %834 = vmatpush.msra.mxu0 0.0
  %835 = vmatpush.msra.mxu0 %v820
  %836 = vmatpush.msra.mxu0 %v819
  %837 = vmatmul.f32.gmra.mxu0 %v133
  %v838 = vpop.f32.mrf.mxu0
  %v839 = vadd.f32 0.0, %v838
  %840 = vmatmul.f32.gmra.mxu0 %v136
  %v841 = vpop.f32.mrf.mxu0
  %v842 = vadd.f32 0.0, %v841
  %843 = vmatmul.f32.gmra.mxu0 %v139
  %v844 = vpop.f32.mrf.mxu0
  %v845 = vadd.f32 0.0, %v844
  %846 = vmatmul.f32.gmra.mxu0 %v142
  %v847 = vpop.f32.mrf.mxu0
  %v848 = vadd.f32 0.0, %v847
  %849 = vmatmul.f32.gmra.mxu0 %v145
  %v850 = vpop.f32.mrf.mxu0
  %v851 = vadd.f32 0.0, %v850
  %852 = vmatmul.f32.gmra.mxu0 %v148
  %v853 = vpop.f32.mrf.mxu0
  %v854 = vadd.f32 0.0, %v853
  %855 = vmatmul.f32.gmra.mxu0 %v151
  %v856 = vpop.f32.mrf.mxu0
  %v857 = vadd.f32 0.0, %v856
  %858 = vmatmul.f32.gmra.mxu0 %v154
  %v859 = vpop.f32.mrf.mxu0
  %v860 = vadd.f32 0.0, %v859
  %861 = vmatmul.f32.gmra.mxu0 %v157
  %v862 = vpop.f32.mrf.mxu0
  %v863 = vadd.f32 0.0, %v862
  %864 = vmatmul.f32.gmra.mxu0 %v160
  %v865 = vpop.f32.mrf.mxu0
  %v866 = vadd.f32 0.0, %v865
  %867 = vmatmul.f32.gmra.mxu0 %v163
  %v868 = vpop.f32.mrf.mxu0
  %v869 = vadd.f32 0.0, %v868
  %870 = vmatmul.f32.gmra.mxu0 %v166
  %v871 = vpop.f32.mrf.mxu0
  %v872 = vadd.f32 0.0, %v871
  %873 = vmatmul.f32.gmra.mxu0 %v169
  %v874 = vpop.f32.mrf.mxu0
  %v875 = vadd.f32 0.0, %v874
  %876 = vmatmul.f32.gmra.mxu0 %v172
  %v877 = vpop.f32.mrf.mxu0
  %v878 = vadd.f32 0.0, %v877
  %879 = vmatmul.f32.gmra.mxu0 %v175
  %v880 = vpop.f32.mrf.mxu0
  %v881 = vadd.f32 0.0, %v880
  %882 = vmatmul.f32.gmra.mxu0 %v178
  %v883 = vpop.f32.mrf.mxu0
  %v884 = vadd.f32 0.0, %v883
  %885 = vdwg.mxu0
  %886 = vmatpush.msra.mxu0 0.0
  %887 = vmatpush.msra.mxu0 0.0
  %888 = vmatpush.msra.mxu0 0.0
  %889 = vmatpush.msra.mxu0 0.0
  %890 = vmatpush.msra.mxu0 0.0
  %891 = vmatpush.msra.mxu0 0.0
  %892 = vmatpush.msra.mxu0 0.0
  %893 = vmatpush.msra.mxu0 0.0
  %894 = vmatpush.msra.mxu0 0.0
  %895 = vmatpush.msra.mxu0 0.0
  %896 = vmatpush.msra.mxu0 0.0
  %897 = vmatpush.msra.mxu0 0.0
  %898 = vmatpush.msra.mxu0 0.0
  %899 = vmatpush.msra.mxu0 0.0
  %900 = vmatpush.msra.mxu0 %v818
  %901 = vmatpush.msra.mxu0 %v817
  %902 = vmatmul.f32.gmra.mxu0 %v246
  %v903 = vpop.f32.mrf.mxu0
  %v904 = vadd.f32 %v839, %v903
  %905 = vmatmul.f32.gmra.mxu0 %v249
  %v906 = vpop.f32.mrf.mxu0
  %v907 = vadd.f32 %v842, %v906
  %908 = vmatmul.f32.gmra.mxu0 %v252
  %v909 = vpop.f32.mrf.mxu0
  %v910 = vadd.f32 %v845, %v909
  %911 = vmatmul.f32.gmra.mxu0 %v255
  %v912 = vpop.f32.mrf.mxu0
  %v913 = vadd.f32 %v848, %v912
  %914 = vmatmul.f32.gmra.mxu0 %v258
  %v915 = vpop.f32.mrf.mxu0
  %v916 = vadd.f32 %v851, %v915
  %917 = vmatmul.f32.gmra.mxu0 %v261
  %v918 = vpop.f32.mrf.mxu0
  %v919 = vadd.f32 %v854, %v918
  %920 = vmatmul.f32.gmra.mxu0 %v264
  %v921 = vpop.f32.mrf.mxu0
  %v922 = vadd.f32 %v857, %v921
  %923 = vmatmul.f32.gmra.mxu0 %v267
  %v924 = vpop.f32.mrf.mxu0
  %v925 = vadd.f32 %v860, %v924
  %926 = vmatmul.f32.gmra.mxu0 %v270
  %v927 = vpop.f32.mrf.mxu0
  %v928 = vadd.f32 %v863, %v927
  %929 = vmatmul.f32.gmra.mxu0 %v273
  %v930 = vpop.f32.mrf.mxu0
  %v931 = vadd.f32 %v866, %v930
  %932 = vmatmul.f32.gmra.mxu0 %v276
  %v933 = vpop.f32.mrf.mxu0
  %v934 = vadd.f32 %v869, %v933
  %935 = vmatmul.f32.gmra.mxu0 %v279
  %v936 = vpop.f32.mrf.mxu0
  %v937 = vadd.f32 %v872, %v936
  %938 = vmatmul.f32.gmra.mxu0 %v282
  %v939 = vpop.f32.mrf.mxu0
  %v940 = vadd.f32 %v875, %v939
  %941 = vmatmul.f32.gmra.mxu0 %v285
  %v942 = vpop.f32.mrf.mxu0
  %v943 = vadd.f32 %v878, %v942
  %944 = vmatmul.f32.gmra.mxu0 %v288
  %v945 = vpop.f32.mrf.mxu0
  %v946 = vadd.f32 %v881, %v945
  %947 = vmatmul.f32.gmra.mxu0 %v291
  %v948 = vpop.f32.mrf.mxu0
  %v949 = vadd.f32 %v884, %v948
  %950 = vdwg.mxu0
  %v951 = vld [vmem:[%s7] sm:$0x1]
  %v953 = vperm.slane %v951, 0
  %v955 = vadd.f32 %v904, %v953
  %v956 = vadd.f32 %v907, %v953
  %v957 = vadd.f32 %v910, %v953
  %v958 = vadd.f32 %v913, %v953
  %v959 = vadd.f32 %v916, %v953
  %v960 = vadd.f32 %v919, %v953
  %v961 = vadd.f32 %v922, %v953
  %v962 = vadd.f32 %v925, %v953
  %v963 = vadd.f32 %v928, %v953
  %v964 = vadd.f32 %v931, %v953
  %v965 = vadd.f32 %v934, %v953
  %v966 = vadd.f32 %v937, %v953
  %v967 = vadd.f32 %v940, %v953
  %v968 = vadd.f32 %v943, %v953
  %v969 = vadd.f32 %v946, %v953
  %v970 = vadd.f32 %v949, %v953
  %v971 = vxor.u32 %v955, 2147483648
  %v972 = vxor.u32 %v956, 2147483648
  %v973 = vxor.u32 %v957, 2147483648
  %v974 = vxor.u32 %v958, 2147483648
  %v975 = vxor.u32 %v959, 2147483648
  %v976 = vxor.u32 %v960, 2147483648
  %v977 = vxor.u32 %v961, 2147483648
  %v978 = vxor.u32 %v962, 2147483648
  %v979 = vxor.u32 %v963, 2147483648
  %v980 = vxor.u32 %v964, 2147483648
  %v981 = vxor.u32 %v965, 2147483648
  %v982 = vxor.u32 %v966, 2147483648
  %v983 = vxor.u32 %v967, 2147483648
  %v984 = vxor.u32 %v968, 2147483648
  %v985 = vxor.u32 %v969, 2147483648
  %v986 = vxor.u32 %v970, 2147483648
  %v987 = vmul.f32 %v971, 1.442695
  %v988 = vpow.pop %v987
  %v989 = vmul.f32 %v972, 1.442695
  %v990 = vpow.pop %v989
  %v991 = vmul.f32 %v973, 1.442695
  %v992 = vpow.pop %v991
  %v993 = vmul.f32 %v974, 1.442695
  %v994 = vpow.pop %v993
  %v995 = vmul.f32 %v975, 1.442695
  %v996 = vpow.pop %v995
  %v997 = vmul.f32 %v976, 1.442695
  %v998 = vpow.pop %v997
  %v999 = vmul.f32 %v977, 1.442695
  %v1000 = vpow.pop %v999
  %v1001 = vmul.f32 %v978, 1.442695
  %v1002 = vpow.pop %v1001
  %v1003 = vmul.f32 %v979, 1.442695
  %v1004 = vpow.pop %v1003
  %v1005 = vmul.f32 %v980, 1.442695
  %v1006 = vpow.pop %v1005
  %v1007 = vmul.f32 %v981, 1.442695
  %v1008 = vpow.pop %v1007
  %v1009 = vmul.f32 %v982, 1.442695
  %v1010 = vpow.pop %v1009
  %v1011 = vmul.f32 %v983, 1.442695
  %v1012 = vpow.pop %v1011
  %v1013 = vmul.f32 %v984, 1.442695
  %v1014 = vpow.pop %v1013
  %v1015 = vmul.f32 %v985, 1.442695
  %v1016 = vpow.pop %v1015
  %v1017 = vmul.f32 %v986, 1.442695
  %v1018 = vpow.pop %v1017
  %v1019 = vadd.f32 %v988, 1.0
  %v1020 = vadd.f32 %v990, 1.0
  %v1021 = vadd.f32 %v992, 1.0
  %v1022 = vadd.f32 %v994, 1.0
  %v1023 = vadd.f32 %v996, 1.0
  %v1024 = vadd.f32 %v998, 1.0
  %v1025 = vadd.f32 %v1000, 1.0
  %v1026 = vadd.f32 %v1002, 1.0
  %v1027 = vadd.f32 %v1004, 1.0
  %v1028 = vadd.f32 %v1006, 1.0
  %v1029 = vadd.f32 %v1008, 1.0
  %v1030 = vadd.f32 %v1010, 1.0
  %v1031 = vadd.f32 %v1012, 1.0
  %v1032 = vadd.f32 %v1014, 1.0
  %v1033 = vadd.f32 %v1016, 1.0
  %v1034 = vadd.f32 %v1018, 1.0
  %v1035 = vrcp.pop %v1019
  %v1036 = vmul.f32 %v1019, %v1035
  %v1037 = vsub.f32 1.0, %v1036
  %v1038 = vmul.f32 %v1035, %v1037
  %v1039 = vadd.f32 %v1035, %v1038
  %vm1040 = vweird.f32 %v1019
  %vm1041 = vweird.f32 %v1035
  %vm1042 = vmor %vm1040, %vm1041
  %v1043 = vsel %vm1042, %v1035, %v1039
  %v1044 = vand.u32 2147483647, %v1019
  %vm1045 = vcmp.eq.f32.partialorder %v1044, 8.507059e+37
  %v1046 = vand.u32 %v1019, 2147483648
  %v1047 = vor.u32 1.1754944e-38, %v1046
  %v1048 = vsel %vm1045, %v1047, %v1043
  %v1049 = vmul.f32 1.0, %v1048
  %v1050 = vrcp.pop %v1020
  %v1051 = vmul.f32 %v1020, %v1050
  %v1052 = vsub.f32 1.0, %v1051
  %v1053 = vmul.f32 %v1050, %v1052
  %v1054 = vadd.f32 %v1050, %v1053
  %vm1055 = vweird.f32 %v1020
  %vm1056 = vweird.f32 %v1050
  %vm1057 = vmor %vm1055, %vm1056
  %v1058 = vsel %vm1057, %v1050, %v1054
  %v1059 = vand.u32 2147483647, %v1020
  %vm1060 = vcmp.eq.f32.partialorder %v1059, 8.507059e+37
  %v1061 = vand.u32 %v1020, 2147483648
  %v1062 = vor.u32 1.1754944e-38, %v1061
  %v1063 = vsel %vm1060, %v1062, %v1058
  %v1064 = vmul.f32 1.0, %v1063
  %v1065 = vrcp.pop %v1021
  %v1066 = vmul.f32 %v1021, %v1065
  %v1067 = vsub.f32 1.0, %v1066
  %v1068 = vmul.f32 %v1065, %v1067
  %v1069 = vadd.f32 %v1065, %v1068
  %vm1070 = vweird.f32 %v1021
  %vm1071 = vweird.f32 %v1065
  %vm1072 = vmor %vm1070, %vm1071
  %v1073 = vsel %vm1072, %v1065, %v1069
  %v1074 = vand.u32 2147483647, %v1021
  %vm1075 = vcmp.eq.f32.partialorder %v1074, 8.507059e+37
  %v1076 = vand.u32 %v1021, 2147483648
  %v1077 = vor.u32 1.1754944e-38, %v1076
  %v1078 = vsel %vm1075, %v1077, %v1073
  %v1079 = vmul.f32 1.0, %v1078
  %v1080 = vrcp.pop %v1022
  %v1081 = vmul.f32 %v1022, %v1080
  %v1082 = vsub.f32 1.0, %v1081
  %v1083 = vmul.f32 %v1080, %v1082
  %v1084 = vadd.f32 %v1080, %v1083
  %vm1085 = vweird.f32 %v1022
  %vm1086 = vweird.f32 %v1080
  %vm1087 = vmor %vm1085, %vm1086
  %v1088 = vsel %vm1087, %v1080, %v1084
  %v1089 = vand.u32 2147483647, %v1022
  %vm1090 = vcmp.eq.f32.partialorder %v1089, 8.507059e+37
  %v1091 = vand.u32 %v1022, 2147483648
  %v1092 = vor.u32 1.1754944e-38, %v1091
  %v1093 = vsel %vm1090, %v1092, %v1088
  %v1094 = vmul.f32 1.0, %v1093
  %v1095 = vrcp.pop %v1023
  %v1096 = vmul.f32 %v1023, %v1095
  %v1097 = vsub.f32 1.0, %v1096
  %v1098 = vmul.f32 %v1095, %v1097
  %v1099 = vadd.f32 %v1095, %v1098
  %vm1100 = vweird.f32 %v1023
  %vm1101 = vweird.f32 %v1095
  %vm1102 = vmor %vm1100, %vm1101
  %v1103 = vsel %vm1102, %v1095, %v1099
  %v1104 = vand.u32 2147483647, %v1023
  %vm1105 = vcmp.eq.f32.partialorder %v1104, 8.507059e+37
  %v1106 = vand.u32 %v1023, 2147483648
  %v1107 = vor.u32 1.1754944e-38, %v1106
  %v1108 = vsel %vm1105, %v1107, %v1103
  %v1109 = vmul.f32 1.0, %v1108
  %v1110 = vrcp.pop %v1024
  %v1111 = vmul.f32 %v1024, %v1110
  %v1112 = vsub.f32 1.0, %v1111
  %v1113 = vmul.f32 %v1110, %v1112
  %v1114 = vadd.f32 %v1110, %v1113
  %vm1115 = vweird.f32 %v1024
  %vm1116 = vweird.f32 %v1110
  %vm1117 = vmor %vm1115, %vm1116
  %v1118 = vsel %vm1117, %v1110, %v1114
  %v1119 = vand.u32 2147483647, %v1024
  %vm1120 = vcmp.eq.f32.partialorder %v1119, 8.507059e+37
  %v1121 = vand.u32 %v1024, 2147483648
  %v1122 = vor.u32 1.1754944e-38, %v1121
  %v1123 = vsel %vm1120, %v1122, %v1118
  %v1124 = vmul.f32 1.0, %v1123
  %v1125 = vrcp.pop %v1025
  %v1126 = vmul.f32 %v1025, %v1125
  %v1127 = vsub.f32 1.0, %v1126
  %v1128 = vmul.f32 %v1125, %v1127
  %v1129 = vadd.f32 %v1125, %v1128
  %vm1130 = vweird.f32 %v1025
  %vm1131 = vweird.f32 %v1125
  %vm1132 = vmor %vm1130, %vm1131
  %v1133 = vsel %vm1132, %v1125, %v1129
  %v1134 = vand.u32 2147483647, %v1025
  %vm1135 = vcmp.eq.f32.partialorder %v1134, 8.507059e+37
  %v1136 = vand.u32 %v1025, 2147483648
  %v1137 = vor.u32 1.1754944e-38, %v1136
  %v1138 = vsel %vm1135, %v1137, %v1133
  %v1139 = vmul.f32 1.0, %v1138
  %v1140 = vrcp.pop %v1026
  %v1141 = vmul.f32 %v1026, %v1140
  %v1142 = vsub.f32 1.0, %v1141
  %v1143 = vmul.f32 %v1140, %v1142
  %v1144 = vadd.f32 %v1140, %v1143
  %vm1145 = vweird.f32 %v1026
  %vm1146 = vweird.f32 %v1140
  %vm1147 = vmor %vm1145, %vm1146
  %v1148 = vsel %vm1147, %v1140, %v1144
  %v1149 = vand.u32 2147483647, %v1026
  %vm1150 = vcmp.eq.f32.partialorder %v1149, 8.507059e+37
  %v1151 = vand.u32 %v1026, 2147483648
  %v1152 = vor.u32 1.1754944e-38, %v1151
  %v1153 = vsel %vm1150, %v1152, %v1148
  %v1154 = vmul.f32 1.0, %v1153
  %v1155 = vrcp.pop %v1027
  %v1156 = vmul.f32 %v1027, %v1155
  %v1157 = vsub.f32 1.0, %v1156
  %v1158 = vmul.f32 %v1155, %v1157
  %v1159 = vadd.f32 %v1155, %v1158
  %vm1160 = vweird.f32 %v1027
  %vm1161 = vweird.f32 %v1155
  %vm1162 = vmor %vm1160, %vm1161
  %v1163 = vsel %vm1162, %v1155, %v1159
  %v1164 = vand.u32 2147483647, %v1027
  %vm1165 = vcmp.eq.f32.partialorder %v1164, 8.507059e+37
  %v1166 = vand.u32 %v1027, 2147483648
  %v1167 = vor.u32 1.1754944e-38, %v1166
  %v1168 = vsel %vm1165, %v1167, %v1163
  %v1169 = vmul.f32 1.0, %v1168
  %v1170 = vrcp.pop %v1028
  %v1171 = vmul.f32 %v1028, %v1170
  %v1172 = vsub.f32 1.0, %v1171
  %v1173 = vmul.f32 %v1170, %v1172
  %v1174 = vadd.f32 %v1170, %v1173
  %vm1175 = vweird.f32 %v1028
  %vm1176 = vweird.f32 %v1170
  %vm1177 = vmor %vm1175, %vm1176
  %v1178 = vsel %vm1177, %v1170, %v1174
  %v1179 = vand.u32 2147483647, %v1028
  %vm1180 = vcmp.eq.f32.partialorder %v1179, 8.507059e+37
  %v1181 = vand.u32 %v1028, 2147483648
  %v1182 = vor.u32 1.1754944e-38, %v1181
  %v1183 = vsel %vm1180, %v1182, %v1178
  %v1184 = vmul.f32 1.0, %v1183
  %v1185 = vrcp.pop %v1029
  %v1186 = vmul.f32 %v1029, %v1185
  %v1187 = vsub.f32 1.0, %v1186
  %v1188 = vmul.f32 %v1185, %v1187
  %v1189 = vadd.f32 %v1185, %v1188
  %vm1190 = vweird.f32 %v1029
  %vm1191 = vweird.f32 %v1185
  %vm1192 = vmor %vm1190, %vm1191
  %v1193 = vsel %vm1192, %v1185, %v1189
  %v1194 = vand.u32 2147483647, %v1029
  %vm1195 = vcmp.eq.f32.partialorder %v1194, 8.507059e+37
  %v1196 = vand.u32 %v1029, 2147483648
  %v1197 = vor.u32 1.1754944e-38, %v1196
  %v1198 = vsel %vm1195, %v1197, %v1193
  %v1199 = vmul.f32 1.0, %v1198
  %v1200 = vrcp.pop %v1030
  %v1201 = vmul.f32 %v1030, %v1200
  %v1202 = vsub.f32 1.0, %v1201
  %v1203 = vmul.f32 %v1200, %v1202
  %v1204 = vadd.f32 %v1200, %v1203
  %vm1205 = vweird.f32 %v1030
  %vm1206 = vweird.f32 %v1200
  %vm1207 = vmor %vm1205, %vm1206
  %v1208 = vsel %vm1207, %v1200, %v1204
  %v1209 = vand.u32 2147483647, %v1030
  %vm1210 = vcmp.eq.f32.partialorder %v1209, 8.507059e+37
  %v1211 = vand.u32 %v1030, 2147483648
  %v1212 = vor.u32 1.1754944e-38, %v1211
  %v1213 = vsel %vm1210, %v1212, %v1208
  %v1214 = vmul.f32 1.0, %v1213
  %v1215 = vrcp.pop %v1031
  %v1216 = vmul.f32 %v1031, %v1215
  %v1217 = vsub.f32 1.0, %v1216
  %v1218 = vmul.f32 %v1215, %v1217
  %v1219 = vadd.f32 %v1215, %v1218
  %vm1220 = vweird.f32 %v1031
  %vm1221 = vweird.f32 %v1215
  %vm1222 = vmor %vm1220, %vm1221
  %v1223 = vsel %vm1222, %v1215, %v1219
  %v1224 = vand.u32 2147483647, %v1031
  %vm1225 = vcmp.eq.f32.partialorder %v1224, 8.507059e+37
  %v1226 = vand.u32 %v1031, 2147483648
  %v1227 = vor.u32 1.1754944e-38, %v1226
  %v1228 = vsel %vm1225, %v1227, %v1223
  %v1229 = vmul.f32 1.0, %v1228
  %v1230 = vrcp.pop %v1032
  %v1231 = vmul.f32 %v1032, %v1230
  %v1232 = vsub.f32 1.0, %v1231
  %v1233 = vmul.f32 %v1230, %v1232
  %v1234 = vadd.f32 %v1230, %v1233
  %vm1235 = vweird.f32 %v1032
  %vm1236 = vweird.f32 %v1230
  %vm1237 = vmor %vm1235, %vm1236
  %v1238 = vsel %vm1237, %v1230, %v1234
  %v1239 = vand.u32 2147483647, %v1032
  %vm1240 = vcmp.eq.f32.partialorder %v1239, 8.507059e+37
  %v1241 = vand.u32 %v1032, 2147483648
  %v1242 = vor.u32 1.1754944e-38, %v1241
  %v1243 = vsel %vm1240, %v1242, %v1238
  %v1244 = vmul.f32 1.0, %v1243
  %v1245 = vrcp.pop %v1033
  %v1246 = vmul.f32 %v1033, %v1245
  %v1247 = vsub.f32 1.0, %v1246
  %v1248 = vmul.f32 %v1245, %v1247
  %v1249 = vadd.f32 %v1245, %v1248
  %vm1250 = vweird.f32 %v1033
  %vm1251 = vweird.f32 %v1245
  %vm1252 = vmor %vm1250, %vm1251
  %v1253 = vsel %vm1252, %v1245, %v1249
  %v1254 = vand.u32 2147483647, %v1033
  %vm1255 = vcmp.eq.f32.partialorder %v1254, 8.507059e+37
  %v1256 = vand.u32 %v1033, 2147483648
  %v1257 = vor.u32 1.1754944e-38, %v1256
  %v1258 = vsel %vm1255, %v1257, %v1253
  %v1259 = vmul.f32 1.0, %v1258
  %v1260 = vrcp.pop %v1034
  %v1261 = vmul.f32 %v1034, %v1260
  %v1262 = vsub.f32 1.0, %v1261
  %v1263 = vmul.f32 %v1260, %v1262
  %v1264 = vadd.f32 %v1260, %v1263
  %vm1265 = vweird.f32 %v1034
  %vm1266 = vweird.f32 %v1260
  %vm1267 = vmor %vm1265, %vm1266
  %v1268 = vsel %vm1267, %v1260, %v1264
  %v1269 = vand.u32 2147483647, %v1034
  %vm1270 = vcmp.eq.f32.partialorder %v1269, 8.507059e+37
  %v1271 = vand.u32 %v1034, 2147483648
  %v1272 = vor.u32 1.1754944e-38, %v1271
  %v1273 = vsel %vm1270, %v1272, %v1268
  %v1274 = vmul.f32 1.0, %v1273
  %v1275 = vmul.f32 %v955, %v1049
  %v1276 = vmul.f32 %v956, %v1064
  %v1277 = vmul.f32 %v957, %v1079
  %v1278 = vmul.f32 %v958, %v1094
  %v1279 = vmul.f32 %v959, %v1109
  %v1280 = vmul.f32 %v960, %v1124
  %v1281 = vmul.f32 %v961, %v1139
  %v1282 = vmul.f32 %v962, %v1154
  %v1283 = vmul.f32 %v963, %v1169
  %v1284 = vmul.f32 %v964, %v1184
  %v1285 = vmul.f32 %v965, %v1199
  %v1286 = vmul.f32 %v966, %v1214
  %v1287 = vmul.f32 %v967, %v1229
  %v1288 = vmul.f32 %v968, %v1244
  %v1289 = vmul.f32 %v969, %v1259
  %v1290 = vmul.f32 %v970, %v1274
  %v1291 = vld [vmem:[%s8] sm:$0xff]
  %v1292 = vld [vmem:[%s8 + $0x8] sm:$0xff]
  %v1293 = vld [vmem:[%s9] sm:$0x1]
  %v1295 = vperm.slane %v1293, 0
  %v1298 = vsel %vm131, %v1275, 0
  %v1301 = vsel %vm131, %v1276, 0
  %v1304 = vsel %vm131, %v1277, 0
  %v1307 = vsel %vm131, %v1278, 0
  %v1310 = vsel %vm131, %v1279, 0
  %v1313 = vsel %vm131, %v1280, 0
  %v1316 = vsel %vm131, %v1281, 0
  %v1319 = vsel %vm131, %v1282, 0
  %v1322 = vsel %vm131, %v1283, 0
  %v1325 = vsel %vm131, %v1284, 0
  %v1328 = vsel %vm131, %v1285, 0
  %v1331 = vsel %vm131, %v1286, 0
  %v1334 = vsel %vm131, %v1287, 0
  %v1337 = vsel %vm131, %v1288, 0
  %v1340 = vsel %vm131, %v1289, 0
  %v1343 = vsel %vm131, %v1290, 0
  %1345 = vmatpush.msra.mxu0 0.0
  %1346 = vmatpush.msra.mxu0 0.0
  %1347 = vmatpush.msra.mxu0 0.0
  %1348 = vmatpush.msra.mxu0 0.0
  %1349 = vmatpush.msra.mxu0 0.0
  %1350 = vmatpush.msra.mxu0 0.0
  %1351 = vmatpush.msra.mxu0 0.0
  %1352 = vmatpush.msra.mxu0 0.0
  %1353 = vmatpush.msra.mxu0 0.0
  %1354 = vmatpush.msra.mxu0 0.0
  %1355 = vmatpush.msra.mxu0 0.0
  %1356 = vmatpush.msra.mxu0 0.0
  %1357 = vmatpush.msra.mxu0 0.0
  %1358 = vmatpush.msra.mxu0 0.0
  %1359 = vmatpush.msra.mxu0 %v1292
  %1360 = vmatpush.msra.mxu0 %v1291
  %1361 = vmatmul.f32.gmra.mxu0 %v1298
  %v1362 = vpop.f32.mrf.mxu0
  %v1363 = vadd.f32 %v1295, %v1362
  %1364 = vmatmul.f32.gmra.mxu0 %v1301
  %v1365 = vpop.f32.mrf.mxu0
  %v1366 = vadd.f32 %v1295, %v1365
  %1367 = vmatmul.f32.gmra.mxu0 %v1304
  %v1368 = vpop.f32.mrf.mxu0
  %v1369 = vadd.f32 %v1295, %v1368
  %1370 = vmatmul.f32.gmra.mxu0 %v1307
  %v1371 = vpop.f32.mrf.mxu0
  %v1372 = vadd.f32 %v1295, %v1371
  %1373 = vmatmul.f32.gmra.mxu0 %v1310
  %v1374 = vpop.f32.mrf.mxu0
  %v1375 = vadd.f32 %v1295, %v1374
  %1376 = vmatmul.f32.gmra.mxu0 %v1313
  %v1377 = vpop.f32.mrf.mxu0
  %v1378 = vadd.f32 %v1295, %v1377
  %1379 = vmatmul.f32.gmra.mxu0 %v1316
  %v1380 = vpop.f32.mrf.mxu0
  %v1381 = vadd.f32 %v1295, %v1380
  %1382 = vmatmul.f32.gmra.mxu0 %v1319
  %v1383 = vpop.f32.mrf.mxu0
  %v1384 = vadd.f32 %v1295, %v1383
  %1385 = vmatmul.f32.gmra.mxu0 %v1322
  %v1386 = vpop.f32.mrf.mxu0
  %v1387 = vadd.f32 %v1295, %v1386
  %1388 = vmatmul.f32.gmra.mxu0 %v1325
  %v1389 = vpop.f32.mrf.mxu0
  %v1390 = vadd.f32 %v1295, %v1389
  %1391 = vmatmul.f32.gmra.mxu0 %v1328
  %v1392 = vpop.f32.mrf.mxu0
  %v1393 = vadd.f32 %v1295, %v1392
  %1394 = vmatmul.f32.gmra.mxu0 %v1331
  %v1395 = vpop.f32.mrf.mxu0
  %v1396 = vadd.f32 %v1295, %v1395
  %1397 = vmatmul.f32.gmra.mxu0 %v1334
  %v1398 = vpop.f32.mrf.mxu0
  %v1399 = vadd.f32 %v1295, %v1398
  %1400 = vmatmul.f32.gmra.mxu0 %v1337
  %v1401 = vpop.f32.mrf.mxu0
  %v1402 = vadd.f32 %v1295, %v1401
  %1403 = vmatmul.f32.gmra.mxu0 %v1340
  %v1404 = vpop.f32.mrf.mxu0
  %v1405 = vadd.f32 %v1295, %v1404
  %1406 = vmatmul.f32.gmra.mxu0 %v1343
  %v1407 = vpop.f32.mrf.mxu0
  %v1408 = vadd.f32 %v1295, %v1407
  %1409 = vdwg.mxu0
  %vm1410 = vcmask 64512
  %v1411 = vsel %vm1410, %v770, -inf
  %1412 = vmax.xlane.f32.xlu0 %v1411
  %v1413 = vpop.xlane.xlu0 %1412
  %v1414 = vsel %vm1410, %v773, -inf
  %1415 = vmax.xlane.f32.xlu0 %v1414
  %v1416 = vpop.xlane.xlu0 %1415
  %v1417 = vsel %vm1410, %v776, -inf
  %1418 = vmax.xlane.f32.xlu0 %v1417
  %v1419 = vpop.xlane.xlu0 %1418
  %v1420 = vsel %vm1410, %v779, -inf
  %1421 = vmax.xlane.f32.xlu0 %v1420
  %v1422 = vpop.xlane.xlu0 %1421
  %v1423 = vsel %vm1410, %v782, -inf
  %1424 = vmax.xlane.f32.xlu0 %v1423
  %v1425 = vpop.xlane.xlu0 %1424
  %v1426 = vsel %vm1410, %v785, -inf
  %1427 = vmax.xlane.f32.xlu0 %v1426
  %v1428 = vpop.xlane.xlu0 %1427
  %v1429 = vsel %vm1410, %v788, -inf
  %1430 = vmax.xlane.f32.xlu0 %v1429
  %v1431 = vpop.xlane.xlu0 %1430
  %v1432 = vsel %vm1410, %v791, -inf
  %1433 = vmax.xlane.f32.xlu0 %v1432
  %v1434 = vpop.xlane.xlu0 %1433
  %v1435 = vsel %vm1410, %v794, -inf
  %1436 = vmax.xlane.f32.xlu0 %v1435
  %v1437 = vpop.xlane.xlu0 %1436
  %v1438 = vsel %vm1410, %v797, -inf
  %1439 = vmax.xlane.f32.xlu0 %v1438
  %v1440 = vpop.xlane.xlu0 %1439
  %v1441 = vsel %vm1410, %v800, -inf
  %1442 = vmax.xlane.f32.xlu0 %v1441
  %v1443 = vpop.xlane.xlu0 %1442
  %v1444 = vsel %vm1410, %v803, -inf
  %1445 = vmax.xlane.f32.xlu0 %v1444
  %v1446 = vpop.xlane.xlu0 %1445
  %v1447 = vsel %vm1410, %v806, -inf
  %1448 = vmax.xlane.f32.xlu0 %v1447
  %v1449 = vpop.xlane.xlu0 %1448
  %v1450 = vsel %vm1410, %v809, -inf
  %1451 = vmax.xlane.f32.xlu0 %v1450
  %v1452 = vpop.xlane.xlu0 %1451
  %v1453 = vsel %vm1410, %v812, -inf
  %1454 = vmax.xlane.f32.xlu0 %v1453
  %v1455 = vpop.xlane.xlu0 %1454
  %v1456 = vsel %vm1410, %v815, -inf
  %1457 = vmax.xlane.f32.xlu0 %v1456
  %v1458 = vpop.xlane.xlu0 %1457
  %v1459 = vsub.f32 %v770, %v1413
  %v1460 = vsub.f32 %v773, %v1416
  %v1461 = vsub.f32 %v776, %v1419
  %v1462 = vsub.f32 %v779, %v1422
  %v1463 = vsub.f32 %v782, %v1425
  %v1464 = vsub.f32 %v785, %v1428
  %v1465 = vsub.f32 %v788, %v1431
  %v1466 = vsub.f32 %v791, %v1434
  %v1467 = vsub.f32 %v794, %v1437
  %v1468 = vsub.f32 %v797, %v1440
  %v1469 = vsub.f32 %v800, %v1443
  %v1470 = vsub.f32 %v803, %v1446
  %v1471 = vsub.f32 %v806, %v1449
  %v1472 = vsub.f32 %v809, %v1452
  %v1473 = vsub.f32 %v812, %v1455
  %v1474 = vsub.f32 %v815, %v1458
  %v1475 = vmul.f32 %v1459, 1.442695
  %v1476 = vpow.pop %v1475
  %v1477 = vmul.f32 %v1460, 1.442695
  %v1478 = vpow.pop %v1477
  %v1479 = vmul.f32 %v1461, 1.442695
  %v1480 = vpow.pop %v1479
  %v1481 = vmul.f32 %v1462, 1.442695
  %v1482 = vpow.pop %v1481
  %v1483 = vmul.f32 %v1463, 1.442695
  %v1484 = vpow.pop %v1483
  %v1485 = vmul.f32 %v1464, 1.442695
  %v1486 = vpow.pop %v1485
  %v1487 = vmul.f32 %v1465, 1.442695
  %v1488 = vpow.pop %v1487
  %v1489 = vmul.f32 %v1466, 1.442695
  %v1490 = vpow.pop %v1489
  %v1491 = vmul.f32 %v1467, 1.442695
  %v1492 = vpow.pop %v1491
  %v1493 = vmul.f32 %v1468, 1.442695
  %v1494 = vpow.pop %v1493
  %v1495 = vmul.f32 %v1469, 1.442695
  %v1496 = vpow.pop %v1495
  %v1497 = vmul.f32 %v1470, 1.442695
  %v1498 = vpow.pop %v1497
  %v1499 = vmul.f32 %v1471, 1.442695
  %v1500 = vpow.pop %v1499
  %v1501 = vmul.f32 %v1472, 1.442695
  %v1502 = vpow.pop %v1501
  %v1503 = vmul.f32 %v1473, 1.442695
  %v1504 = vpow.pop %v1503
  %v1505 = vmul.f32 %v1474, 1.442695
  %v1506 = vpow.pop %v1505
  %v1507 = vsel %vm1410, %v1476, 0.0
  %1508 = vadd.xlane.f32.xlu0 %v1507
  %v1509 = vpop.xlane.xlu0 %1508
  %v1510 = vsel %vm1410, %v1478, 0.0
  %1511 = vadd.xlane.f32.xlu0 %v1510
  %v1512 = vpop.xlane.xlu0 %1511
  %v1513 = vsel %vm1410, %v1480, 0.0
  %1514 = vadd.xlane.f32.xlu0 %v1513
  %v1515 = vpop.xlane.xlu0 %1514
  %v1516 = vsel %vm1410, %v1482, 0.0
  %1517 = vadd.xlane.f32.xlu0 %v1516
  %v1518 = vpop.xlane.xlu0 %1517
  %v1519 = vsel %vm1410, %v1484, 0.0
  %1520 = vadd.xlane.f32.xlu0 %v1519
  %v1521 = vpop.xlane.xlu0 %1520
  %v1522 = vsel %vm1410, %v1486, 0.0
  %1523 = vadd.xlane.f32.xlu0 %v1522
  %v1524 = vpop.xlane.xlu0 %1523
  %v1525 = vsel %vm1410, %v1488, 0.0
  %1526 = vadd.xlane.f32.xlu0 %v1525
  %v1527 = vpop.xlane.xlu0 %1526
  %v1528 = vsel %vm1410, %v1490, 0.0
  %1529 = vadd.xlane.f32.xlu0 %v1528
  %v1530 = vpop.xlane.xlu0 %1529
  %v1531 = vsel %vm1410, %v1492, 0.0
  %1532 = vadd.xlane.f32.xlu0 %v1531
  %v1533 = vpop.xlane.xlu0 %1532
  %v1534 = vsel %vm1410, %v1494, 0.0
  %1535 = vadd.xlane.f32.xlu0 %v1534
  %v1536 = vpop.xlane.xlu0 %1535
  %v1537 = vsel %vm1410, %v1496, 0.0
  %1538 = vadd.xlane.f32.xlu0 %v1537
  %v1539 = vpop.xlane.xlu0 %1538
  %v1540 = vsel %vm1410, %v1498, 0.0
  %1541 = vadd.xlane.f32.xlu0 %v1540
  %v1542 = vpop.xlane.xlu0 %1541
  %v1543 = vsel %vm1410, %v1500, 0.0
  %1544 = vadd.xlane.f32.xlu0 %v1543
  %v1545 = vpop.xlane.xlu0 %1544
  %v1546 = vsel %vm1410, %v1502, 0.0
  %1547 = vadd.xlane.f32.xlu0 %v1546
  %v1548 = vpop.xlane.xlu0 %1547
  %v1549 = vsel %vm1410, %v1504, 0.0
  %1550 = vadd.xlane.f32.xlu0 %v1549
  %v1551 = vpop.xlane.xlu0 %1550
  %v1552 = vsel %vm1410, %v1506, 0.0
  %1553 = vadd.xlane.f32.xlu0 %v1552
  %v1554 = vpop.xlane.xlu0 %1553
  %v1555 = vrcp.pop %v1509
  %v1556 = vmul.f32 %v1509, %v1555
  %v1557 = vsub.f32 1.0, %v1556
  %v1558 = vmul.f32 %v1555, %v1557
  %v1559 = vadd.f32 %v1555, %v1558
  %vm1560 = vweird.f32 %v1509
  %vm1561 = vweird.f32 %v1555
  %vm1562 = vmor %vm1560, %vm1561
  %v1563 = vsel %vm1562, %v1555, %v1559
  %v1564 = vand.u32 2147483647, %v1509
  %vm1565 = vcmp.eq.f32.partialorder %v1564, 8.507059e+37
  %v1566 = vand.u32 %v1509, 2147483648
  %v1567 = vor.u32 1.1754944e-38, %v1566
  %v1568 = vsel %vm1565, %v1567, %v1563
  %v1569 = vmul.f32 %v1476, %v1568
  %v1570 = vrcp.pop %v1512
  %v1571 = vmul.f32 %v1512, %v1570
  %v1572 = vsub.f32 1.0, %v1571
  %v1573 = vmul.f32 %v1570, %v1572
  %v1574 = vadd.f32 %v1570, %v1573
  %vm1575 = vweird.f32 %v1512
  %vm1576 = vweird.f32 %v1570
  %vm1577 = vmor %vm1575, %vm1576
  %v1578 = vsel %vm1577, %v1570, %v1574
  %v1579 = vand.u32 2147483647, %v1512
  %vm1580 = vcmp.eq.f32.partialorder %v1579, 8.507059e+37
  %v1581 = vand.u32 %v1512, 2147483648
  %v1582 = vor.u32 1.1754944e-38, %v1581
  %v1583 = vsel %vm1580, %v1582, %v1578
  %v1584 = vmul.f32 %v1478, %v1583
  %v1585 = vrcp.pop %v1515
  %v1586 = vmul.f32 %v1515, %v1585
  %v1587 = vsub.f32 1.0, %v1586
  %v1588 = vmul.f32 %v1585, %v1587
  %v1589 = vadd.f32 %v1585, %v1588
  %vm1590 = vweird.f32 %v1515
  %vm1591 = vweird.f32 %v1585
  %vm1592 = vmor %vm1590, %vm1591
  %v1593 = vsel %vm1592, %v1585, %v1589
  %v1594 = vand.u32 2147483647, %v1515
  %vm1595 = vcmp.eq.f32.partialorder %v1594, 8.507059e+37
  %v1596 = vand.u32 %v1515, 2147483648
  %v1597 = vor.u32 1.1754944e-38, %v1596
  %v1598 = vsel %vm1595, %v1597, %v1593
  %v1599 = vmul.f32 %v1480, %v1598
  %v1600 = vrcp.pop %v1518
  %v1601 = vmul.f32 %v1518, %v1600
  %v1602 = vsub.f32 1.0, %v1601
  %v1603 = vmul.f32 %v1600, %v1602
  %v1604 = vadd.f32 %v1600, %v1603
  %vm1605 = vweird.f32 %v1518
  %vm1606 = vweird.f32 %v1600
  %vm1607 = vmor %vm1605, %vm1606
  %v1608 = vsel %vm1607, %v1600, %v1604
  %v1609 = vand.u32 2147483647, %v1518
  %vm1610 = vcmp.eq.f32.partialorder %v1609, 8.507059e+37
  %v1611 = vand.u32 %v1518, 2147483648
  %v1612 = vor.u32 1.1754944e-38, %v1611
  %v1613 = vsel %vm1610, %v1612, %v1608
  %v1614 = vmul.f32 %v1482, %v1613
  %v1615 = vrcp.pop %v1521
  %v1616 = vmul.f32 %v1521, %v1615
  %v1617 = vsub.f32 1.0, %v1616
  %v1618 = vmul.f32 %v1615, %v1617
  %v1619 = vadd.f32 %v1615, %v1618
  %vm1620 = vweird.f32 %v1521
  %vm1621 = vweird.f32 %v1615
  %vm1622 = vmor %vm1620, %vm1621
  %v1623 = vsel %vm1622, %v1615, %v1619
  %v1624 = vand.u32 2147483647, %v1521
  %vm1625 = vcmp.eq.f32.partialorder %v1624, 8.507059e+37
  %v1626 = vand.u32 %v1521, 2147483648
  %v1627 = vor.u32 1.1754944e-38, %v1626
  %v1628 = vsel %vm1625, %v1627, %v1623
  %v1629 = vmul.f32 %v1484, %v1628
  %v1630 = vrcp.pop %v1524
  %v1631 = vmul.f32 %v1524, %v1630
  %v1632 = vsub.f32 1.0, %v1631
  %v1633 = vmul.f32 %v1630, %v1632
  %v1634 = vadd.f32 %v1630, %v1633
  %vm1635 = vweird.f32 %v1524
  %vm1636 = vweird.f32 %v1630
  %vm1637 = vmor %vm1635, %vm1636
  %v1638 = vsel %vm1637, %v1630, %v1634
  %v1639 = vand.u32 2147483647, %v1524
  %vm1640 = vcmp.eq.f32.partialorder %v1639, 8.507059e+37
  %v1641 = vand.u32 %v1524, 2147483648
  %v1642 = vor.u32 1.1754944e-38, %v1641
  %v1643 = vsel %vm1640, %v1642, %v1638
  %v1644 = vmul.f32 %v1486, %v1643
  %v1645 = vrcp.pop %v1527
  %v1646 = vmul.f32 %v1527, %v1645
  %v1647 = vsub.f32 1.0, %v1646
  %v1648 = vmul.f32 %v1645, %v1647
  %v1649 = vadd.f32 %v1645, %v1648
  %vm1650 = vweird.f32 %v1527
  %vm1651 = vweird.f32 %v1645
  %vm1652 = vmor %vm1650, %vm1651
  %v1653 = vsel %vm1652, %v1645, %v1649
  %v1654 = vand.u32 2147483647, %v1527
  %vm1655 = vcmp.eq.f32.partialorder %v1654, 8.507059e+37
  %v1656 = vand.u32 %v1527, 2147483648
  %v1657 = vor.u32 1.1754944e-38, %v1656
  %v1658 = vsel %vm1655, %v1657, %v1653
  %v1659 = vmul.f32 %v1488, %v1658
  %v1660 = vrcp.pop %v1530
  %v1661 = vmul.f32 %v1530, %v1660
  %v1662 = vsub.f32 1.0, %v1661
  %v1663 = vmul.f32 %v1660, %v1662
  %v1664 = vadd.f32 %v1660, %v1663
  %vm1665 = vweird.f32 %v1530
  %vm1666 = vweird.f32 %v1660
  %vm1667 = vmor %vm1665, %vm1666
  %v1668 = vsel %vm1667, %v1660, %v1664
  %v1669 = vand.u32 2147483647, %v1530
  %vm1670 = vcmp.eq.f32.partialorder %v1669, 8.507059e+37
  %v1671 = vand.u32 %v1530, 2147483648
  %v1672 = vor.u32 1.1754944e-38, %v1671
  %v1673 = vsel %vm1670, %v1672, %v1668
  %v1674 = vmul.f32 %v1490, %v1673
  %v1675 = vrcp.pop %v1533
  %v1676 = vmul.f32 %v1533, %v1675
  %v1677 = vsub.f32 1.0, %v1676
  %v1678 = vmul.f32 %v1675, %v1677
  %v1679 = vadd.f32 %v1675, %v1678
  %vm1680 = vweird.f32 %v1533
  %vm1681 = vweird.f32 %v1675
  %vm1682 = vmor %vm1680, %vm1681
  %v1683 = vsel %vm1682, %v1675, %v1679
  %v1684 = vand.u32 2147483647, %v1533
  %vm1685 = vcmp.eq.f32.partialorder %v1684, 8.507059e+37
  %v1686 = vand.u32 %v1533, 2147483648
  %v1687 = vor.u32 1.1754944e-38, %v1686
  %v1688 = vsel %vm1685, %v1687, %v1683
  %v1689 = vmul.f32 %v1492, %v1688
  %v1690 = vrcp.pop %v1536
  %v1691 = vmul.f32 %v1536, %v1690
  %v1692 = vsub.f32 1.0, %v1691
  %v1693 = vmul.f32 %v1690, %v1692
  %v1694 = vadd.f32 %v1690, %v1693
  %vm1695 = vweird.f32 %v1536
  %vm1696 = vweird.f32 %v1690
  %vm1697 = vmor %vm1695, %vm1696
  %v1698 = vsel %vm1697, %v1690, %v1694
  %v1699 = vand.u32 2147483647, %v1536
  %vm1700 = vcmp.eq.f32.partialorder %v1699, 8.507059e+37
  %v1701 = vand.u32 %v1536, 2147483648
  %v1702 = vor.u32 1.1754944e-38, %v1701
  %v1703 = vsel %vm1700, %v1702, %v1698
  %v1704 = vmul.f32 %v1494, %v1703
  %v1705 = vrcp.pop %v1539
  %v1706 = vmul.f32 %v1539, %v1705
  %v1707 = vsub.f32 1.0, %v1706
  %v1708 = vmul.f32 %v1705, %v1707
  %v1709 = vadd.f32 %v1705, %v1708
  %vm1710 = vweird.f32 %v1539
  %vm1711 = vweird.f32 %v1705
  %vm1712 = vmor %vm1710, %vm1711
  %v1713 = vsel %vm1712, %v1705, %v1709
  %v1714 = vand.u32 2147483647, %v1539
  %vm1715 = vcmp.eq.f32.partialorder %v1714, 8.507059e+37
  %v1716 = vand.u32 %v1539, 2147483648
  %v1717 = vor.u32 1.1754944e-38, %v1716
  %v1718 = vsel %vm1715, %v1717, %v1713
  %v1719 = vmul.f32 %v1496, %v1718
  %v1720 = vrcp.pop %v1542
  %v1721 = vmul.f32 %v1542, %v1720
  %v1722 = vsub.f32 1.0, %v1721
  %v1723 = vmul.f32 %v1720, %v1722
  %v1724 = vadd.f32 %v1720, %v1723
  %vm1725 = vweird.f32 %v1542
  %vm1726 = vweird.f32 %v1720
  %vm1727 = vmor %vm1725, %vm1726
  %v1728 = vsel %vm1727, %v1720, %v1724
  %v1729 = vand.u32 2147483647, %v1542
  %vm1730 = vcmp.eq.f32.partialorder %v1729, 8.507059e+37
  %v1731 = vand.u32 %v1542, 2147483648
  %v1732 = vor.u32 1.1754944e-38, %v1731
  %v1733 = vsel %vm1730, %v1732, %v1728
  %v1734 = vmul.f32 %v1498, %v1733
  %v1735 = vrcp.pop %v1545
  %v1736 = vmul.f32 %v1545, %v1735
  %v1737 = vsub.f32 1.0, %v1736
  %v1738 = vmul.f32 %v1735, %v1737
  %v1739 = vadd.f32 %v1735, %v1738
  %vm1740 = vweird.f32 %v1545
  %vm1741 = vweird.f32 %v1735
  %vm1742 = vmor %vm1740, %vm1741
  %v1743 = vsel %vm1742, %v1735, %v1739
  %v1744 = vand.u32 2147483647, %v1545
  %vm1745 = vcmp.eq.f32.partialorder %v1744, 8.507059e+37
  %v1746 = vand.u32 %v1545, 2147483648
  %v1747 = vor.u32 1.1754944e-38, %v1746
  %v1748 = vsel %vm1745, %v1747, %v1743
  %v1749 = vmul.f32 %v1500, %v1748
  %v1750 = vrcp.pop %v1548
  %v1751 = vmul.f32 %v1548, %v1750
  %v1752 = vsub.f32 1.0, %v1751
  %v1753 = vmul.f32 %v1750, %v1752
  %v1754 = vadd.f32 %v1750, %v1753
  %vm1755 = vweird.f32 %v1548
  %vm1756 = vweird.f32 %v1750
  %vm1757 = vmor %vm1755, %vm1756
  %v1758 = vsel %vm1757, %v1750, %v1754
  %v1759 = vand.u32 2147483647, %v1548
  %vm1760 = vcmp.eq.f32.partialorder %v1759, 8.507059e+37
  %v1761 = vand.u32 %v1548, 2147483648
  %v1762 = vor.u32 1.1754944e-38, %v1761
  %v1763 = vsel %vm1760, %v1762, %v1758
  %v1764 = vmul.f32 %v1502, %v1763
  %v1765 = vrcp.pop %v1551
  %v1766 = vmul.f32 %v1551, %v1765
  %v1767 = vsub.f32 1.0, %v1766
  %v1768 = vmul.f32 %v1765, %v1767
  %v1769 = vadd.f32 %v1765, %v1768
  %vm1770 = vweird.f32 %v1551
  %vm1771 = vweird.f32 %v1765
  %vm1772 = vmor %vm1770, %vm1771
  %v1773 = vsel %vm1772, %v1765, %v1769
  %v1774 = vand.u32 2147483647, %v1551
  %vm1775 = vcmp.eq.f32.partialorder %v1774, 8.507059e+37
  %v1776 = vand.u32 %v1551, 2147483648
  %v1777 = vor.u32 1.1754944e-38, %v1776
  %v1778 = vsel %vm1775, %v1777, %v1773
  %v1779 = vmul.f32 %v1504, %v1778
  %v1780 = vrcp.pop %v1554
  %v1781 = vmul.f32 %v1554, %v1780
  %v1782 = vsub.f32 1.0, %v1781
  %v1783 = vmul.f32 %v1780, %v1782
  %v1784 = vadd.f32 %v1780, %v1783
  %vm1785 = vweird.f32 %v1554
  %vm1786 = vweird.f32 %v1780
  %vm1787 = vmor %vm1785, %vm1786
  %v1788 = vsel %vm1787, %v1780, %v1784
  %v1789 = vand.u32 2147483647, %v1554
  %vm1790 = vcmp.eq.f32.partialorder %v1789, 8.507059e+37
  %v1791 = vand.u32 %v1554, 2147483648
  %v1792 = vor.u32 1.1754944e-38, %v1791
  %v1793 = vsel %vm1790, %v1792, %v1788
  %v1794 = vmul.f32 %v1506, %v1793
  %v1795 = vsel %vm1410, %v1363, -inf
  %1796 = vmax.xlane.f32.xlu0 %v1795
  %v1797 = vpop.xlane.xlu0 %1796
  %v1798 = vsel %vm1410, %v1366, -inf
  %1799 = vmax.xlane.f32.xlu0 %v1798
  %v1800 = vpop.xlane.xlu0 %1799
  %v1801 = vsel %vm1410, %v1369, -inf
  %1802 = vmax.xlane.f32.xlu0 %v1801
  %v1803 = vpop.xlane.xlu0 %1802
  %v1804 = vsel %vm1410, %v1372, -inf
  %1805 = vmax.xlane.f32.xlu0 %v1804
  %v1806 = vpop.xlane.xlu0 %1805
  %v1807 = vsel %vm1410, %v1375, -inf
  %1808 = vmax.xlane.f32.xlu0 %v1807
  %v1809 = vpop.xlane.xlu0 %1808
  %v1810 = vsel %vm1410, %v1378, -inf
  %1811 = vmax.xlane.f32.xlu0 %v1810
  %v1812 = vpop.xlane.xlu0 %1811
  %v1813 = vsel %vm1410, %v1381, -inf
  %1814 = vmax.xlane.f32.xlu0 %v1813
  %v1815 = vpop.xlane.xlu0 %1814
  %v1816 = vsel %vm1410, %v1384, -inf
  %1817 = vmax.xlane.f32.xlu0 %v1816
  %v1818 = vpop.xlane.xlu0 %1817
  %v1819 = vsel %vm1410, %v1387, -inf
  %1820 = vmax.xlane.f32.xlu0 %v1819
  %v1821 = vpop.xlane.xlu0 %1820
  %v1822 = vsel %vm1410, %v1390, -inf
  %1823 = vmax.xlane.f32.xlu0 %v1822
  %v1824 = vpop.xlane.xlu0 %1823
  %v1825 = vsel %vm1410, %v1393, -inf
  %1826 = vmax.xlane.f32.xlu0 %v1825
  %v1827 = vpop.xlane.xlu0 %1826
  %v1828 = vsel %vm1410, %v1396, -inf
  %1829 = vmax.xlane.f32.xlu0 %v1828
  %v1830 = vpop.xlane.xlu0 %1829
  %v1831 = vsel %vm1410, %v1399, -inf
  %1832 = vmax.xlane.f32.xlu0 %v1831
  %v1833 = vpop.xlane.xlu0 %1832
  %v1834 = vsel %vm1410, %v1402, -inf
  %1835 = vmax.xlane.f32.xlu0 %v1834
  %v1836 = vpop.xlane.xlu0 %1835
  %v1837 = vsel %vm1410, %v1405, -inf
  %1838 = vmax.xlane.f32.xlu0 %v1837
  %v1839 = vpop.xlane.xlu0 %1838
  %v1840 = vsel %vm1410, %v1408, -inf
  %1841 = vmax.xlane.f32.xlu0 %v1840
  %v1842 = vpop.xlane.xlu0 %1841
  %v1843 = vsub.f32 %v1363, %v1797
  %v1844 = vsub.f32 %v1366, %v1800
  %v1845 = vsub.f32 %v1369, %v1803
  %v1846 = vsub.f32 %v1372, %v1806
  %v1847 = vsub.f32 %v1375, %v1809
  %v1848 = vsub.f32 %v1378, %v1812
  %v1849 = vsub.f32 %v1381, %v1815
  %v1850 = vsub.f32 %v1384, %v1818
  %v1851 = vsub.f32 %v1387, %v1821
  %v1852 = vsub.f32 %v1390, %v1824
  %v1853 = vsub.f32 %v1393, %v1827
  %v1854 = vsub.f32 %v1396, %v1830
  %v1855 = vsub.f32 %v1399, %v1833
  %v1856 = vsub.f32 %v1402, %v1836
  %v1857 = vsub.f32 %v1405, %v1839
  %v1858 = vsub.f32 %v1408, %v1842
  %v1859 = vmul.f32 %v1843, 1.442695
  %v1860 = vpow.pop %v1859
  %v1861 = vmul.f32 %v1844, 1.442695
  %v1862 = vpow.pop %v1861
  %v1863 = vmul.f32 %v1845, 1.442695
  %v1864 = vpow.pop %v1863
  %v1865 = vmul.f32 %v1846, 1.442695
  %v1866 = vpow.pop %v1865
  %v1867 = vmul.f32 %v1847, 1.442695
  %v1868 = vpow.pop %v1867
  %v1869 = vmul.f32 %v1848, 1.442695
  %v1870 = vpow.pop %v1869
  %v1871 = vmul.f32 %v1849, 1.442695
  %v1872 = vpow.pop %v1871
  %v1873 = vmul.f32 %v1850, 1.442695
  %v1874 = vpow.pop %v1873
  %v1875 = vmul.f32 %v1851, 1.442695
  %v1876 = vpow.pop %v1875
  %v1877 = vmul.f32 %v1852, 1.442695
  %v1878 = vpow.pop %v1877
  %v1879 = vmul.f32 %v1853, 1.442695
  %v1880 = vpow.pop %v1879
  %v1881 = vmul.f32 %v1854, 1.442695
  %v1882 = vpow.pop %v1881
  %v1883 = vmul.f32 %v1855, 1.442695
  %v1884 = vpow.pop %v1883
  %v1885 = vmul.f32 %v1856, 1.442695
  %v1886 = vpow.pop %v1885
  %v1887 = vmul.f32 %v1857, 1.442695
  %v1888 = vpow.pop %v1887
  %v1889 = vmul.f32 %v1858, 1.442695
  %v1890 = vpow.pop %v1889
  %v1891 = vsel %vm1410, %v1860, 0.0
  %1892 = vadd.xlane.f32.xlu0 %v1891
  %v1893 = vpop.xlane.xlu0 %1892
  %v1894 = vsel %vm1410, %v1862, 0.0
  %1895 = vadd.xlane.f32.xlu0 %v1894
  %v1896 = vpop.xlane.xlu0 %1895
  %v1897 = vsel %vm1410, %v1864, 0.0
  %1898 = vadd.xlane.f32.xlu0 %v1897
  %v1899 = vpop.xlane.xlu0 %1898
  %v1900 = vsel %vm1410, %v1866, 0.0
  %1901 = vadd.xlane.f32.xlu0 %v1900
  %v1902 = vpop.xlane.xlu0 %1901
  %v1903 = vsel %vm1410, %v1868, 0.0
  %1904 = vadd.xlane.f32.xlu0 %v1903
  %v1905 = vpop.xlane.xlu0 %1904
  %v1906 = vsel %vm1410, %v1870, 0.0
  %1907 = vadd.xlane.f32.xlu0 %v1906
  %v1908 = vpop.xlane.xlu0 %1907
  %v1909 = vsel %vm1410, %v1872, 0.0
  %1910 = vadd.xlane.f32.xlu0 %v1909
  %v1911 = vpop.xlane.xlu0 %1910
  %v1912 = vsel %vm1410, %v1874, 0.0
  %1913 = vadd.xlane.f32.xlu0 %v1912
  %v1914 = vpop.xlane.xlu0 %1913
  %v1915 = vsel %vm1410, %v1876, 0.0
  %1916 = vadd.xlane.f32.xlu0 %v1915
  %v1917 = vpop.xlane.xlu0 %1916
  %v1918 = vsel %vm1410, %v1878, 0.0
  %1919 = vadd.xlane.f32.xlu0 %v1918
  %v1920 = vpop.xlane.xlu0 %1919
  %v1921 = vsel %vm1410, %v1880, 0.0
  %1922 = vadd.xlane.f32.xlu0 %v1921
  %v1923 = vpop.xlane.xlu0 %1922
  %v1924 = vsel %vm1410, %v1882, 0.0
  %1925 = vadd.xlane.f32.xlu0 %v1924
  %v1926 = vpop.xlane.xlu0 %1925
  %v1927 = vsel %vm1410, %v1884, 0.0
  %1928 = vadd.xlane.f32.xlu0 %v1927
  %v1929 = vpop.xlane.xlu0 %1928
  %v1930 = vsel %vm1410, %v1886, 0.0
  %1931 = vadd.xlane.f32.xlu0 %v1930
  %v1932 = vpop.xlane.xlu0 %1931
  %v1933 = vsel %vm1410, %v1888, 0.0
  %1934 = vadd.xlane.f32.xlu0 %v1933
  %v1935 = vpop.xlane.xlu0 %1934
  %v1936 = vsel %vm1410, %v1890, 0.0
  %1937 = vadd.xlane.f32.xlu0 %v1936
  %v1938 = vpop.xlane.xlu0 %1937
  %v1939 = vrcp.pop %v1893
  %v1940 = vmul.f32 %v1893, %v1939
  %v1941 = vsub.f32 1.0, %v1940
  %v1942 = vmul.f32 %v1939, %v1941
  %v1943 = vadd.f32 %v1939, %v1942
  %vm1944 = vweird.f32 %v1893
  %vm1945 = vweird.f32 %v1939
  %vm1946 = vmor %vm1944, %vm1945
  %v1947 = vsel %vm1946, %v1939, %v1943
  %v1948 = vand.u32 2147483647, %v1893
  %vm1949 = vcmp.eq.f32.partialorder %v1948, 8.507059e+37
  %v1950 = vand.u32 %v1893, 2147483648
  %v1951 = vor.u32 1.1754944e-38, %v1950
  %v1952 = vsel %vm1949, %v1951, %v1947
  %v1953 = vmul.f32 %v1860, %v1952
  %v1954 = vrcp.pop %v1896
  %v1955 = vmul.f32 %v1896, %v1954
  %v1956 = vsub.f32 1.0, %v1955
  %v1957 = vmul.f32 %v1954, %v1956
  %v1958 = vadd.f32 %v1954, %v1957
  %vm1959 = vweird.f32 %v1896
  %vm1960 = vweird.f32 %v1954
  %vm1961 = vmor %vm1959, %vm1960
  %v1962 = vsel %vm1961, %v1954, %v1958
  %v1963 = vand.u32 2147483647, %v1896
  %vm1964 = vcmp.eq.f32.partialorder %v1963, 8.507059e+37
  %v1965 = vand.u32 %v1896, 2147483648
  %v1966 = vor.u32 1.1754944e-38, %v1965
  %v1967 = vsel %vm1964, %v1966, %v1962
  %v1968 = vmul.f32 %v1862, %v1967
  %v1969 = vrcp.pop %v1899
  %v1970 = vmul.f32 %v1899, %v1969
  %v1971 = vsub.f32 1.0, %v1970
  %v1972 = vmul.f32 %v1969, %v1971
  %v1973 = vadd.f32 %v1969, %v1972
  %vm1974 = vweird.f32 %v1899
  %vm1975 = vweird.f32 %v1969
  %vm1976 = vmor %vm1974, %vm1975
  %v1977 = vsel %vm1976, %v1969, %v1973
  %v1978 = vand.u32 2147483647, %v1899
  %vm1979 = vcmp.eq.f32.partialorder %v1978, 8.507059e+37
  %v1980 = vand.u32 %v1899, 2147483648
  %v1981 = vor.u32 1.1754944e-38, %v1980
  %v1982 = vsel %vm1979, %v1981, %v1977
  %v1983 = vmul.f32 %v1864, %v1982
  %v1984 = vrcp.pop %v1902
  %v1985 = vmul.f32 %v1902, %v1984
  %v1986 = vsub.f32 1.0, %v1985
  %v1987 = vmul.f32 %v1984, %v1986
  %v1988 = vadd.f32 %v1984, %v1987
  %vm1989 = vweird.f32 %v1902
  %vm1990 = vweird.f32 %v1984
  %vm1991 = vmor %vm1989, %vm1990
  %v1992 = vsel %vm1991, %v1984, %v1988
  %v1993 = vand.u32 2147483647, %v1902
  %vm1994 = vcmp.eq.f32.partialorder %v1993, 8.507059e+37
  %v1995 = vand.u32 %v1902, 2147483648
  %v1996 = vor.u32 1.1754944e-38, %v1995
  %v1997 = vsel %vm1994, %v1996, %v1992
  %v1998 = vmul.f32 %v1866, %v1997
  %v1999 = vrcp.pop %v1905
  %v2000 = vmul.f32 %v1905, %v1999
  %v2001 = vsub.f32 1.0, %v2000
  %v2002 = vmul.f32 %v1999, %v2001
  %v2003 = vadd.f32 %v1999, %v2002
  %vm2004 = vweird.f32 %v1905
  %vm2005 = vweird.f32 %v1999
  %vm2006 = vmor %vm2004, %vm2005
  %v2007 = vsel %vm2006, %v1999, %v2003
  %v2008 = vand.u32 2147483647, %v1905
  %vm2009 = vcmp.eq.f32.partialorder %v2008, 8.507059e+37
  %v2010 = vand.u32 %v1905, 2147483648
  %v2011 = vor.u32 1.1754944e-38, %v2010
  %v2012 = vsel %vm2009, %v2011, %v2007
  %v2013 = vmul.f32 %v1868, %v2012
  %v2014 = vrcp.pop %v1908
  %v2015 = vmul.f32 %v1908, %v2014
  %v2016 = vsub.f32 1.0, %v2015
  %v2017 = vmul.f32 %v2014, %v2016
  %v2018 = vadd.f32 %v2014, %v2017
  %vm2019 = vweird.f32 %v1908
  %vm2020 = vweird.f32 %v2014
  %vm2021 = vmor %vm2019, %vm2020
  %v2022 = vsel %vm2021, %v2014, %v2018
  %v2023 = vand.u32 2147483647, %v1908
  %vm2024 = vcmp.eq.f32.partialorder %v2023, 8.507059e+37
  %v2025 = vand.u32 %v1908, 2147483648
  %v2026 = vor.u32 1.1754944e-38, %v2025
  %v2027 = vsel %vm2024, %v2026, %v2022
  %v2028 = vmul.f32 %v1870, %v2027
  %v2029 = vrcp.pop %v1911
  %v2030 = vmul.f32 %v1911, %v2029
  %v2031 = vsub.f32 1.0, %v2030
  %v2032 = vmul.f32 %v2029, %v2031
  %v2033 = vadd.f32 %v2029, %v2032
  %vm2034 = vweird.f32 %v1911
  %vm2035 = vweird.f32 %v2029
  %vm2036 = vmor %vm2034, %vm2035
  %v2037 = vsel %vm2036, %v2029, %v2033
  %v2038 = vand.u32 2147483647, %v1911
  %vm2039 = vcmp.eq.f32.partialorder %v2038, 8.507059e+37
  %v2040 = vand.u32 %v1911, 2147483648
  %v2041 = vor.u32 1.1754944e-38, %v2040
  %v2042 = vsel %vm2039, %v2041, %v2037
  %v2043 = vmul.f32 %v1872, %v2042
  %v2044 = vrcp.pop %v1914
  %v2045 = vmul.f32 %v1914, %v2044
  %v2046 = vsub.f32 1.0, %v2045
  %v2047 = vmul.f32 %v2044, %v2046
  %v2048 = vadd.f32 %v2044, %v2047
  %vm2049 = vweird.f32 %v1914
  %vm2050 = vweird.f32 %v2044
  %vm2051 = vmor %vm2049, %vm2050
  %v2052 = vsel %vm2051, %v2044, %v2048
  %v2053 = vand.u32 2147483647, %v1914
  %vm2054 = vcmp.eq.f32.partialorder %v2053, 8.507059e+37
  %v2055 = vand.u32 %v1914, 2147483648
  %v2056 = vor.u32 1.1754944e-38, %v2055
  %v2057 = vsel %vm2054, %v2056, %v2052
  %v2058 = vmul.f32 %v1874, %v2057
  %v2059 = vrcp.pop %v1917
  %v2060 = vmul.f32 %v1917, %v2059
  %v2061 = vsub.f32 1.0, %v2060
  %v2062 = vmul.f32 %v2059, %v2061
  %v2063 = vadd.f32 %v2059, %v2062
  %vm2064 = vweird.f32 %v1917
  %vm2065 = vweird.f32 %v2059
  %vm2066 = vmor %vm2064, %vm2065
  %v2067 = vsel %vm2066, %v2059, %v2063
  %v2068 = vand.u32 2147483647, %v1917
  %vm2069 = vcmp.eq.f32.partialorder %v2068, 8.507059e+37
  %v2070 = vand.u32 %v1917, 2147483648
  %v2071 = vor.u32 1.1754944e-38, %v2070
  %v2072 = vsel %vm2069, %v2071, %v2067
  %v2073 = vmul.f32 %v1876, %v2072
  %v2074 = vrcp.pop %v1920
  %v2075 = vmul.f32 %v1920, %v2074
  %v2076 = vsub.f32 1.0, %v2075
  %v2077 = vmul.f32 %v2074, %v2076
  %v2078 = vadd.f32 %v2074, %v2077
  %vm2079 = vweird.f32 %v1920
  %vm2080 = vweird.f32 %v2074
  %vm2081 = vmor %vm2079, %vm2080
  %v2082 = vsel %vm2081, %v2074, %v2078
  %v2083 = vand.u32 2147483647, %v1920
  %vm2084 = vcmp.eq.f32.partialorder %v2083, 8.507059e+37
  %v2085 = vand.u32 %v1920, 2147483648
  %v2086 = vor.u32 1.1754944e-38, %v2085
  %v2087 = vsel %vm2084, %v2086, %v2082
  %v2088 = vmul.f32 %v1878, %v2087
  %v2089 = vrcp.pop %v1923
  %v2090 = vmul.f32 %v1923, %v2089
  %v2091 = vsub.f32 1.0, %v2090
  %v2092 = vmul.f32 %v2089, %v2091
  %v2093 = vadd.f32 %v2089, %v2092
  %vm2094 = vweird.f32 %v1923
  %vm2095 = vweird.f32 %v2089
  %vm2096 = vmor %vm2094, %vm2095
  %v2097 = vsel %vm2096, %v2089, %v2093
  %v2098 = vand.u32 2147483647, %v1923
  %vm2099 = vcmp.eq.f32.partialorder %v2098, 8.507059e+37
  %v2100 = vand.u32 %v1923, 2147483648
  %v2101 = vor.u32 1.1754944e-38, %v2100
  %v2102 = vsel %vm2099, %v2101, %v2097
  %v2103 = vmul.f32 %v1880, %v2102
  %v2104 = vrcp.pop %v1926
  %v2105 = vmul.f32 %v1926, %v2104
  %v2106 = vsub.f32 1.0, %v2105
  %v2107 = vmul.f32 %v2104, %v2106
  %v2108 = vadd.f32 %v2104, %v2107
  %vm2109 = vweird.f32 %v1926
  %vm2110 = vweird.f32 %v2104
  %vm2111 = vmor %vm2109, %vm2110
  %v2112 = vsel %vm2111, %v2104, %v2108
  %v2113 = vand.u32 2147483647, %v1926
  %vm2114 = vcmp.eq.f32.partialorder %v2113, 8.507059e+37
  %v2115 = vand.u32 %v1926, 2147483648
  %v2116 = vor.u32 1.1754944e-38, %v2115
  %v2117 = vsel %vm2114, %v2116, %v2112
  %v2118 = vmul.f32 %v1882, %v2117
  %v2119 = vrcp.pop %v1929
  %v2120 = vmul.f32 %v1929, %v2119
  %v2121 = vsub.f32 1.0, %v2120
  %v2122 = vmul.f32 %v2119, %v2121
  %v2123 = vadd.f32 %v2119, %v2122
  %vm2124 = vweird.f32 %v1929
  %vm2125 = vweird.f32 %v2119
  %vm2126 = vmor %vm2124, %vm2125
  %v2127 = vsel %vm2126, %v2119, %v2123
  %v2128 = vand.u32 2147483647, %v1929
  %vm2129 = vcmp.eq.f32.partialorder %v2128, 8.507059e+37
  %v2130 = vand.u32 %v1929, 2147483648
  %v2131 = vor.u32 1.1754944e-38, %v2130
  %v2132 = vsel %vm2129, %v2131, %v2127
  %v2133 = vmul.f32 %v1884, %v2132
  %v2134 = vrcp.pop %v1932
  %v2135 = vmul.f32 %v1932, %v2134
  %v2136 = vsub.f32 1.0, %v2135
  %v2137 = vmul.f32 %v2134, %v2136
  %v2138 = vadd.f32 %v2134, %v2137
  %vm2139 = vweird.f32 %v1932
  %vm2140 = vweird.f32 %v2134
  %vm2141 = vmor %vm2139, %vm2140
  %v2142 = vsel %vm2141, %v2134, %v2138
  %v2143 = vand.u32 2147483647, %v1932
  %vm2144 = vcmp.eq.f32.partialorder %v2143, 8.507059e+37
  %v2145 = vand.u32 %v1932, 2147483648
  %v2146 = vor.u32 1.1754944e-38, %v2145
  %v2147 = vsel %vm2144, %v2146, %v2142
  %v2148 = vmul.f32 %v1886, %v2147
  %v2149 = vrcp.pop %v1935
  %v2150 = vmul.f32 %v1935, %v2149
  %v2151 = vsub.f32 1.0, %v2150
  %v2152 = vmul.f32 %v2149, %v2151
  %v2153 = vadd.f32 %v2149, %v2152
  %vm2154 = vweird.f32 %v1935
  %vm2155 = vweird.f32 %v2149
  %vm2156 = vmor %vm2154, %vm2155
  %v2157 = vsel %vm2156, %v2149, %v2153
  %v2158 = vand.u32 2147483647, %v1935
  %vm2159 = vcmp.eq.f32.partialorder %v2158, 8.507059e+37
  %v2160 = vand.u32 %v1935, 2147483648
  %v2161 = vor.u32 1.1754944e-38, %v2160
  %v2162 = vsel %vm2159, %v2161, %v2157
  %v2163 = vmul.f32 %v1888, %v2162
  %v2164 = vrcp.pop %v1938
  %v2165 = vmul.f32 %v1938, %v2164
  %v2166 = vsub.f32 1.0, %v2165
  %v2167 = vmul.f32 %v2164, %v2166
  %v2168 = vadd.f32 %v2164, %v2167
  %vm2169 = vweird.f32 %v1938
  %vm2170 = vweird.f32 %v2164
  %vm2171 = vmor %vm2169, %vm2170
  %v2172 = vsel %vm2171, %v2164, %v2168
  %v2173 = vand.u32 2147483647, %v1938
  %vm2174 = vcmp.eq.f32.partialorder %v2173, 8.507059e+37
  %v2175 = vand.u32 %v1938, 2147483648
  %v2176 = vor.u32 1.1754944e-38, %v2175
  %v2177 = vsel %vm2174, %v2176, %v2172
  %v2178 = vmul.f32 %v1890, %v2177
  %v2179 = vld [vmem:[%s10] sm:$0xf]
  %v2180 = vld [vmem:[%s10 + $0x4] sm:$0xf]
  %v2181 = vld [vmem:[%s10 + $0x8] sm:$0xf]
  %v2182 = vld [vmem:[%s10 + $0xc] sm:$0xf]
  %v2185 = vunpack.c.l.b16 %v2181
  %v2186 = vunpack.c.l.b16 %v2182
  %v2187 = vpack.c.b16 %v2186, %v2185
  %v2190 = vsel %vm131, %v119, 0
  %v2193 = vsel %vm131, %v120, 0
  %v2196 = vsel %vm131, %v121, 0
  %v2199 = vsel %vm131, %v122, 0
  %v2202 = vsel %vm131, %v123, 0
  %v2205 = vsel %vm131, %v124, 0
  %v2208 = vsel %vm131, %v125, 0
  %v2211 = vsel %vm131, %v126, 0
  %2213 = vmatpush.bf16.msra.mxu0 0
  %2214 = vmatpush.bf16.msra.mxu0 0
  %2215 = vmatpush.bf16.msra.mxu0 0
  %2216 = vmatpush.bf16.msra.mxu0 0
  %2217 = vmatpush.bf16.msra.mxu0 0
  %2218 = vmatpush.bf16.msra.mxu0 0
  %2219 = vmatpush.bf16.msra.mxu0 0
  %2220 = vmatpush.bf16.msra.mxu0 %v2187
  %2221 = vmatmul.bf16.gmra.mxu0 %v2190
  %v2222 = vpop.f32.mrf.mxu0
  %v2223 = vadd.f32 0.0, %v2222
  %v2224 = vpop.f32.mrf.mxu0
  %v2225 = vadd.f32 0.0, %v2224
  %2226 = vmatmul.bf16.gmra.mxu0 %v2193
  %v2227 = vpop.f32.mrf.mxu0
  %v2228 = vadd.f32 0.0, %v2227
  %v2229 = vpop.f32.mrf.mxu0
  %v2230 = vadd.f32 0.0, %v2229
  %2231 = vmatmul.bf16.gmra.mxu0 %v2196
  %v2232 = vpop.f32.mrf.mxu0
  %v2233 = vadd.f32 0.0, %v2232
  %v2234 = vpop.f32.mrf.mxu0
  %v2235 = vadd.f32 0.0, %v2234
  %2236 = vmatmul.bf16.gmra.mxu0 %v2199
  %v2237 = vpop.f32.mrf.mxu0
  %v2238 = vadd.f32 0.0, %v2237
  %v2239 = vpop.f32.mrf.mxu0
  %v2240 = vadd.f32 0.0, %v2239
  %2241 = vmatmul.bf16.gmra.mxu0 %v2202
  %v2242 = vpop.f32.mrf.mxu0
  %v2243 = vadd.f32 0.0, %v2242
  %v2244 = vpop.f32.mrf.mxu0
  %v2245 = vadd.f32 0.0, %v2244
  %2246 = vmatmul.bf16.gmra.mxu0 %v2205
  %v2247 = vpop.f32.mrf.mxu0
  %v2248 = vadd.f32 0.0, %v2247
  %v2249 = vpop.f32.mrf.mxu0
  %v2250 = vadd.f32 0.0, %v2249
  %2251 = vmatmul.bf16.gmra.mxu0 %v2208
  %v2252 = vpop.f32.mrf.mxu0
  %v2253 = vadd.f32 0.0, %v2252
  %v2254 = vpop.f32.mrf.mxu0
  %v2255 = vadd.f32 0.0, %v2254
  %2256 = vmatmul.bf16.gmra.mxu0 %v2211
  %v2257 = vpop.f32.mrf.mxu0
  %v2258 = vadd.f32 0.0, %v2257
  %v2259 = vpop.f32.mrf.mxu0
  %v2260 = vadd.f32 0.0, %v2259
  %2261 = vdwg.mxu0
  %v2264 = vunpack.c.l.b16 %v2179
  %v2265 = vunpack.c.l.b16 %v2180
  %v2266 = vpack.c.b16 %v2265, %v2264
  %v2269 = vsel %vm131, %v111, 0
  %v2272 = vsel %vm131, %v112, 0
  %v2275 = vsel %vm131, %v113, 0
  %v2278 = vsel %vm131, %v114, 0
  %v2281 = vsel %vm131, %v115, 0
  %v2284 = vsel %vm131, %v116, 0
  %v2287 = vsel %vm131, %v117, 0
  %v2290 = vsel %vm131, %v118, 0
  %2292 = vmatpush.bf16.msra.mxu0 0
  %2293 = vmatpush.bf16.msra.mxu0 0
  %2294 = vmatpush.bf16.msra.mxu0 0
  %2295 = vmatpush.bf16.msra.mxu0 0
  %2296 = vmatpush.bf16.msra.mxu0 0
  %2297 = vmatpush.bf16.msra.mxu0 0
  %2298 = vmatpush.bf16.msra.mxu0 0
  %2299 = vmatpush.bf16.msra.mxu0 %v2266
  %2300 = vmatmul.bf16.gmra.mxu0 %v2269
  %v2301 = vpop.f32.mrf.mxu0
  %v2302 = vadd.f32 %v2223, %v2301
  %v2303 = vpop.f32.mrf.mxu0
  %v2304 = vadd.f32 %v2225, %v2303
  %2305 = vmatmul.bf16.gmra.mxu0 %v2272
  %v2306 = vpop.f32.mrf.mxu0
  %v2307 = vadd.f32 %v2228, %v2306
  %v2308 = vpop.f32.mrf.mxu0
  %v2309 = vadd.f32 %v2230, %v2308
  %2310 = vmatmul.bf16.gmra.mxu0 %v2275
  %v2311 = vpop.f32.mrf.mxu0
  %v2312 = vadd.f32 %v2233, %v2311
  %v2313 = vpop.f32.mrf.mxu0
  %v2314 = vadd.f32 %v2235, %v2313
  %2315 = vmatmul.bf16.gmra.mxu0 %v2278
  %v2316 = vpop.f32.mrf.mxu0
  %v2317 = vadd.f32 %v2238, %v2316
  %v2318 = vpop.f32.mrf.mxu0
  %v2319 = vadd.f32 %v2240, %v2318
  %2320 = vmatmul.bf16.gmra.mxu0 %v2281
  %v2321 = vpop.f32.mrf.mxu0
  %v2322 = vadd.f32 %v2243, %v2321
  %v2323 = vpop.f32.mrf.mxu0
  %v2324 = vadd.f32 %v2245, %v2323
  %2325 = vmatmul.bf16.gmra.mxu0 %v2284
  %v2326 = vpop.f32.mrf.mxu0
  %v2327 = vadd.f32 %v2248, %v2326
  %v2328 = vpop.f32.mrf.mxu0
  %v2329 = vadd.f32 %v2250, %v2328
  %2330 = vmatmul.bf16.gmra.mxu0 %v2287
  %v2331 = vpop.f32.mrf.mxu0
  %v2332 = vadd.f32 %v2253, %v2331
  %v2333 = vpop.f32.mrf.mxu0
  %v2334 = vadd.f32 %v2255, %v2333
  %2335 = vmatmul.bf16.gmra.mxu0 %v2290
  %v2336 = vpop.f32.mrf.mxu0
  %v2337 = vadd.f32 %v2258, %v2336
  %v2338 = vpop.f32.mrf.mxu0
  %v2339 = vadd.f32 %v2260, %v2338
  %2340 = vdwg.mxu0
  %v2341 = vld [vmem:[%s11] sm:$0x1]
  %v2343 = vperm.slane %v2341, 0
  %v2345 = vadd.f32 %v2302, %v2343
  %v2346 = vadd.f32 %v2304, %v2343
  %v2347 = vadd.f32 %v2307, %v2343
  %v2348 = vadd.f32 %v2309, %v2343
  %v2349 = vadd.f32 %v2312, %v2343
  %v2350 = vadd.f32 %v2314, %v2343
  %v2351 = vadd.f32 %v2317, %v2343
  %v2352 = vadd.f32 %v2319, %v2343
  %v2353 = vadd.f32 %v2322, %v2343
  %v2354 = vadd.f32 %v2324, %v2343
  %v2355 = vadd.f32 %v2327, %v2343
  %v2356 = vadd.f32 %v2329, %v2343
  %v2357 = vadd.f32 %v2332, %v2343
  %v2358 = vadd.f32 %v2334, %v2343
  %v2359 = vadd.f32 %v2337, %v2343
  %v2360 = vadd.f32 %v2339, %v2343
  %v2361 = vxor.u32 %v2345, 2147483648
  %v2362 = vxor.u32 %v2346, 2147483648
  %v2363 = vxor.u32 %v2347, 2147483648
  %v2364 = vxor.u32 %v2348, 2147483648
  %v2365 = vxor.u32 %v2349, 2147483648
  %v2366 = vxor.u32 %v2350, 2147483648
  %v2367 = vxor.u32 %v2351, 2147483648
  %v2368 = vxor.u32 %v2352, 2147483648
  %v2369 = vxor.u32 %v2353, 2147483648
  %v2370 = vxor.u32 %v2354, 2147483648
  %v2371 = vxor.u32 %v2355, 2147483648
  %v2372 = vxor.u32 %v2356, 2147483648
  %v2373 = vxor.u32 %v2357, 2147483648
  %v2374 = vxor.u32 %v2358, 2147483648
  %v2375 = vxor.u32 %v2359, 2147483648
  %v2376 = vxor.u32 %v2360, 2147483648
  %v2377 = vmul.f32 %v2361, 1.442695
  %v2378 = vpow.pop %v2377
  %v2379 = vmul.f32 %v2362, 1.442695
  %v2380 = vpow.pop %v2379
  %v2381 = vmul.f32 %v2363, 1.442695
  %v2382 = vpow.pop %v2381
  %v2383 = vmul.f32 %v2364, 1.442695
  %v2384 = vpow.pop %v2383
  %v2385 = vmul.f32 %v2365, 1.442695
  %v2386 = vpow.pop %v2385
  %v2387 = vmul.f32 %v2366, 1.442695
  %v2388 = vpow.pop %v2387
  %v2389 = vmul.f32 %v2367, 1.442695
  %v2390 = vpow.pop %v2389
  %v2391 = vmul.f32 %v2368, 1.442695
  %v2392 = vpow.pop %v2391
  %v2393 = vmul.f32 %v2369, 1.442695
  %v2394 = vpow.pop %v2393
  %v2395 = vmul.f32 %v2370, 1.442695
  %v2396 = vpow.pop %v2395
  %v2397 = vmul.f32 %v2371, 1.442695
  %v2398 = vpow.pop %v2397
  %v2399 = vmul.f32 %v2372, 1.442695
  %v2400 = vpow.pop %v2399
  %v2401 = vmul.f32 %v2373, 1.442695
  %v2402 = vpow.pop %v2401
  %v2403 = vmul.f32 %v2374, 1.442695
  %v2404 = vpow.pop %v2403
  %v2405 = vmul.f32 %v2375, 1.442695
  %v2406 = vpow.pop %v2405
  %v2407 = vmul.f32 %v2376, 1.442695
  %v2408 = vpow.pop %v2407
  %v2409 = vadd.f32 %v2378, 1.0
  %v2410 = vadd.f32 %v2380, 1.0
  %v2411 = vadd.f32 %v2382, 1.0
  %v2412 = vadd.f32 %v2384, 1.0
  %v2413 = vadd.f32 %v2386, 1.0
  %v2414 = vadd.f32 %v2388, 1.0
  %v2415 = vadd.f32 %v2390, 1.0
  %v2416 = vadd.f32 %v2392, 1.0
  %v2417 = vadd.f32 %v2394, 1.0
  %v2418 = vadd.f32 %v2396, 1.0
  %v2419 = vadd.f32 %v2398, 1.0
  %v2420 = vadd.f32 %v2400, 1.0
  %v2421 = vadd.f32 %v2402, 1.0
  %v2422 = vadd.f32 %v2404, 1.0
  %v2423 = vadd.f32 %v2406, 1.0
  %v2424 = vadd.f32 %v2408, 1.0
  %v2425 = vrcp.pop %v2409
  %v2426 = vmul.f32 %v2409, %v2425
  %v2427 = vsub.f32 1.0, %v2426
  %v2428 = vmul.f32 %v2425, %v2427
  %v2429 = vadd.f32 %v2425, %v2428
  %vm2430 = vweird.f32 %v2409
  %vm2431 = vweird.f32 %v2425
  %vm2432 = vmor %vm2430, %vm2431
  %v2433 = vsel %vm2432, %v2425, %v2429
  %v2434 = vand.u32 2147483647, %v2409
  %vm2435 = vcmp.eq.f32.partialorder %v2434, 8.507059e+37
  %v2436 = vand.u32 %v2409, 2147483648
  %v2437 = vor.u32 1.1754944e-38, %v2436
  %v2438 = vsel %vm2435, %v2437, %v2433
  %v2439 = vmul.f32 1.0, %v2438
  %v2440 = vrcp.pop %v2410
  %v2441 = vmul.f32 %v2410, %v2440
  %v2442 = vsub.f32 1.0, %v2441
  %v2443 = vmul.f32 %v2440, %v2442
  %v2444 = vadd.f32 %v2440, %v2443
  %vm2445 = vweird.f32 %v2410
  %vm2446 = vweird.f32 %v2440
  %vm2447 = vmor %vm2445, %vm2446
  %v2448 = vsel %vm2447, %v2440, %v2444
  %v2449 = vand.u32 2147483647, %v2410
  %vm2450 = vcmp.eq.f32.partialorder %v2449, 8.507059e+37
  %v2451 = vand.u32 %v2410, 2147483648
  %v2452 = vor.u32 1.1754944e-38, %v2451
  %v2453 = vsel %vm2450, %v2452, %v2448
  %v2454 = vmul.f32 1.0, %v2453
  %v2455 = vrcp.pop %v2411
  %v2456 = vmul.f32 %v2411, %v2455
  %v2457 = vsub.f32 1.0, %v2456
  %v2458 = vmul.f32 %v2455, %v2457
  %v2459 = vadd.f32 %v2455, %v2458
  %vm2460 = vweird.f32 %v2411
  %vm2461 = vweird.f32 %v2455
  %vm2462 = vmor %vm2460, %vm2461
  %v2463 = vsel %vm2462, %v2455, %v2459
  %v2464 = vand.u32 2147483647, %v2411
  %vm2465 = vcmp.eq.f32.partialorder %v2464, 8.507059e+37
  %v2466 = vand.u32 %v2411, 2147483648
  %v2467 = vor.u32 1.1754944e-38, %v2466
  %v2468 = vsel %vm2465, %v2467, %v2463
  %v2469 = vmul.f32 1.0, %v2468
  %v2470 = vrcp.pop %v2412
  %v2471 = vmul.f32 %v2412, %v2470
  %v2472 = vsub.f32 1.0, %v2471
  %v2473 = vmul.f32 %v2470, %v2472
  %v2474 = vadd.f32 %v2470, %v2473
  %vm2475 = vweird.f32 %v2412
  %vm2476 = vweird.f32 %v2470
  %vm2477 = vmor %vm2475, %vm2476
  %v2478 = vsel %vm2477, %v2470, %v2474
  %v2479 = vand.u32 2147483647, %v2412
  %vm2480 = vcmp.eq.f32.partialorder %v2479, 8.507059e+37
  %v2481 = vand.u32 %v2412, 2147483648
  %v2482 = vor.u32 1.1754944e-38, %v2481
  %v2483 = vsel %vm2480, %v2482, %v2478
  %v2484 = vmul.f32 1.0, %v2483
  %v2485 = vrcp.pop %v2413
  %v2486 = vmul.f32 %v2413, %v2485
  %v2487 = vsub.f32 1.0, %v2486
  %v2488 = vmul.f32 %v2485, %v2487
  %v2489 = vadd.f32 %v2485, %v2488
  %vm2490 = vweird.f32 %v2413
  %vm2491 = vweird.f32 %v2485
  %vm2492 = vmor %vm2490, %vm2491
  %v2493 = vsel %vm2492, %v2485, %v2489
  %v2494 = vand.u32 2147483647, %v2413
  %vm2495 = vcmp.eq.f32.partialorder %v2494, 8.507059e+37
  %v2496 = vand.u32 %v2413, 2147483648
  %v2497 = vor.u32 1.1754944e-38, %v2496
  %v2498 = vsel %vm2495, %v2497, %v2493
  %v2499 = vmul.f32 1.0, %v2498
  %v2500 = vrcp.pop %v2414
  %v2501 = vmul.f32 %v2414, %v2500
  %v2502 = vsub.f32 1.0, %v2501
  %v2503 = vmul.f32 %v2500, %v2502
  %v2504 = vadd.f32 %v2500, %v2503
  %vm2505 = vweird.f32 %v2414
  %vm2506 = vweird.f32 %v2500
  %vm2507 = vmor %vm2505, %vm2506
  %v2508 = vsel %vm2507, %v2500, %v2504
  %v2509 = vand.u32 2147483647, %v2414
  %vm2510 = vcmp.eq.f32.partialorder %v2509, 8.507059e+37
  %v2511 = vand.u32 %v2414, 2147483648
  %v2512 = vor.u32 1.1754944e-38, %v2511
  %v2513 = vsel %vm2510, %v2512, %v2508
  %v2514 = vmul.f32 1.0, %v2513
  %v2515 = vrcp.pop %v2415
  %v2516 = vmul.f32 %v2415, %v2515
  %v2517 = vsub.f32 1.0, %v2516
  %v2518 = vmul.f32 %v2515, %v2517
  %v2519 = vadd.f32 %v2515, %v2518
  %vm2520 = vweird.f32 %v2415
  %vm2521 = vweird.f32 %v2515
  %vm2522 = vmor %vm2520, %vm2521
  %v2523 = vsel %vm2522, %v2515, %v2519
  %v2524 = vand.u32 2147483647, %v2415
  %vm2525 = vcmp.eq.f32.partialorder %v2524, 8.507059e+37
  %v2526 = vand.u32 %v2415, 2147483648
  %v2527 = vor.u32 1.1754944e-38, %v2526
  %v2528 = vsel %vm2525, %v2527, %v2523
  %v2529 = vmul.f32 1.0, %v2528
  %v2530 = vrcp.pop %v2416
  %v2531 = vmul.f32 %v2416, %v2530
  %v2532 = vsub.f32 1.0, %v2531
  %v2533 = vmul.f32 %v2530, %v2532
  %v2534 = vadd.f32 %v2530, %v2533
  %vm2535 = vweird.f32 %v2416
  %vm2536 = vweird.f32 %v2530
  %vm2537 = vmor %vm2535, %vm2536
  %v2538 = vsel %vm2537, %v2530, %v2534
  %v2539 = vand.u32 2147483647, %v2416
  %vm2540 = vcmp.eq.f32.partialorder %v2539, 8.507059e+37
  %v2541 = vand.u32 %v2416, 2147483648
  %v2542 = vor.u32 1.1754944e-38, %v2541
  %v2543 = vsel %vm2540, %v2542, %v2538
  %v2544 = vmul.f32 1.0, %v2543
  %v2545 = vrcp.pop %v2417
  %v2546 = vmul.f32 %v2417, %v2545
  %v2547 = vsub.f32 1.0, %v2546
  %v2548 = vmul.f32 %v2545, %v2547
  %v2549 = vadd.f32 %v2545, %v2548
  %vm2550 = vweird.f32 %v2417
  %vm2551 = vweird.f32 %v2545
  %vm2552 = vmor %vm2550, %vm2551
  %v2553 = vsel %vm2552, %v2545, %v2549
  %v2554 = vand.u32 2147483647, %v2417
  %vm2555 = vcmp.eq.f32.partialorder %v2554, 8.507059e+37
  %v2556 = vand.u32 %v2417, 2147483648
  %v2557 = vor.u32 1.1754944e-38, %v2556
  %v2558 = vsel %vm2555, %v2557, %v2553
  %v2559 = vmul.f32 1.0, %v2558
  %v2560 = vrcp.pop %v2418
  %v2561 = vmul.f32 %v2418, %v2560
  %v2562 = vsub.f32 1.0, %v2561
  %v2563 = vmul.f32 %v2560, %v2562
  %v2564 = vadd.f32 %v2560, %v2563
  %vm2565 = vweird.f32 %v2418
  %vm2566 = vweird.f32 %v2560
  %vm2567 = vmor %vm2565, %vm2566
  %v2568 = vsel %vm2567, %v2560, %v2564
  %v2569 = vand.u32 2147483647, %v2418
  %vm2570 = vcmp.eq.f32.partialorder %v2569, 8.507059e+37
  %v2571 = vand.u32 %v2418, 2147483648
  %v2572 = vor.u32 1.1754944e-38, %v2571
  %v2573 = vsel %vm2570, %v2572, %v2568
  %v2574 = vmul.f32 1.0, %v2573
  %v2575 = vrcp.pop %v2419
  %v2576 = vmul.f32 %v2419, %v2575
  %v2577 = vsub.f32 1.0, %v2576
  %v2578 = vmul.f32 %v2575, %v2577
  %v2579 = vadd.f32 %v2575, %v2578
  %vm2580 = vweird.f32 %v2419
  %vm2581 = vweird.f32 %v2575
  %vm2582 = vmor %vm2580, %vm2581
  %v2583 = vsel %vm2582, %v2575, %v2579
  %v2584 = vand.u32 2147483647, %v2419
  %vm2585 = vcmp.eq.f32.partialorder %v2584, 8.507059e+37
  %v2586 = vand.u32 %v2419, 2147483648
  %v2587 = vor.u32 1.1754944e-38, %v2586
  %v2588 = vsel %vm2585, %v2587, %v2583
  %v2589 = vmul.f32 1.0, %v2588
  %v2590 = vrcp.pop %v2420
  %v2591 = vmul.f32 %v2420, %v2590
  %v2592 = vsub.f32 1.0, %v2591
  %v2593 = vmul.f32 %v2590, %v2592
  %v2594 = vadd.f32 %v2590, %v2593
  %vm2595 = vweird.f32 %v2420
  %vm2596 = vweird.f32 %v2590
  %vm2597 = vmor %vm2595, %vm2596
  %v2598 = vsel %vm2597, %v2590, %v2594
  %v2599 = vand.u32 2147483647, %v2420
  %vm2600 = vcmp.eq.f32.partialorder %v2599, 8.507059e+37
  %v2601 = vand.u32 %v2420, 2147483648
  %v2602 = vor.u32 1.1754944e-38, %v2601
  %v2603 = vsel %vm2600, %v2602, %v2598
  %v2604 = vmul.f32 1.0, %v2603
  %v2605 = vrcp.pop %v2421
  %v2606 = vmul.f32 %v2421, %v2605
  %v2607 = vsub.f32 1.0, %v2606
  %v2608 = vmul.f32 %v2605, %v2607
  %v2609 = vadd.f32 %v2605, %v2608
  %vm2610 = vweird.f32 %v2421
  %vm2611 = vweird.f32 %v2605
  %vm2612 = vmor %vm2610, %vm2611
  %v2613 = vsel %vm2612, %v2605, %v2609
  %v2614 = vand.u32 2147483647, %v2421
  %vm2615 = vcmp.eq.f32.partialorder %v2614, 8.507059e+37
  %v2616 = vand.u32 %v2421, 2147483648
  %v2617 = vor.u32 1.1754944e-38, %v2616
  %v2618 = vsel %vm2615, %v2617, %v2613
  %v2619 = vmul.f32 1.0, %v2618
  %v2620 = vrcp.pop %v2422
  %v2621 = vmul.f32 %v2422, %v2620
  %v2622 = vsub.f32 1.0, %v2621
  %v2623 = vmul.f32 %v2620, %v2622
  %v2624 = vadd.f32 %v2620, %v2623
  %vm2625 = vweird.f32 %v2422
  %vm2626 = vweird.f32 %v2620
  %vm2627 = vmor %vm2625, %vm2626
  %v2628 = vsel %vm2627, %v2620, %v2624
  %v2629 = vand.u32 2147483647, %v2422
  %vm2630 = vcmp.eq.f32.partialorder %v2629, 8.507059e+37
  %v2631 = vand.u32 %v2422, 2147483648
  %v2632 = vor.u32 1.1754944e-38, %v2631
  %v2633 = vsel %vm2630, %v2632, %v2628
  %v2634 = vmul.f32 1.0, %v2633
  %v2635 = vrcp.pop %v2423
  %v2636 = vmul.f32 %v2423, %v2635
  %v2637 = vsub.f32 1.0, %v2636
  %v2638 = vmul.f32 %v2635, %v2637
  %v2639 = vadd.f32 %v2635, %v2638
  %vm2640 = vweird.f32 %v2423
  %vm2641 = vweird.f32 %v2635
  %vm2642 = vmor %vm2640, %vm2641
  %v2643 = vsel %vm2642, %v2635, %v2639
  %v2644 = vand.u32 2147483647, %v2423
  %vm2645 = vcmp.eq.f32.partialorder %v2644, 8.507059e+37
  %v2646 = vand.u32 %v2423, 2147483648
  %v2647 = vor.u32 1.1754944e-38, %v2646
  %v2648 = vsel %vm2645, %v2647, %v2643
  %v2649 = vmul.f32 1.0, %v2648
  %v2650 = vrcp.pop %v2424
  %v2651 = vmul.f32 %v2424, %v2650
  %v2652 = vsub.f32 1.0, %v2651
  %v2653 = vmul.f32 %v2650, %v2652
  %v2654 = vadd.f32 %v2650, %v2653
  %vm2655 = vweird.f32 %v2424
  %vm2656 = vweird.f32 %v2650
  %vm2657 = vmor %vm2655, %vm2656
  %v2658 = vsel %vm2657, %v2650, %v2654
  %v2659 = vand.u32 2147483647, %v2424
  %vm2660 = vcmp.eq.f32.partialorder %v2659, 8.507059e+37
  %v2661 = vand.u32 %v2424, 2147483648
  %v2662 = vor.u32 1.1754944e-38, %v2661
  %v2663 = vsel %vm2660, %v2662, %v2658
  %v2664 = vmul.f32 1.0, %v2663
  %v2665 = vmul.f32 %v2345, %v2439
  %v2666 = vmul.f32 %v2346, %v2454
  %v2667 = vmul.f32 %v2347, %v2469
  %v2668 = vmul.f32 %v2348, %v2484
  %v2669 = vmul.f32 %v2349, %v2499
  %v2670 = vmul.f32 %v2350, %v2514
  %v2671 = vmul.f32 %v2351, %v2529
  %v2672 = vmul.f32 %v2352, %v2544
  %v2673 = vmul.f32 %v2353, %v2559
  %v2674 = vmul.f32 %v2354, %v2574
  %v2675 = vmul.f32 %v2355, %v2589
  %v2676 = vmul.f32 %v2356, %v2604
  %v2677 = vmul.f32 %v2357, %v2619
  %v2678 = vmul.f32 %v2358, %v2634
  %v2679 = vmul.f32 %v2359, %v2649
  %v2680 = vmul.f32 %v2360, %v2664
  %v2681 = vpack.c.bf16 %v2666, %v2665
  %v2682 = vpack.c.bf16 %v2668, %v2667
  %v2683 = vpack.c.bf16 %v2670, %v2669
  %v2684 = vpack.c.bf16 %v2672, %v2671
  %v2685 = vpack.c.bf16 %v2674, %v2673
  %v2686 = vpack.c.bf16 %v2676, %v2675
  %v2687 = vpack.c.bf16 %v2678, %v2677
  %v2688 = vpack.c.bf16 %v2680, %v2679
  %v2689 = vld [vmem:[%s12] sm:$0xf]
  %v2690 = vld [vmem:[%s12 + $0x4] sm:$0xf]
  %v2691 = vld [vmem:[%s12 + $0x8] sm:$0xf]
  %v2692 = vld [vmem:[%s12 + $0xc] sm:$0xf]
  %v2693 = vld [vmem:[%s12 + $0x10] sm:$0xf]
  %v2694 = vld [vmem:[%s12 + $0x14] sm:$0xf]
  %v2695 = vld [vmem:[%s12 + $0x18] sm:$0xf]
  %v2696 = vld [vmem:[%s12 + $0x1c] sm:$0xf]
  %v2697 = vld [vmem:[%s13] sm:$0x1]
  %v2699 = vperm.slane %v2697, 0
  %v2709 = vunpack.c.l.b16 %v2689
  %v2710 = vunpack.c.l.b16 %v2690
  %v2711 = vunpack.c.l.b16 %v2691
  %v2712 = vunpack.c.l.b16 %v2692
  %v2713 = vunpack.c.l.b16 %v2693
  %v2714 = vunpack.c.l.b16 %v2694
  %v2715 = vunpack.c.l.b16 %v2695
  %v2716 = vunpack.c.l.b16 %v2696
  %v2717 = vpack.c.b16 %v2710, %v2709
  %v2718 = vpack.c.b16 %v2712, %v2711
  %v2719 = vpack.c.b16 %v2714, %v2713
  %v2720 = vpack.c.b16 %v2716, %v2715
  %vm2725 = vcmask 523264
  %v2727 = vsel %vm2725, %v2681, 0
  %v2730 = vsel %vm2725, %v2682, 0
  %v2733 = vsel %vm2725, %v2683, 0
  %v2736 = vsel %vm2725, %v2684, 0
  %v2739 = vsel %vm2725, %v2685, 0
  %v2742 = vsel %vm2725, %v2686, 0
  %v2745 = vsel %vm2725, %v2687, 0
  %v2748 = vsel %vm2725, %v2688, 0
  %2750 = vmatpush.bf16.msra.mxu0 0
  %2751 = vmatpush.bf16.msra.mxu0 0
  %2752 = vmatpush.bf16.msra.mxu0 0
  %2753 = vmatpush.bf16.msra.mxu0 0
  %2754 = vmatpush.bf16.msra.mxu0 %v2720
  %2755 = vmatpush.bf16.msra.mxu0 %v2719
  %2756 = vmatpush.bf16.msra.mxu0 %v2718
  %2757 = vmatpush.bf16.msra.mxu0 %v2717
  %2758 = vmatmul.bf16.gmra.mxu0 %v2727
  %v2759 = vpop.f32.mrf.mxu0
  %v2760 = vadd.f32 %v2699, %v2759
  %v2761 = vpop.f32.mrf.mxu0
  %v2762 = vadd.f32 %v2699, %v2761
  %2763 = vmatmul.bf16.gmra.mxu0 %v2730
  %v2764 = vpop.f32.mrf.mxu0
  %v2765 = vadd.f32 %v2699, %v2764
  %v2766 = vpop.f32.mrf.mxu0
  %v2767 = vadd.f32 %v2699, %v2766
  %2768 = vmatmul.bf16.gmra.mxu0 %v2733
  %v2769 = vpop.f32.mrf.mxu0
  %v2770 = vadd.f32 %v2699, %v2769
  %v2771 = vpop.f32.mrf.mxu0
  %v2772 = vadd.f32 %v2699, %v2771
  %2773 = vmatmul.bf16.gmra.mxu0 %v2736
  %v2774 = vpop.f32.mrf.mxu0
  %v2775 = vadd.f32 %v2699, %v2774
  %v2776 = vpop.f32.mrf.mxu0
  %v2777 = vadd.f32 %v2699, %v2776
  %2778 = vmatmul.bf16.gmra.mxu0 %v2739
  %v2779 = vpop.f32.mrf.mxu0
  %v2780 = vadd.f32 %v2699, %v2779
  %v2781 = vpop.f32.mrf.mxu0
  %v2782 = vadd.f32 %v2699, %v2781
  %2783 = vmatmul.bf16.gmra.mxu0 %v2742
  %v2784 = vpop.f32.mrf.mxu0
  %v2785 = vadd.f32 %v2699, %v2784
  %v2786 = vpop.f32.mrf.mxu0
  %v2787 = vadd.f32 %v2699, %v2786
  %2788 = vmatmul.bf16.gmra.mxu0 %v2745
  %v2789 = vpop.f32.mrf.mxu0
  %v2790 = vadd.f32 %v2699, %v2789
  %v2791 = vpop.f32.mrf.mxu0
  %v2792 = vadd.f32 %v2699, %v2791
  %2793 = vmatmul.bf16.gmra.mxu0 %v2748
  %v2794 = vpop.f32.mrf.mxu0
  %v2795 = vadd.f32 %v2699, %v2794
  %v2796 = vpop.f32.mrf.mxu0
  %v2797 = vadd.f32 %v2699, %v2796
  %2798 = vdwg.mxu0
  %v2799 = vxor.u32 %v2760, 2147483648
  %v2800 = vxor.u32 %v2762, 2147483648
  %v2801 = vxor.u32 %v2765, 2147483648
  %v2802 = vxor.u32 %v2767, 2147483648
  %v2803 = vxor.u32 %v2770, 2147483648
  %v2804 = vxor.u32 %v2772, 2147483648
  %v2805 = vxor.u32 %v2775, 2147483648
  %v2806 = vxor.u32 %v2777, 2147483648
  %v2807 = vxor.u32 %v2780, 2147483648
  %v2808 = vxor.u32 %v2782, 2147483648
  %v2809 = vxor.u32 %v2785, 2147483648
  %v2810 = vxor.u32 %v2787, 2147483648
  %v2811 = vxor.u32 %v2790, 2147483648
  %v2812 = vxor.u32 %v2792, 2147483648
  %v2813 = vxor.u32 %v2795, 2147483648
  %v2814 = vxor.u32 %v2797, 2147483648
  %v2815 = vmul.f32 %v2799, 1.442695
  %v2816 = vpow.pop %v2815
  %v2817 = vmul.f32 %v2800, 1.442695
  %v2818 = vpow.pop %v2817
  %v2819 = vmul.f32 %v2801, 1.442695
  %v2820 = vpow.pop %v2819
  %v2821 = vmul.f32 %v2802, 1.442695
  %v2822 = vpow.pop %v2821
  %v2823 = vmul.f32 %v2803, 1.442695
  %v2824 = vpow.pop %v2823
  %v2825 = vmul.f32 %v2804, 1.442695
  %v2826 = vpow.pop %v2825
  %v2827 = vmul.f32 %v2805, 1.442695
  %v2828 = vpow.pop %v2827
  %v2829 = vmul.f32 %v2806, 1.442695
  %v2830 = vpow.pop %v2829
  %v2831 = vmul.f32 %v2807, 1.442695
  %v2832 = vpow.pop %v2831
  %v2833 = vmul.f32 %v2808, 1.442695
  %v2834 = vpow.pop %v2833
  %v2835 = vmul.f32 %v2809, 1.442695
  %v2836 = vpow.pop %v2835
  %v2837 = vmul.f32 %v2810, 1.442695
  %v2838 = vpow.pop %v2837
  %v2839 = vmul.f32 %v2811, 1.442695
  %v2840 = vpow.pop %v2839
  %v2841 = vmul.f32 %v2812, 1.442695
  %v2842 = vpow.pop %v2841
  %v2843 = vmul.f32 %v2813, 1.442695
  %v2844 = vpow.pop %v2843
  %v2845 = vmul.f32 %v2814, 1.442695
  %v2846 = vpow.pop %v2845
  %v2847 = vadd.f32 %v2816, 1.0
  %v2848 = vadd.f32 %v2818, 1.0
  %v2849 = vadd.f32 %v2820, 1.0
  %v2850 = vadd.f32 %v2822, 1.0
  %v2851 = vadd.f32 %v2824, 1.0
  %v2852 = vadd.f32 %v2826, 1.0
  %v2853 = vadd.f32 %v2828, 1.0
  %v2854 = vadd.f32 %v2830, 1.0
  %v2855 = vadd.f32 %v2832, 1.0
  %v2856 = vadd.f32 %v2834, 1.0
  %v2857 = vadd.f32 %v2836, 1.0
  %v2858 = vadd.f32 %v2838, 1.0
  %v2859 = vadd.f32 %v2840, 1.0
  %v2860 = vadd.f32 %v2842, 1.0
  %v2861 = vadd.f32 %v2844, 1.0
  %v2862 = vadd.f32 %v2846, 1.0
  %v2863 = vrcp.pop %v2847
  %v2864 = vmul.f32 %v2847, %v2863
  %v2865 = vsub.f32 1.0, %v2864
  %v2866 = vmul.f32 %v2863, %v2865
  %v2867 = vadd.f32 %v2863, %v2866
  %vm2868 = vweird.f32 %v2847
  %vm2869 = vweird.f32 %v2863
  %vm2870 = vmor %vm2868, %vm2869
  %v2871 = vsel %vm2870, %v2863, %v2867
  %v2872 = vand.u32 2147483647, %v2847
  %vm2873 = vcmp.eq.f32.partialorder %v2872, 8.507059e+37
  %v2874 = vand.u32 %v2847, 2147483648
  %v2875 = vor.u32 1.1754944e-38, %v2874
  %v2876 = vsel %vm2873, %v2875, %v2871
  %v2877 = vmul.f32 1.0, %v2876
  %v2878 = vrcp.pop %v2848
  %v2879 = vmul.f32 %v2848, %v2878
  %v2880 = vsub.f32 1.0, %v2879
  %v2881 = vmul.f32 %v2878, %v2880
  %v2882 = vadd.f32 %v2878, %v2881
  %vm2883 = vweird.f32 %v2848
  %vm2884 = vweird.f32 %v2878
  %vm2885 = vmor %vm2883, %vm2884
  %v2886 = vsel %vm2885, %v2878, %v2882
  %v2887 = vand.u32 2147483647, %v2848
  %vm2888 = vcmp.eq.f32.partialorder %v2887, 8.507059e+37
  %v2889 = vand.u32 %v2848, 2147483648
  %v2890 = vor.u32 1.1754944e-38, %v2889
  %v2891 = vsel %vm2888, %v2890, %v2886
  %v2892 = vmul.f32 1.0, %v2891
  %v2893 = vrcp.pop %v2849
  %v2894 = vmul.f32 %v2849, %v2893
  %v2895 = vsub.f32 1.0, %v2894
  %v2896 = vmul.f32 %v2893, %v2895
  %v2897 = vadd.f32 %v2893, %v2896
  %vm2898 = vweird.f32 %v2849
  %vm2899 = vweird.f32 %v2893
  %vm2900 = vmor %vm2898, %vm2899
  %v2901 = vsel %vm2900, %v2893, %v2897
  %v2902 = vand.u32 2147483647, %v2849
  %vm2903 = vcmp.eq.f32.partialorder %v2902, 8.507059e+37
  %v2904 = vand.u32 %v2849, 2147483648
  %v2905 = vor.u32 1.1754944e-38, %v2904
  %v2906 = vsel %vm2903, %v2905, %v2901
  %v2907 = vmul.f32 1.0, %v2906
  %v2908 = vrcp.pop %v2850
  %v2909 = vmul.f32 %v2850, %v2908
  %v2910 = vsub.f32 1.0, %v2909
  %v2911 = vmul.f32 %v2908, %v2910
  %v2912 = vadd.f32 %v2908, %v2911
  %vm2913 = vweird.f32 %v2850
  %vm2914 = vweird.f32 %v2908
  %vm2915 = vmor %vm2913, %vm2914
  %v2916 = vsel %vm2915, %v2908, %v2912
  %v2917 = vand.u32 2147483647, %v2850
  %vm2918 = vcmp.eq.f32.partialorder %v2917, 8.507059e+37
  %v2919 = vand.u32 %v2850, 2147483648
  %v2920 = vor.u32 1.1754944e-38, %v2919
  %v2921 = vsel %vm2918, %v2920, %v2916
  %v2922 = vmul.f32 1.0, %v2921
  %v2923 = vrcp.pop %v2851
  %v2924 = vmul.f32 %v2851, %v2923
  %v2925 = vsub.f32 1.0, %v2924
  %v2926 = vmul.f32 %v2923, %v2925
  %v2927 = vadd.f32 %v2923, %v2926
  %vm2928 = vweird.f32 %v2851
  %vm2929 = vweird.f32 %v2923
  %vm2930 = vmor %vm2928, %vm2929
  %v2931 = vsel %vm2930, %v2923, %v2927
  %v2932 = vand.u32 2147483647, %v2851
  %vm2933 = vcmp.eq.f32.partialorder %v2932, 8.507059e+37
  %v2934 = vand.u32 %v2851, 2147483648
  %v2935 = vor.u32 1.1754944e-38, %v2934
  %v2936 = vsel %vm2933, %v2935, %v2931
  %v2937 = vmul.f32 1.0, %v2936
  %v2938 = vrcp.pop %v2852
  %v2939 = vmul.f32 %v2852, %v2938
  %v2940 = vsub.f32 1.0, %v2939
  %v2941 = vmul.f32 %v2938, %v2940
  %v2942 = vadd.f32 %v2938, %v2941
  %vm2943 = vweird.f32 %v2852
  %vm2944 = vweird.f32 %v2938
  %vm2945 = vmor %vm2943, %vm2944
  %v2946 = vsel %vm2945, %v2938, %v2942
  %v2947 = vand.u32 2147483647, %v2852
  %vm2948 = vcmp.eq.f32.partialorder %v2947, 8.507059e+37
  %v2949 = vand.u32 %v2852, 2147483648
  %v2950 = vor.u32 1.1754944e-38, %v2949
  %v2951 = vsel %vm2948, %v2950, %v2946
  %v2952 = vmul.f32 1.0, %v2951
  %v2953 = vrcp.pop %v2853
  %v2954 = vmul.f32 %v2853, %v2953
  %v2955 = vsub.f32 1.0, %v2954
  %v2956 = vmul.f32 %v2953, %v2955
  %v2957 = vadd.f32 %v2953, %v2956
  %vm2958 = vweird.f32 %v2853
  %vm2959 = vweird.f32 %v2953
  %vm2960 = vmor %vm2958, %vm2959
  %v2961 = vsel %vm2960, %v2953, %v2957
  %v2962 = vand.u32 2147483647, %v2853
  %vm2963 = vcmp.eq.f32.partialorder %v2962, 8.507059e+37
  %v2964 = vand.u32 %v2853, 2147483648
  %v2965 = vor.u32 1.1754944e-38, %v2964
  %v2966 = vsel %vm2963, %v2965, %v2961
  %v2967 = vmul.f32 1.0, %v2966
  %v2968 = vrcp.pop %v2854
  %v2969 = vmul.f32 %v2854, %v2968
  %v2970 = vsub.f32 1.0, %v2969
  %v2971 = vmul.f32 %v2968, %v2970
  %v2972 = vadd.f32 %v2968, %v2971
  %vm2973 = vweird.f32 %v2854
  %vm2974 = vweird.f32 %v2968
  %vm2975 = vmor %vm2973, %vm2974
  %v2976 = vsel %vm2975, %v2968, %v2972
  %v2977 = vand.u32 2147483647, %v2854
  %vm2978 = vcmp.eq.f32.partialorder %v2977, 8.507059e+37
  %v2979 = vand.u32 %v2854, 2147483648
  %v2980 = vor.u32 1.1754944e-38, %v2979
  %v2981 = vsel %vm2978, %v2980, %v2976
  %v2982 = vmul.f32 1.0, %v2981
  %v2983 = vrcp.pop %v2855
  %v2984 = vmul.f32 %v2855, %v2983
  %v2985 = vsub.f32 1.0, %v2984
  %v2986 = vmul.f32 %v2983, %v2985
  %v2987 = vadd.f32 %v2983, %v2986
  %vm2988 = vweird.f32 %v2855
  %vm2989 = vweird.f32 %v2983
  %vm2990 = vmor %vm2988, %vm2989
  %v2991 = vsel %vm2990, %v2983, %v2987
  %v2992 = vand.u32 2147483647, %v2855
  %vm2993 = vcmp.eq.f32.partialorder %v2992, 8.507059e+37
  %v2994 = vand.u32 %v2855, 2147483648
  %v2995 = vor.u32 1.1754944e-38, %v2994
  %v2996 = vsel %vm2993, %v2995, %v2991
  %v2997 = vmul.f32 1.0, %v2996
  %v2998 = vrcp.pop %v2856
  %v2999 = vmul.f32 %v2856, %v2998
  %v3000 = vsub.f32 1.0, %v2999
  %v3001 = vmul.f32 %v2998, %v3000
  %v3002 = vadd.f32 %v2998, %v3001
  %vm3003 = vweird.f32 %v2856
  %vm3004 = vweird.f32 %v2998
  %vm3005 = vmor %vm3003, %vm3004
  %v3006 = vsel %vm3005, %v2998, %v3002
  %v3007 = vand.u32 2147483647, %v2856
  %vm3008 = vcmp.eq.f32.partialorder %v3007, 8.507059e+37
  %v3009 = vand.u32 %v2856, 2147483648
  %v3010 = vor.u32 1.1754944e-38, %v3009
  %v3011 = vsel %vm3008, %v3010, %v3006
  %v3012 = vmul.f32 1.0, %v3011
  %v3013 = vrcp.pop %v2857
  %v3014 = vmul.f32 %v2857, %v3013
  %v3015 = vsub.f32 1.0, %v3014
  %v3016 = vmul.f32 %v3013, %v3015
  %v3017 = vadd.f32 %v3013, %v3016
  %vm3018 = vweird.f32 %v2857
  %vm3019 = vweird.f32 %v3013
  %vm3020 = vmor %vm3018, %vm3019
  %v3021 = vsel %vm3020, %v3013, %v3017
  %v3022 = vand.u32 2147483647, %v2857
  %vm3023 = vcmp.eq.f32.partialorder %v3022, 8.507059e+37
  %v3024 = vand.u32 %v2857, 2147483648
  %v3025 = vor.u32 1.1754944e-38, %v3024
  %v3026 = vsel %vm3023, %v3025, %v3021
  %v3027 = vmul.f32 1.0, %v3026
  %v3028 = vrcp.pop %v2858
  %v3029 = vmul.f32 %v2858, %v3028
  %v3030 = vsub.f32 1.0, %v3029
  %v3031 = vmul.f32 %v3028, %v3030
  %v3032 = vadd.f32 %v3028, %v3031
  %vm3033 = vweird.f32 %v2858
  %vm3034 = vweird.f32 %v3028
  %vm3035 = vmor %vm3033, %vm3034
  %v3036 = vsel %vm3035, %v3028, %v3032
  %v3037 = vand.u32 2147483647, %v2858
  %vm3038 = vcmp.eq.f32.partialorder %v3037, 8.507059e+37
  %v3039 = vand.u32 %v2858, 2147483648
  %v3040 = vor.u32 1.1754944e-38, %v3039
  %v3041 = vsel %vm3038, %v3040, %v3036
  %v3042 = vmul.f32 1.0, %v3041
  %v3043 = vrcp.pop %v2859
  %v3044 = vmul.f32 %v2859, %v3043
  %v3045 = vsub.f32 1.0, %v3044
  %v3046 = vmul.f32 %v3043, %v3045
  %v3047 = vadd.f32 %v3043, %v3046
  %vm3048 = vweird.f32 %v2859
  %vm3049 = vweird.f32 %v3043
  %vm3050 = vmor %vm3048, %vm3049
  %v3051 = vsel %vm3050, %v3043, %v3047
  %v3052 = vand.u32 2147483647, %v2859
  %vm3053 = vcmp.eq.f32.partialorder %v3052, 8.507059e+37
  %v3054 = vand.u32 %v2859, 2147483648
  %v3055 = vor.u32 1.1754944e-38, %v3054
  %v3056 = vsel %vm3053, %v3055, %v3051
  %v3057 = vmul.f32 1.0, %v3056
  %v3058 = vrcp.pop %v2860
  %v3059 = vmul.f32 %v2860, %v3058
  %v3060 = vsub.f32 1.0, %v3059
  %v3061 = vmul.f32 %v3058, %v3060
  %v3062 = vadd.f32 %v3058, %v3061
  %vm3063 = vweird.f32 %v2860
  %vm3064 = vweird.f32 %v3058
  %vm3065 = vmor %vm3063, %vm3064
  %v3066 = vsel %vm3065, %v3058, %v3062
  %v3067 = vand.u32 2147483647, %v2860
  %vm3068 = vcmp.eq.f32.partialorder %v3067, 8.507059e+37
  %v3069 = vand.u32 %v2860, 2147483648
  %v3070 = vor.u32 1.1754944e-38, %v3069
  %v3071 = vsel %vm3068, %v3070, %v3066
  %v3072 = vmul.f32 1.0, %v3071
  %v3073 = vrcp.pop %v2861
  %v3074 = vmul.f32 %v2861, %v3073
  %v3075 = vsub.f32 1.0, %v3074
  %v3076 = vmul.f32 %v3073, %v3075
  %v3077 = vadd.f32 %v3073, %v3076
  %vm3078 = vweird.f32 %v2861
  %vm3079 = vweird.f32 %v3073
  %vm3080 = vmor %vm3078, %vm3079
  %v3081 = vsel %vm3080, %v3073, %v3077
  %v3082 = vand.u32 2147483647, %v2861
  %vm3083 = vcmp.eq.f32.partialorder %v3082, 8.507059e+37
  %v3084 = vand.u32 %v2861, 2147483648
  %v3085 = vor.u32 1.1754944e-38, %v3084
  %v3086 = vsel %vm3083, %v3085, %v3081
  %v3087 = vmul.f32 1.0, %v3086
  %v3088 = vrcp.pop %v2862
  %v3089 = vmul.f32 %v2862, %v3088
  %v3090 = vsub.f32 1.0, %v3089
  %v3091 = vmul.f32 %v3088, %v3090
  %v3092 = vadd.f32 %v3088, %v3091
  %vm3093 = vweird.f32 %v2862
  %vm3094 = vweird.f32 %v3088
  %vm3095 = vmor %vm3093, %vm3094
  %v3096 = vsel %vm3095, %v3088, %v3092
  %v3097 = vand.u32 2147483647, %v2862
  %vm3098 = vcmp.eq.f32.partialorder %v3097, 8.507059e+37
  %v3099 = vand.u32 %v2862, 2147483648
  %v3100 = vor.u32 1.1754944e-38, %v3099
  %v3101 = vsel %vm3098, %v3100, %v3096
  %v3102 = vmul.f32 1.0, %v3101
  %v3103 = vmul.f32 %v2760, %v2877
  %v3104 = vmul.f32 %v2762, %v2892
  %v3105 = vmul.f32 %v2765, %v2907
  %v3106 = vmul.f32 %v2767, %v2922
  %v3107 = vmul.f32 %v2770, %v2937
  %v3108 = vmul.f32 %v2772, %v2952
  %v3109 = vmul.f32 %v2775, %v2967
  %v3110 = vmul.f32 %v2777, %v2982
  %v3111 = vmul.f32 %v2780, %v2997
  %v3112 = vmul.f32 %v2782, %v3012
  %v3113 = vmul.f32 %v2785, %v3027
  %v3114 = vmul.f32 %v2787, %v3042
  %v3115 = vmul.f32 %v2790, %v3057
  %v3116 = vmul.f32 %v2792, %v3072
  %v3117 = vmul.f32 %v2795, %v3087
  %v3118 = vmul.f32 %v2797, %v3102
  %v3119 = vlaneseq
  %v3120 = vand.u32 %v3119, 127
  %v3121 = vsel %vm1410, %v1569, -inf
  %3122 = vmax.xlane.f32.xlu0 %v3121
  %v3123 = vpop.xlane.xlu0 %3122
  %v3124 = vsel %vm1410, %v1584, -inf
  %3125 = vmax.xlane.f32.xlu0 %v3124
  %v3126 = vpop.xlane.xlu0 %3125
  %v3127 = vsel %vm1410, %v1599, -inf
  %3128 = vmax.xlane.f32.xlu0 %v3127
  %v3129 = vpop.xlane.xlu0 %3128
  %v3130 = vsel %vm1410, %v1614, -inf
  %3131 = vmax.xlane.f32.xlu0 %v3130
  %v3132 = vpop.xlane.xlu0 %3131
  %v3133 = vsel %vm1410, %v1629, -inf
  %3134 = vmax.xlane.f32.xlu0 %v3133
  %v3135 = vpop.xlane.xlu0 %3134
  %v3136 = vsel %vm1410, %v1644, -inf
  %3137 = vmax.xlane.f32.xlu0 %v3136
  %v3138 = vpop.xlane.xlu0 %3137
  %v3139 = vsel %vm1410, %v1659, -inf
  %3140 = vmax.xlane.f32.xlu0 %v3139
  %v3141 = vpop.xlane.xlu0 %3140
  %v3142 = vsel %vm1410, %v1674, -inf
  %3143 = vmax.xlane.f32.xlu0 %v3142
  %v3144 = vpop.xlane.xlu0 %3143
  %v3145 = vsel %vm1410, %v1689, -inf
  %3146 = vmax.xlane.f32.xlu0 %v3145
  %v3147 = vpop.xlane.xlu0 %3146
  %v3148 = vsel %vm1410, %v1704, -inf
  %3149 = vmax.xlane.f32.xlu0 %v3148
  %v3150 = vpop.xlane.xlu0 %3149
  %v3151 = vsel %vm1410, %v1719, -inf
  %3152 = vmax.xlane.f32.xlu0 %v3151
  %v3153 = vpop.xlane.xlu0 %3152
  %v3154 = vsel %vm1410, %v1734, -inf
  %3155 = vmax.xlane.f32.xlu0 %v3154
  %v3156 = vpop.xlane.xlu0 %3155
  %v3157 = vsel %vm1410, %v1749, -inf
  %3158 = vmax.xlane.f32.xlu0 %v3157
  %v3159 = vpop.xlane.xlu0 %3158
  %v3160 = vsel %vm1410, %v1764, -inf
  %3161 = vmax.xlane.f32.xlu0 %v3160
  %v3162 = vpop.xlane.xlu0 %3161
  %v3163 = vsel %vm1410, %v1779, -inf
  %3164 = vmax.xlane.f32.xlu0 %v3163
  %v3165 = vpop.xlane.xlu0 %3164
  %v3166 = vsel %vm1410, %v1794, -inf
  %3167 = vmax.xlane.f32.xlu0 %v3166
  %v3168 = vpop.xlane.xlu0 %3167
  %vm3169 = vcmp.eq.f32.partialorder %v1569, %v3123
  %vm3170 = vcmp.eq.f32.partialorder %v1584, %v3126
  %vm3171 = vcmp.eq.f32.partialorder %v1599, %v3129
  %vm3172 = vcmp.eq.f32.partialorder %v1614, %v3132
  %vm3173 = vcmp.eq.f32.partialorder %v1629, %v3135
  %vm3174 = vcmp.eq.f32.partialorder %v1644, %v3138
  %vm3175 = vcmp.eq.f32.partialorder %v1659, %v3141
  %vm3176 = vcmp.eq.f32.partialorder %v1674, %v3144
  %vm3177 = vcmp.eq.f32.partialorder %v1689, %v3147
  %vm3178 = vcmp.eq.f32.partialorder %v1704, %v3150
  %vm3179 = vcmp.eq.f32.partialorder %v1719, %v3153
  %vm3180 = vcmp.eq.f32.partialorder %v1734, %v3156
  %vm3181 = vcmp.eq.f32.partialorder %v1749, %v3159
  %vm3182 = vcmp.eq.f32.partialorder %v1764, %v3162
  %vm3183 = vcmp.eq.f32.partialorder %v1779, %v3165
  %vm3184 = vcmp.eq.f32.partialorder %v1794, %v3168
  %v3185 = vsel %vm3169, %v3120, 8
  %v3186 = vsel %vm3170, %v3120, 8
  %v3187 = vsel %vm3171, %v3120, 8
  %v3188 = vsel %vm3172, %v3120, 8
  %v3189 = vsel %vm3173, %v3120, 8
  %v3190 = vsel %vm3174, %v3120, 8
  %v3191 = vsel %vm3175, %v3120, 8
  %v3192 = vsel %vm3176, %v3120, 8
  %v3193 = vsel %vm3177, %v3120, 8
  %v3194 = vsel %vm3178, %v3120, 8
  %v3195 = vsel %vm3179, %v3120, 8
  %v3196 = vsel %vm3180, %v3120, 8
  %v3197 = vsel %vm3181, %v3120, 8
  %v3198 = vsel %vm3182, %v3120, 8
  %v3199 = vsel %vm3183, %v3120, 8
  %v3200 = vsel %vm3184, %v3120, 8
  %v3201 = vsel %vm1410, %v3185, 2147483647
  %v3202 = vand.u32 %v3201, 65535
  %v3203 = vshra.s32 %v3201, 16
  %v3204 = vcvt.s32.f32 %v3202
  %v3205 = vcvt.s32.f32 %v3203
  %3206 = vmin.xlane.f32.xlu0 %v3205
  %v3207 = vpop.xlane.xlu0 %3206
  %vm3208 = vcmp.eq.f32.partialorder %v3205, %v3207
  %v3209 = vsel %vm3208, %v3204, inf
  %3210 = vmin.xlane.f32.xlu0 %v3209
  %v3211 = vpop.xlane.xlu0 %3210
  %v3212 = vcvt.f32.s32 %v3211
  %v3213 = vcvt.f32.s32 %v3207
  %v3214 = vshll.u32 %v3213, 16
  %v3215 = vadd.s32 %v3214, %v3212
  %v3216 = vsel %vm1410, %v3186, 2147483647
  %v3217 = vand.u32 %v3216, 65535
  %v3218 = vshra.s32 %v3216, 16
  %v3219 = vcvt.s32.f32 %v3217
  %v3220 = vcvt.s32.f32 %v3218
  %3221 = vmin.xlane.f32.xlu0 %v3220
  %v3222 = vpop.xlane.xlu0 %3221
  %vm3223 = vcmp.eq.f32.partialorder %v3220, %v3222
  %v3224 = vsel %vm3223, %v3219, inf
  %3225 = vmin.xlane.f32.xlu0 %v3224
  %v3226 = vpop.xlane.xlu0 %3225
  %v3227 = vcvt.f32.s32 %v3226
  %v3228 = vcvt.f32.s32 %v3222
  %v3229 = vshll.u32 %v3228, 16
  %v3230 = vadd.s32 %v3229, %v3227
  %v3231 = vsel %vm1410, %v3187, 2147483647
  %v3232 = vand.u32 %v3231, 65535
  %v3233 = vshra.s32 %v3231, 16
  %v3234 = vcvt.s32.f32 %v3232
  %v3235 = vcvt.s32.f32 %v3233
  %3236 = vmin.xlane.f32.xlu0 %v3235
  %v3237 = vpop.xlane.xlu0 %3236
  %vm3238 = vcmp.eq.f32.partialorder %v3235, %v3237
  %v3239 = vsel %vm3238, %v3234, inf
  %3240 = vmin.xlane.f32.xlu0 %v3239
  %v3241 = vpop.xlane.xlu0 %3240
  %v3242 = vcvt.f32.s32 %v3241
  %v3243 = vcvt.f32.s32 %v3237
  %v3244 = vshll.u32 %v3243, 16
  %v3245 = vadd.s32 %v3244, %v3242
  %v3246 = vsel %vm1410, %v3188, 2147483647
  %v3247 = vand.u32 %v3246, 65535
  %v3248 = vshra.s32 %v3246, 16
  %v3249 = vcvt.s32.f32 %v3247
  %v3250 = vcvt.s32.f32 %v3248
  %3251 = vmin.xlane.f32.xlu0 %v3250
  %v3252 = vpop.xlane.xlu0 %3251
  %vm3253 = vcmp.eq.f32.partialorder %v3250, %v3252
  %v3254 = vsel %vm3253, %v3249, inf
  %3255 = vmin.xlane.f32.xlu0 %v3254
  %v3256 = vpop.xlane.xlu0 %3255
  %v3257 = vcvt.f32.s32 %v3256
  %v3258 = vcvt.f32.s32 %v3252
  %v3259 = vshll.u32 %v3258, 16
  %v3260 = vadd.s32 %v3259, %v3257
  %v3261 = vsel %vm1410, %v3189, 2147483647
  %v3262 = vand.u32 %v3261, 65535
  %v3263 = vshra.s32 %v3261, 16
  %v3264 = vcvt.s32.f32 %v3262
  %v3265 = vcvt.s32.f32 %v3263
  %3266 = vmin.xlane.f32.xlu0 %v3265
  %v3267 = vpop.xlane.xlu0 %3266
  %vm3268 = vcmp.eq.f32.partialorder %v3265, %v3267
  %v3269 = vsel %vm3268, %v3264, inf
  %3270 = vmin.xlane.f32.xlu0 %v3269
  %v3271 = vpop.xlane.xlu0 %3270
  %v3272 = vcvt.f32.s32 %v3271
  %v3273 = vcvt.f32.s32 %v3267
  %v3274 = vshll.u32 %v3273, 16
  %v3275 = vadd.s32 %v3274, %v3272
  %v3276 = vsel %vm1410, %v3190, 2147483647
  %v3277 = vand.u32 %v3276, 65535
  %v3278 = vshra.s32 %v3276, 16
  %v3279 = vcvt.s32.f32 %v3277
  %v3280 = vcvt.s32.f32 %v3278
  %3281 = vmin.xlane.f32.xlu0 %v3280
  %v3282 = vpop.xlane.xlu0 %3281
  %vm3283 = vcmp.eq.f32.partialorder %v3280, %v3282
  %v3284 = vsel %vm3283, %v3279, inf
  %3285 = vmin.xlane.f32.xlu0 %v3284
  %v3286 = vpop.xlane.xlu0 %3285
  %v3287 = vcvt.f32.s32 %v3286
  %v3288 = vcvt.f32.s32 %v3282
  %v3289 = vshll.u32 %v3288, 16
  %v3290 = vadd.s32 %v3289, %v3287
  %v3291 = vsel %vm1410, %v3191, 2147483647
  %v3292 = vand.u32 %v3291, 65535
  %v3293 = vshra.s32 %v3291, 16
  %v3294 = vcvt.s32.f32 %v3292
  %v3295 = vcvt.s32.f32 %v3293
  %3296 = vmin.xlane.f32.xlu0 %v3295
  %v3297 = vpop.xlane.xlu0 %3296
  %vm3298 = vcmp.eq.f32.partialorder %v3295, %v3297
  %v3299 = vsel %vm3298, %v3294, inf
  %3300 = vmin.xlane.f32.xlu0 %v3299
  %v3301 = vpop.xlane.xlu0 %3300
  %v3302 = vcvt.f32.s32 %v3301
  %v3303 = vcvt.f32.s32 %v3297
  %v3304 = vshll.u32 %v3303, 16
  %v3305 = vadd.s32 %v3304, %v3302
  %v3306 = vsel %vm1410, %v3192, 2147483647
  %v3307 = vand.u32 %v3306, 65535
  %v3308 = vshra.s32 %v3306, 16
  %v3309 = vcvt.s32.f32 %v3307
  %v3310 = vcvt.s32.f32 %v3308
  %3311 = vmin.xlane.f32.xlu0 %v3310
  %v3312 = vpop.xlane.xlu0 %3311
  %vm3313 = vcmp.eq.f32.partialorder %v3310, %v3312
  %v3314 = vsel %vm3313, %v3309, inf
  %3315 = vmin.xlane.f32.xlu0 %v3314
  %v3316 = vpop.xlane.xlu0 %3315
  %v3317 = vcvt.f32.s32 %v3316
  %v3318 = vcvt.f32.s32 %v3312
  %v3319 = vshll.u32 %v3318, 16
  %v3320 = vadd.s32 %v3319, %v3317
  %v3321 = vsel %vm1410, %v3193, 2147483647
  %v3322 = vand.u32 %v3321, 65535
  %v3323 = vshra.s32 %v3321, 16
  %v3324 = vcvt.s32.f32 %v3322
  %v3325 = vcvt.s32.f32 %v3323
  %3326 = vmin.xlane.f32.xlu0 %v3325
  %v3327 = vpop.xlane.xlu0 %3326
  %vm3328 = vcmp.eq.f32.partialorder %v3325, %v3327
  %v3329 = vsel %vm3328, %v3324, inf
  %3330 = vmin.xlane.f32.xlu0 %v3329
  %v3331 = vpop.xlane.xlu0 %3330
  %v3332 = vcvt.f32.s32 %v3331
  %v3333 = vcvt.f32.s32 %v3327
  %v3334 = vshll.u32 %v3333, 16
  %v3335 = vadd.s32 %v3334, %v3332
  %v3336 = vsel %vm1410, %v3194, 2147483647
  %v3337 = vand.u32 %v3336, 65535
  %v3338 = vshra.s32 %v3336, 16
  %v3339 = vcvt.s32.f32 %v3337
  %v3340 = vcvt.s32.f32 %v3338
  %3341 = vmin.xlane.f32.xlu0 %v3340
  %v3342 = vpop.xlane.xlu0 %3341
  %vm3343 = vcmp.eq.f32.partialorder %v3340, %v3342
  %v3344 = vsel %vm3343, %v3339, inf
  %3345 = vmin.xlane.f32.xlu0 %v3344
  %v3346 = vpop.xlane.xlu0 %3345
  %v3347 = vcvt.f32.s32 %v3346
  %v3348 = vcvt.f32.s32 %v3342
  %v3349 = vshll.u32 %v3348, 16
  %v3350 = vadd.s32 %v3349, %v3347
  %v3351 = vsel %vm1410, %v3195, 2147483647
  %v3352 = vand.u32 %v3351, 65535
  %v3353 = vshra.s32 %v3351, 16
  %v3354 = vcvt.s32.f32 %v3352
  %v3355 = vcvt.s32.f32 %v3353
  %3356 = vmin.xlane.f32.xlu0 %v3355
  %v3357 = vpop.xlane.xlu0 %3356
  %vm3358 = vcmp.eq.f32.partialorder %v3355, %v3357
  %v3359 = vsel %vm3358, %v3354, inf
  %3360 = vmin.xlane.f32.xlu0 %v3359
  %v3361 = vpop.xlane.xlu0 %3360
  %v3362 = vcvt.f32.s32 %v3361
  %v3363 = vcvt.f32.s32 %v3357
  %v3364 = vshll.u32 %v3363, 16
  %v3365 = vadd.s32 %v3364, %v3362
  %v3366 = vsel %vm1410, %v3196, 2147483647
  %v3367 = vand.u32 %v3366, 65535
  %v3368 = vshra.s32 %v3366, 16
  %v3369 = vcvt.s32.f32 %v3367
  %v3370 = vcvt.s32.f32 %v3368
  %3371 = vmin.xlane.f32.xlu0 %v3370
  %v3372 = vpop.xlane.xlu0 %3371
  %vm3373 = vcmp.eq.f32.partialorder %v3370, %v3372
  %v3374 = vsel %vm3373, %v3369, inf
  %3375 = vmin.xlane.f32.xlu0 %v3374
  %v3376 = vpop.xlane.xlu0 %3375
  %v3377 = vcvt.f32.s32 %v3376
  %v3378 = vcvt.f32.s32 %v3372
  %v3379 = vshll.u32 %v3378, 16
  %v3380 = vadd.s32 %v3379, %v3377
  %v3381 = vsel %vm1410, %v3197, 2147483647
  %v3382 = vand.u32 %v3381, 65535
  %v3383 = vshra.s32 %v3381, 16
  %v3384 = vcvt.s32.f32 %v3382
  %v3385 = vcvt.s32.f32 %v3383
  %3386 = vmin.xlane.f32.xlu0 %v3385
  %v3387 = vpop.xlane.xlu0 %3386
  %vm3388 = vcmp.eq.f32.partialorder %v3385, %v3387
  %v3389 = vsel %vm3388, %v3384, inf
  %3390 = vmin.xlane.f32.xlu0 %v3389
  %v3391 = vpop.xlane.xlu0 %3390
  %v3392 = vcvt.f32.s32 %v3391
  %v3393 = vcvt.f32.s32 %v3387
  %v3394 = vshll.u32 %v3393, 16
  %v3395 = vadd.s32 %v3394, %v3392
  %v3396 = vsel %vm1410, %v3198, 2147483647
  %v3397 = vand.u32 %v3396, 65535
  %v3398 = vshra.s32 %v3396, 16
  %v3399 = vcvt.s32.f32 %v3397
  %v3400 = vcvt.s32.f32 %v3398
  %3401 = vmin.xlane.f32.xlu0 %v3400
  %v3402 = vpop.xlane.xlu0 %3401
  %vm3403 = vcmp.eq.f32.partialorder %v3400, %v3402
  %v3404 = vsel %vm3403, %v3399, inf
  %3405 = vmin.xlane.f32.xlu0 %v3404
  %v3406 = vpop.xlane.xlu0 %3405
  %v3407 = vcvt.f32.s32 %v3406
  %v3408 = vcvt.f32.s32 %v3402
  %v3409 = vshll.u32 %v3408, 16
  %v3410 = vadd.s32 %v3409, %v3407
  %v3411 = vsel %vm1410, %v3199, 2147483647
  %v3412 = vand.u32 %v3411, 65535
  %v3413 = vshra.s32 %v3411, 16
  %v3414 = vcvt.s32.f32 %v3412
  %v3415 = vcvt.s32.f32 %v3413
  %3416 = vmin.xlane.f32.xlu0 %v3415
  %v3417 = vpop.xlane.xlu0 %3416
  %vm3418 = vcmp.eq.f32.partialorder %v3415, %v3417
  %v3419 = vsel %vm3418, %v3414, inf
  %3420 = vmin.xlane.f32.xlu0 %v3419
  %v3421 = vpop.xlane.xlu0 %3420
  %v3422 = vcvt.f32.s32 %v3421
  %v3423 = vcvt.f32.s32 %v3417
  %v3424 = vshll.u32 %v3423, 16
  %v3425 = vadd.s32 %v3424, %v3422
  %v3426 = vsel %vm1410, %v3200, 2147483647
  %v3427 = vand.u32 %v3426, 65535
  %v3428 = vshra.s32 %v3426, 16
  %v3429 = vcvt.s32.f32 %v3427
  %v3430 = vcvt.s32.f32 %v3428
  %3431 = vmin.xlane.f32.xlu0 %v3430
  %v3432 = vpop.xlane.xlu0 %3431
  %vm3433 = vcmp.eq.f32.partialorder %v3430, %v3432
  %v3434 = vsel %vm3433, %v3429, inf
  %3435 = vmin.xlane.f32.xlu0 %v3434
  %v3436 = vpop.xlane.xlu0 %3435
  %v3437 = vcvt.f32.s32 %v3436
  %v3438 = vcvt.f32.s32 %v3432
  %v3439 = vshll.u32 %v3438, 16
  %v3440 = vadd.s32 %v3439, %v3437
  %vm3441 = vcmp.eq.s32.totalorder %v3120, %v3215
  %vm3442 = vcmp.eq.s32.totalorder %v3120, %v3230
  %vm3443 = vcmp.eq.s32.totalorder %v3120, %v3245
  %vm3444 = vcmp.eq.s32.totalorder %v3120, %v3260
  %vm3445 = vcmp.eq.s32.totalorder %v3120, %v3275
  %vm3446 = vcmp.eq.s32.totalorder %v3120, %v3290
  %vm3447 = vcmp.eq.s32.totalorder %v3120, %v3305
  %vm3448 = vcmp.eq.s32.totalorder %v3120, %v3320
  %vm3449 = vcmp.eq.s32.totalorder %v3120, %v3335
  %vm3450 = vcmp.eq.s32.totalorder %v3120, %v3350
  %vm3451 = vcmp.eq.s32.totalorder %v3120, %v3365
  %vm3452 = vcmp.eq.s32.totalorder %v3120, %v3380
  %vm3453 = vcmp.eq.s32.totalorder %v3120, %v3395
  %vm3454 = vcmp.eq.s32.totalorder %v3120, %v3410
  %vm3455 = vcmp.eq.s32.totalorder %v3120, %v3425
  %vm3456 = vcmp.eq.s32.totalorder %v3120, %v3440
  %v3457 = vsel %vm3441, %v1569, 0.0
  %v3458 = vsel %vm3442, %v1584, 0.0
  %v3459 = vsel %vm3443, %v1599, 0.0
  %v3460 = vsel %vm3444, %v1614, 0.0
  %v3461 = vsel %vm3445, %v1629, 0.0
  %v3462 = vsel %vm3446, %v1644, 0.0
  %v3463 = vsel %vm3447, %v1659, 0.0
  %v3464 = vsel %vm3448, %v1674, 0.0
  %v3465 = vsel %vm3449, %v1689, 0.0
  %v3466 = vsel %vm3450, %v1704, 0.0
  %v3467 = vsel %vm3451, %v1719, 0.0
  %v3468 = vsel %vm3452, %v1734, 0.0
  %v3469 = vsel %vm3453, %v1749, 0.0
  %v3470 = vsel %vm3454, %v1764, 0.0
  %v3471 = vsel %vm3455, %v1779, 0.0
  %v3472 = vsel %vm3456, %v1794, 0.0
  %v3473 = vsel %vm3441, -inf, %v1569
  %v3474 = vsel %vm3442, -inf, %v1584
  %v3475 = vsel %vm3443, -inf, %v1599
  %v3476 = vsel %vm3444, -inf, %v1614
  %v3477 = vsel %vm3445, -inf, %v1629
  %v3478 = vsel %vm3446, -inf, %v1644
  %v3479 = vsel %vm3447, -inf, %v1659
  %v3480 = vsel %vm3448, -inf, %v1674
  %v3481 = vsel %vm3449, -inf, %v1689
  %v3482 = vsel %vm3450, -inf, %v1704
  %v3483 = vsel %vm3451, -inf, %v1719
  %v3484 = vsel %vm3452, -inf, %v1734
  %v3485 = vsel %vm3453, -inf, %v1749
  %v3486 = vsel %vm3454, -inf, %v1764
  %v3487 = vsel %vm3455, -inf, %v1779
  %v3488 = vsel %vm3456, -inf, %v1794
  %v3489 = vsel %vm1410, %v3473, -inf
  %3490 = vmax.xlane.f32.xlu0 %v3489
  %v3491 = vpop.xlane.xlu0 %3490
  %v3492 = vsel %vm1410, %v3474, -inf
  %3493 = vmax.xlane.f32.xlu0 %v3492
  %v3494 = vpop.xlane.xlu0 %3493
  %v3495 = vsel %vm1410, %v3475, -inf
  %3496 = vmax.xlane.f32.xlu0 %v3495
  %v3497 = vpop.xlane.xlu0 %3496
  %v3498 = vsel %vm1410, %v3476, -inf
  %3499 = vmax.xlane.f32.xlu0 %v3498
  %v3500 = vpop.xlane.xlu0 %3499
  %v3501 = vsel %vm1410, %v3477, -inf
  %3502 = vmax.xlane.f32.xlu0 %v3501
  %v3503 = vpop.xlane.xlu0 %3502
  %v3504 = vsel %vm1410, %v3478, -inf
  %3505 = vmax.xlane.f32.xlu0 %v3504
  %v3506 = vpop.xlane.xlu0 %3505
  %v3507 = vsel %vm1410, %v3479, -inf
  %3508 = vmax.xlane.f32.xlu0 %v3507
  %v3509 = vpop.xlane.xlu0 %3508
  %v3510 = vsel %vm1410, %v3480, -inf
  %3511 = vmax.xlane.f32.xlu0 %v3510
  %v3512 = vpop.xlane.xlu0 %3511
  %v3513 = vsel %vm1410, %v3481, -inf
  %3514 = vmax.xlane.f32.xlu0 %v3513
  %v3515 = vpop.xlane.xlu0 %3514
  %v3516 = vsel %vm1410, %v3482, -inf
  %3517 = vmax.xlane.f32.xlu0 %v3516
  %v3518 = vpop.xlane.xlu0 %3517
  %v3519 = vsel %vm1410, %v3483, -inf
  %3520 = vmax.xlane.f32.xlu0 %v3519
  %v3521 = vpop.xlane.xlu0 %3520
  %v3522 = vsel %vm1410, %v3484, -inf
  %3523 = vmax.xlane.f32.xlu0 %v3522
  %v3524 = vpop.xlane.xlu0 %3523
  %v3525 = vsel %vm1410, %v3485, -inf
  %3526 = vmax.xlane.f32.xlu0 %v3525
  %v3527 = vpop.xlane.xlu0 %3526
  %v3528 = vsel %vm1410, %v3486, -inf
  %3529 = vmax.xlane.f32.xlu0 %v3528
  %v3530 = vpop.xlane.xlu0 %3529
  %v3531 = vsel %vm1410, %v3487, -inf
  %3532 = vmax.xlane.f32.xlu0 %v3531
  %v3533 = vpop.xlane.xlu0 %3532
  %v3534 = vsel %vm1410, %v3488, -inf
  %3535 = vmax.xlane.f32.xlu0 %v3534
  %v3536 = vpop.xlane.xlu0 %3535
  %vm3537 = vcmp.eq.f32.partialorder %v3473, %v3491
  %vm3538 = vcmp.eq.f32.partialorder %v3474, %v3494
  %vm3539 = vcmp.eq.f32.partialorder %v3475, %v3497
  %vm3540 = vcmp.eq.f32.partialorder %v3476, %v3500
  %vm3541 = vcmp.eq.f32.partialorder %v3477, %v3503
  %vm3542 = vcmp.eq.f32.partialorder %v3478, %v3506
  %vm3543 = vcmp.eq.f32.partialorder %v3479, %v3509
  %vm3544 = vcmp.eq.f32.partialorder %v3480, %v3512
  %vm3545 = vcmp.eq.f32.partialorder %v3481, %v3515
  %vm3546 = vcmp.eq.f32.partialorder %v3482, %v3518
  %vm3547 = vcmp.eq.f32.partialorder %v3483, %v3521
  %vm3548 = vcmp.eq.f32.partialorder %v3484, %v3524
  %vm3549 = vcmp.eq.f32.partialorder %v3485, %v3527
  %vm3550 = vcmp.eq.f32.partialorder %v3486, %v3530
  %vm3551 = vcmp.eq.f32.partialorder %v3487, %v3533
  %vm3552 = vcmp.eq.f32.partialorder %v3488, %v3536
  %v3553 = vsel %vm3537, %v3120, 8
  %v3554 = vsel %vm3538, %v3120, 8
  %v3555 = vsel %vm3539, %v3120, 8
  %v3556 = vsel %vm3540, %v3120, 8
  %v3557 = vsel %vm3541, %v3120, 8
  %v3558 = vsel %vm3542, %v3120, 8
  %v3559 = vsel %vm3543, %v3120, 8
  %v3560 = vsel %vm3544, %v3120, 8
  %v3561 = vsel %vm3545, %v3120, 8
  %v3562 = vsel %vm3546, %v3120, 8
  %v3563 = vsel %vm3547, %v3120, 8
  %v3564 = vsel %vm3548, %v3120, 8
  %v3565 = vsel %vm3549, %v3120, 8
  %v3566 = vsel %vm3550, %v3120, 8
  %v3567 = vsel %vm3551, %v3120, 8
  %v3568 = vsel %vm3552, %v3120, 8
  %v3569 = vsel %vm1410, %v3553, 2147483647
  %v3570 = vand.u32 %v3569, 65535
  %v3571 = vshra.s32 %v3569, 16
  %v3572 = vcvt.s32.f32 %v3570
  %v3573 = vcvt.s32.f32 %v3571
  %3574 = vmin.xlane.f32.xlu0 %v3573
  %v3575 = vpop.xlane.xlu0 %3574
  %vm3576 = vcmp.eq.f32.partialorder %v3573, %v3575
  %v3577 = vsel %vm3576, %v3572, inf
  %3578 = vmin.xlane.f32.xlu0 %v3577
  %v3579 = vpop.xlane.xlu0 %3578
  %v3580 = vcvt.f32.s32 %v3579
  %v3581 = vcvt.f32.s32 %v3575
  %v3582 = vshll.u32 %v3581, 16
  %v3583 = vadd.s32 %v3582, %v3580
  %v3584 = vsel %vm1410, %v3554, 2147483647
  %v3585 = vand.u32 %v3584, 65535
  %v3586 = vshra.s32 %v3584, 16
  %v3587 = vcvt.s32.f32 %v3585
  %v3588 = vcvt.s32.f32 %v3586
  %3589 = vmin.xlane.f32.xlu0 %v3588
  %v3590 = vpop.xlane.xlu0 %3589
  %vm3591 = vcmp.eq.f32.partialorder %v3588, %v3590
  %v3592 = vsel %vm3591, %v3587, inf
  %3593 = vmin.xlane.f32.xlu0 %v3592
  %v3594 = vpop.xlane.xlu0 %3593
  %v3595 = vcvt.f32.s32 %v3594
  %v3596 = vcvt.f32.s32 %v3590
  %v3597 = vshll.u32 %v3596, 16
  %v3598 = vadd.s32 %v3597, %v3595
  %v3599 = vsel %vm1410, %v3555, 2147483647
  %v3600 = vand.u32 %v3599, 65535
  %v3601 = vshra.s32 %v3599, 16
  %v3602 = vcvt.s32.f32 %v3600
  %v3603 = vcvt.s32.f32 %v3601
  %3604 = vmin.xlane.f32.xlu0 %v3603
  %v3605 = vpop.xlane.xlu0 %3604
  %vm3606 = vcmp.eq.f32.partialorder %v3603, %v3605
  %v3607 = vsel %vm3606, %v3602, inf
  %3608 = vmin.xlane.f32.xlu0 %v3607
  %v3609 = vpop.xlane.xlu0 %3608
  %v3610 = vcvt.f32.s32 %v3609
  %v3611 = vcvt.f32.s32 %v3605
  %v3612 = vshll.u32 %v3611, 16
  %v3613 = vadd.s32 %v3612, %v3610
  %v3614 = vsel %vm1410, %v3556, 2147483647
  %v3615 = vand.u32 %v3614, 65535
  %v3616 = vshra.s32 %v3614, 16
  %v3617 = vcvt.s32.f32 %v3615
  %v3618 = vcvt.s32.f32 %v3616
  %3619 = vmin.xlane.f32.xlu0 %v3618
  %v3620 = vpop.xlane.xlu0 %3619
  %vm3621 = vcmp.eq.f32.partialorder %v3618, %v3620
  %v3622 = vsel %vm3621, %v3617, inf
  %3623 = vmin.xlane.f32.xlu0 %v3622
  %v3624 = vpop.xlane.xlu0 %3623
  %v3625 = vcvt.f32.s32 %v3624
  %v3626 = vcvt.f32.s32 %v3620
  %v3627 = vshll.u32 %v3626, 16
  %v3628 = vadd.s32 %v3627, %v3625
  %v3629 = vsel %vm1410, %v3557, 2147483647
  %v3630 = vand.u32 %v3629, 65535
  %v3631 = vshra.s32 %v3629, 16
  %v3632 = vcvt.s32.f32 %v3630
  %v3633 = vcvt.s32.f32 %v3631
  %3634 = vmin.xlane.f32.xlu0 %v3633
  %v3635 = vpop.xlane.xlu0 %3634
  %vm3636 = vcmp.eq.f32.partialorder %v3633, %v3635
  %v3637 = vsel %vm3636, %v3632, inf
  %3638 = vmin.xlane.f32.xlu0 %v3637
  %v3639 = vpop.xlane.xlu0 %3638
  %v3640 = vcvt.f32.s32 %v3639
  %v3641 = vcvt.f32.s32 %v3635
  %v3642 = vshll.u32 %v3641, 16
  %v3643 = vadd.s32 %v3642, %v3640
  %v3644 = vsel %vm1410, %v3558, 2147483647
  %v3645 = vand.u32 %v3644, 65535
  %v3646 = vshra.s32 %v3644, 16
  %v3647 = vcvt.s32.f32 %v3645
  %v3648 = vcvt.s32.f32 %v3646
  %3649 = vmin.xlane.f32.xlu0 %v3648
  %v3650 = vpop.xlane.xlu0 %3649
  %vm3651 = vcmp.eq.f32.partialorder %v3648, %v3650
  %v3652 = vsel %vm3651, %v3647, inf
  %3653 = vmin.xlane.f32.xlu0 %v3652
  %v3654 = vpop.xlane.xlu0 %3653
  %v3655 = vcvt.f32.s32 %v3654
  %v3656 = vcvt.f32.s32 %v3650
  %v3657 = vshll.u32 %v3656, 16
  %v3658 = vadd.s32 %v3657, %v3655
  %v3659 = vsel %vm1410, %v3559, 2147483647
  %v3660 = vand.u32 %v3659, 65535
  %v3661 = vshra.s32 %v3659, 16
  %v3662 = vcvt.s32.f32 %v3660
  %v3663 = vcvt.s32.f32 %v3661
  %3664 = vmin.xlane.f32.xlu0 %v3663
  %v3665 = vpop.xlane.xlu0 %3664
  %vm3666 = vcmp.eq.f32.partialorder %v3663, %v3665
  %v3667 = vsel %vm3666, %v3662, inf
  %3668 = vmin.xlane.f32.xlu0 %v3667
  %v3669 = vpop.xlane.xlu0 %3668
  %v3670 = vcvt.f32.s32 %v3669
  %v3671 = vcvt.f32.s32 %v3665
  %v3672 = vshll.u32 %v3671, 16
  %v3673 = vadd.s32 %v3672, %v3670
  %v3674 = vsel %vm1410, %v3560, 2147483647
  %v3675 = vand.u32 %v3674, 65535
  %v3676 = vshra.s32 %v3674, 16
  %v3677 = vcvt.s32.f32 %v3675
  %v3678 = vcvt.s32.f32 %v3676
  %3679 = vmin.xlane.f32.xlu0 %v3678
  %v3680 = vpop.xlane.xlu0 %3679
  %vm3681 = vcmp.eq.f32.partialorder %v3678, %v3680
  %v3682 = vsel %vm3681, %v3677, inf
  %3683 = vmin.xlane.f32.xlu0 %v3682
  %v3684 = vpop.xlane.xlu0 %3683
  %v3685 = vcvt.f32.s32 %v3684
  %v3686 = vcvt.f32.s32 %v3680
  %v3687 = vshll.u32 %v3686, 16
  %v3688 = vadd.s32 %v3687, %v3685
  %v3689 = vsel %vm1410, %v3561, 2147483647
  %v3690 = vand.u32 %v3689, 65535
  %v3691 = vshra.s32 %v3689, 16
  %v3692 = vcvt.s32.f32 %v3690
  %v3693 = vcvt.s32.f32 %v3691
  %3694 = vmin.xlane.f32.xlu0 %v3693
  %v3695 = vpop.xlane.xlu0 %3694
  %vm3696 = vcmp.eq.f32.partialorder %v3693, %v3695
  %v3697 = vsel %vm3696, %v3692, inf
  %3698 = vmin.xlane.f32.xlu0 %v3697
  %v3699 = vpop.xlane.xlu0 %3698
  %v3700 = vcvt.f32.s32 %v3699
  %v3701 = vcvt.f32.s32 %v3695
  %v3702 = vshll.u32 %v3701, 16
  %v3703 = vadd.s32 %v3702, %v3700
  %v3704 = vsel %vm1410, %v3562, 2147483647
  %v3705 = vand.u32 %v3704, 65535
  %v3706 = vshra.s32 %v3704, 16
  %v3707 = vcvt.s32.f32 %v3705
  %v3708 = vcvt.s32.f32 %v3706
  %3709 = vmin.xlane.f32.xlu0 %v3708
  %v3710 = vpop.xlane.xlu0 %3709
  %vm3711 = vcmp.eq.f32.partialorder %v3708, %v3710
  %v3712 = vsel %vm3711, %v3707, inf
  %3713 = vmin.xlane.f32.xlu0 %v3712
  %v3714 = vpop.xlane.xlu0 %3713
  %v3715 = vcvt.f32.s32 %v3714
  %v3716 = vcvt.f32.s32 %v3710
  %v3717 = vshll.u32 %v3716, 16
  %v3718 = vadd.s32 %v3717, %v3715
  %v3719 = vsel %vm1410, %v3563, 2147483647
  %v3720 = vand.u32 %v3719, 65535
  %v3721 = vshra.s32 %v3719, 16
  %v3722 = vcvt.s32.f32 %v3720
  %v3723 = vcvt.s32.f32 %v3721
  %3724 = vmin.xlane.f32.xlu0 %v3723
  %v3725 = vpop.xlane.xlu0 %3724
  %vm3726 = vcmp.eq.f32.partialorder %v3723, %v3725
  %v3727 = vsel %vm3726, %v3722, inf
  %3728 = vmin.xlane.f32.xlu0 %v3727
  %v3729 = vpop.xlane.xlu0 %3728
  %v3730 = vcvt.f32.s32 %v3729
  %v3731 = vcvt.f32.s32 %v3725
  %v3732 = vshll.u32 %v3731, 16
  %v3733 = vadd.s32 %v3732, %v3730
  %v3734 = vsel %vm1410, %v3564, 2147483647
  %v3735 = vand.u32 %v3734, 65535
  %v3736 = vshra.s32 %v3734, 16
  %v3737 = vcvt.s32.f32 %v3735
  %v3738 = vcvt.s32.f32 %v3736
  %3739 = vmin.xlane.f32.xlu0 %v3738
  %v3740 = vpop.xlane.xlu0 %3739
  %vm3741 = vcmp.eq.f32.partialorder %v3738, %v3740
  %v3742 = vsel %vm3741, %v3737, inf
  %3743 = vmin.xlane.f32.xlu0 %v3742
  %v3744 = vpop.xlane.xlu0 %3743
  %v3745 = vcvt.f32.s32 %v3744
  %v3746 = vcvt.f32.s32 %v3740
  %v3747 = vshll.u32 %v3746, 16
  %v3748 = vadd.s32 %v3747, %v3745
  %v3749 = vsel %vm1410, %v3565, 2147483647
  %v3750 = vand.u32 %v3749, 65535
  %v3751 = vshra.s32 %v3749, 16
  %v3752 = vcvt.s32.f32 %v3750
  %v3753 = vcvt.s32.f32 %v3751
  %3754 = vmin.xlane.f32.xlu0 %v3753
  %v3755 = vpop.xlane.xlu0 %3754
  %vm3756 = vcmp.eq.f32.partialorder %v3753, %v3755
  %v3757 = vsel %vm3756, %v3752, inf
  %3758 = vmin.xlane.f32.xlu0 %v3757
  %v3759 = vpop.xlane.xlu0 %3758
  %v3760 = vcvt.f32.s32 %v3759
  %v3761 = vcvt.f32.s32 %v3755
  %v3762 = vshll.u32 %v3761, 16
  %v3763 = vadd.s32 %v3762, %v3760
  %v3764 = vsel %vm1410, %v3566, 2147483647
  %v3765 = vand.u32 %v3764, 65535
  %v3766 = vshra.s32 %v3764, 16
  %v3767 = vcvt.s32.f32 %v3765
  %v3768 = vcvt.s32.f32 %v3766
  %3769 = vmin.xlane.f32.xlu0 %v3768
  %v3770 = vpop.xlane.xlu0 %3769
  %vm3771 = vcmp.eq.f32.partialorder %v3768, %v3770
  %v3772 = vsel %vm3771, %v3767, inf
  %3773 = vmin.xlane.f32.xlu0 %v3772
  %v3774 = vpop.xlane.xlu0 %3773
  %v3775 = vcvt.f32.s32 %v3774
  %v3776 = vcvt.f32.s32 %v3770
  %v3777 = vshll.u32 %v3776, 16
  %v3778 = vadd.s32 %v3777, %v3775
  %v3779 = vsel %vm1410, %v3567, 2147483647
  %v3780 = vand.u32 %v3779, 65535
  %v3781 = vshra.s32 %v3779, 16
  %v3782 = vcvt.s32.f32 %v3780
  %v3783 = vcvt.s32.f32 %v3781
  %3784 = vmin.xlane.f32.xlu0 %v3783
  %v3785 = vpop.xlane.xlu0 %3784
  %vm3786 = vcmp.eq.f32.partialorder %v3783, %v3785
  %v3787 = vsel %vm3786, %v3782, inf
  %3788 = vmin.xlane.f32.xlu0 %v3787
  %v3789 = vpop.xlane.xlu0 %3788
  %v3790 = vcvt.f32.s32 %v3789
  %v3791 = vcvt.f32.s32 %v3785
  %v3792 = vshll.u32 %v3791, 16
  %v3793 = vadd.s32 %v3792, %v3790
  %v3794 = vsel %vm1410, %v3568, 2147483647
  %v3795 = vand.u32 %v3794, 65535
  %v3796 = vshra.s32 %v3794, 16
  %v3797 = vcvt.s32.f32 %v3795
  %v3798 = vcvt.s32.f32 %v3796
  %3799 = vmin.xlane.f32.xlu0 %v3798
  %v3800 = vpop.xlane.xlu0 %3799
  %vm3801 = vcmp.eq.f32.partialorder %v3798, %v3800
  %v3802 = vsel %vm3801, %v3797, inf
  %3803 = vmin.xlane.f32.xlu0 %v3802
  %v3804 = vpop.xlane.xlu0 %3803
  %v3805 = vcvt.f32.s32 %v3804
  %v3806 = vcvt.f32.s32 %v3800
  %v3807 = vshll.u32 %v3806, 16
  %v3808 = vadd.s32 %v3807, %v3805
  %vm3809 = vcmp.eq.s32.totalorder %v3120, %v3583
  %vm3810 = vcmp.eq.s32.totalorder %v3120, %v3598
  %vm3811 = vcmp.eq.s32.totalorder %v3120, %v3613
  %vm3812 = vcmp.eq.s32.totalorder %v3120, %v3628
  %vm3813 = vcmp.eq.s32.totalorder %v3120, %v3643
  %vm3814 = vcmp.eq.s32.totalorder %v3120, %v3658
  %vm3815 = vcmp.eq.s32.totalorder %v3120, %v3673
  %vm3816 = vcmp.eq.s32.totalorder %v3120, %v3688
  %vm3817 = vcmp.eq.s32.totalorder %v3120, %v3703
  %vm3818 = vcmp.eq.s32.totalorder %v3120, %v3718
  %vm3819 = vcmp.eq.s32.totalorder %v3120, %v3733
  %vm3820 = vcmp.eq.s32.totalorder %v3120, %v3748
  %vm3821 = vcmp.eq.s32.totalorder %v3120, %v3763
  %vm3822 = vcmp.eq.s32.totalorder %v3120, %v3778
  %vm3823 = vcmp.eq.s32.totalorder %v3120, %v3793
  %vm3824 = vcmp.eq.s32.totalorder %v3120, %v3808
  %v3825 = vsel %vm3809, %v1569, %v3457
  %v3826 = vsel %vm3810, %v1584, %v3458
  %v3827 = vsel %vm3811, %v1599, %v3459
  %v3828 = vsel %vm3812, %v1614, %v3460
  %v3829 = vsel %vm3813, %v1629, %v3461
  %v3830 = vsel %vm3814, %v1644, %v3462
  %v3831 = vsel %vm3815, %v1659, %v3463
  %v3832 = vsel %vm3816, %v1674, %v3464
  %v3833 = vsel %vm3817, %v1689, %v3465
  %v3834 = vsel %vm3818, %v1704, %v3466
  %v3835 = vsel %vm3819, %v1719, %v3467
  %v3836 = vsel %vm3820, %v1734, %v3468
  %v3837 = vsel %vm3821, %v1749, %v3469
  %v3838 = vsel %vm3822, %v1764, %v3470
  %v3839 = vsel %vm3823, %v1779, %v3471
  %v3840 = vsel %vm3824, %v1794, %v3472
  %v3841 = vsel %vm3809, -inf, %v3473
  %v3842 = vsel %vm3810, -inf, %v3474
  %v3843 = vsel %vm3811, -inf, %v3475
  %v3844 = vsel %vm3812, -inf, %v3476
  %v3845 = vsel %vm3813, -inf, %v3477
  %v3846 = vsel %vm3814, -inf, %v3478
  %v3847 = vsel %vm3815, -inf, %v3479
  %v3848 = vsel %vm3816, -inf, %v3480
  %v3849 = vsel %vm3817, -inf, %v3481
  %v3850 = vsel %vm3818, -inf, %v3482
  %v3851 = vsel %vm3819, -inf, %v3483
  %v3852 = vsel %vm3820, -inf, %v3484
  %v3853 = vsel %vm3821, -inf, %v3485
  %v3854 = vsel %vm3822, -inf, %v3486
  %v3855 = vsel %vm3823, -inf, %v3487
  %v3856 = vsel %vm3824, -inf, %v3488
  %v3857 = vsel %vm1410, %v3841, -inf
  %3858 = vmax.xlane.f32.xlu0 %v3857
  %v3859 = vpop.xlane.xlu0 %3858
  %v3860 = vsel %vm1410, %v3842, -inf
  %3861 = vmax.xlane.f32.xlu0 %v3860
  %v3862 = vpop.xlane.xlu0 %3861
  %v3863 = vsel %vm1410, %v3843, -inf
  %3864 = vmax.xlane.f32.xlu0 %v3863
  %v3865 = vpop.xlane.xlu0 %3864
  %v3866 = vsel %vm1410, %v3844, -inf
  %3867 = vmax.xlane.f32.xlu0 %v3866
  %v3868 = vpop.xlane.xlu0 %3867
  %v3869 = vsel %vm1410, %v3845, -inf
  %3870 = vmax.xlane.f32.xlu0 %v3869
  %v3871 = vpop.xlane.xlu0 %3870
  %v3872 = vsel %vm1410, %v3846, -inf
  %3873 = vmax.xlane.f32.xlu0 %v3872
  %v3874 = vpop.xlane.xlu0 %3873
  %v3875 = vsel %vm1410, %v3847, -inf
  %3876 = vmax.xlane.f32.xlu0 %v3875
  %v3877 = vpop.xlane.xlu0 %3876
  %v3878 = vsel %vm1410, %v3848, -inf
  %3879 = vmax.xlane.f32.xlu0 %v3878
  %v3880 = vpop.xlane.xlu0 %3879
  %v3881 = vsel %vm1410, %v3849, -inf
  %3882 = vmax.xlane.f32.xlu0 %v3881
  %v3883 = vpop.xlane.xlu0 %3882
  %v3884 = vsel %vm1410, %v3850, -inf
  %3885 = vmax.xlane.f32.xlu0 %v3884
  %v3886 = vpop.xlane.xlu0 %3885
  %v3887 = vsel %vm1410, %v3851, -inf
  %3888 = vmax.xlane.f32.xlu0 %v3887
  %v3889 = vpop.xlane.xlu0 %3888
  %v3890 = vsel %vm1410, %v3852, -inf
  %3891 = vmax.xlane.f32.xlu0 %v3890
  %v3892 = vpop.xlane.xlu0 %3891
  %v3893 = vsel %vm1410, %v3853, -inf
  %3894 = vmax.xlane.f32.xlu0 %v3893
  %v3895 = vpop.xlane.xlu0 %3894
  %v3896 = vsel %vm1410, %v3854, -inf
  %3897 = vmax.xlane.f32.xlu0 %v3896
  %v3898 = vpop.xlane.xlu0 %3897
  %v3899 = vsel %vm1410, %v3855, -inf
  %3900 = vmax.xlane.f32.xlu0 %v3899
  %v3901 = vpop.xlane.xlu0 %3900
  %v3902 = vsel %vm1410, %v3856, -inf
  %3903 = vmax.xlane.f32.xlu0 %v3902
  %v3904 = vpop.xlane.xlu0 %3903
  %vm3905 = vcmp.eq.f32.partialorder %v3841, %v3859
  %vm3906 = vcmp.eq.f32.partialorder %v3842, %v3862
  %vm3907 = vcmp.eq.f32.partialorder %v3843, %v3865
  %vm3908 = vcmp.eq.f32.partialorder %v3844, %v3868
  %vm3909 = vcmp.eq.f32.partialorder %v3845, %v3871
  %vm3910 = vcmp.eq.f32.partialorder %v3846, %v3874
  %vm3911 = vcmp.eq.f32.partialorder %v3847, %v3877
  %vm3912 = vcmp.eq.f32.partialorder %v3848, %v3880
  %vm3913 = vcmp.eq.f32.partialorder %v3849, %v3883
  %vm3914 = vcmp.eq.f32.partialorder %v3850, %v3886
  %vm3915 = vcmp.eq.f32.partialorder %v3851, %v3889
  %vm3916 = vcmp.eq.f32.partialorder %v3852, %v3892
  %vm3917 = vcmp.eq.f32.partialorder %v3853, %v3895
  %vm3918 = vcmp.eq.f32.partialorder %v3854, %v3898
  %vm3919 = vcmp.eq.f32.partialorder %v3855, %v3901
  %vm3920 = vcmp.eq.f32.partialorder %v3856, %v3904
  %v3921 = vsel %vm3905, %v3120, 8
  %v3922 = vsel %vm3906, %v3120, 8
  %v3923 = vsel %vm3907, %v3120, 8
  %v3924 = vsel %vm3908, %v3120, 8
  %v3925 = vsel %vm3909, %v3120, 8
  %v3926 = vsel %vm3910, %v3120, 8
  %v3927 = vsel %vm3911, %v3120, 8
  %v3928 = vsel %vm3912, %v3120, 8
  %v3929 = vsel %vm3913, %v3120, 8
  %v3930 = vsel %vm3914, %v3120, 8
  %v3931 = vsel %vm3915, %v3120, 8
  %v3932 = vsel %vm3916, %v3120, 8
  %v3933 = vsel %vm3917, %v3120, 8
  %v3934 = vsel %vm3918, %v3120, 8
  %v3935 = vsel %vm3919, %v3120, 8
  %v3936 = vsel %vm3920, %v3120, 8
  %v3937 = vsel %vm1410, %v3921, 2147483647
  %v3938 = vand.u32 %v3937, 65535
  %v3939 = vshra.s32 %v3937, 16
  %v3940 = vcvt.s32.f32 %v3938
  %v3941 = vcvt.s32.f32 %v3939
  %3942 = vmin.xlane.f32.xlu0 %v3941
  %v3943 = vpop.xlane.xlu0 %3942
  %vm3944 = vcmp.eq.f32.partialorder %v3941, %v3943
  %v3945 = vsel %vm3944, %v3940, inf
  %3946 = vmin.xlane.f32.xlu0 %v3945
  %v3947 = vpop.xlane.xlu0 %3946
  %v3948 = vcvt.f32.s32 %v3947
  %v3949 = vcvt.f32.s32 %v3943
  %v3950 = vshll.u32 %v3949, 16
  %v3951 = vadd.s32 %v3950, %v3948
  %v3952 = vsel %vm1410, %v3922, 2147483647
  %v3953 = vand.u32 %v3952, 65535
  %v3954 = vshra.s32 %v3952, 16
  %v3955 = vcvt.s32.f32 %v3953
  %v3956 = vcvt.s32.f32 %v3954
  %3957 = vmin.xlane.f32.xlu0 %v3956
  %v3958 = vpop.xlane.xlu0 %3957
  %vm3959 = vcmp.eq.f32.partialorder %v3956, %v3958
  %v3960 = vsel %vm3959, %v3955, inf
  %3961 = vmin.xlane.f32.xlu0 %v3960
  %v3962 = vpop.xlane.xlu0 %3961
  %v3963 = vcvt.f32.s32 %v3962
  %v3964 = vcvt.f32.s32 %v3958
  %v3965 = vshll.u32 %v3964, 16
  %v3966 = vadd.s32 %v3965, %v3963
  %v3967 = vsel %vm1410, %v3923, 2147483647
  %v3968 = vand.u32 %v3967, 65535
  %v3969 = vshra.s32 %v3967, 16
  %v3970 = vcvt.s32.f32 %v3968
  %v3971 = vcvt.s32.f32 %v3969
  %3972 = vmin.xlane.f32.xlu0 %v3971
  %v3973 = vpop.xlane.xlu0 %3972
  %vm3974 = vcmp.eq.f32.partialorder %v3971, %v3973
  %v3975 = vsel %vm3974, %v3970, inf
  %3976 = vmin.xlane.f32.xlu0 %v3975
  %v3977 = vpop.xlane.xlu0 %3976
  %v3978 = vcvt.f32.s32 %v3977
  %v3979 = vcvt.f32.s32 %v3973
  %v3980 = vshll.u32 %v3979, 16
  %v3981 = vadd.s32 %v3980, %v3978
  %v3982 = vsel %vm1410, %v3924, 2147483647
  %v3983 = vand.u32 %v3982, 65535
  %v3984 = vshra.s32 %v3982, 16
  %v3985 = vcvt.s32.f32 %v3983
  %v3986 = vcvt.s32.f32 %v3984
  %3987 = vmin.xlane.f32.xlu0 %v3986
  %v3988 = vpop.xlane.xlu0 %3987
  %vm3989 = vcmp.eq.f32.partialorder %v3986, %v3988
  %v3990 = vsel %vm3989, %v3985, inf
  %3991 = vmin.xlane.f32.xlu0 %v3990
  %v3992 = vpop.xlane.xlu0 %3991
  %v3993 = vcvt.f32.s32 %v3992
  %v3994 = vcvt.f32.s32 %v3988
  %v3995 = vshll.u32 %v3994, 16
  %v3996 = vadd.s32 %v3995, %v3993
  %v3997 = vsel %vm1410, %v3925, 2147483647
  %v3998 = vand.u32 %v3997, 65535
  %v3999 = vshra.s32 %v3997, 16
  %v4000 = vcvt.s32.f32 %v3998
  %v4001 = vcvt.s32.f32 %v3999
  %4002 = vmin.xlane.f32.xlu0 %v4001
  %v4003 = vpop.xlane.xlu0 %4002
  %vm4004 = vcmp.eq.f32.partialorder %v4001, %v4003
  %v4005 = vsel %vm4004, %v4000, inf
  %4006 = vmin.xlane.f32.xlu0 %v4005
  %v4007 = vpop.xlane.xlu0 %4006
  %v4008 = vcvt.f32.s32 %v4007
  %v4009 = vcvt.f32.s32 %v4003
  %v4010 = vshll.u32 %v4009, 16
  %v4011 = vadd.s32 %v4010, %v4008
  %v4012 = vsel %vm1410, %v3926, 2147483647
  %v4013 = vand.u32 %v4012, 65535
  %v4014 = vshra.s32 %v4012, 16
  %v4015 = vcvt.s32.f32 %v4013
  %v4016 = vcvt.s32.f32 %v4014
  %4017 = vmin.xlane.f32.xlu0 %v4016
  %v4018 = vpop.xlane.xlu0 %4017
  %vm4019 = vcmp.eq.f32.partialorder %v4016, %v4018
  %v4020 = vsel %vm4019, %v4015, inf
  %4021 = vmin.xlane.f32.xlu0 %v4020
  %v4022 = vpop.xlane.xlu0 %4021
  %v4023 = vcvt.f32.s32 %v4022
  %v4024 = vcvt.f32.s32 %v4018
  %v4025 = vshll.u32 %v4024, 16
  %v4026 = vadd.s32 %v4025, %v4023
  %v4027 = vsel %vm1410, %v3927, 2147483647
  %v4028 = vand.u32 %v4027, 65535
  %v4029 = vshra.s32 %v4027, 16
  %v4030 = vcvt.s32.f32 %v4028
  %v4031 = vcvt.s32.f32 %v4029
  %4032 = vmin.xlane.f32.xlu0 %v4031
  %v4033 = vpop.xlane.xlu0 %4032
  %vm4034 = vcmp.eq.f32.partialorder %v4031, %v4033
  %v4035 = vsel %vm4034, %v4030, inf
  %4036 = vmin.xlane.f32.xlu0 %v4035
  %v4037 = vpop.xlane.xlu0 %4036
  %v4038 = vcvt.f32.s32 %v4037
  %v4039 = vcvt.f32.s32 %v4033
  %v4040 = vshll.u32 %v4039, 16
  %v4041 = vadd.s32 %v4040, %v4038
  %v4042 = vsel %vm1410, %v3928, 2147483647
  %v4043 = vand.u32 %v4042, 65535
  %v4044 = vshra.s32 %v4042, 16
  %v4045 = vcvt.s32.f32 %v4043
  %v4046 = vcvt.s32.f32 %v4044
  %4047 = vmin.xlane.f32.xlu0 %v4046
  %v4048 = vpop.xlane.xlu0 %4047
  %vm4049 = vcmp.eq.f32.partialorder %v4046, %v4048
  %v4050 = vsel %vm4049, %v4045, inf
  %4051 = vmin.xlane.f32.xlu0 %v4050
  %v4052 = vpop.xlane.xlu0 %4051
  %v4053 = vcvt.f32.s32 %v4052
  %v4054 = vcvt.f32.s32 %v4048
  %v4055 = vshll.u32 %v4054, 16
  %v4056 = vadd.s32 %v4055, %v4053
  %v4057 = vsel %vm1410, %v3929, 2147483647
  %v4058 = vand.u32 %v4057, 65535
  %v4059 = vshra.s32 %v4057, 16
  %v4060 = vcvt.s32.f32 %v4058
  %v4061 = vcvt.s32.f32 %v4059
  %4062 = vmin.xlane.f32.xlu0 %v4061
  %v4063 = vpop.xlane.xlu0 %4062
  %vm4064 = vcmp.eq.f32.partialorder %v4061, %v4063
  %v4065 = vsel %vm4064, %v4060, inf
  %4066 = vmin.xlane.f32.xlu0 %v4065
  %v4067 = vpop.xlane.xlu0 %4066
  %v4068 = vcvt.f32.s32 %v4067
  %v4069 = vcvt.f32.s32 %v4063
  %v4070 = vshll.u32 %v4069, 16
  %v4071 = vadd.s32 %v4070, %v4068
  %v4072 = vsel %vm1410, %v3930, 2147483647
  %v4073 = vand.u32 %v4072, 65535
  %v4074 = vshra.s32 %v4072, 16
  %v4075 = vcvt.s32.f32 %v4073
  %v4076 = vcvt.s32.f32 %v4074
  %4077 = vmin.xlane.f32.xlu0 %v4076
  %v4078 = vpop.xlane.xlu0 %4077
  %vm4079 = vcmp.eq.f32.partialorder %v4076, %v4078
  %v4080 = vsel %vm4079, %v4075, inf
  %4081 = vmin.xlane.f32.xlu0 %v4080
  %v4082 = vpop.xlane.xlu0 %4081
  %v4083 = vcvt.f32.s32 %v4082
  %v4084 = vcvt.f32.s32 %v4078
  %v4085 = vshll.u32 %v4084, 16
  %v4086 = vadd.s32 %v4085, %v4083
  %v4087 = vsel %vm1410, %v3931, 2147483647
  %v4088 = vand.u32 %v4087, 65535
  %v4089 = vshra.s32 %v4087, 16
  %v4090 = vcvt.s32.f32 %v4088
  %v4091 = vcvt.s32.f32 %v4089
  %4092 = vmin.xlane.f32.xlu0 %v4091
  %v4093 = vpop.xlane.xlu0 %4092
  %vm4094 = vcmp.eq.f32.partialorder %v4091, %v4093
  %v4095 = vsel %vm4094, %v4090, inf
  %4096 = vmin.xlane.f32.xlu0 %v4095
  %v4097 = vpop.xlane.xlu0 %4096
  %v4098 = vcvt.f32.s32 %v4097
  %v4099 = vcvt.f32.s32 %v4093
  %v4100 = vshll.u32 %v4099, 16
  %v4101 = vadd.s32 %v4100, %v4098
  %v4102 = vsel %vm1410, %v3932, 2147483647
  %v4103 = vand.u32 %v4102, 65535
  %v4104 = vshra.s32 %v4102, 16
  %v4105 = vcvt.s32.f32 %v4103
  %v4106 = vcvt.s32.f32 %v4104
  %4107 = vmin.xlane.f32.xlu0 %v4106
  %v4108 = vpop.xlane.xlu0 %4107
  %vm4109 = vcmp.eq.f32.partialorder %v4106, %v4108
  %v4110 = vsel %vm4109, %v4105, inf
  %4111 = vmin.xlane.f32.xlu0 %v4110
  %v4112 = vpop.xlane.xlu0 %4111
  %v4113 = vcvt.f32.s32 %v4112
  %v4114 = vcvt.f32.s32 %v4108
  %v4115 = vshll.u32 %v4114, 16
  %v4116 = vadd.s32 %v4115, %v4113
  %v4117 = vsel %vm1410, %v3933, 2147483647
  %v4118 = vand.u32 %v4117, 65535
  %v4119 = vshra.s32 %v4117, 16
  %v4120 = vcvt.s32.f32 %v4118
  %v4121 = vcvt.s32.f32 %v4119
  %4122 = vmin.xlane.f32.xlu0 %v4121
  %v4123 = vpop.xlane.xlu0 %4122
  %vm4124 = vcmp.eq.f32.partialorder %v4121, %v4123
  %v4125 = vsel %vm4124, %v4120, inf
  %4126 = vmin.xlane.f32.xlu0 %v4125
  %v4127 = vpop.xlane.xlu0 %4126
  %v4128 = vcvt.f32.s32 %v4127
  %v4129 = vcvt.f32.s32 %v4123
  %v4130 = vshll.u32 %v4129, 16
  %v4131 = vadd.s32 %v4130, %v4128
  %v4132 = vsel %vm1410, %v3934, 2147483647
  %v4133 = vand.u32 %v4132, 65535
  %v4134 = vshra.s32 %v4132, 16
  %v4135 = vcvt.s32.f32 %v4133
  %v4136 = vcvt.s32.f32 %v4134
  %4137 = vmin.xlane.f32.xlu0 %v4136
  %v4138 = vpop.xlane.xlu0 %4137
  %vm4139 = vcmp.eq.f32.partialorder %v4136, %v4138
  %v4140 = vsel %vm4139, %v4135, inf
  %4141 = vmin.xlane.f32.xlu0 %v4140
  %v4142 = vpop.xlane.xlu0 %4141
  %v4143 = vcvt.f32.s32 %v4142
  %v4144 = vcvt.f32.s32 %v4138
  %v4145 = vshll.u32 %v4144, 16
  %v4146 = vadd.s32 %v4145, %v4143
  %v4147 = vsel %vm1410, %v3935, 2147483647
  %v4148 = vand.u32 %v4147, 65535
  %v4149 = vshra.s32 %v4147, 16
  %v4150 = vcvt.s32.f32 %v4148
  %v4151 = vcvt.s32.f32 %v4149
  %4152 = vmin.xlane.f32.xlu0 %v4151
  %v4153 = vpop.xlane.xlu0 %4152
  %vm4154 = vcmp.eq.f32.partialorder %v4151, %v4153
  %v4155 = vsel %vm4154, %v4150, inf
  %4156 = vmin.xlane.f32.xlu0 %v4155
  %v4157 = vpop.xlane.xlu0 %4156
  %v4158 = vcvt.f32.s32 %v4157
  %v4159 = vcvt.f32.s32 %v4153
  %v4160 = vshll.u32 %v4159, 16
  %v4161 = vadd.s32 %v4160, %v4158
  %v4162 = vsel %vm1410, %v3936, 2147483647
  %v4163 = vand.u32 %v4162, 65535
  %v4164 = vshra.s32 %v4162, 16
  %v4165 = vcvt.s32.f32 %v4163
  %v4166 = vcvt.s32.f32 %v4164
  %4167 = vmin.xlane.f32.xlu0 %v4166
  %v4168 = vpop.xlane.xlu0 %4167
  %vm4169 = vcmp.eq.f32.partialorder %v4166, %v4168
  %v4170 = vsel %vm4169, %v4165, inf
  %4171 = vmin.xlane.f32.xlu0 %v4170
  %v4172 = vpop.xlane.xlu0 %4171
  %v4173 = vcvt.f32.s32 %v4172
  %v4174 = vcvt.f32.s32 %v4168
  %v4175 = vshll.u32 %v4174, 16
  %v4176 = vadd.s32 %v4175, %v4173
  %vm4177 = vcmp.eq.s32.totalorder %v3120, %v3951
  %vm4178 = vcmp.eq.s32.totalorder %v3120, %v3966
  %vm4179 = vcmp.eq.s32.totalorder %v3120, %v3981
  %vm4180 = vcmp.eq.s32.totalorder %v3120, %v3996
  %vm4181 = vcmp.eq.s32.totalorder %v3120, %v4011
  %vm4182 = vcmp.eq.s32.totalorder %v3120, %v4026
  %vm4183 = vcmp.eq.s32.totalorder %v3120, %v4041
  %vm4184 = vcmp.eq.s32.totalorder %v3120, %v4056
  %vm4185 = vcmp.eq.s32.totalorder %v3120, %v4071
  %vm4186 = vcmp.eq.s32.totalorder %v3120, %v4086
  %vm4187 = vcmp.eq.s32.totalorder %v3120, %v4101
  %vm4188 = vcmp.eq.s32.totalorder %v3120, %v4116
  %vm4189 = vcmp.eq.s32.totalorder %v3120, %v4131
  %vm4190 = vcmp.eq.s32.totalorder %v3120, %v4146
  %vm4191 = vcmp.eq.s32.totalorder %v3120, %v4161
  %vm4192 = vcmp.eq.s32.totalorder %v3120, %v4176
  %v4193 = vsel %vm4177, %v1569, %v3825
  %v4194 = vsel %vm4178, %v1584, %v3826
  %v4195 = vsel %vm4179, %v1599, %v3827
  %v4196 = vsel %vm4180, %v1614, %v3828
  %v4197 = vsel %vm4181, %v1629, %v3829
  %v4198 = vsel %vm4182, %v1644, %v3830
  %v4199 = vsel %vm4183, %v1659, %v3831
  %v4200 = vsel %vm4184, %v1674, %v3832
  %v4201 = vsel %vm4185, %v1689, %v3833
  %v4202 = vsel %vm4186, %v1704, %v3834
  %v4203 = vsel %vm4187, %v1719, %v3835
  %v4204 = vsel %vm4188, %v1734, %v3836
  %v4205 = vsel %vm4189, %v1749, %v3837
  %v4206 = vsel %vm4190, %v1764, %v3838
  %v4207 = vsel %vm4191, %v1779, %v3839
  %v4208 = vsel %vm4192, %v1794, %v3840
  %v4209 = vsel %vm1410, %v1953, -inf
  %4210 = vmax.xlane.f32.xlu0 %v4209
  %v4211 = vpop.xlane.xlu0 %4210
  %v4212 = vsel %vm1410, %v1968, -inf
  %4213 = vmax.xlane.f32.xlu0 %v4212
  %v4214 = vpop.xlane.xlu0 %4213
  %v4215 = vsel %vm1410, %v1983, -inf
  %4216 = vmax.xlane.f32.xlu0 %v4215
  %v4217 = vpop.xlane.xlu0 %4216
  %v4218 = vsel %vm1410, %v1998, -inf
  %4219 = vmax.xlane.f32.xlu0 %v4218
  %v4220 = vpop.xlane.xlu0 %4219
  %v4221 = vsel %vm1410, %v2013, -inf
  %4222 = vmax.xlane.f32.xlu0 %v4221
  %v4223 = vpop.xlane.xlu0 %4222
  %v4224 = vsel %vm1410, %v2028, -inf
  %4225 = vmax.xlane.f32.xlu0 %v4224
  %v4226 = vpop.xlane.xlu0 %4225
  %v4227 = vsel %vm1410, %v2043, -inf
  %4228 = vmax.xlane.f32.xlu0 %v4227
  %v4229 = vpop.xlane.xlu0 %4228
  %v4230 = vsel %vm1410, %v2058, -inf
  %4231 = vmax.xlane.f32.xlu0 %v4230
  %v4232 = vpop.xlane.xlu0 %4231
  %v4233 = vsel %vm1410, %v2073, -inf
  %4234 = vmax.xlane.f32.xlu0 %v4233
  %v4235 = vpop.xlane.xlu0 %4234
  %v4236 = vsel %vm1410, %v2088, -inf
  %4237 = vmax.xlane.f32.xlu0 %v4236
  %v4238 = vpop.xlane.xlu0 %4237
  %v4239 = vsel %vm1410, %v2103, -inf
  %4240 = vmax.xlane.f32.xlu0 %v4239
  %v4241 = vpop.xlane.xlu0 %4240
  %v4242 = vsel %vm1410, %v2118, -inf
  %4243 = vmax.xlane.f32.xlu0 %v4242
  %v4244 = vpop.xlane.xlu0 %4243
  %v4245 = vsel %vm1410, %v2133, -inf
  %4246 = vmax.xlane.f32.xlu0 %v4245
  %v4247 = vpop.xlane.xlu0 %4246
  %v4248 = vsel %vm1410, %v2148, -inf
  %4249 = vmax.xlane.f32.xlu0 %v4248
  %v4250 = vpop.xlane.xlu0 %4249
  %v4251 = vsel %vm1410, %v2163, -inf
  %4252 = vmax.xlane.f32.xlu0 %v4251
  %v4253 = vpop.xlane.xlu0 %4252
  %v4254 = vsel %vm1410, %v2178, -inf
  %4255 = vmax.xlane.f32.xlu0 %v4254
  %v4256 = vpop.xlane.xlu0 %4255
  %vm4257 = vcmp.eq.f32.partialorder %v1953, %v4211
  %vm4258 = vcmp.eq.f32.partialorder %v1968, %v4214
  %vm4259 = vcmp.eq.f32.partialorder %v1983, %v4217
  %vm4260 = vcmp.eq.f32.partialorder %v1998, %v4220
  %vm4261 = vcmp.eq.f32.partialorder %v2013, %v4223
  %vm4262 = vcmp.eq.f32.partialorder %v2028, %v4226
  %vm4263 = vcmp.eq.f32.partialorder %v2043, %v4229
  %vm4264 = vcmp.eq.f32.partialorder %v2058, %v4232
  %vm4265 = vcmp.eq.f32.partialorder %v2073, %v4235
  %vm4266 = vcmp.eq.f32.partialorder %v2088, %v4238
  %vm4267 = vcmp.eq.f32.partialorder %v2103, %v4241
  %vm4268 = vcmp.eq.f32.partialorder %v2118, %v4244
  %vm4269 = vcmp.eq.f32.partialorder %v2133, %v4247
  %vm4270 = vcmp.eq.f32.partialorder %v2148, %v4250
  %vm4271 = vcmp.eq.f32.partialorder %v2163, %v4253
  %vm4272 = vcmp.eq.f32.partialorder %v2178, %v4256
  %v4273 = vsel %vm4257, %v3120, 8
  %v4274 = vsel %vm4258, %v3120, 8
  %v4275 = vsel %vm4259, %v3120, 8
  %v4276 = vsel %vm4260, %v3120, 8
  %v4277 = vsel %vm4261, %v3120, 8
  %v4278 = vsel %vm4262, %v3120, 8
  %v4279 = vsel %vm4263, %v3120, 8
  %v4280 = vsel %vm4264, %v3120, 8
  %v4281 = vsel %vm4265, %v3120, 8
  %v4282 = vsel %vm4266, %v3120, 8
  %v4283 = vsel %vm4267, %v3120, 8
  %v4284 = vsel %vm4268, %v3120, 8
  %v4285 = vsel %vm4269, %v3120, 8
  %v4286 = vsel %vm4270, %v3120, 8
  %v4287 = vsel %vm4271, %v3120, 8
  %v4288 = vsel %vm4272, %v3120, 8
  %v4289 = vsel %vm1410, %v4273, 2147483647
  %v4290 = vand.u32 %v4289, 65535
  %v4291 = vshra.s32 %v4289, 16
  %v4292 = vcvt.s32.f32 %v4290
  %v4293 = vcvt.s32.f32 %v4291
  %4294 = vmin.xlane.f32.xlu0 %v4293
  %v4295 = vpop.xlane.xlu0 %4294
  %vm4296 = vcmp.eq.f32.partialorder %v4293, %v4295
  %v4297 = vsel %vm4296, %v4292, inf
  %4298 = vmin.xlane.f32.xlu0 %v4297
  %v4299 = vpop.xlane.xlu0 %4298
  %v4300 = vcvt.f32.s32 %v4299
  %v4301 = vcvt.f32.s32 %v4295
  %v4302 = vshll.u32 %v4301, 16
  %v4303 = vadd.s32 %v4302, %v4300
  %v4304 = vsel %vm1410, %v4274, 2147483647
  %v4305 = vand.u32 %v4304, 65535
  %v4306 = vshra.s32 %v4304, 16
  %v4307 = vcvt.s32.f32 %v4305
  %v4308 = vcvt.s32.f32 %v4306
  %4309 = vmin.xlane.f32.xlu0 %v4308
  %v4310 = vpop.xlane.xlu0 %4309
  %vm4311 = vcmp.eq.f32.partialorder %v4308, %v4310
  %v4312 = vsel %vm4311, %v4307, inf
  %4313 = vmin.xlane.f32.xlu0 %v4312
  %v4314 = vpop.xlane.xlu0 %4313
  %v4315 = vcvt.f32.s32 %v4314
  %v4316 = vcvt.f32.s32 %v4310
  %v4317 = vshll.u32 %v4316, 16
  %v4318 = vadd.s32 %v4317, %v4315
  %v4319 = vsel %vm1410, %v4275, 2147483647
  %v4320 = vand.u32 %v4319, 65535
  %v4321 = vshra.s32 %v4319, 16
  %v4322 = vcvt.s32.f32 %v4320
  %v4323 = vcvt.s32.f32 %v4321
  %4324 = vmin.xlane.f32.xlu0 %v4323
  %v4325 = vpop.xlane.xlu0 %4324
  %vm4326 = vcmp.eq.f32.partialorder %v4323, %v4325
  %v4327 = vsel %vm4326, %v4322, inf
  %4328 = vmin.xlane.f32.xlu0 %v4327
  %v4329 = vpop.xlane.xlu0 %4328
  %v4330 = vcvt.f32.s32 %v4329
  %v4331 = vcvt.f32.s32 %v4325
  %v4332 = vshll.u32 %v4331, 16
  %v4333 = vadd.s32 %v4332, %v4330
  %v4334 = vsel %vm1410, %v4276, 2147483647
  %v4335 = vand.u32 %v4334, 65535
  %v4336 = vshra.s32 %v4334, 16
  %v4337 = vcvt.s32.f32 %v4335
  %v4338 = vcvt.s32.f32 %v4336
  %4339 = vmin.xlane.f32.xlu0 %v4338
  %v4340 = vpop.xlane.xlu0 %4339
  %vm4341 = vcmp.eq.f32.partialorder %v4338, %v4340
  %v4342 = vsel %vm4341, %v4337, inf
  %4343 = vmin.xlane.f32.xlu0 %v4342
  %v4344 = vpop.xlane.xlu0 %4343
  %v4345 = vcvt.f32.s32 %v4344
  %v4346 = vcvt.f32.s32 %v4340
  %v4347 = vshll.u32 %v4346, 16
  %v4348 = vadd.s32 %v4347, %v4345
  %v4349 = vsel %vm1410, %v4277, 2147483647
  %v4350 = vand.u32 %v4349, 65535
  %v4351 = vshra.s32 %v4349, 16
  %v4352 = vcvt.s32.f32 %v4350
  %v4353 = vcvt.s32.f32 %v4351
  %4354 = vmin.xlane.f32.xlu0 %v4353
  %v4355 = vpop.xlane.xlu0 %4354
  %vm4356 = vcmp.eq.f32.partialorder %v4353, %v4355
  %v4357 = vsel %vm4356, %v4352, inf
  %4358 = vmin.xlane.f32.xlu0 %v4357
  %v4359 = vpop.xlane.xlu0 %4358
  %v4360 = vcvt.f32.s32 %v4359
  %v4361 = vcvt.f32.s32 %v4355
  %v4362 = vshll.u32 %v4361, 16
  %v4363 = vadd.s32 %v4362, %v4360
  %v4364 = vsel %vm1410, %v4278, 2147483647
  %v4365 = vand.u32 %v4364, 65535
  %v4366 = vshra.s32 %v4364, 16
  %v4367 = vcvt.s32.f32 %v4365
  %v4368 = vcvt.s32.f32 %v4366
  %4369 = vmin.xlane.f32.xlu0 %v4368
  %v4370 = vpop.xlane.xlu0 %4369
  %vm4371 = vcmp.eq.f32.partialorder %v4368, %v4370
  %v4372 = vsel %vm4371, %v4367, inf
  %4373 = vmin.xlane.f32.xlu0 %v4372
  %v4374 = vpop.xlane.xlu0 %4373
  %v4375 = vcvt.f32.s32 %v4374
  %v4376 = vcvt.f32.s32 %v4370
  %v4377 = vshll.u32 %v4376, 16
  %v4378 = vadd.s32 %v4377, %v4375
  %v4379 = vsel %vm1410, %v4279, 2147483647
  %v4380 = vand.u32 %v4379, 65535
  %v4381 = vshra.s32 %v4379, 16
  %v4382 = vcvt.s32.f32 %v4380
  %v4383 = vcvt.s32.f32 %v4381
  %4384 = vmin.xlane.f32.xlu0 %v4383
  %v4385 = vpop.xlane.xlu0 %4384
  %vm4386 = vcmp.eq.f32.partialorder %v4383, %v4385
  %v4387 = vsel %vm4386, %v4382, inf
  %4388 = vmin.xlane.f32.xlu0 %v4387
  %v4389 = vpop.xlane.xlu0 %4388
  %v4390 = vcvt.f32.s32 %v4389
  %v4391 = vcvt.f32.s32 %v4385
  %v4392 = vshll.u32 %v4391, 16
  %v4393 = vadd.s32 %v4392, %v4390
  %v4394 = vsel %vm1410, %v4280, 2147483647
  %v4395 = vand.u32 %v4394, 65535
  %v4396 = vshra.s32 %v4394, 16
  %v4397 = vcvt.s32.f32 %v4395
  %v4398 = vcvt.s32.f32 %v4396
  %4399 = vmin.xlane.f32.xlu0 %v4398
  %v4400 = vpop.xlane.xlu0 %4399
  %vm4401 = vcmp.eq.f32.partialorder %v4398, %v4400
  %v4402 = vsel %vm4401, %v4397, inf
  %4403 = vmin.xlane.f32.xlu0 %v4402
  %v4404 = vpop.xlane.xlu0 %4403
  %v4405 = vcvt.f32.s32 %v4404
  %v4406 = vcvt.f32.s32 %v4400
  %v4407 = vshll.u32 %v4406, 16
  %v4408 = vadd.s32 %v4407, %v4405
  %v4409 = vsel %vm1410, %v4281, 2147483647
  %v4410 = vand.u32 %v4409, 65535
  %v4411 = vshra.s32 %v4409, 16
  %v4412 = vcvt.s32.f32 %v4410
  %v4413 = vcvt.s32.f32 %v4411
  %4414 = vmin.xlane.f32.xlu0 %v4413
  %v4415 = vpop.xlane.xlu0 %4414
  %vm4416 = vcmp.eq.f32.partialorder %v4413, %v4415
  %v4417 = vsel %vm4416, %v4412, inf
  %4418 = vmin.xlane.f32.xlu0 %v4417
  %v4419 = vpop.xlane.xlu0 %4418
  %v4420 = vcvt.f32.s32 %v4419
  %v4421 = vcvt.f32.s32 %v4415
  %v4422 = vshll.u32 %v4421, 16
  %v4423 = vadd.s32 %v4422, %v4420
  %v4424 = vsel %vm1410, %v4282, 2147483647
  %v4425 = vand.u32 %v4424, 65535
  %v4426 = vshra.s32 %v4424, 16
  %v4427 = vcvt.s32.f32 %v4425
  %v4428 = vcvt.s32.f32 %v4426
  %4429 = vmin.xlane.f32.xlu0 %v4428
  %v4430 = vpop.xlane.xlu0 %4429
  %vm4431 = vcmp.eq.f32.partialorder %v4428, %v4430
  %v4432 = vsel %vm4431, %v4427, inf
  %4433 = vmin.xlane.f32.xlu0 %v4432
  %v4434 = vpop.xlane.xlu0 %4433
  %v4435 = vcvt.f32.s32 %v4434
  %v4436 = vcvt.f32.s32 %v4430
  %v4437 = vshll.u32 %v4436, 16
  %v4438 = vadd.s32 %v4437, %v4435
  %v4439 = vsel %vm1410, %v4283, 2147483647
  %v4440 = vand.u32 %v4439, 65535
  %v4441 = vshra.s32 %v4439, 16
  %v4442 = vcvt.s32.f32 %v4440
  %v4443 = vcvt.s32.f32 %v4441
  %4444 = vmin.xlane.f32.xlu0 %v4443
  %v4445 = vpop.xlane.xlu0 %4444
  %vm4446 = vcmp.eq.f32.partialorder %v4443, %v4445
  %v4447 = vsel %vm4446, %v4442, inf
  %4448 = vmin.xlane.f32.xlu0 %v4447
  %v4449 = vpop.xlane.xlu0 %4448
  %v4450 = vcvt.f32.s32 %v4449
  %v4451 = vcvt.f32.s32 %v4445
  %v4452 = vshll.u32 %v4451, 16
  %v4453 = vadd.s32 %v4452, %v4450
  %v4454 = vsel %vm1410, %v4284, 2147483647
  %v4455 = vand.u32 %v4454, 65535
  %v4456 = vshra.s32 %v4454, 16
  %v4457 = vcvt.s32.f32 %v4455
  %v4458 = vcvt.s32.f32 %v4456
  %4459 = vmin.xlane.f32.xlu0 %v4458
  %v4460 = vpop.xlane.xlu0 %4459
  %vm4461 = vcmp.eq.f32.partialorder %v4458, %v4460
  %v4462 = vsel %vm4461, %v4457, inf
  %4463 = vmin.xlane.f32.xlu0 %v4462
  %v4464 = vpop.xlane.xlu0 %4463
  %v4465 = vcvt.f32.s32 %v4464
  %v4466 = vcvt.f32.s32 %v4460
  %v4467 = vshll.u32 %v4466, 16
  %v4468 = vadd.s32 %v4467, %v4465
  %v4469 = vsel %vm1410, %v4285, 2147483647
  %v4470 = vand.u32 %v4469, 65535
  %v4471 = vshra.s32 %v4469, 16
  %v4472 = vcvt.s32.f32 %v4470
  %v4473 = vcvt.s32.f32 %v4471
  %4474 = vmin.xlane.f32.xlu0 %v4473
  %v4475 = vpop.xlane.xlu0 %4474
  %vm4476 = vcmp.eq.f32.partialorder %v4473, %v4475
  %v4477 = vsel %vm4476, %v4472, inf
  %4478 = vmin.xlane.f32.xlu0 %v4477
  %v4479 = vpop.xlane.xlu0 %4478
  %v4480 = vcvt.f32.s32 %v4479
  %v4481 = vcvt.f32.s32 %v4475
  %v4482 = vshll.u32 %v4481, 16
  %v4483 = vadd.s32 %v4482, %v4480
  %v4484 = vsel %vm1410, %v4286, 2147483647
  %v4485 = vand.u32 %v4484, 65535
  %v4486 = vshra.s32 %v4484, 16
  %v4487 = vcvt.s32.f32 %v4485
  %v4488 = vcvt.s32.f32 %v4486
  %4489 = vmin.xlane.f32.xlu0 %v4488
  %v4490 = vpop.xlane.xlu0 %4489
  %vm4491 = vcmp.eq.f32.partialorder %v4488, %v4490
  %v4492 = vsel %vm4491, %v4487, inf
  %4493 = vmin.xlane.f32.xlu0 %v4492
  %v4494 = vpop.xlane.xlu0 %4493
  %v4495 = vcvt.f32.s32 %v4494
  %v4496 = vcvt.f32.s32 %v4490
  %v4497 = vshll.u32 %v4496, 16
  %v4498 = vadd.s32 %v4497, %v4495
  %v4499 = vsel %vm1410, %v4287, 2147483647
  %v4500 = vand.u32 %v4499, 65535
  %v4501 = vshra.s32 %v4499, 16
  %v4502 = vcvt.s32.f32 %v4500
  %v4503 = vcvt.s32.f32 %v4501
  %4504 = vmin.xlane.f32.xlu0 %v4503
  %v4505 = vpop.xlane.xlu0 %4504
  %vm4506 = vcmp.eq.f32.partialorder %v4503, %v4505
  %v4507 = vsel %vm4506, %v4502, inf
  %4508 = vmin.xlane.f32.xlu0 %v4507
  %v4509 = vpop.xlane.xlu0 %4508
  %v4510 = vcvt.f32.s32 %v4509
  %v4511 = vcvt.f32.s32 %v4505
  %v4512 = vshll.u32 %v4511, 16
  %v4513 = vadd.s32 %v4512, %v4510
  %v4514 = vsel %vm1410, %v4288, 2147483647
  %v4515 = vand.u32 %v4514, 65535
  %v4516 = vshra.s32 %v4514, 16
  %v4517 = vcvt.s32.f32 %v4515
  %v4518 = vcvt.s32.f32 %v4516
  %4519 = vmin.xlane.f32.xlu0 %v4518
  %v4520 = vpop.xlane.xlu0 %4519
  %vm4521 = vcmp.eq.f32.partialorder %v4518, %v4520
  %v4522 = vsel %vm4521, %v4517, inf
  %4523 = vmin.xlane.f32.xlu0 %v4522
  %v4524 = vpop.xlane.xlu0 %4523
  %v4525 = vcvt.f32.s32 %v4524
  %v4526 = vcvt.f32.s32 %v4520
  %v4527 = vshll.u32 %v4526, 16
  %v4528 = vadd.s32 %v4527, %v4525
  %vm4529 = vcmp.eq.s32.totalorder %v3120, %v4303
  %vm4530 = vcmp.eq.s32.totalorder %v3120, %v4318
  %vm4531 = vcmp.eq.s32.totalorder %v3120, %v4333
  %vm4532 = vcmp.eq.s32.totalorder %v3120, %v4348
  %vm4533 = vcmp.eq.s32.totalorder %v3120, %v4363
  %vm4534 = vcmp.eq.s32.totalorder %v3120, %v4378
  %vm4535 = vcmp.eq.s32.totalorder %v3120, %v4393
  %vm4536 = vcmp.eq.s32.totalorder %v3120, %v4408
  %vm4537 = vcmp.eq.s32.totalorder %v3120, %v4423
  %vm4538 = vcmp.eq.s32.totalorder %v3120, %v4438
  %vm4539 = vcmp.eq.s32.totalorder %v3120, %v4453
  %vm4540 = vcmp.eq.s32.totalorder %v3120, %v4468
  %vm4541 = vcmp.eq.s32.totalorder %v3120, %v4483
  %vm4542 = vcmp.eq.s32.totalorder %v3120, %v4498
  %vm4543 = vcmp.eq.s32.totalorder %v3120, %v4513
  %vm4544 = vcmp.eq.s32.totalorder %v3120, %v4528
  %v4545 = vsel %vm4529, %v1953, 0.0
  %v4546 = vsel %vm4530, %v1968, 0.0
  %v4547 = vsel %vm4531, %v1983, 0.0
  %v4548 = vsel %vm4532, %v1998, 0.0
  %v4549 = vsel %vm4533, %v2013, 0.0
  %v4550 = vsel %vm4534, %v2028, 0.0
  %v4551 = vsel %vm4535, %v2043, 0.0
  %v4552 = vsel %vm4536, %v2058, 0.0
  %v4553 = vsel %vm4537, %v2073, 0.0
  %v4554 = vsel %vm4538, %v2088, 0.0
  %v4555 = vsel %vm4539, %v2103, 0.0
  %v4556 = vsel %vm4540, %v2118, 0.0
  %v4557 = vsel %vm4541, %v2133, 0.0
  %v4558 = vsel %vm4542, %v2148, 0.0
  %v4559 = vsel %vm4543, %v2163, 0.0
  %v4560 = vsel %vm4544, %v2178, 0.0
  %v4561 = vsel %vm4529, -inf, %v1953
  %v4562 = vsel %vm4530, -inf, %v1968
  %v4563 = vsel %vm4531, -inf, %v1983
  %v4564 = vsel %vm4532, -inf, %v1998
  %v4565 = vsel %vm4533, -inf, %v2013
  %v4566 = vsel %vm4534, -inf, %v2028
  %v4567 = vsel %vm4535, -inf, %v2043
  %v4568 = vsel %vm4536, -inf, %v2058
  %v4569 = vsel %vm4537, -inf, %v2073
  %v4570 = vsel %vm4538, -inf, %v2088
  %v4571 = vsel %vm4539, -inf, %v2103
  %v4572 = vsel %vm4540, -inf, %v2118
  %v4573 = vsel %vm4541, -inf, %v2133
  %v4574 = vsel %vm4542, -inf, %v2148
  %v4575 = vsel %vm4543, -inf, %v2163
  %v4576 = vsel %vm4544, -inf, %v2178
  %v4577 = vsel %vm1410, %v4561, -inf
  %4578 = vmax.xlane.f32.xlu0 %v4577
  %v4579 = vpop.xlane.xlu0 %4578
  %v4580 = vsel %vm1410, %v4562, -inf
  %4581 = vmax.xlane.f32.xlu0 %v4580
  %v4582 = vpop.xlane.xlu0 %4581
  %v4583 = vsel %vm1410, %v4563, -inf
  %4584 = vmax.xlane.f32.xlu0 %v4583
  %v4585 = vpop.xlane.xlu0 %4584
  %v4586 = vsel %vm1410, %v4564, -inf
  %4587 = vmax.xlane.f32.xlu0 %v4586
  %v4588 = vpop.xlane.xlu0 %4587
  %v4589 = vsel %vm1410, %v4565, -inf
  %4590 = vmax.xlane.f32.xlu0 %v4589
  %v4591 = vpop.xlane.xlu0 %4590
  %v4592 = vsel %vm1410, %v4566, -inf
  %4593 = vmax.xlane.f32.xlu0 %v4592
  %v4594 = vpop.xlane.xlu0 %4593
  %v4595 = vsel %vm1410, %v4567, -inf
  %4596 = vmax.xlane.f32.xlu0 %v4595
  %v4597 = vpop.xlane.xlu0 %4596
  %v4598 = vsel %vm1410, %v4568, -inf
  %4599 = vmax.xlane.f32.xlu0 %v4598
  %v4600 = vpop.xlane.xlu0 %4599
  %v4601 = vsel %vm1410, %v4569, -inf
  %4602 = vmax.xlane.f32.xlu0 %v4601
  %v4603 = vpop.xlane.xlu0 %4602
  %v4604 = vsel %vm1410, %v4570, -inf
  %4605 = vmax.xlane.f32.xlu0 %v4604
  %v4606 = vpop.xlane.xlu0 %4605
  %v4607 = vsel %vm1410, %v4571, -inf
  %4608 = vmax.xlane.f32.xlu0 %v4607
  %v4609 = vpop.xlane.xlu0 %4608
  %v4610 = vsel %vm1410, %v4572, -inf
  %4611 = vmax.xlane.f32.xlu0 %v4610
  %v4612 = vpop.xlane.xlu0 %4611
  %v4613 = vsel %vm1410, %v4573, -inf
  %4614 = vmax.xlane.f32.xlu0 %v4613
  %v4615 = vpop.xlane.xlu0 %4614
  %v4616 = vsel %vm1410, %v4574, -inf
  %4617 = vmax.xlane.f32.xlu0 %v4616
  %v4618 = vpop.xlane.xlu0 %4617
  %v4619 = vsel %vm1410, %v4575, -inf
  %4620 = vmax.xlane.f32.xlu0 %v4619
  %v4621 = vpop.xlane.xlu0 %4620
  %v4622 = vsel %vm1410, %v4576, -inf
  %4623 = vmax.xlane.f32.xlu0 %v4622
  %v4624 = vpop.xlane.xlu0 %4623
  %vm4625 = vcmp.eq.f32.partialorder %v4561, %v4579
  %vm4626 = vcmp.eq.f32.partialorder %v4562, %v4582
  %vm4627 = vcmp.eq.f32.partialorder %v4563, %v4585
  %vm4628 = vcmp.eq.f32.partialorder %v4564, %v4588
  %vm4629 = vcmp.eq.f32.partialorder %v4565, %v4591
  %vm4630 = vcmp.eq.f32.partialorder %v4566, %v4594
  %vm4631 = vcmp.eq.f32.partialorder %v4567, %v4597
  %vm4632 = vcmp.eq.f32.partialorder %v4568, %v4600
  %vm4633 = vcmp.eq.f32.partialorder %v4569, %v4603
  %vm4634 = vcmp.eq.f32.partialorder %v4570, %v4606
  %vm4635 = vcmp.eq.f32.partialorder %v4571, %v4609
  %vm4636 = vcmp.eq.f32.partialorder %v4572, %v4612
  %vm4637 = vcmp.eq.f32.partialorder %v4573, %v4615
  %vm4638 = vcmp.eq.f32.partialorder %v4574, %v4618
  %vm4639 = vcmp.eq.f32.partialorder %v4575, %v4621
  %vm4640 = vcmp.eq.f32.partialorder %v4576, %v4624
  %v4641 = vsel %vm4625, %v3120, 8
  %v4642 = vsel %vm4626, %v3120, 8
  %v4643 = vsel %vm4627, %v3120, 8
  %v4644 = vsel %vm4628, %v3120, 8
  %v4645 = vsel %vm4629, %v3120, 8
  %v4646 = vsel %vm4630, %v3120, 8
  %v4647 = vsel %vm4631, %v3120, 8
  %v4648 = vsel %vm4632, %v3120, 8
  %v4649 = vsel %vm4633, %v3120, 8
  %v4650 = vsel %vm4634, %v3120, 8
  %v4651 = vsel %vm4635, %v3120, 8
  %v4652 = vsel %vm4636, %v3120, 8
  %v4653 = vsel %vm4637, %v3120, 8
  %v4654 = vsel %vm4638, %v3120, 8
  %v4655 = vsel %vm4639, %v3120, 8
  %v4656 = vsel %vm4640, %v3120, 8
  %v4657 = vsel %vm1410, %v4641, 2147483647
  %v4658 = vand.u32 %v4657, 65535
  %v4659 = vshra.s32 %v4657, 16
  %v4660 = vcvt.s32.f32 %v4658
  %v4661 = vcvt.s32.f32 %v4659
  %4662 = vmin.xlane.f32.xlu0 %v4661
  %v4663 = vpop.xlane.xlu0 %4662
  %vm4664 = vcmp.eq.f32.partialorder %v4661, %v4663
  %v4665 = vsel %vm4664, %v4660, inf
  %4666 = vmin.xlane.f32.xlu0 %v4665
  %v4667 = vpop.xlane.xlu0 %4666
  %v4668 = vcvt.f32.s32 %v4667
  %v4669 = vcvt.f32.s32 %v4663
  %v4670 = vshll.u32 %v4669, 16
  %v4671 = vadd.s32 %v4670, %v4668
  %v4672 = vsel %vm1410, %v4642, 2147483647
  %v4673 = vand.u32 %v4672, 65535
  %v4674 = vshra.s32 %v4672, 16
  %v4675 = vcvt.s32.f32 %v4673
  %v4676 = vcvt.s32.f32 %v4674
  %4677 = vmin.xlane.f32.xlu0 %v4676
  %v4678 = vpop.xlane.xlu0 %4677
  %vm4679 = vcmp.eq.f32.partialorder %v4676, %v4678
  %v4680 = vsel %vm4679, %v4675, inf
  %4681 = vmin.xlane.f32.xlu0 %v4680
  %v4682 = vpop.xlane.xlu0 %4681
  %v4683 = vcvt.f32.s32 %v4682
  %v4684 = vcvt.f32.s32 %v4678
  %v4685 = vshll.u32 %v4684, 16
  %v4686 = vadd.s32 %v4685, %v4683
  %v4687 = vsel %vm1410, %v4643, 2147483647
  %v4688 = vand.u32 %v4687, 65535
  %v4689 = vshra.s32 %v4687, 16
  %v4690 = vcvt.s32.f32 %v4688
  %v4691 = vcvt.s32.f32 %v4689
  %4692 = vmin.xlane.f32.xlu0 %v4691
  %v4693 = vpop.xlane.xlu0 %4692
  %vm4694 = vcmp.eq.f32.partialorder %v4691, %v4693
  %v4695 = vsel %vm4694, %v4690, inf
  %4696 = vmin.xlane.f32.xlu0 %v4695
  %v4697 = vpop.xlane.xlu0 %4696
  %v4698 = vcvt.f32.s32 %v4697
  %v4699 = vcvt.f32.s32 %v4693
  %v4700 = vshll.u32 %v4699, 16
  %v4701 = vadd.s32 %v4700, %v4698
  %v4702 = vsel %vm1410, %v4644, 2147483647
  %v4703 = vand.u32 %v4702, 65535
  %v4704 = vshra.s32 %v4702, 16
  %v4705 = vcvt.s32.f32 %v4703
  %v4706 = vcvt.s32.f32 %v4704
  %4707 = vmin.xlane.f32.xlu0 %v4706
  %v4708 = vpop.xlane.xlu0 %4707
  %vm4709 = vcmp.eq.f32.partialorder %v4706, %v4708
  %v4710 = vsel %vm4709, %v4705, inf
  %4711 = vmin.xlane.f32.xlu0 %v4710
  %v4712 = vpop.xlane.xlu0 %4711
  %v4713 = vcvt.f32.s32 %v4712
  %v4714 = vcvt.f32.s32 %v4708
  %v4715 = vshll.u32 %v4714, 16
  %v4716 = vadd.s32 %v4715, %v4713
  %v4717 = vsel %vm1410, %v4645, 2147483647
  %v4718 = vand.u32 %v4717, 65535
  %v4719 = vshra.s32 %v4717, 16
  %v4720 = vcvt.s32.f32 %v4718
  %v4721 = vcvt.s32.f32 %v4719
  %4722 = vmin.xlane.f32.xlu0 %v4721
  %v4723 = vpop.xlane.xlu0 %4722
  %vm4724 = vcmp.eq.f32.partialorder %v4721, %v4723
  %v4725 = vsel %vm4724, %v4720, inf
  %4726 = vmin.xlane.f32.xlu0 %v4725
  %v4727 = vpop.xlane.xlu0 %4726
  %v4728 = vcvt.f32.s32 %v4727
  %v4729 = vcvt.f32.s32 %v4723
  %v4730 = vshll.u32 %v4729, 16
  %v4731 = vadd.s32 %v4730, %v4728
  %v4732 = vsel %vm1410, %v4646, 2147483647
  %v4733 = vand.u32 %v4732, 65535
  %v4734 = vshra.s32 %v4732, 16
  %v4735 = vcvt.s32.f32 %v4733
  %v4736 = vcvt.s32.f32 %v4734
  %4737 = vmin.xlane.f32.xlu0 %v4736
  %v4738 = vpop.xlane.xlu0 %4737
  %vm4739 = vcmp.eq.f32.partialorder %v4736, %v4738
  %v4740 = vsel %vm4739, %v4735, inf
  %4741 = vmin.xlane.f32.xlu0 %v4740
  %v4742 = vpop.xlane.xlu0 %4741
  %v4743 = vcvt.f32.s32 %v4742
  %v4744 = vcvt.f32.s32 %v4738
  %v4745 = vshll.u32 %v4744, 16
  %v4746 = vadd.s32 %v4745, %v4743
  %v4747 = vsel %vm1410, %v4647, 2147483647
  %v4748 = vand.u32 %v4747, 65535
  %v4749 = vshra.s32 %v4747, 16
  %v4750 = vcvt.s32.f32 %v4748
  %v4751 = vcvt.s32.f32 %v4749
  %4752 = vmin.xlane.f32.xlu0 %v4751
  %v4753 = vpop.xlane.xlu0 %4752
  %vm4754 = vcmp.eq.f32.partialorder %v4751, %v4753
  %v4755 = vsel %vm4754, %v4750, inf
  %4756 = vmin.xlane.f32.xlu0 %v4755
  %v4757 = vpop.xlane.xlu0 %4756
  %v4758 = vcvt.f32.s32 %v4757
  %v4759 = vcvt.f32.s32 %v4753
  %v4760 = vshll.u32 %v4759, 16
  %v4761 = vadd.s32 %v4760, %v4758
  %v4762 = vsel %vm1410, %v4648, 2147483647
  %v4763 = vand.u32 %v4762, 65535
  %v4764 = vshra.s32 %v4762, 16
  %v4765 = vcvt.s32.f32 %v4763
  %v4766 = vcvt.s32.f32 %v4764
  %4767 = vmin.xlane.f32.xlu0 %v4766
  %v4768 = vpop.xlane.xlu0 %4767
  %vm4769 = vcmp.eq.f32.partialorder %v4766, %v4768
  %v4770 = vsel %vm4769, %v4765, inf
  %4771 = vmin.xlane.f32.xlu0 %v4770
  %v4772 = vpop.xlane.xlu0 %4771
  %v4773 = vcvt.f32.s32 %v4772
  %v4774 = vcvt.f32.s32 %v4768
  %v4775 = vshll.u32 %v4774, 16
  %v4776 = vadd.s32 %v4775, %v4773
  %v4777 = vsel %vm1410, %v4649, 2147483647
  %v4778 = vand.u32 %v4777, 65535
  %v4779 = vshra.s32 %v4777, 16
  %v4780 = vcvt.s32.f32 %v4778
  %v4781 = vcvt.s32.f32 %v4779
  %4782 = vmin.xlane.f32.xlu0 %v4781
  %v4783 = vpop.xlane.xlu0 %4782
  %vm4784 = vcmp.eq.f32.partialorder %v4781, %v4783
  %v4785 = vsel %vm4784, %v4780, inf
  %4786 = vmin.xlane.f32.xlu0 %v4785
  %v4787 = vpop.xlane.xlu0 %4786
  %v4788 = vcvt.f32.s32 %v4787
  %v4789 = vcvt.f32.s32 %v4783
  %v4790 = vshll.u32 %v4789, 16
  %v4791 = vadd.s32 %v4790, %v4788
  %v4792 = vsel %vm1410, %v4650, 2147483647
  %v4793 = vand.u32 %v4792, 65535
  %v4794 = vshra.s32 %v4792, 16
  %v4795 = vcvt.s32.f32 %v4793
  %v4796 = vcvt.s32.f32 %v4794
  %4797 = vmin.xlane.f32.xlu0 %v4796
  %v4798 = vpop.xlane.xlu0 %4797
  %vm4799 = vcmp.eq.f32.partialorder %v4796, %v4798
  %v4800 = vsel %vm4799, %v4795, inf
  %4801 = vmin.xlane.f32.xlu0 %v4800
  %v4802 = vpop.xlane.xlu0 %4801
  %v4803 = vcvt.f32.s32 %v4802
  %v4804 = vcvt.f32.s32 %v4798
  %v4805 = vshll.u32 %v4804, 16
  %v4806 = vadd.s32 %v4805, %v4803
  %v4807 = vsel %vm1410, %v4651, 2147483647
  %v4808 = vand.u32 %v4807, 65535
  %v4809 = vshra.s32 %v4807, 16
  %v4810 = vcvt.s32.f32 %v4808
  %v4811 = vcvt.s32.f32 %v4809
  %4812 = vmin.xlane.f32.xlu0 %v4811
  %v4813 = vpop.xlane.xlu0 %4812
  %vm4814 = vcmp.eq.f32.partialorder %v4811, %v4813
  %v4815 = vsel %vm4814, %v4810, inf
  %4816 = vmin.xlane.f32.xlu0 %v4815
  %v4817 = vpop.xlane.xlu0 %4816
  %v4818 = vcvt.f32.s32 %v4817
  %v4819 = vcvt.f32.s32 %v4813
  %v4820 = vshll.u32 %v4819, 16
  %v4821 = vadd.s32 %v4820, %v4818
  %v4822 = vsel %vm1410, %v4652, 2147483647
  %v4823 = vand.u32 %v4822, 65535
  %v4824 = vshra.s32 %v4822, 16
  %v4825 = vcvt.s32.f32 %v4823
  %v4826 = vcvt.s32.f32 %v4824
  %4827 = vmin.xlane.f32.xlu0 %v4826
  %v4828 = vpop.xlane.xlu0 %4827
  %vm4829 = vcmp.eq.f32.partialorder %v4826, %v4828
  %v4830 = vsel %vm4829, %v4825, inf
  %4831 = vmin.xlane.f32.xlu0 %v4830
  %v4832 = vpop.xlane.xlu0 %4831
  %v4833 = vcvt.f32.s32 %v4832
  %v4834 = vcvt.f32.s32 %v4828
  %v4835 = vshll.u32 %v4834, 16
  %v4836 = vadd.s32 %v4835, %v4833
  %v4837 = vsel %vm1410, %v4653, 2147483647
  %v4838 = vand.u32 %v4837, 65535
  %v4839 = vshra.s32 %v4837, 16
  %v4840 = vcvt.s32.f32 %v4838
  %v4841 = vcvt.s32.f32 %v4839
  %4842 = vmin.xlane.f32.xlu0 %v4841
  %v4843 = vpop.xlane.xlu0 %4842
  %vm4844 = vcmp.eq.f32.partialorder %v4841, %v4843
  %v4845 = vsel %vm4844, %v4840, inf
  %4846 = vmin.xlane.f32.xlu0 %v4845
  %v4847 = vpop.xlane.xlu0 %4846
  %v4848 = vcvt.f32.s32 %v4847
  %v4849 = vcvt.f32.s32 %v4843
  %v4850 = vshll.u32 %v4849, 16
  %v4851 = vadd.s32 %v4850, %v4848
  %v4852 = vsel %vm1410, %v4654, 2147483647
  %v4853 = vand.u32 %v4852, 65535
  %v4854 = vshra.s32 %v4852, 16
  %v4855 = vcvt.s32.f32 %v4853
  %v4856 = vcvt.s32.f32 %v4854
  %4857 = vmin.xlane.f32.xlu0 %v4856
  %v4858 = vpop.xlane.xlu0 %4857
  %vm4859 = vcmp.eq.f32.partialorder %v4856, %v4858
  %v4860 = vsel %vm4859, %v4855, inf
  %4861 = vmin.xlane.f32.xlu0 %v4860
  %v4862 = vpop.xlane.xlu0 %4861
  %v4863 = vcvt.f32.s32 %v4862
  %v4864 = vcvt.f32.s32 %v4858
  %v4865 = vshll.u32 %v4864, 16
  %v4866 = vadd.s32 %v4865, %v4863
  %v4867 = vsel %vm1410, %v4655, 2147483647
  %v4868 = vand.u32 %v4867, 65535
  %v4869 = vshra.s32 %v4867, 16
  %v4870 = vcvt.s32.f32 %v4868
  %v4871 = vcvt.s32.f32 %v4869
  %4872 = vmin.xlane.f32.xlu0 %v4871
  %v4873 = vpop.xlane.xlu0 %4872
  %vm4874 = vcmp.eq.f32.partialorder %v4871, %v4873
  %v4875 = vsel %vm4874, %v4870, inf
  %4876 = vmin.xlane.f32.xlu0 %v4875
  %v4877 = vpop.xlane.xlu0 %4876
  %v4878 = vcvt.f32.s32 %v4877
  %v4879 = vcvt.f32.s32 %v4873
  %v4880 = vshll.u32 %v4879, 16
  %v4881 = vadd.s32 %v4880, %v4878
  %v4882 = vsel %vm1410, %v4656, 2147483647
  %v4883 = vand.u32 %v4882, 65535
  %v4884 = vshra.s32 %v4882, 16
  %v4885 = vcvt.s32.f32 %v4883
  %v4886 = vcvt.s32.f32 %v4884
  %4887 = vmin.xlane.f32.xlu0 %v4886
  %v4888 = vpop.xlane.xlu0 %4887
  %vm4889 = vcmp.eq.f32.partialorder %v4886, %v4888
  %v4890 = vsel %vm4889, %v4885, inf
  %4891 = vmin.xlane.f32.xlu0 %v4890
  %v4892 = vpop.xlane.xlu0 %4891
  %v4893 = vcvt.f32.s32 %v4892
  %v4894 = vcvt.f32.s32 %v4888
  %v4895 = vshll.u32 %v4894, 16
  %v4896 = vadd.s32 %v4895, %v4893
  %vm4897 = vcmp.eq.s32.totalorder %v3120, %v4671
  %vm4898 = vcmp.eq.s32.totalorder %v3120, %v4686
  %vm4899 = vcmp.eq.s32.totalorder %v3120, %v4701
  %vm4900 = vcmp.eq.s32.totalorder %v3120, %v4716
  %vm4901 = vcmp.eq.s32.totalorder %v3120, %v4731
  %vm4902 = vcmp.eq.s32.totalorder %v3120, %v4746
  %vm4903 = vcmp.eq.s32.totalorder %v3120, %v4761
  %vm4904 = vcmp.eq.s32.totalorder %v3120, %v4776
  %vm4905 = vcmp.eq.s32.totalorder %v3120, %v4791
  %vm4906 = vcmp.eq.s32.totalorder %v3120, %v4806
  %vm4907 = vcmp.eq.s32.totalorder %v3120, %v4821
  %vm4908 = vcmp.eq.s32.totalorder %v3120, %v4836
  %vm4909 = vcmp.eq.s32.totalorder %v3120, %v4851
  %vm4910 = vcmp.eq.s32.totalorder %v3120, %v4866
  %vm4911 = vcmp.eq.s32.totalorder %v3120, %v4881
  %vm4912 = vcmp.eq.s32.totalorder %v3120, %v4896
  %v4913 = vsel %vm4897, %v1953, %v4545
  %v4914 = vsel %vm4898, %v1968, %v4546
  %v4915 = vsel %vm4899, %v1983, %v4547
  %v4916 = vsel %vm4900, %v1998, %v4548
  %v4917 = vsel %vm4901, %v2013, %v4549
  %v4918 = vsel %vm4902, %v2028, %v4550
  %v4919 = vsel %vm4903, %v2043, %v4551
  %v4920 = vsel %vm4904, %v2058, %v4552
  %v4921 = vsel %vm4905, %v2073, %v4553
  %v4922 = vsel %vm4906, %v2088, %v4554
  %v4923 = vsel %vm4907, %v2103, %v4555
  %v4924 = vsel %vm4908, %v2118, %v4556
  %v4925 = vsel %vm4909, %v2133, %v4557
  %v4926 = vsel %vm4910, %v2148, %v4558
  %v4927 = vsel %vm4911, %v2163, %v4559
  %v4928 = vsel %vm4912, %v2178, %v4560
  %v4929 = vsel %vm4897, -inf, %v4561
  %v4930 = vsel %vm4898, -inf, %v4562
  %v4931 = vsel %vm4899, -inf, %v4563
  %v4932 = vsel %vm4900, -inf, %v4564
  %v4933 = vsel %vm4901, -inf, %v4565
  %v4934 = vsel %vm4902, -inf, %v4566
  %v4935 = vsel %vm4903, -inf, %v4567
  %v4936 = vsel %vm4904, -inf, %v4568
  %v4937 = vsel %vm4905, -inf, %v4569
  %v4938 = vsel %vm4906, -inf, %v4570
  %v4939 = vsel %vm4907, -inf, %v4571
  %v4940 = vsel %vm4908, -inf, %v4572
  %v4941 = vsel %vm4909, -inf, %v4573
  %v4942 = vsel %vm4910, -inf, %v4574
  %v4943 = vsel %vm4911, -inf, %v4575
  %v4944 = vsel %vm4912, -inf, %v4576
  %v4945 = vsel %vm1410, %v4929, -inf
  %4946 = vmax.xlane.f32.xlu0 %v4945
  %v4947 = vpop.xlane.xlu0 %4946
  %v4948 = vsel %vm1410, %v4930, -inf
  %4949 = vmax.xlane.f32.xlu0 %v4948
  %v4950 = vpop.xlane.xlu0 %4949
  %v4951 = vsel %vm1410, %v4931, -inf
  %4952 = vmax.xlane.f32.xlu0 %v4951
  %v4953 = vpop.xlane.xlu0 %4952
  %v4954 = vsel %vm1410, %v4932, -inf
  %4955 = vmax.xlane.f32.xlu0 %v4954
  %v4956 = vpop.xlane.xlu0 %4955
  %v4957 = vsel %vm1410, %v4933, -inf
  %4958 = vmax.xlane.f32.xlu0 %v4957
  %v4959 = vpop.xlane.xlu0 %4958
  %v4960 = vsel %vm1410, %v4934, -inf
  %4961 = vmax.xlane.f32.xlu0 %v4960
  %v4962 = vpop.xlane.xlu0 %4961
  %v4963 = vsel %vm1410, %v4935, -inf
  %4964 = vmax.xlane.f32.xlu0 %v4963
  %v4965 = vpop.xlane.xlu0 %4964
  %v4966 = vsel %vm1410, %v4936, -inf
  %4967 = vmax.xlane.f32.xlu0 %v4966
  %v4968 = vpop.xlane.xlu0 %4967
  %v4969 = vsel %vm1410, %v4937, -inf
  %4970 = vmax.xlane.f32.xlu0 %v4969
  %v4971 = vpop.xlane.xlu0 %4970
  %v4972 = vsel %vm1410, %v4938, -inf
  %4973 = vmax.xlane.f32.xlu0 %v4972
  %v4974 = vpop.xlane.xlu0 %4973
  %v4975 = vsel %vm1410, %v4939, -inf
  %4976 = vmax.xlane.f32.xlu0 %v4975
  %v4977 = vpop.xlane.xlu0 %4976
  %v4978 = vsel %vm1410, %v4940, -inf
  %4979 = vmax.xlane.f32.xlu0 %v4978
  %v4980 = vpop.xlane.xlu0 %4979
  %v4981 = vsel %vm1410, %v4941, -inf
  %4982 = vmax.xlane.f32.xlu0 %v4981
  %v4983 = vpop.xlane.xlu0 %4982
  %v4984 = vsel %vm1410, %v4942, -inf
  %4985 = vmax.xlane.f32.xlu0 %v4984
  %v4986 = vpop.xlane.xlu0 %4985
  %v4987 = vsel %vm1410, %v4943, -inf
  %4988 = vmax.xlane.f32.xlu0 %v4987
  %v4989 = vpop.xlane.xlu0 %4988
  %v4990 = vsel %vm1410, %v4944, -inf
  %4991 = vmax.xlane.f32.xlu0 %v4990
  %v4992 = vpop.xlane.xlu0 %4991
  %vm4993 = vcmp.eq.f32.partialorder %v4929, %v4947
  %vm4994 = vcmp.eq.f32.partialorder %v4930, %v4950
  %vm4995 = vcmp.eq.f32.partialorder %v4931, %v4953
  %vm4996 = vcmp.eq.f32.partialorder %v4932, %v4956
  %vm4997 = vcmp.eq.f32.partialorder %v4933, %v4959
  %vm4998 = vcmp.eq.f32.partialorder %v4934, %v4962
  %vm4999 = vcmp.eq.f32.partialorder %v4935, %v4965
  %vm5000 = vcmp.eq.f32.partialorder %v4936, %v4968
  %vm5001 = vcmp.eq.f32.partialorder %v4937, %v4971
  %vm5002 = vcmp.eq.f32.partialorder %v4938, %v4974
  %vm5003 = vcmp.eq.f32.partialorder %v4939, %v4977
  %vm5004 = vcmp.eq.f32.partialorder %v4940, %v4980
  %vm5005 = vcmp.eq.f32.partialorder %v4941, %v4983
  %vm5006 = vcmp.eq.f32.partialorder %v4942, %v4986
  %vm5007 = vcmp.eq.f32.partialorder %v4943, %v4989
  %vm5008 = vcmp.eq.f32.partialorder %v4944, %v4992
  %v5009 = vsel %vm4993, %v3120, 8
  %v5010 = vsel %vm4994, %v3120, 8
  %v5011 = vsel %vm4995, %v3120, 8
  %v5012 = vsel %vm4996, %v3120, 8
  %v5013 = vsel %vm4997, %v3120, 8
  %v5014 = vsel %vm4998, %v3120, 8
  %v5015 = vsel %vm4999, %v3120, 8
  %v5016 = vsel %vm5000, %v3120, 8
  %v5017 = vsel %vm5001, %v3120, 8
  %v5018 = vsel %vm5002, %v3120, 8
  %v5019 = vsel %vm5003, %v3120, 8
  %v5020 = vsel %vm5004, %v3120, 8
  %v5021 = vsel %vm5005, %v3120, 8
  %v5022 = vsel %vm5006, %v3120, 8
  %v5023 = vsel %vm5007, %v3120, 8
  %v5024 = vsel %vm5008, %v3120, 8
  %v5025 = vsel %vm1410, %v5009, 2147483647
  %v5026 = vand.u32 %v5025, 65535
  %v5027 = vshra.s32 %v5025, 16
  %v5028 = vcvt.s32.f32 %v5026
  %v5029 = vcvt.s32.f32 %v5027
  %5030 = vmin.xlane.f32.xlu0 %v5029
  %v5031 = vpop.xlane.xlu0 %5030
  %vm5032 = vcmp.eq.f32.partialorder %v5029, %v5031
  %v5033 = vsel %vm5032, %v5028, inf
  %5034 = vmin.xlane.f32.xlu0 %v5033
  %v5035 = vpop.xlane.xlu0 %5034
  %v5036 = vcvt.f32.s32 %v5035
  %v5037 = vcvt.f32.s32 %v5031
  %v5038 = vshll.u32 %v5037, 16
  %v5039 = vadd.s32 %v5038, %v5036
  %v5040 = vsel %vm1410, %v5010, 2147483647
  %v5041 = vand.u32 %v5040, 65535
  %v5042 = vshra.s32 %v5040, 16
  %v5043 = vcvt.s32.f32 %v5041
  %v5044 = vcvt.s32.f32 %v5042
  %5045 = vmin.xlane.f32.xlu0 %v5044
  %v5046 = vpop.xlane.xlu0 %5045
  %vm5047 = vcmp.eq.f32.partialorder %v5044, %v5046
  %v5048 = vsel %vm5047, %v5043, inf
  %5049 = vmin.xlane.f32.xlu0 %v5048
  %v5050 = vpop.xlane.xlu0 %5049
  %v5051 = vcvt.f32.s32 %v5050
  %v5052 = vcvt.f32.s32 %v5046
  %v5053 = vshll.u32 %v5052, 16
  %v5054 = vadd.s32 %v5053, %v5051
  %v5055 = vsel %vm1410, %v5011, 2147483647
  %v5056 = vand.u32 %v5055, 65535
  %v5057 = vshra.s32 %v5055, 16
  %v5058 = vcvt.s32.f32 %v5056
  %v5059 = vcvt.s32.f32 %v5057
  %5060 = vmin.xlane.f32.xlu0 %v5059
  %v5061 = vpop.xlane.xlu0 %5060
  %vm5062 = vcmp.eq.f32.partialorder %v5059, %v5061
  %v5063 = vsel %vm5062, %v5058, inf
  %5064 = vmin.xlane.f32.xlu0 %v5063
  %v5065 = vpop.xlane.xlu0 %5064
  %v5066 = vcvt.f32.s32 %v5065
  %v5067 = vcvt.f32.s32 %v5061
  %v5068 = vshll.u32 %v5067, 16
  %v5069 = vadd.s32 %v5068, %v5066
  %v5070 = vsel %vm1410, %v5012, 2147483647
  %v5071 = vand.u32 %v5070, 65535
  %v5072 = vshra.s32 %v5070, 16
  %v5073 = vcvt.s32.f32 %v5071
  %v5074 = vcvt.s32.f32 %v5072
  %5075 = vmin.xlane.f32.xlu0 %v5074
  %v5076 = vpop.xlane.xlu0 %5075
  %vm5077 = vcmp.eq.f32.partialorder %v5074, %v5076
  %v5078 = vsel %vm5077, %v5073, inf
  %5079 = vmin.xlane.f32.xlu0 %v5078
  %v5080 = vpop.xlane.xlu0 %5079
  %v5081 = vcvt.f32.s32 %v5080
  %v5082 = vcvt.f32.s32 %v5076
  %v5083 = vshll.u32 %v5082, 16
  %v5084 = vadd.s32 %v5083, %v5081
  %v5085 = vsel %vm1410, %v5013, 2147483647
  %v5086 = vand.u32 %v5085, 65535
  %v5087 = vshra.s32 %v5085, 16
  %v5088 = vcvt.s32.f32 %v5086
  %v5089 = vcvt.s32.f32 %v5087
  %5090 = vmin.xlane.f32.xlu0 %v5089
  %v5091 = vpop.xlane.xlu0 %5090
  %vm5092 = vcmp.eq.f32.partialorder %v5089, %v5091
  %v5093 = vsel %vm5092, %v5088, inf
  %5094 = vmin.xlane.f32.xlu0 %v5093
  %v5095 = vpop.xlane.xlu0 %5094
  %v5096 = vcvt.f32.s32 %v5095
  %v5097 = vcvt.f32.s32 %v5091
  %v5098 = vshll.u32 %v5097, 16
  %v5099 = vadd.s32 %v5098, %v5096
  %v5100 = vsel %vm1410, %v5014, 2147483647
  %v5101 = vand.u32 %v5100, 65535
  %v5102 = vshra.s32 %v5100, 16
  %v5103 = vcvt.s32.f32 %v5101
  %v5104 = vcvt.s32.f32 %v5102
  %5105 = vmin.xlane.f32.xlu0 %v5104
  %v5106 = vpop.xlane.xlu0 %5105
  %vm5107 = vcmp.eq.f32.partialorder %v5104, %v5106
  %v5108 = vsel %vm5107, %v5103, inf
  %5109 = vmin.xlane.f32.xlu0 %v5108
  %v5110 = vpop.xlane.xlu0 %5109
  %v5111 = vcvt.f32.s32 %v5110
  %v5112 = vcvt.f32.s32 %v5106
  %v5113 = vshll.u32 %v5112, 16
  %v5114 = vadd.s32 %v5113, %v5111
  %v5115 = vsel %vm1410, %v5015, 2147483647
  %v5116 = vand.u32 %v5115, 65535
  %v5117 = vshra.s32 %v5115, 16
  %v5118 = vcvt.s32.f32 %v5116
  %v5119 = vcvt.s32.f32 %v5117
  %5120 = vmin.xlane.f32.xlu0 %v5119
  %v5121 = vpop.xlane.xlu0 %5120
  %vm5122 = vcmp.eq.f32.partialorder %v5119, %v5121
  %v5123 = vsel %vm5122, %v5118, inf
  %5124 = vmin.xlane.f32.xlu0 %v5123
  %v5125 = vpop.xlane.xlu0 %5124
  %v5126 = vcvt.f32.s32 %v5125
  %v5127 = vcvt.f32.s32 %v5121
  %v5128 = vshll.u32 %v5127, 16
  %v5129 = vadd.s32 %v5128, %v5126
  %v5130 = vsel %vm1410, %v5016, 2147483647
  %v5131 = vand.u32 %v5130, 65535
  %v5132 = vshra.s32 %v5130, 16
  %v5133 = vcvt.s32.f32 %v5131
  %v5134 = vcvt.s32.f32 %v5132
  %5135 = vmin.xlane.f32.xlu0 %v5134
  %v5136 = vpop.xlane.xlu0 %5135
  %vm5137 = vcmp.eq.f32.partialorder %v5134, %v5136
  %v5138 = vsel %vm5137, %v5133, inf
  %5139 = vmin.xlane.f32.xlu0 %v5138
  %v5140 = vpop.xlane.xlu0 %5139
  %v5141 = vcvt.f32.s32 %v5140
  %v5142 = vcvt.f32.s32 %v5136
  %v5143 = vshll.u32 %v5142, 16
  %v5144 = vadd.s32 %v5143, %v5141
  %v5145 = vsel %vm1410, %v5017, 2147483647
  %v5146 = vand.u32 %v5145, 65535
  %v5147 = vshra.s32 %v5145, 16
  %v5148 = vcvt.s32.f32 %v5146
  %v5149 = vcvt.s32.f32 %v5147
  %5150 = vmin.xlane.f32.xlu0 %v5149
  %v5151 = vpop.xlane.xlu0 %5150
  %vm5152 = vcmp.eq.f32.partialorder %v5149, %v5151
  %v5153 = vsel %vm5152, %v5148, inf
  %5154 = vmin.xlane.f32.xlu0 %v5153
  %v5155 = vpop.xlane.xlu0 %5154
  %v5156 = vcvt.f32.s32 %v5155
  %v5157 = vcvt.f32.s32 %v5151
  %v5158 = vshll.u32 %v5157, 16
  %v5159 = vadd.s32 %v5158, %v5156
  %v5160 = vsel %vm1410, %v5018, 2147483647
  %v5161 = vand.u32 %v5160, 65535
  %v5162 = vshra.s32 %v5160, 16
  %v5163 = vcvt.s32.f32 %v5161
  %v5164 = vcvt.s32.f32 %v5162
  %5165 = vmin.xlane.f32.xlu0 %v5164
  %v5166 = vpop.xlane.xlu0 %5165
  %vm5167 = vcmp.eq.f32.partialorder %v5164, %v5166
  %v5168 = vsel %vm5167, %v5163, inf
  %5169 = vmin.xlane.f32.xlu0 %v5168
  %v5170 = vpop.xlane.xlu0 %5169
  %v5171 = vcvt.f32.s32 %v5170
  %v5172 = vcvt.f32.s32 %v5166
  %v5173 = vshll.u32 %v5172, 16
  %v5174 = vadd.s32 %v5173, %v5171
  %v5175 = vsel %vm1410, %v5019, 2147483647
  %v5176 = vand.u32 %v5175, 65535
  %v5177 = vshra.s32 %v5175, 16
  %v5178 = vcvt.s32.f32 %v5176
  %v5179 = vcvt.s32.f32 %v5177
  %5180 = vmin.xlane.f32.xlu0 %v5179
  %v5181 = vpop.xlane.xlu0 %5180
  %vm5182 = vcmp.eq.f32.partialorder %v5179, %v5181
  %v5183 = vsel %vm5182, %v5178, inf
  %5184 = vmin.xlane.f32.xlu0 %v5183
  %v5185 = vpop.xlane.xlu0 %5184
  %v5186 = vcvt.f32.s32 %v5185
  %v5187 = vcvt.f32.s32 %v5181
  %v5188 = vshll.u32 %v5187, 16
  %v5189 = vadd.s32 %v5188, %v5186
  %v5190 = vsel %vm1410, %v5020, 2147483647
  %v5191 = vand.u32 %v5190, 65535
  %v5192 = vshra.s32 %v5190, 16
  %v5193 = vcvt.s32.f32 %v5191
  %v5194 = vcvt.s32.f32 %v5192
  %5195 = vmin.xlane.f32.xlu0 %v5194
  %v5196 = vpop.xlane.xlu0 %5195
  %vm5197 = vcmp.eq.f32.partialorder %v5194, %v5196
  %v5198 = vsel %vm5197, %v5193, inf
  %5199 = vmin.xlane.f32.xlu0 %v5198
  %v5200 = vpop.xlane.xlu0 %5199
  %v5201 = vcvt.f32.s32 %v5200
  %v5202 = vcvt.f32.s32 %v5196
  %v5203 = vshll.u32 %v5202, 16
  %v5204 = vadd.s32 %v5203, %v5201
  %v5205 = vsel %vm1410, %v5021, 2147483647
  %v5206 = vand.u32 %v5205, 65535
  %v5207 = vshra.s32 %v5205, 16
  %v5208 = vcvt.s32.f32 %v5206
  %v5209 = vcvt.s32.f32 %v5207
  %5210 = vmin.xlane.f32.xlu0 %v5209
  %v5211 = vpop.xlane.xlu0 %5210
  %vm5212 = vcmp.eq.f32.partialorder %v5209, %v5211
  %v5213 = vsel %vm5212, %v5208, inf
  %5214 = vmin.xlane.f32.xlu0 %v5213
  %v5215 = vpop.xlane.xlu0 %5214
  %v5216 = vcvt.f32.s32 %v5215
  %v5217 = vcvt.f32.s32 %v5211
  %v5218 = vshll.u32 %v5217, 16
  %v5219 = vadd.s32 %v5218, %v5216
  %v5220 = vsel %vm1410, %v5022, 2147483647
  %v5221 = vand.u32 %v5220, 65535
  %v5222 = vshra.s32 %v5220, 16
  %v5223 = vcvt.s32.f32 %v5221
  %v5224 = vcvt.s32.f32 %v5222
  %5225 = vmin.xlane.f32.xlu0 %v5224
  %v5226 = vpop.xlane.xlu0 %5225
  %vm5227 = vcmp.eq.f32.partialorder %v5224, %v5226
  %v5228 = vsel %vm5227, %v5223, inf
  %5229 = vmin.xlane.f32.xlu0 %v5228
  %v5230 = vpop.xlane.xlu0 %5229
  %v5231 = vcvt.f32.s32 %v5230
  %v5232 = vcvt.f32.s32 %v5226
  %v5233 = vshll.u32 %v5232, 16
  %v5234 = vadd.s32 %v5233, %v5231
  %v5235 = vsel %vm1410, %v5023, 2147483647
  %v5236 = vand.u32 %v5235, 65535
  %v5237 = vshra.s32 %v5235, 16
  %v5238 = vcvt.s32.f32 %v5236
  %v5239 = vcvt.s32.f32 %v5237
  %5240 = vmin.xlane.f32.xlu0 %v5239
  %v5241 = vpop.xlane.xlu0 %5240
  %vm5242 = vcmp.eq.f32.partialorder %v5239, %v5241
  %v5243 = vsel %vm5242, %v5238, inf
  %5244 = vmin.xlane.f32.xlu0 %v5243
  %v5245 = vpop.xlane.xlu0 %5244
  %v5246 = vcvt.f32.s32 %v5245
  %v5247 = vcvt.f32.s32 %v5241
  %v5248 = vshll.u32 %v5247, 16
  %v5249 = vadd.s32 %v5248, %v5246
  %v5250 = vsel %vm1410, %v5024, 2147483647
  %v5251 = vand.u32 %v5250, 65535
  %v5252 = vshra.s32 %v5250, 16
  %v5253 = vcvt.s32.f32 %v5251
  %v5254 = vcvt.s32.f32 %v5252
  %5255 = vmin.xlane.f32.xlu0 %v5254
  %v5256 = vpop.xlane.xlu0 %5255
  %vm5257 = vcmp.eq.f32.partialorder %v5254, %v5256
  %v5258 = vsel %vm5257, %v5253, inf
  %5259 = vmin.xlane.f32.xlu0 %v5258
  %v5260 = vpop.xlane.xlu0 %5259
  %v5261 = vcvt.f32.s32 %v5260
  %v5262 = vcvt.f32.s32 %v5256
  %v5263 = vshll.u32 %v5262, 16
  %v5264 = vadd.s32 %v5263, %v5261
  %vm5265 = vcmp.eq.s32.totalorder %v3120, %v5039
  %vm5266 = vcmp.eq.s32.totalorder %v3120, %v5054
  %vm5267 = vcmp.eq.s32.totalorder %v3120, %v5069
  %vm5268 = vcmp.eq.s32.totalorder %v3120, %v5084
  %vm5269 = vcmp.eq.s32.totalorder %v3120, %v5099
  %vm5270 = vcmp.eq.s32.totalorder %v3120, %v5114
  %vm5271 = vcmp.eq.s32.totalorder %v3120, %v5129
  %vm5272 = vcmp.eq.s32.totalorder %v3120, %v5144
  %vm5273 = vcmp.eq.s32.totalorder %v3120, %v5159
  %vm5274 = vcmp.eq.s32.totalorder %v3120, %v5174
  %vm5275 = vcmp.eq.s32.totalorder %v3120, %v5189
  %vm5276 = vcmp.eq.s32.totalorder %v3120, %v5204
  %vm5277 = vcmp.eq.s32.totalorder %v3120, %v5219
  %vm5278 = vcmp.eq.s32.totalorder %v3120, %v5234
  %vm5279 = vcmp.eq.s32.totalorder %v3120, %v5249
  %vm5280 = vcmp.eq.s32.totalorder %v3120, %v5264
  %v5281 = vsel %vm5265, %v1953, %v4913
  %v5282 = vsel %vm5266, %v1968, %v4914
  %v5283 = vsel %vm5267, %v1983, %v4915
  %v5284 = vsel %vm5268, %v1998, %v4916
  %v5285 = vsel %vm5269, %v2013, %v4917
  %v5286 = vsel %vm5270, %v2028, %v4918
  %v5287 = vsel %vm5271, %v2043, %v4919
  %v5288 = vsel %vm5272, %v2058, %v4920
  %v5289 = vsel %vm5273, %v2073, %v4921
  %v5290 = vsel %vm5274, %v2088, %v4922
  %v5291 = vsel %vm5275, %v2103, %v4923
  %v5292 = vsel %vm5276, %v2118, %v4924
  %v5293 = vsel %vm5277, %v2133, %v4925
  %v5294 = vsel %vm5278, %v2148, %v4926
  %v5295 = vsel %vm5279, %v2163, %v4927
  %v5296 = vsel %vm5280, %v2178, %v4928
  %v5297 = vld [vmem:[%s14] sm:$0xff]
  %v5299 = vsel %vm1410, %v4193, 0
  %v5302 = vsel %vm1410, %v4194, 0
  %v5305 = vsel %vm1410, %v4195, 0
  %v5308 = vsel %vm1410, %v4196, 0
  %v5311 = vsel %vm1410, %v4197, 0
  %v5314 = vsel %vm1410, %v4198, 0
  %v5317 = vsel %vm1410, %v4199, 0
  %v5320 = vsel %vm1410, %v4200, 0
  %v5323 = vsel %vm1410, %v4201, 0
  %v5326 = vsel %vm1410, %v4202, 0
  %v5329 = vsel %vm1410, %v4203, 0
  %v5332 = vsel %vm1410, %v4204, 0
  %v5335 = vsel %vm1410, %v4205, 0
  %v5338 = vsel %vm1410, %v4206, 0
  %v5341 = vsel %vm1410, %v4207, 0
  %v5344 = vsel %vm1410, %v4208, 0
  %5346 = vmatpush.msra.mxu0 0.0
  %5347 = vmatpush.msra.mxu0 0.0
  %5348 = vmatpush.msra.mxu0 0.0
  %5349 = vmatpush.msra.mxu0 0.0
  %5350 = vmatpush.msra.mxu0 0.0
  %5351 = vmatpush.msra.mxu0 0.0
  %5352 = vmatpush.msra.mxu0 0.0
  %5353 = vmatpush.msra.mxu0 0.0
  %5354 = vmatpush.msra.mxu0 0.0
  %5355 = vmatpush.msra.mxu0 0.0
  %5356 = vmatpush.msra.mxu0 0.0
  %5357 = vmatpush.msra.mxu0 0.0
  %5358 = vmatpush.msra.mxu0 0.0
  %5359 = vmatpush.msra.mxu0 0.0
  %5360 = vmatpush.msra.mxu0 0.0
  %5361 = vmatpush.msra.mxu0 %v5297
  %5362 = vmatmul.f32.gmra.mxu0 %v5299
  %v5363 = vpop.f32.mrf.mxu0
  %v5364 = vadd.f32 0.0, %v5363
  %5365 = vmatmul.f32.gmra.mxu0 %v5302
  %v5366 = vpop.f32.mrf.mxu0
  %v5367 = vadd.f32 0.0, %v5366
  %5368 = vmatmul.f32.gmra.mxu0 %v5305
  %v5369 = vpop.f32.mrf.mxu0
  %v5370 = vadd.f32 0.0, %v5369
  %5371 = vmatmul.f32.gmra.mxu0 %v5308
  %v5372 = vpop.f32.mrf.mxu0
  %v5373 = vadd.f32 0.0, %v5372
  %5374 = vmatmul.f32.gmra.mxu0 %v5311
  %v5375 = vpop.f32.mrf.mxu0
  %v5376 = vadd.f32 0.0, %v5375
  %5377 = vmatmul.f32.gmra.mxu0 %v5314
  %v5378 = vpop.f32.mrf.mxu0
  %v5379 = vadd.f32 0.0, %v5378
  %5380 = vmatmul.f32.gmra.mxu0 %v5317
  %v5381 = vpop.f32.mrf.mxu0
  %v5382 = vadd.f32 0.0, %v5381
  %5383 = vmatmul.f32.gmra.mxu0 %v5320
  %v5384 = vpop.f32.mrf.mxu0
  %v5385 = vadd.f32 0.0, %v5384
  %5386 = vmatmul.f32.gmra.mxu0 %v5323
  %v5387 = vpop.f32.mrf.mxu0
  %v5388 = vadd.f32 0.0, %v5387
  %5389 = vmatmul.f32.gmra.mxu0 %v5326
  %v5390 = vpop.f32.mrf.mxu0
  %v5391 = vadd.f32 0.0, %v5390
  %5392 = vmatmul.f32.gmra.mxu0 %v5329
  %v5393 = vpop.f32.mrf.mxu0
  %v5394 = vadd.f32 0.0, %v5393
  %5395 = vmatmul.f32.gmra.mxu0 %v5332
  %v5396 = vpop.f32.mrf.mxu0
  %v5397 = vadd.f32 0.0, %v5396
  %5398 = vmatmul.f32.gmra.mxu0 %v5335
  %v5399 = vpop.f32.mrf.mxu0
  %v5400 = vadd.f32 0.0, %v5399
  %5401 = vmatmul.f32.gmra.mxu0 %v5338
  %v5402 = vpop.f32.mrf.mxu0
  %v5403 = vadd.f32 0.0, %v5402
  %5404 = vmatmul.f32.gmra.mxu0 %v5341
  %v5405 = vpop.f32.mrf.mxu0
  %v5406 = vadd.f32 0.0, %v5405
  %5407 = vmatmul.f32.gmra.mxu0 %v5344
  %v5408 = vpop.f32.mrf.mxu0
  %v5409 = vadd.f32 0.0, %v5408
  %5410 = vdwg.mxu0
  %v5412 = vsel %vm1410, %v5281, 0
  %v5415 = vsel %vm1410, %v5282, 0
  %v5418 = vsel %vm1410, %v5283, 0
  %v5421 = vsel %vm1410, %v5284, 0
  %v5424 = vsel %vm1410, %v5285, 0
  %v5427 = vsel %vm1410, %v5286, 0
  %v5430 = vsel %vm1410, %v5287, 0
  %v5433 = vsel %vm1410, %v5288, 0
  %v5436 = vsel %vm1410, %v5289, 0
  %v5439 = vsel %vm1410, %v5290, 0
  %v5442 = vsel %vm1410, %v5291, 0
  %v5445 = vsel %vm1410, %v5292, 0
  %v5448 = vsel %vm1410, %v5293, 0
  %v5451 = vsel %vm1410, %v5294, 0
  %v5454 = vsel %vm1410, %v5295, 0
  %v5457 = vsel %vm1410, %v5296, 0
  %5459 = vmatpush.msra.mxu0 0.0
  %5460 = vmatpush.msra.mxu0 0.0
  %5461 = vmatpush.msra.mxu0 0.0
  %5462 = vmatpush.msra.mxu0 0.0
  %5463 = vmatpush.msra.mxu0 0.0
  %5464 = vmatpush.msra.mxu0 0.0
  %5465 = vmatpush.msra.mxu0 0.0
  %5466 = vmatpush.msra.mxu0 0.0
  %5467 = vmatpush.msra.mxu0 0.0
  %5468 = vmatpush.msra.mxu0 0.0
  %5469 = vmatpush.msra.mxu0 0.0
  %5470 = vmatpush.msra.mxu0 0.0
  %5471 = vmatpush.msra.mxu0 0.0
  %5472 = vmatpush.msra.mxu0 0.0
  %5473 = vmatpush.msra.mxu0 0.0
  %5474 = vmatpush.msra.mxu0 %v5297
  %5475 = vmatmul.f32.gmra.mxu0 %v5412
  %v5476 = vpop.f32.mrf.mxu0
  %v5477 = vadd.f32 0.0, %v5476
  %5478 = vmatmul.f32.gmra.mxu0 %v5415
  %v5479 = vpop.f32.mrf.mxu0
  %v5480 = vadd.f32 0.0, %v5479
  %5481 = vmatmul.f32.gmra.mxu0 %v5418
  %v5482 = vpop.f32.mrf.mxu0
  %v5483 = vadd.f32 0.0, %v5482
  %5484 = vmatmul.f32.gmra.mxu0 %v5421
  %v5485 = vpop.f32.mrf.mxu0
  %v5486 = vadd.f32 0.0, %v5485
  %5487 = vmatmul.f32.gmra.mxu0 %v5424
  %v5488 = vpop.f32.mrf.mxu0
  %v5489 = vadd.f32 0.0, %v5488
  %5490 = vmatmul.f32.gmra.mxu0 %v5427
  %v5491 = vpop.f32.mrf.mxu0
  %v5492 = vadd.f32 0.0, %v5491
  %5493 = vmatmul.f32.gmra.mxu0 %v5430
  %v5494 = vpop.f32.mrf.mxu0
  %v5495 = vadd.f32 0.0, %v5494
  %5496 = vmatmul.f32.gmra.mxu0 %v5433
  %v5497 = vpop.f32.mrf.mxu0
  %v5498 = vadd.f32 0.0, %v5497
  %5499 = vmatmul.f32.gmra.mxu0 %v5436
  %v5500 = vpop.f32.mrf.mxu0
  %v5501 = vadd.f32 0.0, %v5500
  %5502 = vmatmul.f32.gmra.mxu0 %v5439
  %v5503 = vpop.f32.mrf.mxu0
  %v5504 = vadd.f32 0.0, %v5503
  %5505 = vmatmul.f32.gmra.mxu0 %v5442
  %v5506 = vpop.f32.mrf.mxu0
  %v5507 = vadd.f32 0.0, %v5506
  %5508 = vmatmul.f32.gmra.mxu0 %v5445
  %v5509 = vpop.f32.mrf.mxu0
  %v5510 = vadd.f32 0.0, %v5509
  %5511 = vmatmul.f32.gmra.mxu0 %v5448
  %v5512 = vpop.f32.mrf.mxu0
  %v5513 = vadd.f32 0.0, %v5512
  %5514 = vmatmul.f32.gmra.mxu0 %v5451
  %v5515 = vpop.f32.mrf.mxu0
  %v5516 = vadd.f32 0.0, %v5515
  %5517 = vmatmul.f32.gmra.mxu0 %v5454
  %v5518 = vpop.f32.mrf.mxu0
  %v5519 = vadd.f32 0.0, %v5518
  %5520 = vmatmul.f32.gmra.mxu0 %v5457
  %v5521 = vpop.f32.mrf.mxu0
  %v5522 = vadd.f32 0.0, %v5521
  %5523 = vdwg.mxu0
  %v5524 = vmul.f32 %v5364, %v3103
  %v5525 = vmul.f32 %v5367, %v3104
  %v5526 = vmul.f32 %v5370, %v3105
  %v5527 = vmul.f32 %v5373, %v3106
  %v5528 = vmul.f32 %v5376, %v3107
  %v5529 = vmul.f32 %v5379, %v3108
  %v5530 = vmul.f32 %v5382, %v3109
  %v5531 = vmul.f32 %v5385, %v3110
  %v5532 = vmul.f32 %v5388, %v3111
  %v5533 = vmul.f32 %v5391, %v3112
  %v5534 = vmul.f32 %v5394, %v3113
  %v5535 = vmul.f32 %v5397, %v3114
  %v5536 = vmul.f32 %v5400, %v3115
  %v5537 = vmul.f32 %v5403, %v3116
  %v5538 = vmul.f32 %v5406, %v3117
  %v5539 = vmul.f32 %v5409, %v3118
  %v5540 = vpack.c.bf16 %v5525, %v5524
  %v5541 = vpack.c.bf16 %v5527, %v5526
  %v5542 = vpack.c.bf16 %v5529, %v5528
  %v5543 = vpack.c.bf16 %v5531, %v5530
  %v5544 = vpack.c.bf16 %v5533, %v5532
  %v5545 = vpack.c.bf16 %v5535, %v5534
  %v5546 = vpack.c.bf16 %v5537, %v5536
  %v5547 = vpack.c.bf16 %v5539, %v5538
  %v5548 = vmul.f32 %v5477, %v3103
  %v5549 = vmul.f32 %v5480, %v3104
  %v5550 = vmul.f32 %v5483, %v3105
  %v5551 = vmul.f32 %v5486, %v3106
  %v5552 = vmul.f32 %v5489, %v3107
  %v5553 = vmul.f32 %v5492, %v3108
  %v5554 = vmul.f32 %v5495, %v3109
  %v5555 = vmul.f32 %v5498, %v3110
  %v5556 = vmul.f32 %v5501, %v3111
  %v5557 = vmul.f32 %v5504, %v3112
  %v5558 = vmul.f32 %v5507, %v3113
  %v5559 = vmul.f32 %v5510, %v3114
  %v5560 = vmul.f32 %v5513, %v3115
  %v5561 = vmul.f32 %v5516, %v3116
  %v5562 = vmul.f32 %v5519, %v3117
  %v5563 = vmul.f32 %v5522, %v3118
  %v5564 = vpack.c.bf16 %v5549, %v5548
  %v5565 = vpack.c.bf16 %v5551, %v5550
  %v5566 = vpack.c.bf16 %v5553, %v5552
  %v5567 = vpack.c.bf16 %v5555, %v5554
  %v5568 = vpack.c.bf16 %v5557, %v5556
  %v5569 = vpack.c.bf16 %v5559, %v5558
  %v5570 = vpack.c.bf16 %v5561, %v5560
  %v5571 = vpack.c.bf16 %v5563, %v5562
  %v5572 = vld [vmem:[%s15] sm:$0xf]
  %v5573 = vld [vmem:[%s15 + $0x4] sm:$0xf]
  %v5574 = vld [vmem:[%s15 + $0x8] sm:$0xf]
  %v5575 = vld [vmem:[%s15 + $0xc] sm:$0xf]
  %v5576 = vld [vmem:[%s15 + $0x10] sm:$0xf]
  %v5577 = vld [vmem:[%s15 + $0x14] sm:$0xf]
  %v5578 = vld [vmem:[%s15 + $0x18] sm:$0xf]
  %v5579 = vld [vmem:[%s15 + $0x1c] sm:$0xf]
  %v5580 = vld [vmem:[%s16] sm:$0x1]
  %v5582 = vperm.slane %v5580, 0
  %v5592 = vunpack.c.l.b16 %v5572
  %v5593 = vunpack.c.l.b16 %v5573
  %v5594 = vunpack.c.l.b16 %v5574
  %v5595 = vunpack.c.l.b16 %v5575
  %v5596 = vunpack.c.l.b16 %v5576
  %v5597 = vunpack.c.l.b16 %v5577
  %v5598 = vunpack.c.l.b16 %v5578
  %v5599 = vunpack.c.l.b16 %v5579
  %v5600 = vpack.c.b16 %v5593, %v5592
  %v5601 = vpack.c.b16 %v5595, %v5594
  %v5602 = vpack.c.b16 %v5597, %v5596
  %v5603 = vpack.c.b16 %v5599, %v5598
  %v5609 = vsel %vm2725, %v5540, 0
  %v5612 = vsel %vm2725, %v5541, 0
  %v5615 = vsel %vm2725, %v5542, 0
  %v5618 = vsel %vm2725, %v5543, 0
  %v5621 = vsel %vm2725, %v5544, 0
  %v5624 = vsel %vm2725, %v5545, 0
  %v5627 = vsel %vm2725, %v5546, 0
  %v5630 = vsel %vm2725, %v5547, 0
  %5632 = vmatpush.bf16.msra.mxu0 0
  %5633 = vmatpush.bf16.msra.mxu0 0
  %5634 = vmatpush.bf16.msra.mxu0 0
  %5635 = vmatpush.bf16.msra.mxu0 0
  %5636 = vmatpush.bf16.msra.mxu0 %v5603
  %5637 = vmatpush.bf16.msra.mxu0 %v5602
  %5638 = vmatpush.bf16.msra.mxu0 %v5601
  %5639 = vmatpush.bf16.msra.mxu0 %v5600
  %5640 = vmatmul.bf16.gmra.mxu0 %v5609
  %v5641 = vpop.f32.mrf.mxu0
  %v5642 = vadd.f32 %v5582, %v5641
  %v5643 = vpop.f32.mrf.mxu0
  %v5644 = vadd.f32 %v5582, %v5643
  %5645 = vmatmul.bf16.gmra.mxu0 %v5612
  %v5646 = vpop.f32.mrf.mxu0
  %v5647 = vadd.f32 %v5582, %v5646
  %v5648 = vpop.f32.mrf.mxu0
  %v5649 = vadd.f32 %v5582, %v5648
  %5650 = vmatmul.bf16.gmra.mxu0 %v5615
  %v5651 = vpop.f32.mrf.mxu0
  %v5652 = vadd.f32 %v5582, %v5651
  %v5653 = vpop.f32.mrf.mxu0
  %v5654 = vadd.f32 %v5582, %v5653
  %5655 = vmatmul.bf16.gmra.mxu0 %v5618
  %v5656 = vpop.f32.mrf.mxu0
  %v5657 = vadd.f32 %v5582, %v5656
  %v5658 = vpop.f32.mrf.mxu0
  %v5659 = vadd.f32 %v5582, %v5658
  %5660 = vmatmul.bf16.gmra.mxu0 %v5621
  %v5661 = vpop.f32.mrf.mxu0
  %v5662 = vadd.f32 %v5582, %v5661
  %v5663 = vpop.f32.mrf.mxu0
  %v5664 = vadd.f32 %v5582, %v5663
  %5665 = vmatmul.bf16.gmra.mxu0 %v5624
  %v5666 = vpop.f32.mrf.mxu0
  %v5667 = vadd.f32 %v5582, %v5666
  %v5668 = vpop.f32.mrf.mxu0
  %v5669 = vadd.f32 %v5582, %v5668
  %5670 = vmatmul.bf16.gmra.mxu0 %v5627
  %v5671 = vpop.f32.mrf.mxu0
  %v5672 = vadd.f32 %v5582, %v5671
  %v5673 = vpop.f32.mrf.mxu0
  %v5674 = vadd.f32 %v5582, %v5673
  %5675 = vmatmul.bf16.gmra.mxu0 %v5630
  %v5676 = vpop.f32.mrf.mxu0
  %v5677 = vadd.f32 %v5582, %v5676
  %v5678 = vpop.f32.mrf.mxu0
  %v5679 = vadd.f32 %v5582, %v5678
  %5680 = vdwg.mxu0
  %v5681 = vxor.u32 %v5642, 2147483648
  %v5682 = vxor.u32 %v5644, 2147483648
  %v5683 = vxor.u32 %v5647, 2147483648
  %v5684 = vxor.u32 %v5649, 2147483648
  %v5685 = vxor.u32 %v5652, 2147483648
  %v5686 = vxor.u32 %v5654, 2147483648
  %v5687 = vxor.u32 %v5657, 2147483648
  %v5688 = vxor.u32 %v5659, 2147483648
  %v5689 = vxor.u32 %v5662, 2147483648
  %v5690 = vxor.u32 %v5664, 2147483648
  %v5691 = vxor.u32 %v5667, 2147483648
  %v5692 = vxor.u32 %v5669, 2147483648
  %v5693 = vxor.u32 %v5672, 2147483648
  %v5694 = vxor.u32 %v5674, 2147483648
  %v5695 = vxor.u32 %v5677, 2147483648
  %v5696 = vxor.u32 %v5679, 2147483648
  %v5697 = vmul.f32 %v5681, 1.442695
  %v5698 = vpow.pop %v5697
  %v5699 = vmul.f32 %v5682, 1.442695
  %v5700 = vpow.pop %v5699
  %v5701 = vmul.f32 %v5683, 1.442695
  %v5702 = vpow.pop %v5701
  %v5703 = vmul.f32 %v5684, 1.442695
  %v5704 = vpow.pop %v5703
  %v5705 = vmul.f32 %v5685, 1.442695
  %v5706 = vpow.pop %v5705
  %v5707 = vmul.f32 %v5686, 1.442695
  %v5708 = vpow.pop %v5707
  %v5709 = vmul.f32 %v5687, 1.442695
  %v5710 = vpow.pop %v5709
  %v5711 = vmul.f32 %v5688, 1.442695
  %v5712 = vpow.pop %v5711
  %v5713 = vmul.f32 %v5689, 1.442695
  %v5714 = vpow.pop %v5713
  %v5715 = vmul.f32 %v5690, 1.442695
  %v5716 = vpow.pop %v5715
  %v5717 = vmul.f32 %v5691, 1.442695
  %v5718 = vpow.pop %v5717
  %v5719 = vmul.f32 %v5692, 1.442695
  %v5720 = vpow.pop %v5719
  %v5721 = vmul.f32 %v5693, 1.442695
  %v5722 = vpow.pop %v5721
  %v5723 = vmul.f32 %v5694, 1.442695
  %v5724 = vpow.pop %v5723
  %v5725 = vmul.f32 %v5695, 1.442695
  %v5726 = vpow.pop %v5725
  %v5727 = vmul.f32 %v5696, 1.442695
  %v5728 = vpow.pop %v5727
  %v5729 = vadd.f32 %v5698, 1.0
  %v5730 = vadd.f32 %v5700, 1.0
  %v5731 = vadd.f32 %v5702, 1.0
  %v5732 = vadd.f32 %v5704, 1.0
  %v5733 = vadd.f32 %v5706, 1.0
  %v5734 = vadd.f32 %v5708, 1.0
  %v5735 = vadd.f32 %v5710, 1.0
  %v5736 = vadd.f32 %v5712, 1.0
  %v5737 = vadd.f32 %v5714, 1.0
  %v5738 = vadd.f32 %v5716, 1.0
  %v5739 = vadd.f32 %v5718, 1.0
  %v5740 = vadd.f32 %v5720, 1.0
  %v5741 = vadd.f32 %v5722, 1.0
  %v5742 = vadd.f32 %v5724, 1.0
  %v5743 = vadd.f32 %v5726, 1.0
  %v5744 = vadd.f32 %v5728, 1.0
  %v5745 = vrcp.pop %v5729
  %v5746 = vmul.f32 %v5729, %v5745
  %v5747 = vsub.f32 1.0, %v5746
  %v5748 = vmul.f32 %v5745, %v5747
  %v5749 = vadd.f32 %v5745, %v5748
  %vm5750 = vweird.f32 %v5729
  %vm5751 = vweird.f32 %v5745
  %vm5752 = vmor %vm5750, %vm5751
  %v5753 = vsel %vm5752, %v5745, %v5749
  %v5754 = vand.u32 2147483647, %v5729
  %vm5755 = vcmp.eq.f32.partialorder %v5754, 8.507059e+37
  %v5756 = vand.u32 %v5729, 2147483648
  %v5757 = vor.u32 1.1754944e-38, %v5756
  %v5758 = vsel %vm5755, %v5757, %v5753
  %v5759 = vmul.f32 1.0, %v5758
  %v5760 = vrcp.pop %v5730
  %v5761 = vmul.f32 %v5730, %v5760
  %v5762 = vsub.f32 1.0, %v5761
  %v5763 = vmul.f32 %v5760, %v5762
  %v5764 = vadd.f32 %v5760, %v5763
  %vm5765 = vweird.f32 %v5730
  %vm5766 = vweird.f32 %v5760
  %vm5767 = vmor %vm5765, %vm5766
  %v5768 = vsel %vm5767, %v5760, %v5764
  %v5769 = vand.u32 2147483647, %v5730
  %vm5770 = vcmp.eq.f32.partialorder %v5769, 8.507059e+37
  %v5771 = vand.u32 %v5730, 2147483648
  %v5772 = vor.u32 1.1754944e-38, %v5771
  %v5773 = vsel %vm5770, %v5772, %v5768
  %v5774 = vmul.f32 1.0, %v5773
  %v5775 = vrcp.pop %v5731
  %v5776 = vmul.f32 %v5731, %v5775
  %v5777 = vsub.f32 1.0, %v5776
  %v5778 = vmul.f32 %v5775, %v5777
  %v5779 = vadd.f32 %v5775, %v5778
  %vm5780 = vweird.f32 %v5731
  %vm5781 = vweird.f32 %v5775
  %vm5782 = vmor %vm5780, %vm5781
  %v5783 = vsel %vm5782, %v5775, %v5779
  %v5784 = vand.u32 2147483647, %v5731
  %vm5785 = vcmp.eq.f32.partialorder %v5784, 8.507059e+37
  %v5786 = vand.u32 %v5731, 2147483648
  %v5787 = vor.u32 1.1754944e-38, %v5786
  %v5788 = vsel %vm5785, %v5787, %v5783
  %v5789 = vmul.f32 1.0, %v5788
  %v5790 = vrcp.pop %v5732
  %v5791 = vmul.f32 %v5732, %v5790
  %v5792 = vsub.f32 1.0, %v5791
  %v5793 = vmul.f32 %v5790, %v5792
  %v5794 = vadd.f32 %v5790, %v5793
  %vm5795 = vweird.f32 %v5732
  %vm5796 = vweird.f32 %v5790
  %vm5797 = vmor %vm5795, %vm5796
  %v5798 = vsel %vm5797, %v5790, %v5794
  %v5799 = vand.u32 2147483647, %v5732
  %vm5800 = vcmp.eq.f32.partialorder %v5799, 8.507059e+37
  %v5801 = vand.u32 %v5732, 2147483648
  %v5802 = vor.u32 1.1754944e-38, %v5801
  %v5803 = vsel %vm5800, %v5802, %v5798
  %v5804 = vmul.f32 1.0, %v5803
  %v5805 = vrcp.pop %v5733
  %v5806 = vmul.f32 %v5733, %v5805
  %v5807 = vsub.f32 1.0, %v5806
  %v5808 = vmul.f32 %v5805, %v5807
  %v5809 = vadd.f32 %v5805, %v5808
  %vm5810 = vweird.f32 %v5733
  %vm5811 = vweird.f32 %v5805
  %vm5812 = vmor %vm5810, %vm5811
  %v5813 = vsel %vm5812, %v5805, %v5809
  %v5814 = vand.u32 2147483647, %v5733
  %vm5815 = vcmp.eq.f32.partialorder %v5814, 8.507059e+37
  %v5816 = vand.u32 %v5733, 2147483648
  %v5817 = vor.u32 1.1754944e-38, %v5816
  %v5818 = vsel %vm5815, %v5817, %v5813
  %v5819 = vmul.f32 1.0, %v5818
  %v5820 = vrcp.pop %v5734
  %v5821 = vmul.f32 %v5734, %v5820
  %v5822 = vsub.f32 1.0, %v5821
  %v5823 = vmul.f32 %v5820, %v5822
  %v5824 = vadd.f32 %v5820, %v5823
  %vm5825 = vweird.f32 %v5734
  %vm5826 = vweird.f32 %v5820
  %vm5827 = vmor %vm5825, %vm5826
  %v5828 = vsel %vm5827, %v5820, %v5824
  %v5829 = vand.u32 2147483647, %v5734
  %vm5830 = vcmp.eq.f32.partialorder %v5829, 8.507059e+37
  %v5831 = vand.u32 %v5734, 2147483648
  %v5832 = vor.u32 1.1754944e-38, %v5831
  %v5833 = vsel %vm5830, %v5832, %v5828
  %v5834 = vmul.f32 1.0, %v5833
  %v5835 = vrcp.pop %v5735
  %v5836 = vmul.f32 %v5735, %v5835
  %v5837 = vsub.f32 1.0, %v5836
  %v5838 = vmul.f32 %v5835, %v5837
  %v5839 = vadd.f32 %v5835, %v5838
  %vm5840 = vweird.f32 %v5735
  %vm5841 = vweird.f32 %v5835
  %vm5842 = vmor %vm5840, %vm5841
  %v5843 = vsel %vm5842, %v5835, %v5839
  %v5844 = vand.u32 2147483647, %v5735
  %vm5845 = vcmp.eq.f32.partialorder %v5844, 8.507059e+37
  %v5846 = vand.u32 %v5735, 2147483648
  %v5847 = vor.u32 1.1754944e-38, %v5846
  %v5848 = vsel %vm5845, %v5847, %v5843
  %v5849 = vmul.f32 1.0, %v5848
  %v5850 = vrcp.pop %v5736
  %v5851 = vmul.f32 %v5736, %v5850
  %v5852 = vsub.f32 1.0, %v5851
  %v5853 = vmul.f32 %v5850, %v5852
  %v5854 = vadd.f32 %v5850, %v5853
  %vm5855 = vweird.f32 %v5736
  %vm5856 = vweird.f32 %v5850
  %vm5857 = vmor %vm5855, %vm5856
  %v5858 = vsel %vm5857, %v5850, %v5854
  %v5859 = vand.u32 2147483647, %v5736
  %vm5860 = vcmp.eq.f32.partialorder %v5859, 8.507059e+37
  %v5861 = vand.u32 %v5736, 2147483648
  %v5862 = vor.u32 1.1754944e-38, %v5861
  %v5863 = vsel %vm5860, %v5862, %v5858
  %v5864 = vmul.f32 1.0, %v5863
  %v5865 = vrcp.pop %v5737
  %v5866 = vmul.f32 %v5737, %v5865
  %v5867 = vsub.f32 1.0, %v5866
  %v5868 = vmul.f32 %v5865, %v5867
  %v5869 = vadd.f32 %v5865, %v5868
  %vm5870 = vweird.f32 %v5737
  %vm5871 = vweird.f32 %v5865
  %vm5872 = vmor %vm5870, %vm5871
  %v5873 = vsel %vm5872, %v5865, %v5869
  %v5874 = vand.u32 2147483647, %v5737
  %vm5875 = vcmp.eq.f32.partialorder %v5874, 8.507059e+37
  %v5876 = vand.u32 %v5737, 2147483648
  %v5877 = vor.u32 1.1754944e-38, %v5876
  %v5878 = vsel %vm5875, %v5877, %v5873
  %v5879 = vmul.f32 1.0, %v5878
  %v5880 = vrcp.pop %v5738
  %v5881 = vmul.f32 %v5738, %v5880
  %v5882 = vsub.f32 1.0, %v5881
  %v5883 = vmul.f32 %v5880, %v5882
  %v5884 = vadd.f32 %v5880, %v5883
  %vm5885 = vweird.f32 %v5738
  %vm5886 = vweird.f32 %v5880
  %vm5887 = vmor %vm5885, %vm5886
  %v5888 = vsel %vm5887, %v5880, %v5884
  %v5889 = vand.u32 2147483647, %v5738
  %vm5890 = vcmp.eq.f32.partialorder %v5889, 8.507059e+37
  %v5891 = vand.u32 %v5738, 2147483648
  %v5892 = vor.u32 1.1754944e-38, %v5891
  %v5893 = vsel %vm5890, %v5892, %v5888
  %v5894 = vmul.f32 1.0, %v5893
  %v5895 = vrcp.pop %v5739
  %v5896 = vmul.f32 %v5739, %v5895
  %v5897 = vsub.f32 1.0, %v5896
  %v5898 = vmul.f32 %v5895, %v5897
  %v5899 = vadd.f32 %v5895, %v5898
  %vm5900 = vweird.f32 %v5739
  %vm5901 = vweird.f32 %v5895
  %vm5902 = vmor %vm5900, %vm5901
  %v5903 = vsel %vm5902, %v5895, %v5899
  %v5904 = vand.u32 2147483647, %v5739
  %vm5905 = vcmp.eq.f32.partialorder %v5904, 8.507059e+37
  %v5906 = vand.u32 %v5739, 2147483648
  %v5907 = vor.u32 1.1754944e-38, %v5906
  %v5908 = vsel %vm5905, %v5907, %v5903
  %v5909 = vmul.f32 1.0, %v5908
  %v5910 = vrcp.pop %v5740
  %v5911 = vmul.f32 %v5740, %v5910
  %v5912 = vsub.f32 1.0, %v5911
  %v5913 = vmul.f32 %v5910, %v5912
  %v5914 = vadd.f32 %v5910, %v5913
  %vm5915 = vweird.f32 %v5740
  %vm5916 = vweird.f32 %v5910
  %vm5917 = vmor %vm5915, %vm5916
  %v5918 = vsel %vm5917, %v5910, %v5914
  %v5919 = vand.u32 2147483647, %v5740
  %vm5920 = vcmp.eq.f32.partialorder %v5919, 8.507059e+37
  %v5921 = vand.u32 %v5740, 2147483648
  %v5922 = vor.u32 1.1754944e-38, %v5921
  %v5923 = vsel %vm5920, %v5922, %v5918
  %v5924 = vmul.f32 1.0, %v5923
  %v5925 = vrcp.pop %v5741
  %v5926 = vmul.f32 %v5741, %v5925
  %v5927 = vsub.f32 1.0, %v5926
  %v5928 = vmul.f32 %v5925, %v5927
  %v5929 = vadd.f32 %v5925, %v5928
  %vm5930 = vweird.f32 %v5741
  %vm5931 = vweird.f32 %v5925
  %vm5932 = vmor %vm5930, %vm5931
  %v5933 = vsel %vm5932, %v5925, %v5929
  %v5934 = vand.u32 2147483647, %v5741
  %vm5935 = vcmp.eq.f32.partialorder %v5934, 8.507059e+37
  %v5936 = vand.u32 %v5741, 2147483648
  %v5937 = vor.u32 1.1754944e-38, %v5936
  %v5938 = vsel %vm5935, %v5937, %v5933
  %v5939 = vmul.f32 1.0, %v5938
  %v5940 = vrcp.pop %v5742
  %v5941 = vmul.f32 %v5742, %v5940
  %v5942 = vsub.f32 1.0, %v5941
  %v5943 = vmul.f32 %v5940, %v5942
  %v5944 = vadd.f32 %v5940, %v5943
  %vm5945 = vweird.f32 %v5742
  %vm5946 = vweird.f32 %v5940
  %vm5947 = vmor %vm5945, %vm5946
  %v5948 = vsel %vm5947, %v5940, %v5944
  %v5949 = vand.u32 2147483647, %v5742
  %vm5950 = vcmp.eq.f32.partialorder %v5949, 8.507059e+37
  %v5951 = vand.u32 %v5742, 2147483648
  %v5952 = vor.u32 1.1754944e-38, %v5951
  %v5953 = vsel %vm5950, %v5952, %v5948
  %v5954 = vmul.f32 1.0, %v5953
  %v5955 = vrcp.pop %v5743
  %v5956 = vmul.f32 %v5743, %v5955
  %v5957 = vsub.f32 1.0, %v5956
  %v5958 = vmul.f32 %v5955, %v5957
  %v5959 = vadd.f32 %v5955, %v5958
  %vm5960 = vweird.f32 %v5743
  %vm5961 = vweird.f32 %v5955
  %vm5962 = vmor %vm5960, %vm5961
  %v5963 = vsel %vm5962, %v5955, %v5959
  %v5964 = vand.u32 2147483647, %v5743
  %vm5965 = vcmp.eq.f32.partialorder %v5964, 8.507059e+37
  %v5966 = vand.u32 %v5743, 2147483648
  %v5967 = vor.u32 1.1754944e-38, %v5966
  %v5968 = vsel %vm5965, %v5967, %v5963
  %v5969 = vmul.f32 1.0, %v5968
  %v5970 = vrcp.pop %v5744
  %v5971 = vmul.f32 %v5744, %v5970
  %v5972 = vsub.f32 1.0, %v5971
  %v5973 = vmul.f32 %v5970, %v5972
  %v5974 = vadd.f32 %v5970, %v5973
  %vm5975 = vweird.f32 %v5744
  %vm5976 = vweird.f32 %v5970
  %vm5977 = vmor %vm5975, %vm5976
  %v5978 = vsel %vm5977, %v5970, %v5974
  %v5979 = vand.u32 2147483647, %v5744
  %vm5980 = vcmp.eq.f32.partialorder %v5979, 8.507059e+37
  %v5981 = vand.u32 %v5744, 2147483648
  %v5982 = vor.u32 1.1754944e-38, %v5981
  %v5983 = vsel %vm5980, %v5982, %v5978
  %v5984 = vmul.f32 1.0, %v5983
  %v5985 = vmul.f32 %v5642, %v5759
  %v5986 = vmul.f32 %v5644, %v5774
  %v5987 = vmul.f32 %v5647, %v5789
  %v5988 = vmul.f32 %v5649, %v5804
  %v5989 = vmul.f32 %v5652, %v5819
  %v5990 = vmul.f32 %v5654, %v5834
  %v5991 = vmul.f32 %v5657, %v5849
  %v5992 = vmul.f32 %v5659, %v5864
  %v5993 = vmul.f32 %v5662, %v5879
  %v5994 = vmul.f32 %v5664, %v5894
  %v5995 = vmul.f32 %v5667, %v5909
  %v5996 = vmul.f32 %v5669, %v5924
  %v5997 = vmul.f32 %v5672, %v5939
  %v5998 = vmul.f32 %v5674, %v5954
  %v5999 = vmul.f32 %v5677, %v5969
  %v6000 = vmul.f32 %v5679, %v5984
  %v6001 = vld [vmem:[%s19] sm:$0xf]
  %v6002 = vld [vmem:[%s19 + $0x4] sm:$0xf]
  %v6003 = vld [vmem:[%s19 + $0x8] sm:$0xf]
  %v6004 = vld [vmem:[%s19 + $0xc] sm:$0xf]
  %v6005 = vld [vmem:[%s19 + $0x10] sm:$0xf]
  %v6006 = vld [vmem:[%s19 + $0x14] sm:$0xf]
  %v6007 = vld [vmem:[%s19 + $0x18] sm:$0xf]
  %v6008 = vld [vmem:[%s19 + $0x1c] sm:$0xf]
  %v6009 = vld [vmem:[%s20] sm:$0x1]
  %v6011 = vperm.slane %v6009, 0
  %v6021 = vunpack.c.l.b16 %v6001
  %v6022 = vunpack.c.l.b16 %v6002
  %v6023 = vunpack.c.l.b16 %v6003
  %v6024 = vunpack.c.l.b16 %v6004
  %v6025 = vunpack.c.l.b16 %v6005
  %v6026 = vunpack.c.l.b16 %v6006
  %v6027 = vunpack.c.l.b16 %v6007
  %v6028 = vunpack.c.l.b16 %v6008
  %v6029 = vpack.c.b16 %v6022, %v6021
  %v6030 = vpack.c.b16 %v6024, %v6023
  %v6031 = vpack.c.b16 %v6026, %v6025
  %v6032 = vpack.c.b16 %v6028, %v6027
  %v6038 = vsel %vm2725, %v5564, 0
  %v6041 = vsel %vm2725, %v5565, 0
  %v6044 = vsel %vm2725, %v5566, 0
  %v6047 = vsel %vm2725, %v5567, 0
  %v6050 = vsel %vm2725, %v5568, 0
  %v6053 = vsel %vm2725, %v5569, 0
  %v6056 = vsel %vm2725, %v5570, 0
  %v6059 = vsel %vm2725, %v5571, 0
  %6061 = vmatpush.bf16.msra.mxu0 0
  %6062 = vmatpush.bf16.msra.mxu0 0
  %6063 = vmatpush.bf16.msra.mxu0 0
  %6064 = vmatpush.bf16.msra.mxu0 0
  %6065 = vmatpush.bf16.msra.mxu0 %v6032
  %6066 = vmatpush.bf16.msra.mxu0 %v6031
  %6067 = vmatpush.bf16.msra.mxu0 %v6030
  %6068 = vmatpush.bf16.msra.mxu0 %v6029
  %6069 = vmatmul.bf16.gmra.mxu0 %v6038
  %v6070 = vpop.f32.mrf.mxu0
  %v6071 = vadd.f32 %v6011, %v6070
  %v6072 = vpop.f32.mrf.mxu0
  %v6073 = vadd.f32 %v6011, %v6072
  %6074 = vmatmul.bf16.gmra.mxu0 %v6041
  %v6075 = vpop.f32.mrf.mxu0
  %v6076 = vadd.f32 %v6011, %v6075
  %v6077 = vpop.f32.mrf.mxu0
  %v6078 = vadd.f32 %v6011, %v6077
  %6079 = vmatmul.bf16.gmra.mxu0 %v6044
  %v6080 = vpop.f32.mrf.mxu0
  %v6081 = vadd.f32 %v6011, %v6080
  %v6082 = vpop.f32.mrf.mxu0
  %v6083 = vadd.f32 %v6011, %v6082
  %6084 = vmatmul.bf16.gmra.mxu0 %v6047
  %v6085 = vpop.f32.mrf.mxu0
  %v6086 = vadd.f32 %v6011, %v6085
  %v6087 = vpop.f32.mrf.mxu0
  %v6088 = vadd.f32 %v6011, %v6087
  %6089 = vmatmul.bf16.gmra.mxu0 %v6050
  %v6090 = vpop.f32.mrf.mxu0
  %v6091 = vadd.f32 %v6011, %v6090
  %v6092 = vpop.f32.mrf.mxu0
  %v6093 = vadd.f32 %v6011, %v6092
  %6094 = vmatmul.bf16.gmra.mxu0 %v6053
  %v6095 = vpop.f32.mrf.mxu0
  %v6096 = vadd.f32 %v6011, %v6095
  %v6097 = vpop.f32.mrf.mxu0
  %v6098 = vadd.f32 %v6011, %v6097
  %6099 = vmatmul.bf16.gmra.mxu0 %v6056
  %v6100 = vpop.f32.mrf.mxu0
  %v6101 = vadd.f32 %v6011, %v6100
  %v6102 = vpop.f32.mrf.mxu0
  %v6103 = vadd.f32 %v6011, %v6102
  %6104 = vmatmul.bf16.gmra.mxu0 %v6059
  %v6105 = vpop.f32.mrf.mxu0
  %v6106 = vadd.f32 %v6011, %v6105
  %v6107 = vpop.f32.mrf.mxu0
  %v6108 = vadd.f32 %v6011, %v6107
  %6109 = vdwg.mxu0
  %v6110 = vxor.u32 %v6071, 2147483648
  %v6111 = vxor.u32 %v6073, 2147483648
  %v6112 = vxor.u32 %v6076, 2147483648
  %v6113 = vxor.u32 %v6078, 2147483648
  %v6114 = vxor.u32 %v6081, 2147483648
  %v6115 = vxor.u32 %v6083, 2147483648
  %v6116 = vxor.u32 %v6086, 2147483648
  %v6117 = vxor.u32 %v6088, 2147483648
  %v6118 = vxor.u32 %v6091, 2147483648
  %v6119 = vxor.u32 %v6093, 2147483648
  %v6120 = vxor.u32 %v6096, 2147483648
  %v6121 = vxor.u32 %v6098, 2147483648
  %v6122 = vxor.u32 %v6101, 2147483648
  %v6123 = vxor.u32 %v6103, 2147483648
  %v6124 = vxor.u32 %v6106, 2147483648
  %v6125 = vxor.u32 %v6108, 2147483648
  %v6126 = vmul.f32 %v6110, 1.442695
  %v6127 = vpow.pop %v6126
  %v6128 = vmul.f32 %v6111, 1.442695
  %v6129 = vpow.pop %v6128
  %v6130 = vmul.f32 %v6112, 1.442695
  %v6131 = vpow.pop %v6130
  %v6132 = vmul.f32 %v6113, 1.442695
  %v6133 = vpow.pop %v6132
  %v6134 = vmul.f32 %v6114, 1.442695
  %v6135 = vpow.pop %v6134
  %v6136 = vmul.f32 %v6115, 1.442695
  %v6137 = vpow.pop %v6136
  %v6138 = vmul.f32 %v6116, 1.442695
  %v6139 = vpow.pop %v6138
  %v6140 = vmul.f32 %v6117, 1.442695
  %v6141 = vpow.pop %v6140
  %v6142 = vmul.f32 %v6118, 1.442695
  %v6143 = vpow.pop %v6142
  %v6144 = vmul.f32 %v6119, 1.442695
  %v6145 = vpow.pop %v6144
  %v6146 = vmul.f32 %v6120, 1.442695
  %v6147 = vpow.pop %v6146
  %v6148 = vmul.f32 %v6121, 1.442695
  %v6149 = vpow.pop %v6148
  %v6150 = vmul.f32 %v6122, 1.442695
  %v6151 = vpow.pop %v6150
  %v6152 = vmul.f32 %v6123, 1.442695
  %v6153 = vpow.pop %v6152
  %v6154 = vmul.f32 %v6124, 1.442695
  %v6155 = vpow.pop %v6154
  %v6156 = vmul.f32 %v6125, 1.442695
  %v6157 = vpow.pop %v6156
  %v6158 = vadd.f32 %v6127, 1.0
  %v6159 = vadd.f32 %v6129, 1.0
  %v6160 = vadd.f32 %v6131, 1.0
  %v6161 = vadd.f32 %v6133, 1.0
  %v6162 = vadd.f32 %v6135, 1.0
  %v6163 = vadd.f32 %v6137, 1.0
  %v6164 = vadd.f32 %v6139, 1.0
  %v6165 = vadd.f32 %v6141, 1.0
  %v6166 = vadd.f32 %v6143, 1.0
  %v6167 = vadd.f32 %v6145, 1.0
  %v6168 = vadd.f32 %v6147, 1.0
  %v6169 = vadd.f32 %v6149, 1.0
  %v6170 = vadd.f32 %v6151, 1.0
  %v6171 = vadd.f32 %v6153, 1.0
  %v6172 = vadd.f32 %v6155, 1.0
  %v6173 = vadd.f32 %v6157, 1.0
  %v6174 = vrcp.pop %v6158
  %v6175 = vmul.f32 %v6158, %v6174
  %v6176 = vsub.f32 1.0, %v6175
  %v6177 = vmul.f32 %v6174, %v6176
  %v6178 = vadd.f32 %v6174, %v6177
  %vm6179 = vweird.f32 %v6158
  %vm6180 = vweird.f32 %v6174
  %vm6181 = vmor %vm6179, %vm6180
  %v6182 = vsel %vm6181, %v6174, %v6178
  %v6183 = vand.u32 2147483647, %v6158
  %vm6184 = vcmp.eq.f32.partialorder %v6183, 8.507059e+37
  %v6185 = vand.u32 %v6158, 2147483648
  %v6186 = vor.u32 1.1754944e-38, %v6185
  %v6187 = vsel %vm6184, %v6186, %v6182
  %v6188 = vmul.f32 1.0, %v6187
  %v6189 = vrcp.pop %v6159
  %v6190 = vmul.f32 %v6159, %v6189
  %v6191 = vsub.f32 1.0, %v6190
  %v6192 = vmul.f32 %v6189, %v6191
  %v6193 = vadd.f32 %v6189, %v6192
  %vm6194 = vweird.f32 %v6159
  %vm6195 = vweird.f32 %v6189
  %vm6196 = vmor %vm6194, %vm6195
  %v6197 = vsel %vm6196, %v6189, %v6193
  %v6198 = vand.u32 2147483647, %v6159
  %vm6199 = vcmp.eq.f32.partialorder %v6198, 8.507059e+37
  %v6200 = vand.u32 %v6159, 2147483648
  %v6201 = vor.u32 1.1754944e-38, %v6200
  %v6202 = vsel %vm6199, %v6201, %v6197
  %v6203 = vmul.f32 1.0, %v6202
  %v6204 = vrcp.pop %v6160
  %v6205 = vmul.f32 %v6160, %v6204
  %v6206 = vsub.f32 1.0, %v6205
  %v6207 = vmul.f32 %v6204, %v6206
  %v6208 = vadd.f32 %v6204, %v6207
  %vm6209 = vweird.f32 %v6160
  %vm6210 = vweird.f32 %v6204
  %vm6211 = vmor %vm6209, %vm6210
  %v6212 = vsel %vm6211, %v6204, %v6208
  %v6213 = vand.u32 2147483647, %v6160
  %vm6214 = vcmp.eq.f32.partialorder %v6213, 8.507059e+37
  %v6215 = vand.u32 %v6160, 2147483648
  %v6216 = vor.u32 1.1754944e-38, %v6215
  %v6217 = vsel %vm6214, %v6216, %v6212
  %v6218 = vmul.f32 1.0, %v6217
  %v6219 = vrcp.pop %v6161
  %v6220 = vmul.f32 %v6161, %v6219
  %v6221 = vsub.f32 1.0, %v6220
  %v6222 = vmul.f32 %v6219, %v6221
  %v6223 = vadd.f32 %v6219, %v6222
  %vm6224 = vweird.f32 %v6161
  %vm6225 = vweird.f32 %v6219
  %vm6226 = vmor %vm6224, %vm6225
  %v6227 = vsel %vm6226, %v6219, %v6223
  %v6228 = vand.u32 2147483647, %v6161
  %vm6229 = vcmp.eq.f32.partialorder %v6228, 8.507059e+37
  %v6230 = vand.u32 %v6161, 2147483648
  %v6231 = vor.u32 1.1754944e-38, %v6230
  %v6232 = vsel %vm6229, %v6231, %v6227
  %v6233 = vmul.f32 1.0, %v6232
  %v6234 = vrcp.pop %v6162
  %v6235 = vmul.f32 %v6162, %v6234
  %v6236 = vsub.f32 1.0, %v6235
  %v6237 = vmul.f32 %v6234, %v6236
  %v6238 = vadd.f32 %v6234, %v6237
  %vm6239 = vweird.f32 %v6162
  %vm6240 = vweird.f32 %v6234
  %vm6241 = vmor %vm6239, %vm6240
  %v6242 = vsel %vm6241, %v6234, %v6238
  %v6243 = vand.u32 2147483647, %v6162
  %vm6244 = vcmp.eq.f32.partialorder %v6243, 8.507059e+37
  %v6245 = vand.u32 %v6162, 2147483648
  %v6246 = vor.u32 1.1754944e-38, %v6245
  %v6247 = vsel %vm6244, %v6246, %v6242
  %v6248 = vmul.f32 1.0, %v6247
  %v6249 = vrcp.pop %v6163
  %v6250 = vmul.f32 %v6163, %v6249
  %v6251 = vsub.f32 1.0, %v6250
  %v6252 = vmul.f32 %v6249, %v6251
  %v6253 = vadd.f32 %v6249, %v6252
  %vm6254 = vweird.f32 %v6163
  %vm6255 = vweird.f32 %v6249
  %vm6256 = vmor %vm6254, %vm6255
  %v6257 = vsel %vm6256, %v6249, %v6253
  %v6258 = vand.u32 2147483647, %v6163
  %vm6259 = vcmp.eq.f32.partialorder %v6258, 8.507059e+37
  %v6260 = vand.u32 %v6163, 2147483648
  %v6261 = vor.u32 1.1754944e-38, %v6260
  %v6262 = vsel %vm6259, %v6261, %v6257
  %v6263 = vmul.f32 1.0, %v6262
  %v6264 = vrcp.pop %v6164
  %v6265 = vmul.f32 %v6164, %v6264
  %v6266 = vsub.f32 1.0, %v6265
  %v6267 = vmul.f32 %v6264, %v6266
  %v6268 = vadd.f32 %v6264, %v6267
  %vm6269 = vweird.f32 %v6164
  %vm6270 = vweird.f32 %v6264
  %vm6271 = vmor %vm6269, %vm6270
  %v6272 = vsel %vm6271, %v6264, %v6268
  %v6273 = vand.u32 2147483647, %v6164
  %vm6274 = vcmp.eq.f32.partialorder %v6273, 8.507059e+37
  %v6275 = vand.u32 %v6164, 2147483648
  %v6276 = vor.u32 1.1754944e-38, %v6275
  %v6277 = vsel %vm6274, %v6276, %v6272
  %v6278 = vmul.f32 1.0, %v6277
  %v6279 = vrcp.pop %v6165
  %v6280 = vmul.f32 %v6165, %v6279
  %v6281 = vsub.f32 1.0, %v6280
  %v6282 = vmul.f32 %v6279, %v6281
  %v6283 = vadd.f32 %v6279, %v6282
  %vm6284 = vweird.f32 %v6165
  %vm6285 = vweird.f32 %v6279
  %vm6286 = vmor %vm6284, %vm6285
  %v6287 = vsel %vm6286, %v6279, %v6283
  %v6288 = vand.u32 2147483647, %v6165
  %vm6289 = vcmp.eq.f32.partialorder %v6288, 8.507059e+37
  %v6290 = vand.u32 %v6165, 2147483648
  %v6291 = vor.u32 1.1754944e-38, %v6290
  %v6292 = vsel %vm6289, %v6291, %v6287
  %v6293 = vmul.f32 1.0, %v6292
  %v6294 = vrcp.pop %v6166
  %v6295 = vmul.f32 %v6166, %v6294
  %v6296 = vsub.f32 1.0, %v6295
  %v6297 = vmul.f32 %v6294, %v6296
  %v6298 = vadd.f32 %v6294, %v6297
  %vm6299 = vweird.f32 %v6166
  %vm6300 = vweird.f32 %v6294
  %vm6301 = vmor %vm6299, %vm6300
  %v6302 = vsel %vm6301, %v6294, %v6298
  %v6303 = vand.u32 2147483647, %v6166
  %vm6304 = vcmp.eq.f32.partialorder %v6303, 8.507059e+37
  %v6305 = vand.u32 %v6166, 2147483648
  %v6306 = vor.u32 1.1754944e-38, %v6305
  %v6307 = vsel %vm6304, %v6306, %v6302
  %v6308 = vmul.f32 1.0, %v6307
  %v6309 = vrcp.pop %v6167
  %v6310 = vmul.f32 %v6167, %v6309
  %v6311 = vsub.f32 1.0, %v6310
  %v6312 = vmul.f32 %v6309, %v6311
  %v6313 = vadd.f32 %v6309, %v6312
  %vm6314 = vweird.f32 %v6167
  %vm6315 = vweird.f32 %v6309
  %vm6316 = vmor %vm6314, %vm6315
  %v6317 = vsel %vm6316, %v6309, %v6313
  %v6318 = vand.u32 2147483647, %v6167
  %vm6319 = vcmp.eq.f32.partialorder %v6318, 8.507059e+37
  %v6320 = vand.u32 %v6167, 2147483648
  %v6321 = vor.u32 1.1754944e-38, %v6320
  %v6322 = vsel %vm6319, %v6321, %v6317
  %v6323 = vmul.f32 1.0, %v6322
  %v6324 = vrcp.pop %v6168
  %v6325 = vmul.f32 %v6168, %v6324
  %v6326 = vsub.f32 1.0, %v6325
  %v6327 = vmul.f32 %v6324, %v6326
  %v6328 = vadd.f32 %v6324, %v6327
  %vm6329 = vweird.f32 %v6168
  %vm6330 = vweird.f32 %v6324
  %vm6331 = vmor %vm6329, %vm6330
  %v6332 = vsel %vm6331, %v6324, %v6328
  %v6333 = vand.u32 2147483647, %v6168
  %vm6334 = vcmp.eq.f32.partialorder %v6333, 8.507059e+37
  %v6335 = vand.u32 %v6168, 2147483648
  %v6336 = vor.u32 1.1754944e-38, %v6335
  %v6337 = vsel %vm6334, %v6336, %v6332
  %v6338 = vmul.f32 1.0, %v6337
  %v6339 = vrcp.pop %v6169
  %v6340 = vmul.f32 %v6169, %v6339
  %v6341 = vsub.f32 1.0, %v6340
  %v6342 = vmul.f32 %v6339, %v6341
  %v6343 = vadd.f32 %v6339, %v6342
  %vm6344 = vweird.f32 %v6169
  %vm6345 = vweird.f32 %v6339
  %vm6346 = vmor %vm6344, %vm6345
  %v6347 = vsel %vm6346, %v6339, %v6343
  %v6348 = vand.u32 2147483647, %v6169
  %vm6349 = vcmp.eq.f32.partialorder %v6348, 8.507059e+37
  %v6350 = vand.u32 %v6169, 2147483648
  %v6351 = vor.u32 1.1754944e-38, %v6350
  %v6352 = vsel %vm6349, %v6351, %v6347
  %v6353 = vmul.f32 1.0, %v6352
  %v6354 = vrcp.pop %v6170
  %v6355 = vmul.f32 %v6170, %v6354
  %v6356 = vsub.f32 1.0, %v6355
  %v6357 = vmul.f32 %v6354, %v6356
  %v6358 = vadd.f32 %v6354, %v6357
  %vm6359 = vweird.f32 %v6170
  %vm6360 = vweird.f32 %v6354
  %vm6361 = vmor %vm6359, %vm6360
  %v6362 = vsel %vm6361, %v6354, %v6358
  %v6363 = vand.u32 2147483647, %v6170
  %vm6364 = vcmp.eq.f32.partialorder %v6363, 8.507059e+37
  %v6365 = vand.u32 %v6170, 2147483648
  %v6366 = vor.u32 1.1754944e-38, %v6365
  %v6367 = vsel %vm6364, %v6366, %v6362
  %v6368 = vmul.f32 1.0, %v6367
  %v6369 = vrcp.pop %v6171
  %v6370 = vmul.f32 %v6171, %v6369
  %v6371 = vsub.f32 1.0, %v6370
  %v6372 = vmul.f32 %v6369, %v6371
  %v6373 = vadd.f32 %v6369, %v6372
  %vm6374 = vweird.f32 %v6171
  %vm6375 = vweird.f32 %v6369
  %vm6376 = vmor %vm6374, %vm6375
  %v6377 = vsel %vm6376, %v6369, %v6373
  %v6378 = vand.u32 2147483647, %v6171
  %vm6379 = vcmp.eq.f32.partialorder %v6378, 8.507059e+37
  %v6380 = vand.u32 %v6171, 2147483648
  %v6381 = vor.u32 1.1754944e-38, %v6380
  %v6382 = vsel %vm6379, %v6381, %v6377
  %v6383 = vmul.f32 1.0, %v6382
  %v6384 = vrcp.pop %v6172
  %v6385 = vmul.f32 %v6172, %v6384
  %v6386 = vsub.f32 1.0, %v6385
  %v6387 = vmul.f32 %v6384, %v6386
  %v6388 = vadd.f32 %v6384, %v6387
  %vm6389 = vweird.f32 %v6172
  %vm6390 = vweird.f32 %v6384
  %vm6391 = vmor %vm6389, %vm6390
  %v6392 = vsel %vm6391, %v6384, %v6388
  %v6393 = vand.u32 2147483647, %v6172
  %vm6394 = vcmp.eq.f32.partialorder %v6393, 8.507059e+37
  %v6395 = vand.u32 %v6172, 2147483648
  %v6396 = vor.u32 1.1754944e-38, %v6395
  %v6397 = vsel %vm6394, %v6396, %v6392
  %v6398 = vmul.f32 1.0, %v6397
  %v6399 = vrcp.pop %v6173
  %v6400 = vmul.f32 %v6173, %v6399
  %v6401 = vsub.f32 1.0, %v6400
  %v6402 = vmul.f32 %v6399, %v6401
  %v6403 = vadd.f32 %v6399, %v6402
  %vm6404 = vweird.f32 %v6173
  %vm6405 = vweird.f32 %v6399
  %vm6406 = vmor %vm6404, %vm6405
  %v6407 = vsel %vm6406, %v6399, %v6403
  %v6408 = vand.u32 2147483647, %v6173
  %vm6409 = vcmp.eq.f32.partialorder %v6408, 8.507059e+37
  %v6410 = vand.u32 %v6173, 2147483648
  %v6411 = vor.u32 1.1754944e-38, %v6410
  %v6412 = vsel %vm6409, %v6411, %v6407
  %v6413 = vmul.f32 1.0, %v6412
  %v6414 = vmul.f32 %v6071, %v6188
  %v6415 = vmul.f32 %v6073, %v6203
  %v6416 = vmul.f32 %v6076, %v6218
  %v6417 = vmul.f32 %v6078, %v6233
  %v6418 = vmul.f32 %v6081, %v6248
  %v6419 = vmul.f32 %v6083, %v6263
  %v6420 = vmul.f32 %v6086, %v6278
  %v6421 = vmul.f32 %v6088, %v6293
  %v6422 = vmul.f32 %v6091, %v6308
  %v6423 = vmul.f32 %v6093, %v6323
  %v6424 = vmul.f32 %v6096, %v6338
  %v6425 = vmul.f32 %v6098, %v6353
  %v6426 = vmul.f32 %v6101, %v6368
  %v6427 = vmul.f32 %v6103, %v6383
  %v6428 = vmul.f32 %v6106, %v6398
  %v6429 = vmul.f32 %v6108, %v6413
  %v6430 = vpack.c.bf16 %v5986, %v5985
  %v6431 = vpack.c.bf16 %v5988, %v5987
  %v6432 = vpack.c.bf16 %v5990, %v5989
  %v6433 = vpack.c.bf16 %v5992, %v5991
  %v6434 = vpack.c.bf16 %v5994, %v5993
  %v6435 = vpack.c.bf16 %v5996, %v5995
  %v6436 = vpack.c.bf16 %v5998, %v5997
  %v6437 = vpack.c.bf16 %v6000, %v5999
  %v6438 = vld [vmem:[%s17] sm:$0xf]
  %v6439 = vld [vmem:[#allocation2] sm:$0x1]
  %v6441 = vperm.slane %v6439, 0
  %v6444 = vsel %vm1410, %v6430, 0
  %v6447 = vsel %vm1410, %v6431, 0
  %v6450 = vsel %vm1410, %v6432, 0
  %v6453 = vsel %vm1410, %v6433, 0
  %v6456 = vsel %vm1410, %v6434, 0
  %v6459 = vsel %vm1410, %v6435, 0
  %v6462 = vsel %vm1410, %v6436, 0
  %v6465 = vsel %vm1410, %v6437, 0
  %vm6467 = vcmask 1043456
  %v6469 = vsel %vm6467, %v6438, 0
  %6471 = vmatpush.bf16.msra.mxu0 0
  %6472 = vmatpush.bf16.msra.mxu0 0
  %6473 = vmatpush.bf16.msra.mxu0 0
  %6474 = vmatpush.bf16.msra.mxu0 0
  %6475 = vmatpush.bf16.msra.mxu0 0
  %6476 = vmatpush.bf16.msra.mxu0 0
  %6477 = vmatpush.bf16.msra.mxu0 0
  %6478 = vmatpush.bf16.msra.mxu0 %v6469
  %6479 = vmatmul.bf16.gmra.mxu0 %v6444
  %v6480 = vpop.f32.mrf.mxu0
  %v6481 = vadd.f32 %v6441, %v6480
  %v6482 = vpop.f32.mrf.mxu0
  %v6483 = vadd.f32 %v6441, %v6482
  %6484 = vmatmul.bf16.gmra.mxu0 %v6447
  %v6485 = vpop.f32.mrf.mxu0
  %v6486 = vadd.f32 %v6441, %v6485
  %v6487 = vpop.f32.mrf.mxu0
  %v6488 = vadd.f32 %v6441, %v6487
  %6489 = vmatmul.bf16.gmra.mxu0 %v6450
  %v6490 = vpop.f32.mrf.mxu0
  %v6491 = vadd.f32 %v6441, %v6490
  %v6492 = vpop.f32.mrf.mxu0
  %v6493 = vadd.f32 %v6441, %v6492
  %6494 = vmatmul.bf16.gmra.mxu0 %v6453
  %v6495 = vpop.f32.mrf.mxu0
  %v6496 = vadd.f32 %v6441, %v6495
  %v6497 = vpop.f32.mrf.mxu0
  %v6498 = vadd.f32 %v6441, %v6497
  %6499 = vmatmul.bf16.gmra.mxu0 %v6456
  %v6500 = vpop.f32.mrf.mxu0
  %v6501 = vadd.f32 %v6441, %v6500
  %v6502 = vpop.f32.mrf.mxu0
  %v6503 = vadd.f32 %v6441, %v6502
  %6504 = vmatmul.bf16.gmra.mxu0 %v6459
  %v6505 = vpop.f32.mrf.mxu0
  %v6506 = vadd.f32 %v6441, %v6505
  %v6507 = vpop.f32.mrf.mxu0
  %v6508 = vadd.f32 %v6441, %v6507
  %6509 = vmatmul.bf16.gmra.mxu0 %v6462
  %v6510 = vpop.f32.mrf.mxu0
  %v6511 = vadd.f32 %v6441, %v6510
  %v6512 = vpop.f32.mrf.mxu0
  %v6513 = vadd.f32 %v6441, %v6512
  %6514 = vmatmul.bf16.gmra.mxu0 %v6465
  %v6515 = vpop.f32.mrf.mxu0
  %v6516 = vadd.f32 %v6441, %v6515
  %v6517 = vpop.f32.mrf.mxu0
  %v6518 = vadd.f32 %v6441, %v6517
  %6519 = vdwg.mxu0
  %vm6520 = vcmp.gt.f32.partialorder %v6481, 20.0
  %vm6521 = vcmp.gt.f32.partialorder %v6483, 20.0
  %vm6522 = vcmp.gt.f32.partialorder %v6486, 20.0
  %vm6523 = vcmp.gt.f32.partialorder %v6488, 20.0
  %vm6524 = vcmp.gt.f32.partialorder %v6491, 20.0
  %vm6525 = vcmp.gt.f32.partialorder %v6493, 20.0
  %vm6526 = vcmp.gt.f32.partialorder %v6496, 20.0
  %vm6527 = vcmp.gt.f32.partialorder %v6498, 20.0
  %vm6528 = vcmp.gt.f32.partialorder %v6501, 20.0
  %vm6529 = vcmp.gt.f32.partialorder %v6503, 20.0
  %vm6530 = vcmp.gt.f32.partialorder %v6506, 20.0
  %vm6531 = vcmp.gt.f32.partialorder %v6508, 20.0
  %vm6532 = vcmp.gt.f32.partialorder %v6511, 20.0
  %vm6533 = vcmp.gt.f32.partialorder %v6513, 20.0
  %vm6534 = vcmp.gt.f32.partialorder %v6516, 20.0
  %vm6535 = vcmp.gt.f32.partialorder %v6518, 20.0
  %v6536 = vmin.f32 %v6481, 20.0
  %v6537 = vmin.f32 %v6483, 20.0
  %v6538 = vmin.f32 %v6486, 20.0
  %v6539 = vmin.f32 %v6488, 20.0
  %v6540 = vmin.f32 %v6491, 20.0
  %v6541 = vmin.f32 %v6493, 20.0
  %v6542 = vmin.f32 %v6496, 20.0
  %v6543 = vmin.f32 %v6498, 20.0
  %v6544 = vmin.f32 %v6501, 20.0
  %v6545 = vmin.f32 %v6503, 20.0
  %v6546 = vmin.f32 %v6506, 20.0
  %v6547 = vmin.f32 %v6508, 20.0
  %v6548 = vmin.f32 %v6511, 20.0
  %v6549 = vmin.f32 %v6513, 20.0
  %v6550 = vmin.f32 %v6516, 20.0
  %v6551 = vmin.f32 %v6518, 20.0
  %v6552 = vmul.f32 %v6536, 1.442695
  %v6553 = vpow.pop %v6552
  %v6554 = vmul.f32 %v6537, 1.442695
  %v6555 = vpow.pop %v6554
  %v6556 = vmul.f32 %v6538, 1.442695
  %v6557 = vpow.pop %v6556
  %v6558 = vmul.f32 %v6539, 1.442695
  %v6559 = vpow.pop %v6558
  %v6560 = vmul.f32 %v6540, 1.442695
  %v6561 = vpow.pop %v6560
  %v6562 = vmul.f32 %v6541, 1.442695
  %v6563 = vpow.pop %v6562
  %v6564 = vmul.f32 %v6542, 1.442695
  %v6565 = vpow.pop %v6564
  %v6566 = vmul.f32 %v6543, 1.442695
  %v6567 = vpow.pop %v6566
  %v6568 = vmul.f32 %v6544, 1.442695
  %v6569 = vpow.pop %v6568
  %v6570 = vmul.f32 %v6545, 1.442695
  %v6571 = vpow.pop %v6570
  %v6572 = vmul.f32 %v6546, 1.442695
  %v6573 = vpow.pop %v6572
  %v6574 = vmul.f32 %v6547, 1.442695
  %v6575 = vpow.pop %v6574
  %v6576 = vmul.f32 %v6548, 1.442695
  %v6577 = vpow.pop %v6576
  %v6578 = vmul.f32 %v6549, 1.442695
  %v6579 = vpow.pop %v6578
  %v6580 = vmul.f32 %v6550, 1.442695
  %v6581 = vpow.pop %v6580
  %v6582 = vmul.f32 %v6551, 1.442695
  %v6583 = vpow.pop %v6582
  %v6584 = vadd.f32 %v6553, 1.0
  %v6585 = vlog2.pop %v6584
  %v6586 = vmul.f32 %v6585, 0.6931472
  %v6587 = vmul.f32 -0.5, %v6553
  %v6588 = vadd.f32 %v6587, 1.0
  %v6589 = vmul.f32 %v6588, %v6553
  %v6590 = vand.u32 2147483647, %v6553
  %vm6591 = vcmp.lt.f32.partialorder %v6590, 0.0004427343
  %v6592 = vsel %vm6591, %v6589, %v6586
  %v6593 = vadd.f32 %v6555, 1.0
  %v6594 = vlog2.pop %v6593
  %v6595 = vmul.f32 %v6594, 0.6931472
  %v6596 = vmul.f32 -0.5, %v6555
  %v6597 = vadd.f32 %v6596, 1.0
  %v6598 = vmul.f32 %v6597, %v6555
  %v6599 = vand.u32 2147483647, %v6555
  %vm6600 = vcmp.lt.f32.partialorder %v6599, 0.0004427343
  %v6601 = vsel %vm6600, %v6598, %v6595
  %v6602 = vadd.f32 %v6557, 1.0
  %v6603 = vlog2.pop %v6602
  %v6604 = vmul.f32 %v6603, 0.6931472
  %v6605 = vmul.f32 -0.5, %v6557
  %v6606 = vadd.f32 %v6605, 1.0
  %v6607 = vmul.f32 %v6606, %v6557
  %v6608 = vand.u32 2147483647, %v6557
  %vm6609 = vcmp.lt.f32.partialorder %v6608, 0.0004427343
  %v6610 = vsel %vm6609, %v6607, %v6604
  %v6611 = vadd.f32 %v6559, 1.0
  %v6612 = vlog2.pop %v6611
  %v6613 = vmul.f32 %v6612, 0.6931472
  %v6614 = vmul.f32 -0.5, %v6559
  %v6615 = vadd.f32 %v6614, 1.0
  %v6616 = vmul.f32 %v6615, %v6559
  %v6617 = vand.u32 2147483647, %v6559
  %vm6618 = vcmp.lt.f32.partialorder %v6617, 0.0004427343
  %v6619 = vsel %vm6618, %v6616, %v6613
  %v6620 = vadd.f32 %v6561, 1.0
  %v6621 = vlog2.pop %v6620
  %v6622 = vmul.f32 %v6621, 0.6931472
  %v6623 = vmul.f32 -0.5, %v6561
  %v6624 = vadd.f32 %v6623, 1.0
  %v6625 = vmul.f32 %v6624, %v6561
  %v6626 = vand.u32 2147483647, %v6561
  %vm6627 = vcmp.lt.f32.partialorder %v6626, 0.0004427343
  %v6628 = vsel %vm6627, %v6625, %v6622
  %v6629 = vadd.f32 %v6563, 1.0
  %v6630 = vlog2.pop %v6629
  %v6631 = vmul.f32 %v6630, 0.6931472
  %v6632 = vmul.f32 -0.5, %v6563
  %v6633 = vadd.f32 %v6632, 1.0
  %v6634 = vmul.f32 %v6633, %v6563
  %v6635 = vand.u32 2147483647, %v6563
  %vm6636 = vcmp.lt.f32.partialorder %v6635, 0.0004427343
  %v6637 = vsel %vm6636, %v6634, %v6631
  %v6638 = vadd.f32 %v6565, 1.0
  %v6639 = vlog2.pop %v6638
  %v6640 = vmul.f32 %v6639, 0.6931472
  %v6641 = vmul.f32 -0.5, %v6565
  %v6642 = vadd.f32 %v6641, 1.0
  %v6643 = vmul.f32 %v6642, %v6565
  %v6644 = vand.u32 2147483647, %v6565
  %vm6645 = vcmp.lt.f32.partialorder %v6644, 0.0004427343
  %v6646 = vsel %vm6645, %v6643, %v6640
  %v6647 = vadd.f32 %v6567, 1.0
  %v6648 = vlog2.pop %v6647
  %v6649 = vmul.f32 %v6648, 0.6931472
  %v6650 = vmul.f32 -0.5, %v6567
  %v6651 = vadd.f32 %v6650, 1.0
  %v6652 = vmul.f32 %v6651, %v6567
  %v6653 = vand.u32 2147483647, %v6567
  %vm6654 = vcmp.lt.f32.partialorder %v6653, 0.0004427343
  %v6655 = vsel %vm6654, %v6652, %v6649
  %v6656 = vadd.f32 %v6569, 1.0
  %v6657 = vlog2.pop %v6656
  %v6658 = vmul.f32 %v6657, 0.6931472
  %v6659 = vmul.f32 -0.5, %v6569
  %v6660 = vadd.f32 %v6659, 1.0
  %v6661 = vmul.f32 %v6660, %v6569
  %v6662 = vand.u32 2147483647, %v6569
  %vm6663 = vcmp.lt.f32.partialorder %v6662, 0.0004427343
  %v6664 = vsel %vm6663, %v6661, %v6658
  %v6665 = vadd.f32 %v6571, 1.0
  %v6666 = vlog2.pop %v6665
  %v6667 = vmul.f32 %v6666, 0.6931472
  %v6668 = vmul.f32 -0.5, %v6571
  %v6669 = vadd.f32 %v6668, 1.0
  %v6670 = vmul.f32 %v6669, %v6571
  %v6671 = vand.u32 2147483647, %v6571
  %vm6672 = vcmp.lt.f32.partialorder %v6671, 0.0004427343
  %v6673 = vsel %vm6672, %v6670, %v6667
  %v6674 = vadd.f32 %v6573, 1.0
  %v6675 = vlog2.pop %v6674
  %v6676 = vmul.f32 %v6675, 0.6931472
  %v6677 = vmul.f32 -0.5, %v6573
  %v6678 = vadd.f32 %v6677, 1.0
  %v6679 = vmul.f32 %v6678, %v6573
  %v6680 = vand.u32 2147483647, %v6573
  %vm6681 = vcmp.lt.f32.partialorder %v6680, 0.0004427343
  %v6682 = vsel %vm6681, %v6679, %v6676
  %v6683 = vadd.f32 %v6575, 1.0
  %v6684 = vlog2.pop %v6683
  %v6685 = vmul.f32 %v6684, 0.6931472
  %v6686 = vmul.f32 -0.5, %v6575
  %v6687 = vadd.f32 %v6686, 1.0
  %v6688 = vmul.f32 %v6687, %v6575
  %v6689 = vand.u32 2147483647, %v6575
  %vm6690 = vcmp.lt.f32.partialorder %v6689, 0.0004427343
  %v6691 = vsel %vm6690, %v6688, %v6685
  %v6692 = vadd.f32 %v6577, 1.0
  %v6693 = vlog2.pop %v6692
  %v6694 = vmul.f32 %v6693, 0.6931472
  %v6695 = vmul.f32 -0.5, %v6577
  %v6696 = vadd.f32 %v6695, 1.0
  %v6697 = vmul.f32 %v6696, %v6577
  %v6698 = vand.u32 2147483647, %v6577
  %vm6699 = vcmp.lt.f32.partialorder %v6698, 0.0004427343
  %v6700 = vsel %vm6699, %v6697, %v6694
  %v6701 = vadd.f32 %v6579, 1.0
  %v6702 = vlog2.pop %v6701
  %v6703 = vmul.f32 %v6702, 0.6931472
  %v6704 = vmul.f32 -0.5, %v6579
  %v6705 = vadd.f32 %v6704, 1.0
  %v6706 = vmul.f32 %v6705, %v6579
  %v6707 = vand.u32 2147483647, %v6579
  %vm6708 = vcmp.lt.f32.partialorder %v6707, 0.0004427343
  %v6709 = vsel %vm6708, %v6706, %v6703
  %v6710 = vadd.f32 %v6581, 1.0
  %v6711 = vlog2.pop %v6710
  %v6712 = vmul.f32 %v6711, 0.6931472
  %v6713 = vmul.f32 -0.5, %v6581
  %v6714 = vadd.f32 %v6713, 1.0
  %v6715 = vmul.f32 %v6714, %v6581
  %v6716 = vand.u32 2147483647, %v6581
  %vm6717 = vcmp.lt.f32.partialorder %v6716, 0.0004427343
  %v6718 = vsel %vm6717, %v6715, %v6712
  %v6719 = vadd.f32 %v6583, 1.0
  %v6720 = vlog2.pop %v6719
  %v6721 = vmul.f32 %v6720, 0.6931472
  %v6722 = vmul.f32 -0.5, %v6583
  %v6723 = vadd.f32 %v6722, 1.0
  %v6724 = vmul.f32 %v6723, %v6583
  %v6725 = vand.u32 2147483647, %v6583
  %vm6726 = vcmp.lt.f32.partialorder %v6725, 0.0004427343
  %v6727 = vsel %vm6726, %v6724, %v6721
  %v6728 = vsel %vm6520, %v6481, %v6592
  %v6729 = vsel %vm6521, %v6483, %v6601
  %v6730 = vsel %vm6522, %v6486, %v6610
  %v6731 = vsel %vm6523, %v6488, %v6619
  %v6732 = vsel %vm6524, %v6491, %v6628
  %v6733 = vsel %vm6525, %v6493, %v6637
  %v6734 = vsel %vm6526, %v6496, %v6646
  %v6735 = vsel %vm6527, %v6498, %v6655
  %v6736 = vsel %vm6528, %v6501, %v6664
  %v6737 = vsel %vm6529, %v6503, %v6673
  %v6738 = vsel %vm6530, %v6506, %v6682
  %v6739 = vsel %vm6531, %v6508, %v6691
  %v6740 = vsel %vm6532, %v6511, %v6700
  %v6741 = vsel %vm6533, %v6513, %v6709
  %v6742 = vsel %vm6534, %v6516, %v6718
  %v6743 = vsel %vm6535, %v6518, %v6727
  %v6744 = vpack.c.bf16 %v6415, %v6414
  %v6745 = vpack.c.bf16 %v6417, %v6416
  %v6746 = vpack.c.bf16 %v6419, %v6418
  %v6747 = vpack.c.bf16 %v6421, %v6420
  %v6748 = vpack.c.bf16 %v6423, %v6422
  %v6749 = vpack.c.bf16 %v6425, %v6424
  %v6750 = vpack.c.bf16 %v6427, %v6426
  %v6751 = vpack.c.bf16 %v6429, %v6428
  %v6752 = vld [vmem:[%s21] sm:$0xf]
  %v6753 = vld [vmem:[#allocation3] sm:$0x1]
  %v6755 = vperm.slane %v6753, 0
  %v6758 = vsel %vm1410, %v6744, 0
  %v6761 = vsel %vm1410, %v6745, 0
  %v6764 = vsel %vm1410, %v6746, 0
  %v6767 = vsel %vm1410, %v6747, 0
  %v6770 = vsel %vm1410, %v6748, 0
  %v6773 = vsel %vm1410, %v6749, 0
  %v6776 = vsel %vm1410, %v6750, 0
  %v6779 = vsel %vm1410, %v6751, 0
  %v6782 = vsel %vm6467, %v6752, 0
  %6784 = vmatpush.bf16.msra.mxu0 0
  %6785 = vmatpush.bf16.msra.mxu0 0
  %6786 = vmatpush.bf16.msra.mxu0 0
  %6787 = vmatpush.bf16.msra.mxu0 0
  %6788 = vmatpush.bf16.msra.mxu0 0
  %6789 = vmatpush.bf16.msra.mxu0 0
  %6790 = vmatpush.bf16.msra.mxu0 0
  %6791 = vmatpush.bf16.msra.mxu0 %v6782
  %6792 = vmatmul.bf16.gmra.mxu0 %v6758
  %v6793 = vpop.f32.mrf.mxu0
  %v6794 = vadd.f32 %v6755, %v6793
  %v6795 = vpop.f32.mrf.mxu0
  %v6796 = vadd.f32 %v6755, %v6795
  %6797 = vmatmul.bf16.gmra.mxu0 %v6761
  %v6798 = vpop.f32.mrf.mxu0
  %v6799 = vadd.f32 %v6755, %v6798
  %v6800 = vpop.f32.mrf.mxu0
  %v6801 = vadd.f32 %v6755, %v6800
  %6802 = vmatmul.bf16.gmra.mxu0 %v6764
  %v6803 = vpop.f32.mrf.mxu0
  %v6804 = vadd.f32 %v6755, %v6803
  %v6805 = vpop.f32.mrf.mxu0
  %v6806 = vadd.f32 %v6755, %v6805
  %6807 = vmatmul.bf16.gmra.mxu0 %v6767
  %v6808 = vpop.f32.mrf.mxu0
  %v6809 = vadd.f32 %v6755, %v6808
  %v6810 = vpop.f32.mrf.mxu0
  %v6811 = vadd.f32 %v6755, %v6810
  %6812 = vmatmul.bf16.gmra.mxu0 %v6770
  %v6813 = vpop.f32.mrf.mxu0
  %v6814 = vadd.f32 %v6755, %v6813
  %v6815 = vpop.f32.mrf.mxu0
  %v6816 = vadd.f32 %v6755, %v6815
  %6817 = vmatmul.bf16.gmra.mxu0 %v6773
  %v6818 = vpop.f32.mrf.mxu0
  %v6819 = vadd.f32 %v6755, %v6818
  %v6820 = vpop.f32.mrf.mxu0
  %v6821 = vadd.f32 %v6755, %v6820
  %6822 = vmatmul.bf16.gmra.mxu0 %v6776
  %v6823 = vpop.f32.mrf.mxu0
  %v6824 = vadd.f32 %v6755, %v6823
  %v6825 = vpop.f32.mrf.mxu0
  %v6826 = vadd.f32 %v6755, %v6825
  %6827 = vmatmul.bf16.gmra.mxu0 %v6779
  %v6828 = vpop.f32.mrf.mxu0
  %v6829 = vadd.f32 %v6755, %v6828
  %v6830 = vpop.f32.mrf.mxu0
  %v6831 = vadd.f32 %v6755, %v6830
  %6832 = vdwg.mxu0
  %vm6833 = vcmp.gt.f32.partialorder %v6794, 20.0
  %vm6834 = vcmp.gt.f32.partialorder %v6796, 20.0
  %vm6835 = vcmp.gt.f32.partialorder %v6799, 20.0
  %vm6836 = vcmp.gt.f32.partialorder %v6801, 20.0
  %vm6837 = vcmp.gt.f32.partialorder %v6804, 20.0
  %vm6838 = vcmp.gt.f32.partialorder %v6806, 20.0
  %vm6839 = vcmp.gt.f32.partialorder %v6809, 20.0
  %vm6840 = vcmp.gt.f32.partialorder %v6811, 20.0
  %vm6841 = vcmp.gt.f32.partialorder %v6814, 20.0
  %vm6842 = vcmp.gt.f32.partialorder %v6816, 20.0
  %vm6843 = vcmp.gt.f32.partialorder %v6819, 20.0
  %vm6844 = vcmp.gt.f32.partialorder %v6821, 20.0
  %vm6845 = vcmp.gt.f32.partialorder %v6824, 20.0
  %vm6846 = vcmp.gt.f32.partialorder %v6826, 20.0
  %vm6847 = vcmp.gt.f32.partialorder %v6829, 20.0
  %vm6848 = vcmp.gt.f32.partialorder %v6831, 20.0
  %v6849 = vmin.f32 %v6794, 20.0
  %v6850 = vmin.f32 %v6796, 20.0
  %v6851 = vmin.f32 %v6799, 20.0
  %v6852 = vmin.f32 %v6801, 20.0
  %v6853 = vmin.f32 %v6804, 20.0
  %v6854 = vmin.f32 %v6806, 20.0
  %v6855 = vmin.f32 %v6809, 20.0
  %v6856 = vmin.f32 %v6811, 20.0
  %v6857 = vmin.f32 %v6814, 20.0
  %v6858 = vmin.f32 %v6816, 20.0
  %v6859 = vmin.f32 %v6819, 20.0
  %v6860 = vmin.f32 %v6821, 20.0
  %v6861 = vmin.f32 %v6824, 20.0
  %v6862 = vmin.f32 %v6826, 20.0
  %v6863 = vmin.f32 %v6829, 20.0
  %v6864 = vmin.f32 %v6831, 20.0
  %v6865 = vmul.f32 %v6849, 1.442695
  %v6866 = vpow.pop %v6865
  %v6867 = vmul.f32 %v6850, 1.442695
  %v6868 = vpow.pop %v6867
  %v6869 = vmul.f32 %v6851, 1.442695
  %v6870 = vpow.pop %v6869
  %v6871 = vmul.f32 %v6852, 1.442695
  %v6872 = vpow.pop %v6871
  %v6873 = vmul.f32 %v6853, 1.442695
  %v6874 = vpow.pop %v6873
  %v6875 = vmul.f32 %v6854, 1.442695
  %v6876 = vpow.pop %v6875
  %v6877 = vmul.f32 %v6855, 1.442695
  %v6878 = vpow.pop %v6877
  %v6879 = vmul.f32 %v6856, 1.442695
  %v6880 = vpow.pop %v6879
  %v6881 = vmul.f32 %v6857, 1.442695
  %v6882 = vpow.pop %v6881
  %v6883 = vmul.f32 %v6858, 1.442695
  %v6884 = vpow.pop %v6883
  %v6885 = vmul.f32 %v6859, 1.442695
  %v6886 = vpow.pop %v6885
  %v6887 = vmul.f32 %v6860, 1.442695
  %v6888 = vpow.pop %v6887
  %v6889 = vmul.f32 %v6861, 1.442695
  %v6890 = vpow.pop %v6889
  %v6891 = vmul.f32 %v6862, 1.442695
  %v6892 = vpow.pop %v6891
  %v6893 = vmul.f32 %v6863, 1.442695
  %v6894 = vpow.pop %v6893
  %v6895 = vmul.f32 %v6864, 1.442695
  %v6896 = vpow.pop %v6895
  %v6897 = vadd.f32 %v6866, 1.0
  %v6898 = vlog2.pop %v6897
  %v6899 = vmul.f32 %v6898, 0.6931472
  %v6900 = vmul.f32 -0.5, %v6866
  %v6901 = vadd.f32 %v6900, 1.0
  %v6902 = vmul.f32 %v6901, %v6866
  %v6903 = vand.u32 2147483647, %v6866
  %vm6904 = vcmp.lt.f32.partialorder %v6903, 0.0004427343
  %v6905 = vsel %vm6904, %v6902, %v6899
  %v6906 = vadd.f32 %v6868, 1.0
  %v6907 = vlog2.pop %v6906
  %v6908 = vmul.f32 %v6907, 0.6931472
  %v6909 = vmul.f32 -0.5, %v6868
  %v6910 = vadd.f32 %v6909, 1.0
  %v6911 = vmul.f32 %v6910, %v6868
  %v6912 = vand.u32 2147483647, %v6868
  %vm6913 = vcmp.lt.f32.partialorder %v6912, 0.0004427343
  %v6914 = vsel %vm6913, %v6911, %v6908
  %v6915 = vadd.f32 %v6870, 1.0
  %v6916 = vlog2.pop %v6915
  %v6917 = vmul.f32 %v6916, 0.6931472
  %v6918 = vmul.f32 -0.5, %v6870
  %v6919 = vadd.f32 %v6918, 1.0
  %v6920 = vmul.f32 %v6919, %v6870
  %v6921 = vand.u32 2147483647, %v6870
  %vm6922 = vcmp.lt.f32.partialorder %v6921, 0.0004427343
  %v6923 = vsel %vm6922, %v6920, %v6917
  %v6924 = vadd.f32 %v6872, 1.0
  %v6925 = vlog2.pop %v6924
  %v6926 = vmul.f32 %v6925, 0.6931472
  %v6927 = vmul.f32 -0.5, %v6872
  %v6928 = vadd.f32 %v6927, 1.0
  %v6929 = vmul.f32 %v6928, %v6872
  %v6930 = vand.u32 2147483647, %v6872
  %vm6931 = vcmp.lt.f32.partialorder %v6930, 0.0004427343
  %v6932 = vsel %vm6931, %v6929, %v6926
  %v6933 = vadd.f32 %v6874, 1.0
  %v6934 = vlog2.pop %v6933
  %v6935 = vmul.f32 %v6934, 0.6931472
  %v6936 = vmul.f32 -0.5, %v6874
  %v6937 = vadd.f32 %v6936, 1.0
  %v6938 = vmul.f32 %v6937, %v6874
  %v6939 = vand.u32 2147483647, %v6874
  %vm6940 = vcmp.lt.f32.partialorder %v6939, 0.0004427343
  %v6941 = vsel %vm6940, %v6938, %v6935
  %v6942 = vadd.f32 %v6876, 1.0
  %v6943 = vlog2.pop %v6942
  %v6944 = vmul.f32 %v6943, 0.6931472
  %v6945 = vmul.f32 -0.5, %v6876
  %v6946 = vadd.f32 %v6945, 1.0
  %v6947 = vmul.f32 %v6946, %v6876
  %v6948 = vand.u32 2147483647, %v6876
  %vm6949 = vcmp.lt.f32.partialorder %v6948, 0.0004427343
  %v6950 = vsel %vm6949, %v6947, %v6944
  %v6951 = vadd.f32 %v6878, 1.0
  %v6952 = vlog2.pop %v6951
  %v6953 = vmul.f32 %v6952, 0.6931472
  %v6954 = vmul.f32 -0.5, %v6878
  %v6955 = vadd.f32 %v6954, 1.0
  %v6956 = vmul.f32 %v6955, %v6878
  %v6957 = vand.u32 2147483647, %v6878
  %vm6958 = vcmp.lt.f32.partialorder %v6957, 0.0004427343
  %v6959 = vsel %vm6958, %v6956, %v6953
  %v6960 = vadd.f32 %v6880, 1.0
  %v6961 = vlog2.pop %v6960
  %v6962 = vmul.f32 %v6961, 0.6931472
  %v6963 = vmul.f32 -0.5, %v6880
  %v6964 = vadd.f32 %v6963, 1.0
  %v6965 = vmul.f32 %v6964, %v6880
  %v6966 = vand.u32 2147483647, %v6880
  %vm6967 = vcmp.lt.f32.partialorder %v6966, 0.0004427343
  %v6968 = vsel %vm6967, %v6965, %v6962
  %v6969 = vadd.f32 %v6882, 1.0
  %v6970 = vlog2.pop %v6969
  %v6971 = vmul.f32 %v6970, 0.6931472
  %v6972 = vmul.f32 -0.5, %v6882
  %v6973 = vadd.f32 %v6972, 1.0
  %v6974 = vmul.f32 %v6973, %v6882
  %v6975 = vand.u32 2147483647, %v6882
  %vm6976 = vcmp.lt.f32.partialorder %v6975, 0.0004427343
  %v6977 = vsel %vm6976, %v6974, %v6971
  %v6978 = vadd.f32 %v6884, 1.0
  %v6979 = vlog2.pop %v6978
  %v6980 = vmul.f32 %v6979, 0.6931472
  %v6981 = vmul.f32 -0.5, %v6884
  %v6982 = vadd.f32 %v6981, 1.0
  %v6983 = vmul.f32 %v6982, %v6884
  %v6984 = vand.u32 2147483647, %v6884
  %vm6985 = vcmp.lt.f32.partialorder %v6984, 0.0004427343
  %v6986 = vsel %vm6985, %v6983, %v6980
  %v6987 = vadd.f32 %v6886, 1.0
  %v6988 = vlog2.pop %v6987
  %v6989 = vmul.f32 %v6988, 0.6931472
  %v6990 = vmul.f32 -0.5, %v6886
  %v6991 = vadd.f32 %v6990, 1.0
  %v6992 = vmul.f32 %v6991, %v6886
  %v6993 = vand.u32 2147483647, %v6886
  %vm6994 = vcmp.lt.f32.partialorder %v6993, 0.0004427343
  %v6995 = vsel %vm6994, %v6992, %v6989
  %v6996 = vadd.f32 %v6888, 1.0
  %v6997 = vlog2.pop %v6996
  %v6998 = vmul.f32 %v6997, 0.6931472
  %v6999 = vmul.f32 -0.5, %v6888
  %v7000 = vadd.f32 %v6999, 1.0
  %v7001 = vmul.f32 %v7000, %v6888
  %v7002 = vand.u32 2147483647, %v6888
  %vm7003 = vcmp.lt.f32.partialorder %v7002, 0.0004427343
  %v7004 = vsel %vm7003, %v7001, %v6998
  %v7005 = vadd.f32 %v6890, 1.0
  %v7006 = vlog2.pop %v7005
  %v7007 = vmul.f32 %v7006, 0.6931472
  %v7008 = vmul.f32 -0.5, %v6890
  %v7009 = vadd.f32 %v7008, 1.0
  %v7010 = vmul.f32 %v7009, %v6890
  %v7011 = vand.u32 2147483647, %v6890
  %vm7012 = vcmp.lt.f32.partialorder %v7011, 0.0004427343
  %v7013 = vsel %vm7012, %v7010, %v7007
  %v7014 = vadd.f32 %v6892, 1.0
  %v7015 = vlog2.pop %v7014
  %v7016 = vmul.f32 %v7015, 0.6931472
  %v7017 = vmul.f32 -0.5, %v6892
  %v7018 = vadd.f32 %v7017, 1.0
  %v7019 = vmul.f32 %v7018, %v6892
  %v7020 = vand.u32 2147483647, %v6892
  %vm7021 = vcmp.lt.f32.partialorder %v7020, 0.0004427343
  %v7022 = vsel %vm7021, %v7019, %v7016
  %v7023 = vadd.f32 %v6894, 1.0
  %v7024 = vlog2.pop %v7023
  %v7025 = vmul.f32 %v7024, 0.6931472
  %v7026 = vmul.f32 -0.5, %v6894
  %v7027 = vadd.f32 %v7026, 1.0
  %v7028 = vmul.f32 %v7027, %v6894
  %v7029 = vand.u32 2147483647, %v6894
  %vm7030 = vcmp.lt.f32.partialorder %v7029, 0.0004427343
  %v7031 = vsel %vm7030, %v7028, %v7025
  %v7032 = vadd.f32 %v6896, 1.0
  %v7033 = vlog2.pop %v7032
  %v7034 = vmul.f32 %v7033, 0.6931472
  %v7035 = vmul.f32 -0.5, %v6896
  %v7036 = vadd.f32 %v7035, 1.0
  %v7037 = vmul.f32 %v7036, %v6896
  %v7038 = vand.u32 2147483647, %v6896
  %vm7039 = vcmp.lt.f32.partialorder %v7038, 0.0004427343
  %v7040 = vsel %vm7039, %v7037, %v7034
  %v7041 = vsel %vm6833, %v6794, %v6905
  %v7042 = vsel %vm6834, %v6796, %v6914
  %v7043 = vsel %vm6835, %v6799, %v6923
  %v7044 = vsel %vm6836, %v6801, %v6932
  %v7045 = vsel %vm6837, %v6804, %v6941
  %v7046 = vsel %vm6838, %v6806, %v6950
  %v7047 = vsel %vm6839, %v6809, %v6959
  %v7048 = vsel %vm6840, %v6811, %v6968
  %v7049 = vsel %vm6841, %v6814, %v6977
  %v7050 = vsel %vm6842, %v6816, %v6986
  %v7051 = vsel %vm6843, %v6819, %v6995
  %v7052 = vsel %vm6844, %v6821, %v7004
  %v7053 = vsel %vm6845, %v6824, %v7013
  %v7054 = vsel %vm6846, %v6826, %v7022
  %v7055 = vsel %vm6847, %v6829, %v7031
  %v7056 = vsel %vm6848, %v6831, %v7040
  %7073 = vrot.lane.b32.xlu0 %v1953, 8
  %v7074 = vpop.permute.xlu0 %7073
  %7075 = vrot.lane.b32.xlu0 %v1968, 8
  %v7076 = vpop.permute.xlu0 %7075
  %7077 = vrot.lane.b32.xlu0 %v1983, 8
  %v7078 = vpop.permute.xlu0 %7077
  %7079 = vrot.lane.b32.xlu0 %v1998, 8
  %v7080 = vpop.permute.xlu0 %7079
  %7081 = vrot.lane.b32.xlu0 %v2013, 8
  %v7082 = vpop.permute.xlu0 %7081
  %7083 = vrot.lane.b32.xlu0 %v2028, 8
  %v7084 = vpop.permute.xlu0 %7083
  %7085 = vrot.lane.b32.xlu0 %v2043, 8
  %v7086 = vpop.permute.xlu0 %7085
  %7087 = vrot.lane.b32.xlu0 %v2058, 8
  %v7088 = vpop.permute.xlu0 %7087
  %7089 = vrot.lane.b32.xlu0 %v2073, 8
  %v7090 = vpop.permute.xlu0 %7089
  %7091 = vrot.lane.b32.xlu0 %v2088, 8
  %v7092 = vpop.permute.xlu0 %7091
  %7093 = vrot.lane.b32.xlu0 %v2103, 8
  %v7094 = vpop.permute.xlu0 %7093
  %7095 = vrot.lane.b32.xlu0 %v2118, 8
  %v7096 = vpop.permute.xlu0 %7095
  %7097 = vrot.lane.b32.xlu0 %v2133, 8
  %v7098 = vpop.permute.xlu0 %7097
  %7099 = vrot.lane.b32.xlu0 %v2148, 8
  %v7100 = vpop.permute.xlu0 %7099
  %7101 = vrot.lane.b32.xlu0 %v2163, 8
  %v7102 = vpop.permute.xlu0 %7101
  %7103 = vrot.lane.b32.xlu0 %v2178, 8
  %v7104 = vpop.permute.xlu0 %7103
  %7137 = vrot.lane.b32.xlu0 %v6728, 16
  %v7138 = vpop.permute.xlu0 %7137
  %7139 = vrot.lane.b32.xlu0 %v6729, 16
  %v7140 = vpop.permute.xlu0 %7139
  %7141 = vrot.lane.b32.xlu0 %v6730, 16
  %v7142 = vpop.permute.xlu0 %7141
  %7143 = vrot.lane.b32.xlu0 %v6731, 16
  %v7144 = vpop.permute.xlu0 %7143
  %7145 = vrot.lane.b32.xlu0 %v6732, 16
  %v7146 = vpop.permute.xlu0 %7145
  %7147 = vrot.lane.b32.xlu0 %v6733, 16
  %v7148 = vpop.permute.xlu0 %7147
  %7149 = vrot.lane.b32.xlu0 %v6734, 16
  %v7150 = vpop.permute.xlu0 %7149
  %7151 = vrot.lane.b32.xlu0 %v6735, 16
  %v7152 = vpop.permute.xlu0 %7151
  %7153 = vrot.lane.b32.xlu0 %v6736, 16
  %v7154 = vpop.permute.xlu0 %7153
  %7155 = vrot.lane.b32.xlu0 %v6737, 16
  %v7156 = vpop.permute.xlu0 %7155
  %7157 = vrot.lane.b32.xlu0 %v6738, 16
  %v7158 = vpop.permute.xlu0 %7157
  %7159 = vrot.lane.b32.xlu0 %v6739, 16
  %v7160 = vpop.permute.xlu0 %7159
  %7161 = vrot.lane.b32.xlu0 %v6740, 16
  %v7162 = vpop.permute.xlu0 %7161
  %7163 = vrot.lane.b32.xlu0 %v6741, 16
  %v7164 = vpop.permute.xlu0 %7163
  %7165 = vrot.lane.b32.xlu0 %v6742, 16
  %v7166 = vpop.permute.xlu0 %7165
  %7167 = vrot.lane.b32.xlu0 %v6743, 16
  %v7168 = vpop.permute.xlu0 %7167
  %7201 = vrot.lane.b32.xlu0 %v7041, 17
  %v7202 = vpop.permute.xlu0 %7201
  %7203 = vrot.lane.b32.xlu0 %v7042, 17
  %v7204 = vpop.permute.xlu0 %7203
  %7205 = vrot.lane.b32.xlu0 %v7043, 17
  %v7206 = vpop.permute.xlu0 %7205
  %7207 = vrot.lane.b32.xlu0 %v7044, 17
  %v7208 = vpop.permute.xlu0 %7207
  %7209 = vrot.lane.b32.xlu0 %v7045, 17
  %v7210 = vpop.permute.xlu0 %7209
  %7211 = vrot.lane.b32.xlu0 %v7046, 17
  %v7212 = vpop.permute.xlu0 %7211
  %7213 = vrot.lane.b32.xlu0 %v7047, 17
  %v7214 = vpop.permute.xlu0 %7213
  %7215 = vrot.lane.b32.xlu0 %v7048, 17
  %v7216 = vpop.permute.xlu0 %7215
  %7217 = vrot.lane.b32.xlu0 %v7049, 17
  %v7218 = vpop.permute.xlu0 %7217
  %7219 = vrot.lane.b32.xlu0 %v7050, 17
  %v7220 = vpop.permute.xlu0 %7219
  %7221 = vrot.lane.b32.xlu0 %v7051, 17
  %v7222 = vpop.permute.xlu0 %7221
  %7223 = vrot.lane.b32.xlu0 %v7052, 17
  %v7224 = vpop.permute.xlu0 %7223
  %7225 = vrot.lane.b32.xlu0 %v7053, 17
  %v7226 = vpop.permute.xlu0 %7225
  %7227 = vrot.lane.b32.xlu0 %v7054, 17
  %v7228 = vpop.permute.xlu0 %7227
  %7229 = vrot.lane.b32.xlu0 %v7055, 17
  %v7230 = vpop.permute.xlu0 %7229
  %7231 = vrot.lane.b32.xlu0 %v7056, 17
  %v7232 = vpop.permute.xlu0 %7231
  %v7249 = vsel %vm1410, %v1569, %v7074
  %v7250 = vsel %vm1410, %v1584, %v7076
  %v7251 = vsel %vm1410, %v1599, %v7078
  %v7252 = vsel %vm1410, %v1614, %v7080
  %v7253 = vsel %vm1410, %v1629, %v7082
  %v7254 = vsel %vm1410, %v1644, %v7084
  %v7255 = vsel %vm1410, %v1659, %v7086
  %v7256 = vsel %vm1410, %v1674, %v7088
  %v7257 = vsel %vm1410, %v1689, %v7090
  %v7258 = vsel %vm1410, %v1704, %v7092
  %v7259 = vsel %vm1410, %v1719, %v7094
  %v7260 = vsel %vm1410, %v1734, %v7096
  %v7261 = vsel %vm1410, %v1749, %v7098
  %v7262 = vsel %vm1410, %v1764, %v7100
  %v7263 = vsel %vm1410, %v1779, %v7102
  %v7264 = vsel %vm1410, %v1794, %v7104
  %v7265 = vsel %vm131, %v7249, %v7138
  %v7266 = vsel %vm131, %v7250, %v7140
  %v7267 = vsel %vm131, %v7251, %v7142
  %v7268 = vsel %vm131, %v7252, %v7144
  %v7269 = vsel %vm131, %v7253, %v7146
  %v7270 = vsel %vm131, %v7254, %v7148
  %v7271 = vsel %vm131, %v7255, %v7150
  %v7272 = vsel %vm131, %v7256, %v7152
  %v7273 = vsel %vm131, %v7257, %v7154
  %v7274 = vsel %vm131, %v7258, %v7156
  %v7275 = vsel %vm131, %v7259, %v7158
  %v7276 = vsel %vm131, %v7260, %v7160
  %v7277 = vsel %vm131, %v7261, %v7162
  %v7278 = vsel %vm131, %v7262, %v7164
  %v7279 = vsel %vm131, %v7263, %v7166
  %v7280 = vsel %vm131, %v7264, %v7168
  %vm7281 = vcmask 138240
  %v7282 = vsel %vm7281, %v7265, %v7202
  %v7283 = vsel %vm7281, %v7266, %v7204
  %v7284 = vsel %vm7281, %v7267, %v7206
  %v7285 = vsel %vm7281, %v7268, %v7208
  %v7286 = vsel %vm7281, %v7269, %v7210
  %v7287 = vsel %vm7281, %v7270, %v7212
  %v7288 = vsel %vm7281, %v7271, %v7214
  %v7289 = vsel %vm7281, %v7272, %v7216
  %v7290 = vsel %vm7281, %v7273, %v7218
  %v7291 = vsel %vm7281, %v7274, %v7220
  %v7292 = vsel %vm7281, %v7275, %v7222
  %v7293 = vsel %vm7281, %v7276, %v7224
  %v7294 = vsel %vm7281, %v7277, %v7226
  %v7295 = vsel %vm7281, %v7278, %v7228
  %v7296 = vsel %vm7281, %v7279, %v7230
  %v7297 = vsel %vm7281, %v7280, %v7232
  %vm7298 = vcmask 146432
  %7299 = vst.msk [vmem:[%s23] sm:$0xff] %vm7298, %v7282
  %7300 = vst.msk [vmem:[%s23 + $0x8] sm:$0xff] %vm7298, %v7283
  %7301 = vst.msk [vmem:[%s23 + $0x10] sm:$0xff] %vm7298, %v7284
  %7302 = vst.msk [vmem:[%s23 + $0x18] sm:$0xff] %vm7298, %v7285
  %7303 = vst.msk [vmem:[%s23 + $0x20] sm:$0xff] %vm7298, %v7286
  %7304 = vst.msk [vmem:[%s23 + $0x28] sm:$0xff] %vm7298, %v7287
  %7305 = vst.msk [vmem:[%s23 + $0x30] sm:$0xff] %vm7298, %v7288
  %7306 = vst.msk [vmem:[%s23 + $0x38] sm:$0xff] %vm7298, %v7289
  %7307 = vst.msk [vmem:[%s23 + $0x40] sm:$0xff] %vm7298, %v7290
  %7308 = vst.msk [vmem:[%s23 + $0x48] sm:$0xff] %vm7298, %v7291
  %7309 = vst.msk [vmem:[%s23 + $0x50] sm:$0xff] %vm7298, %v7292
  %7310 = vst.msk [vmem:[%s23 + $0x58] sm:$0xff] %vm7298, %v7293
  %7311 = vst.msk [vmem:[%s23 + $0x60] sm:$0xff] %vm7298, %v7294
  %7312 = vst.msk [vmem:[%s23 + $0x68] sm:$0xff] %vm7298, %v7295
  %7313 = vst.msk [vmem:[%s23 + $0x70] sm:$0xff] %vm7298, %v7296
  %7314 = vst.msk [vmem:[%s23 + $0x78] sm:$0xff] %vm7298, %v7297
  // Predicated region
  $region94: #{beta_distribution_classifier.1} parent=0 // pred_check
    _
  $region95: #{beta_distribution_classifier.1} parent=0 // pred_check_branch
    %7316 = sbr.rel (0) target = $region97
  $region96: #{beta_distribution_classifier.1} parent=0 // pred_region
    _
  $region97: #{beta_distribution_classifier.1} parent=0 // pred_fallthru
    _
  // Predicated region
  $region98: #{beta_distribution_classifier.1} parent=0 // pred_check
    _
  $region99: #{beta_distribution_classifier.1} parent=0 // pred_check_branch
    %7318 = sbr.rel (0) target = $region101
  $region100: #{beta_distribution_classifier.1} parent=0 // pred_region
    _
  $region101: #{beta_distribution_classifier.1} parent=0 // pred_fallthru
    _

</llo_original>
